<compile_context>
chip_gen: v5e
topology: v5e:2x2
jax: 0.10.0
libtpu: 0.0.40
codegen_flags: <defaults>
</compile_context>

<pallas_src>
import functools

import jax
import jax.numpy as jnp
from jax import lax
from jax.experimental import pallas as pl
from jax.experimental.pallas import tpu as pltpu


# ---------------------------------------------------------------------------
# Tiling helpers
# ---------------------------------------------------------------------------
def _pick_rows(H, W, target=256, cap=2048):
    """Rows per grid step: smallest divisor R of H with R*W >= target (MXU M
    occupancy), else the largest divisor with R*W <= cap.  Falls back to 1 when
    W is not sublane-aligned (the (R, W, C)->(R*W, C) collapse is only
    layout-preserving for W % 8 == 0)."""
    if W % 8 != 0:
        return 1
    best = 1
    for r in range(1, H + 1):
        if H % r == 0 and r * W <= cap:
            best = r
            if r * W >= target:
                break
    return best


def _pick_tile(m, cap=2048):
    """Largest row-tile <= cap that divides m (epilogue tiling)."""
    if m <= cap:
        return m
    for t in range(cap, 0, -1):
        if m % t == 0:
            return t
    return 1


def _compiler_params(semantics, est_vmem_bytes=0):
    """Only raise the scoped-VMEM limit when the resident blocks need it.
    TODO(synk): for very large decoder levels switch the whole-image inputs to
    row-band BlockSpecs with a 1-row halo instead of raising the limit."""
    kwargs = dict(dimension_semantics=semantics)
    if est_vmem_bytes > 30 * 1024 * 1024:
        kwargs["vmem_limit_bytes"] = int(min(est_vmem_bytes * 1.5,
                                             120 * 1024 * 1024))
    return pltpu.CompilerParams(**kwargs)


# ---------------------------------------------------------------------------
# Pallas kernels
# ---------------------------------------------------------------------------
def _upconv_kernel(x_ref, w_ref, b_ref, y_ref):
    """ConvTranspose2d(k=2, s=2) over a band of R input rows.

    x_ref: (1, R, W, Cin)  f32
    w_ref: (2, Cin, 2*Cout) bf16 indexed [kh, cin, kw*Cout + cout]
    b_ref: (1, 2*Cout)      f32  bias replicated over kw
    y_ref: (1, R, 2, W, 2*Cout) bf16 raw layout [r, kh, w, kw*Cout + cout]
    """
    _, R, W, Cin = x_ref.shape
    Cout2 = w_ref.shape[2]
    x = x_ref[0].reshape(R * W, Cin).astype(jnp.bfloat16)      # (R*W, Cin)
    for kh in range(2):
        y = jnp.dot(x, w_ref[kh], preferred_element_type=jnp.float32)
        y = y + b_ref[...]                                     # (R*W, 2*Cout)
        y_ref[0, :, kh:kh + 1, :, :] = (
            y.reshape(R, 1, W, Cout2).astype(y_ref.dtype))


def _conv3x3_cat2_kernel(xa_ref, xb_ref, w_ref, b_ref,
                         y_ref, sum_ref, ssq_ref, xp):
    """3x3 conv (padding=1) over the channel-concat of two inputs, R output
    rows per grid step, fused per-image BN statistics.

    xa_ref: (1, H, W, Ca) bf16 (up-conv output)  -- whole image, once per n
    xb_ref: (1, H, W, Cb) bf16 (skip connection) -- whole image, once per n
    w_ref:  (9, Ca+Cb, Cout) bf16; b_ref: (1, Cout) f32
    y_ref:  (1, 1, R*W, Cout) bf16; sum_ref/ssq_ref: (1, 1, Cout) f32
    xp: VMEM scratch (H+2, W+2, Ca+Cb) bf16, zero halo + image interior
    """
    hb = pl.program_id(1)
    _, H, W, Ca = xa_ref.shape
    Cb = xb_ref.shape[3]
    C = Ca + Cb
    Cout = y_ref.shape[3]
    R = y_ref.shape[2] // W
    row0 = hb * R

    @pl.when(hb == 0)
    def _fill():
        # Zero only the 1-wide halo, then write the interior once.
        xp[0:1, :, :] = jnp.zeros((1, W + 2, C), xp.dtype)
        xp[H + 1:H + 2, :, :] = jnp.zeros((1, W + 2, C), xp.dtype)
        xp[:, 0:1, :] = jnp.zeros((H + 2, 1, C), xp.dtype)
        xp[:, W + 1:W + 2, :] = jnp.zeros((H + 2, 1, C), xp.dtype)
        xp[1:H + 1, 1:W + 1, :] = jnp.concatenate(
            [xa_ref[0], xb_ref[0]], axis=-1)

    acc = jnp.zeros((R * W, Cout), jnp.float32)
    for kh in range(3):
        for kw in range(3):
            patch = xp[pl.ds(row0 + kh, R), kw:kw + W, :]      # (R, W, C)
            acc = acc + jnp.dot(patch.reshape(R * W, C), w_ref[3 * kh + kw],
                                preferred_element_type=jnp.float32)
    y = acc + b_ref[...]                                       # (R*W, Cout) f32
    y_ref[0, 0] = y.astype(y_ref.dtype)

    band_sum = jnp.sum(y, axis=0, keepdims=True)               # (1, Cout)
    band_ssq = jnp.sum(y * y, axis=0, keepdims=True)

    @pl.when(hb == 0)
    def _init_stats():
        sum_ref[0] = band_sum
        ssq_ref[0] = band_ssq

    @pl.when(hb > 0)
    def _acc_stats():
        sum_ref[0] += band_sum
        ssq_ref[0] += band_ssq


def _conv3x3_act1_kernel(x_ref, scale_ref, shift_ref, w_ref, b_ref,
                         y_ref, sum_ref, ssq_ref, xp):
    """3x3 conv (padding=1) with the previous layer's BN scale/shift + ReLU
    fused into the input fill, R output rows per grid step, fused BN stats.

    x_ref: (1, H, W, Cin) bf16; scale/shift: (1, Cin) f32
    w_ref: (9, Cin, Cout) bf16; b_ref: (1, Cout) f32
    y_ref: (1, 1, R*W, Cout) bf16; sum_ref/ssq_ref: (1, 1, Cout) f32
    xp: VMEM scratch (H+2, W+2, Cin) bf16 (zero halo, activated interior)
    """
    hb = pl.program_id(1)
    _, H, W, Cin = x_ref.shape
    Cout = y_ref.shape[3]
    R = y_ref.shape[2] // W
    row0 = hb * R

    @pl.when(hb == 0)
    def _fill():
        xp[0:1, :, :] = jnp.zeros((1, W + 2, Cin), xp.dtype)
        xp[H + 1:H + 2, :, :] = jnp.zeros((1, W + 2, Cin), xp.dtype)
        xp[:, 0:1, :] = jnp.zeros((H + 2, 1, Cin), xp.dtype)
        xp[:, W + 1:W + 2, :] = jnp.zeros((H + 2, 1, Cin), xp.dtype)
        xin = x_ref[0].astype(jnp.float32) * scale_ref[...] + shift_ref[...]
        xp[1:H + 1, 1:W + 1, :] = jnp.maximum(xin, 0.0).astype(xp.dtype)

    acc = jnp.zeros((R * W, Cout), jnp.float32)
    for kh in range(3):
        for kw in range(3):
            patch = xp[pl.ds(row0 + kh, R), kw:kw + W, :]      # (R, W, Cin)
            acc = acc + jnp.dot(patch.reshape(R * W, Cin), w_ref[3 * kh + kw],
                                preferred_element_type=jnp.float32)
    y = acc + b_ref[...]
    y_ref[0, 0] = y.astype(y_ref.dtype)

    band_sum = jnp.sum(y, axis=0, keepdims=True)
    band_ssq = jnp.sum(y * y, axis=0, keepdims=True)

    @pl.when(hb == 0)
    def _init_stats():
        sum_ref[0] = band_sum
        ssq_ref[0] = band_ssq

    @pl.when(hb > 0)
    def _acc_stats():
        sum_ref[0] += band_sum
        ssq_ref[0] += band_ssq


def _bn_relu_kernel(x_ref, scale_ref, shift_ref, o_ref):
    # x: (tm, C) bf16, scale/shift: (1, C) f32 -> relu(x*scale + shift) f32
    o_ref[...] = jnp.maximum(
        x_ref[...].astype(jnp.float32) * scale_ref[...] + shift_ref[...], 0.0)


# ---------------------------------------------------------------------------
# Wrappers
# ---------------------------------------------------------------------------
def conv_transpose2x2_s2(x_nhwc, w, b):
    """PyTorch ConvTranspose2d(kernel=2, stride=2, padding=0) in NHWC.

    x_nhwc: (N, H, W, Cin) f32; w: (Cin, Cout, 2, 2) [torch layout]; b: (Cout,)
    Returns (N, 2H, 2W, Cout) bf16.
    """
    N, H, W, Cin = x_nhwc.shape
    Cout = w.shape[1]
    R = _pick_rows(H, W)
    Hb = H // R
    # (Cin, Cout, kh, kw) -> (kh, Cin, kw, Cout) -> (2, Cin, 2*Cout)
    w_r = jnp.transpose(w, (2, 0, 3, 1)).reshape(2, Cin, 2 * Cout)
    w_r = w_r.astype(jnp.bfloat16)
    b_r = jnp.tile(b.reshape(1, Cout), (1, 2)).astype(jnp.float32)  # [kw, c]

    est = (2 * R * W * Cin * 4 + 2 * 2 * Cin * 2 * Cout * 2
           + 2 * R * 2 * W * 2 * Cout * 2 + 4 * R * W * 2 * Cout * 4)

    y_raw = pl.pallas_call(
        _upconv_kernel,
        out_shape=jax.ShapeDtypeStruct((N * Hb, R, 2, W, 2 * Cout),
                                       jnp.bfloat16),
        grid=(N, Hb),
        in_specs=[
            pl.BlockSpec((1, R, W, Cin), lambda n, hb: (n, hb, 0, 0)),
            pl.BlockSpec((2, Cin, 2 * Cout), lambda n, hb: (0, 0, 0)),
            pl.BlockSpec((1, 2 * Cout), lambda n, hb: (0, 0)),
        ],
        out_specs=pl.BlockSpec((1, R, 2, W, 2 * Cout),
                               lambda n, hb: (n * Hb + hb, 0, 0, 0, 0)),
        compiler_params=_compiler_params(("parallel", "parallel"), est),
    )(x_nhwc, w_r, b_r)

    # Row-major order of (N*Hb, R, 2, W, 2*Cout) == (N, 2H, 2W, Cout):
    # the reshape is a free relabeling (no transpose, no extra HBM pass).
    return y_raw.reshape(N, 2 * H, 2 * W, Cout)


def conv3x3_cat_bnstats(xa, xb, w, b):
    """conv1: 3x3/pad1 over concat([xa, xb], channels) + fused BN statistics."""
    N, H, W, Ca = xa.shape
    Cb = xb.shape[3]
    C = Ca + Cb
    Cout = w.shape[0]
    R = _pick_rows(H, W)
    Hb = H // R
    # torch (Cout, Cin, kh, kw) -> (kh, kw, Cin, Cout) -> (9, Cin, Cout)
    w_r = jnp.transpose(w, (2, 3, 1, 0)).reshape(9, C, Cout).astype(jnp.bfloat16)
    b_r = b.reshape(1, Cout).astype(jnp.float32)

    est = (2 * H * W * C * 2 + (H + 2) * (W + 2) * C * 2
           + 2 * 9 * C * Cout * 2 + 2 * R * W * Cout * 2
           + 4 * R * W * Cout * 4)

    y, s, ss = pl.pallas_call(
        _conv3x3_cat2_kernel,
        out_shape=(
            jax.ShapeDtypeStruct((N, Hb, R * W, Cout), jnp.bfloat16),
            jax.ShapeDtypeStruct((N, 1, Cout), jnp.float32),
            jax.ShapeDtypeStruct((N, 1, Cout), jnp.float32),
        ),
        grid=(N, Hb),
        in_specs=[
            pl.BlockSpec((1, H, W, Ca), lambda n, hb: (n, 0, 0, 0)),
            pl.BlockSpec((1, H, W, Cb), lambda n, hb: (n, 0, 0, 0)),
            pl.BlockSpec((9, C, Cout), lambda n, hb: (0, 0, 0)),
            pl.BlockSpec((1, Cout), lambda n, hb: (0, 0)),
        ],
        out_specs=(
            pl.BlockSpec((1, 1, R * W, Cout), lambda n, hb: (n, hb, 0, 0)),
            pl.BlockSpec((1, 1, Cout), lambda n, hb: (n, 0, 0)),
            pl.BlockSpec((1, 1, Cout), lambda n, hb: (n, 0, 0)),
        ),
        scratch_shapes=[pltpu.VMEM((H + 2, W + 2, C), jnp.bfloat16)],
        compiler_params=_compiler_params(("parallel", "arbitrary"), est),
    )(xa, xb, w_r, b_r)
    # (N, Hb, R*W, Cout) row-major == (N, H, W, Cout): free relabeling.
    return y.reshape(N, H, W, Cout), s, ss


def conv3x3_bnrelu_in_bnstats(x, scale, shift, w, b):
    """conv2: fused (BN1 affine + ReLU) -> 3x3/pad1 conv + fused BN statistics."""
    N, H, W, Cin = x.shape
    Cout = w.shape[0]
    R = _pick_rows(H, W)
    Hb = H // R
    w_r = jnp.transpose(w, (2, 3, 1, 0)).reshape(9, Cin, Cout).astype(jnp.bfloat16)
    b_r = b.reshape(1, Cout).astype(jnp.float32)
    scale_r = scale.reshape(1, Cin).astype(jnp.float32)
    shift_r = shift.reshape(1, Cin).astype(jnp.float32)

    est = (2 * H * W * Cin * 2 + (H + 2) * (W + 2) * Cin * 2
           + 2 * 9 * Cin * Cout * 2 + 2 * R * W * Cout * 2
           + 4 * R * W * Cout * 4)

    y, s, ss = pl.pallas_call(
        _conv3x3_act1_kernel,
        out_shape=(
            jax.ShapeDtypeStruct((N, Hb, R * W, Cout), jnp.bfloat16),
            jax.ShapeDtypeStruct((N, 1, Cout), jnp.float32),
            jax.ShapeDtypeStruct((N, 1, Cout), jnp.float32),
        ),
        grid=(N, Hb),
        in_specs=[
            pl.BlockSpec((1, H, W, Cin), lambda n, hb: (n, 0, 0, 0)),
            pl.BlockSpec((1, Cin), lambda n, hb: (0, 0)),
            pl.BlockSpec((1, Cin), lambda n, hb: (0, 0)),
            pl.BlockSpec((9, Cin, Cout), lambda n, hb: (0, 0, 0)),
            pl.BlockSpec((1, Cout), lambda n, hb: (0, 0)),
        ],
        out_specs=(
            pl.BlockSpec((1, 1, R * W, Cout), lambda n, hb: (n, hb, 0, 0)),
            pl.BlockSpec((1, 1, Cout), lambda n, hb: (n, 0, 0)),
            pl.BlockSpec((1, 1, Cout), lambda n, hb: (n, 0, 0)),
        ),
        scratch_shapes=[pltpu.VMEM((H + 2, W + 2, Cin), jnp.bfloat16)],
        compiler_params=_compiler_params(("parallel", "arbitrary"), est),
    )(x, scale_r, shift_r, w_r, b_r)
    return y.reshape(N, H, W, Cout), s, ss


def bn_relu_apply(x_nhwc, scale, shift):
    """relu(x*scale + shift) over an NHWC bf16 tensor -> f32, lane-dense tiles."""
    N, H, W, C = x_nhwc.shape
    M = N * H * W
    if (128 % C == 0) and ((M * C) % (8 * 128) == 0):
        # View as (M*C/128, 128): channel pattern repeats every C lanes, so
        # tiling scale/shift 128/C times along lanes keeps BN per-channel.
        rep = 128 // C
        x2 = x_nhwc.reshape(M * C // 128, 128)
        sc = jnp.tile(scale.reshape(1, C), (1, rep)).astype(jnp.float32)
        sh = jnp.tile(shift.reshape(1, C), (1, rep)).astype(jnp.float32)
    else:
        x2 = x_nhwc.reshape(M, C)
        sc = scale.reshape(1, C).astype(jnp.float32)
        sh = shift.reshape(1, C).astype(jnp.float32)
    Mr, Cr = x2.shape
    tm = _pick_tile(Mr)

    # TODO(synk): emit bf16 and/or fold the NHWC->NCHW transpose into the
    # out_spec if the consumer tolerates it (saves one full-tensor HBM pass).
    out = pl.pallas_call(
        _bn_relu_kernel,
        out_shape=jax.ShapeDtypeStruct((Mr, Cr), jnp.float32),
        grid=(Mr // tm,),
        in_specs=[
            pl.BlockSpec((tm, Cr), lambda i: (i, 0)),
            pl.BlockSpec((1, Cr), lambda i: (0, 0)),
            pl.BlockSpec((1, Cr), lambda i: (0, 0)),
        ],
        out_specs=pl.BlockSpec((tm, Cr), lambda i: (i, 0)),
        compiler_params=pltpu.CompilerParams(dimension_semantics=("parallel",)),
    )(x2, sc, sh)
    return out.reshape(N, H, W, C)


def _bn_affine(total_sum, total_ssq, count, gamma, beta, eps):
    """Training-mode BatchNorm affine from fused sum / sum-of-squares."""
    mean = total_sum / count
    var = jnp.maximum(total_ssq / count - mean * mean, 0.0)   # biased variance
    scale = gamma / jnp.sqrt(var + eps)
    shift = beta - mean * scale
    return scale, shift


# ---------------------------------------------------------------------------
# decoder_block forward
# ---------------------------------------------------------------------------
def decoder_block_forward(params, inputs_nchw, skip_nchw, eps=1e-5):
    """inputs: (N, in_c, H, W); skip: (N, out_c, 2H, 2W) -> (N, out_c, 2H, 2W)."""
    # TODO(synk): fold these NCHW->NHWC boundary transposes into the kernels
    # (or accept NHWC at the API boundary) to save two HBM round trips.
    x = jnp.transpose(inputs_nchw, (0, 2, 3, 1)).astype(jnp.float32)   # NHWC
    s = jnp.transpose(skip_nchw, (0, 2, 3, 1)).astype(jnp.bfloat16)    # bf16 skip

    # up = ConvTranspose2d(in_c, out_c, 2, stride=2)
    up = conv_transpose2x2_s2(x, params["up_w"], params["up_b"])       # bf16
    N, H2, W2, Cout = up.shape
    cnt = float(N * H2 * W2)

    # conv1 over the (implicit) channel concat [up, skip]; BN1 stats fused.
    y1, s1, ss1 = conv3x3_cat_bnstats(up, s, params["conv1_w"], params["conv1_b"])
    scale1, shift1 = _bn_affine(jnp.sum(s1, axis=(0, 1)), jnp.sum(ss1, axis=(0, 1)),
                                cnt, params["bn1_g"], params["bn1_b"], eps)

    # conv2 with fused BN1+ReLU prologue; BN2 stats fused.
    y2, s2, ss2 = conv3x3_bnrelu_in_bnstats(y1, scale1, shift1,
                                            params["conv2_w"], params["conv2_b"])
    scale2, shift2 = _bn_affine(jnp.sum(s2, axis=(0, 1)), jnp.sum(ss2, axis=(0, 1)),
                                cnt, params["bn2_g"], params["bn2_b"], eps)

    # BN2 + ReLU epilogue (single lane-dense elementwise pass).
    out = bn_relu_apply(y2, scale2, shift2)
    return jnp.transpose(out, (0, 3, 1, 2))                            # NCHW


def init_params(key, in_c, out_c):
    ks = jax.random.split(key, 6)
    f32 = jnp.float32
    return {
        # ConvTranspose2d weight layout: (in_c, out_c, kH, kW)
        "up_w": 0.1 * jax.random.normal(ks[0], (in_c, out_c, 2, 2), f32),
        "up_b": 0.1 * jax.random.normal(ks[1], (out_c,), f32),
        # Conv2d weight layout: (out_c, in_c, kH, kW)
        "conv1_w": 0.1 * jax.random.normal(ks[2], (out_c, 2 * out_c, 3, 3), f32),
        "conv1_b": 0.1 * jax.random.normal(ks[3], (out_c,), f32),
        "bn1_g": jnp.ones((out_c,), f32),
        "bn1_b": jnp.zeros((out_c,), f32),
        "conv2_w": 0.1 * jax.random.normal(ks[4], (out_c, out_c, 3, 3), f32),
        "conv2_b": 0.1 * jax.random.normal(ks[5], (out_c,), f32),
        "bn2_g": jnp.ones((out_c,), f32),
        "bn2_b": jnp.zeros((out_c,), f32),
    }


# ---------------------------------------------------------------------------
# Pure-JAX float32 reference (mirrors the PyTorch module)
# ---------------------------------------------------------------------------
def _ref_decoder_block(params, inputs, skip, eps=1e-5):
    w_up = params["up_w"]
    N, _, H, W = inputs.shape
    Cout = w_up.shape[1]
    up = jnp.einsum("nchw,cokl->nohkwl", inputs, w_up)
    up = up.reshape(N, Cout, 2 * H, 2 * W) + params["up_b"][None, :, None, None]
    x = jnp.concatenate([up, skip], axis=1)

    def conv3x3(v, w, b):
        return lax.conv_general_dilated(
            v, w, window_strides=(1, 1), padding=((1, 1), (1, 1)),
            dimension_numbers=("NCHW", "OIHW", "NCHW")) + b[None, :, None, None]

    def bn_relu(v, g, b):
        mean = v.mean(axis=(0, 2, 3), keepdims=True)
        var = ((v - mean) ** 2).mean(axis=(0, 2, 3), keepdims=True)
        vhat = (v - mean) / jnp.sqrt(var + eps)
        return jnp.maximum(vhat * g[None, :, None, None] + b[None, :, None, None], 0.0)

    x = conv3x3(x, params["conv1_w"], params["conv1_b"])
    x = bn_relu(x, params["bn1_g"], params["bn1_b"])
    x = conv3x3(x, params["conv2_w"], params["conv2_b"])
    x = bn_relu(x, params["bn2_g"], params["bn2_b"])
    return x


if __name__ == "__main__":
    key = jax.random.PRNGKey(0)
    k_in, k_skip, k_par = jax.random.split(key, 3)

    N, in_c, out_c, H, W = 2, 32, 16, 8, 8
    inputs = jax.random.normal(k_in, (N, in_c, H, W), jnp.float32)          # NCHW
    skip = jax.random.normal(k_skip, (N, out_c, 2 * H, 2 * W), jnp.float32)

    params = init_params(k_par, in_c, out_c)

    fwd = jax.jit(functools.partial(decoder_block_forward, params))
    out = jax.block_until_ready(fwd(inputs, skip))

    assert out.shape == (N, out_c, 2 * H, 2 * W), out.shape
    assert bool(jnp.all(jnp.isfinite(out)))

    # Loose correctness check against a float32 XLA reference (kernel path runs
    # bf16 matmuls with f32 accumulation and bf16 intermediate storage, so
    # allow bf16-level error).
    ref = _ref_decoder_block(params, inputs, skip)
    err = float(jnp.max(jnp.abs(out - ref)))
    assert err < 0.2, f"max abs err {err}"

    print("KERNEL_OK")
</pallas_src>

<mosaic_0001>
module attributes {stable_mosaic.version = 11 : i64} {
  func.func @_upconv_kernel(%arg0: i32, %arg1: i32, %arg2: memref<1x8x8x32xf32, #tpu.memory_space<vmem>>, %arg3: memref<2x32x32xbf16, #tpu.memory_space<vmem>>, %arg4: memref<1x32xf32, #tpu.memory_space<vmem>>, %arg5: memref<1x8x2x8x32xbf16, #tpu.memory_space<vmem>>) attributes {dimension_semantics = [#tpu.dimension_semantics<parallel>, #tpu.dimension_semantics<parallel>], iteration_bounds = array<i64: 2, 1>, scalar_prefetch = 0 : i64, scratch_operands = 0 : i64, tpu.core_type = #tpu.core_type<tc>, window_params = [{transform_indices = @transform_0, window_bounds = array<i64: 1, 8, 8, 32>}, {pipeline_mode = #tpu.pipeline_mode<synchronous>, transform_indices = @transform_1, window_bounds = array<i64: 2, 32, 32>}, {pipeline_mode = #tpu.pipeline_mode<synchronous>, transform_indices = @transform_2, window_bounds = array<i64: 1, 32>}, {transform_indices = @transform_3, window_bounds = array<i64: 1, 8, 2, 8, 32>}]} {
    %c0 = arith.constant 0 : index
    %c0_0 = arith.constant 0 : index
    %c0_1 = arith.constant 0 : index
    %c0_2 = arith.constant 0 : index
    %0 = vector.load %arg2[%c0, %c0_0, %c0_1, %c0_2] : memref<1x8x8x32xf32, #tpu.memory_space<vmem>>, vector<1x8x8x32xf32>
    %1 = vector.shape_cast %0 : vector<1x8x8x32xf32> to vector<8x8x32xf32>
    %2 = vector.shape_cast %1 : vector<8x8x32xf32> to vector<64x32xf32>
    %3 = arith.truncf %2 : vector<64x32xf32> to vector<64x32xbf16>
    %c0_3 = arith.constant 0 : index
    %c0_4 = arith.constant 0 : index
    %c0_5 = arith.constant 0 : index
    %4 = vector.load %arg3[%c0_3, %c0_4, %c0_5] : memref<2x32x32xbf16, #tpu.memory_space<vmem>>, vector<1x32x32xbf16>
    %5 = vector.shape_cast %4 : vector<1x32x32xbf16> to vector<32x32xbf16>
    %cst = arith.constant dense<0.000000e+00> : vector<64x32xf32>
    %6 = tpu.matmul %3, %5, %cst {dimension_numbers = #tpu.dot_dimension_numbers<[1], [0], [0], [1], [0, 0, 1, 1], [], []>} : vector<64x32xbf16>, vector<32x32xbf16>, vector<64x32xf32> -> vector<64x32xf32>
    %c0_6 = arith.constant 0 : index
    %c0_7 = arith.constant 0 : index
    %7 = vector.load %arg4[%c0_6, %c0_7] : memref<1x32xf32, #tpu.memory_space<vmem>>, vector<1x32xf32>
    %8 = vector.broadcast %7 : vector<1x32xf32> to vector<64x32xf32>
    %9 = arith.addf %6, %8 : vector<64x32xf32>
    %10 = vector.shape_cast %9 : vector<64x32xf32> to vector<8x1x8x32xf32>
    %11 = arith.truncf %10 : vector<8x1x8x32xf32> to vector<8x1x8x32xbf16>
    %c0_8 = arith.constant 0 : index
    %c0_9 = arith.constant 0 : index
    %c0_10 = arith.constant 0 : index
    %c0_11 = arith.constant 0 : index
    %c0_12 = arith.constant 0 : index
    %12 = vector.load %arg5[%c0_8, %c0_9, %c0_10, %c0_11, %c0_12] : memref<1x8x2x8x32xbf16, #tpu.memory_space<vmem>>, vector<1x8x1x8x32xbf16>
    %13 = vector.shape_cast %12 : vector<1x8x1x8x32xbf16> to vector<8x1x8x32xbf16>
    %14 = vector.shape_cast %11 : vector<8x1x8x32xbf16> to vector<1x8x1x8x32xbf16>
    tpu.vector_store %arg5[%c0_8, %c0_9, %c0_10, %c0_11, %c0_12], %14 {strides = array<i32>} : memref<1x8x2x8x32xbf16, #tpu.memory_space<vmem>>, vector<1x8x1x8x32xbf16>,
    %c1 = arith.constant 1 : index
    %c0_13 = arith.constant 0 : index
    %c0_14 = arith.constant 0 : index
    %15 = vector.load %arg3[%c1, %c0_13, %c0_14] : memref<2x32x32xbf16, #tpu.memory_space<vmem>>, vector<1x32x32xbf16>
    %16 = vector.shape_cast %15 : vector<1x32x32xbf16> to vector<32x32xbf16>
    %cst_15 = arith.constant dense<0.000000e+00> : vector<64x32xf32>
    %17 = tpu.matmul %3, %16, %cst_15 {dimension_numbers = #tpu.dot_dimension_numbers<[1], [0], [0], [1], [0, 0, 1, 1], [], []>} : vector<64x32xbf16>, vector<32x32xbf16>, vector<64x32xf32> -> vector<64x32xf32>
    %c0_16 = arith.constant 0 : index
    %c0_17 = arith.constant 0 : index
    %18 = vector.load %arg4[%c0_16, %c0_17] : memref<1x32xf32, #tpu.memory_space<vmem>>, vector<1x32xf32>
    %19 = vector.broadcast %18 : vector<1x32xf32> to vector<64x32xf32>
    %20 = arith.addf %17, %19 : vector<64x32xf32>
    %21 = vector.shape_cast %20 : vector<64x32xf32> to vector<8x1x8x32xf32>
    %22 = arith.truncf %21 : vector<8x1x8x32xf32> to vector<8x1x8x32xbf16>
    %c0_18 = arith.constant 0 : index
    %c0_19 = arith.constant 0 : index
    %c1_20 = arith.constant 1 : index
    %c0_21 = arith.constant 0 : index
    %c0_22 = arith.constant 0 : index
    %23 = vector.load %arg5[%c0_18, %c0_19, %c1_20, %c0_21, %c0_22] : memref<1x8x2x8x32xbf16, #tpu.memory_space<vmem>>, vector<1x8x1x8x32xbf16>
    %24 = vector.shape_cast %23 : vector<1x8x1x8x32xbf16> to vector<8x1x8x32xbf16>
    %25 = vector.shape_cast %22 : vector<8x1x8x32xbf16> to vector<1x8x1x8x32xbf16>
    tpu.vector_store %arg5[%c0_18, %c0_19, %c1_20, %c0_21, %c0_22], %25 {strides = array<i32>} : memref<1x8x2x8x32xbf16, #tpu.memory_space<vmem>>, vector<1x8x1x8x32xbf16>,
    return
  }
  func.func @transform_0(%arg0: i32, %arg1: i32) -> (i32, i32, i32, i32) {
    %c0_i32 = arith.constant 0 : i32
    %c0_i32_0 = arith.constant 0 : i32
    %c0_i32_1 = arith.constant 0 : i32
    return %arg0, %arg1, %c0_i32, %c0_i32_0 : i32, i32, i32, i32
  }
  func.func @transform_1(%arg0: i32, %arg1: i32) -> (i32, i32, i32) {
    %c0_i32 = arith.constant 0 : i32
    %c0_i32_0 = arith.constant 0 : i32
    %c0_i32_1 = arith.constant 0 : i32
    %c0_i32_2 = arith.constant 0 : i32
    return %c0_i32, %c0_i32_0, %c0_i32_1 : i32, i32, i32
  }
  func.func @transform_2(%arg0: i32, %arg1: i32) -> (i32, i32) {
    %c0_i32 = arith.constant 0 : i32
    %c0_i32_0 = arith.constant 0 : i32
    %c0_i32_1 = arith.constant 0 : i32
    return %c0_i32, %c0_i32_0 : i32, i32
  }
  func.func @transform_3(%arg0: i32, %arg1: i32) -> (i32, i32, i32, i32, i32) {
    %c1_i32 = arith.constant 1 : i32
    %0 = arith.muli %arg0, %c1_i32 : i32
    %1 = arith.addi %0, %arg1 : i32
    %c0_i32 = arith.constant 0 : i32
    %c0_i32_0 = arith.constant 0 : i32
    %c0_i32_1 = arith.constant 0 : i32
    %c0_i32_2 = arith.constant 0 : i32
    %c0_i32_3 = arith.constant 0 : i32
    return %1, %c0_i32, %c0_i32_0, %c0_i32_1, %c0_i32_2 : i32, i32, i32, i32, i32
  }
}

module attributes {stable_mosaic.version = 11 : i64} {
  func.func @_conv3x3_cat2_kernel(%arg0: i32, %arg1: i32, %arg2: memref<1x16x16x16xbf16, #tpu.memory_space<vmem>>, %arg3: memref<1x16x16x16xbf16, #tpu.memory_space<vmem>>, %arg4: memref<9x32x16xbf16, #tpu.memory_space<vmem>>, %arg5: memref<1x16xf32, #tpu.memory_space<vmem>>, %arg6: memref<1x1x256x16xbf16, #tpu.memory_space<vmem>>, %arg7: memref<1x1x16xf32, #tpu.memory_space<vmem>>, %arg8: memref<1x1x16xf32, #tpu.memory_space<vmem>>, %arg9: memref<18x18x32xbf16, #tpu.memory_space<vmem>>) attributes {dimension_semantics = [#tpu.dimension_semantics<parallel>, #tpu.dimension_semantics<arbitrary>], iteration_bounds = array<i64: 2, 1>, scalar_prefetch = 0 : i64, scratch_operands = 1 : i64, tpu.core_type = #tpu.core_type<tc>, window_params = [{transform_indices = @transform_0, window_bounds = array<i64: 1, 16, 16, 16>}, {transform_indices = @transform_1, window_bounds = array<i64: 1, 16, 16, 16>}, {pipeline_mode = #tpu.pipeline_mode<synchronous>, transform_indices = @transform_2, window_bounds = array<i64: 9, 32, 16>}, {pipeline_mode = #tpu.pipeline_mode<synchronous>, transform_indices = @transform_3, window_bounds = array<i64: 1, 16>}, {transform_indices = @transform_4, window_bounds = array<i64: 1, 1, 256, 16>}, {transform_indices = @transform_5, window_bounds = array<i64: 1, 1, 16>}, {transform_indices = @transform_6, window_bounds = array<i64: 1, 1, 16>}]} {
    %c16_i32 = arith.constant 16 : i32
    %0 = arith.muli %arg1, %c16_i32 : i32
    %c0_i32 = arith.constant 0 : i32
    %1 = arith.cmpi eq, %arg1, %c0_i32 : i32
    %2 = arith.extui %1 : i1 to i32
    %c0_i32_0 = arith.constant 0 : i32
    %3 = arith.cmpi ne, %2, %c0_i32_0 : i32
    scf.if %3 {
      %cst_65 = arith.constant 0.000000e+00 : bf16
      %95 = vector.broadcast %cst_65 : bf16 to vector<1x18x32xbf16>
      %c0_66 = arith.constant 0 : index
      %c0_67 = arith.constant 0 : index
      %c0_68 = arith.constant 0 : index
      %96 = vector.load %arg9[%c0_66, %c0_67, %c0_68] : memref<18x18x32xbf16, #tpu.memory_space<vmem>>, vector<1x18x32xbf16>
      tpu.vector_store %arg9[%c0_66, %c0_67, %c0_68], %95 {strides = array<i32>} : memref<18x18x32xbf16, #tpu.memory_space<vmem>>, vector<1x18x32xbf16>,
      %cst_69 = arith.constant 0.000000e+00 : bf16
      %97 = vector.broadcast %cst_69 : bf16 to vector<1x18x32xbf16>
      %c17 = arith.constant 17 : index
      %c0_70 = arith.constant 0 : index
      %c0_71 = arith.constant 0 : index
      %98 = vector.load %arg9[%c17, %c0_70, %c0_71] : memref<18x18x32xbf16, #tpu.memory_space<vmem>>, vector<1x18x32xbf16>
      tpu.vector_store %arg9[%c17, %c0_70, %c0_71], %97 {strides = array<i32>} : memref<18x18x32xbf16, #tpu.memory_space<vmem>>, vector<1x18x32xbf16>,
      %cst_72 = arith.constant 0.000000e+00 : bf16
      %99 = vector.broadcast %cst_72 : bf16 to vector<18x1x32xbf16>
      %c0_73 = arith.constant 0 : index
      %c0_74 = arith.constant 0 : index
      %c0_75 = arith.constant 0 : index
      %100 = vector.load %arg9[%c0_73, %c0_74, %c0_75] : memref<18x18x32xbf16, #tpu.memory_space<vmem>>, vector<18x1x32xbf16>
      tpu.vector_store %arg9[%c0_73, %c0_74, %c0_75], %99 {strides = array<i32>} : memref<18x18x32xbf16, #tpu.memory_space<vmem>>, vector<18x1x32xbf16>,
      %cst_76 = arith.constant 0.000000e+00 : bf16
      %101 = vector.broadcast %cst_76 : bf16 to vector<18x1x32xbf16>
      %c0_77 = arith.constant 0 : index
      %c17_78 = arith.constant 17 : index
      %c0_79 = arith.constant 0 : index
      %102 = vector.load %arg9[%c0_77, %c17_78, %c0_79] : memref<18x18x32xbf16, #tpu.memory_space<vmem>>, vector<18x1x32xbf16>
      tpu.vector_store %arg9[%c0_77, %c17_78, %c0_79], %101 {strides = array<i32>} : memref<18x18x32xbf16, #tpu.memory_space<vmem>>, vector<18x1x32xbf16>,
      %c0_80 = arith.constant 0 : index
      %c0_81 = arith.constant 0 : index
      %c0_82 = arith.constant 0 : index
      %c0_83 = arith.constant 0 : index
      %103 = vector.load %arg2[%c0_80, %c0_81, %c0_82, %c0_83] : memref<1x16x16x16xbf16, #tpu.memory_space<vmem>>, vector<1x16x16x16xbf16>
      %104 = vector.shape_cast %103 : vector<1x16x16x16xbf16> to vector<16x16x16xbf16>
      %c0_84 = arith.constant 0 : index
      %c0_85 = arith.constant 0 : index
      %c0_86 = arith.constant 0 : index
      %c0_87 = arith.constant 0 : index
      %105 = vector.load %arg3[%c0_84, %c0_85, %c0_86, %c0_87] : memref<1x16x16x16xbf16, #tpu.memory_space<vmem>>, vector<1x16x16x16xbf16>
      %106 = vector.shape_cast %105 : vector<1x16x16x16xbf16> to vector<16x16x16xbf16>
      %107 = tpu.concatenate %104, %106 in 2 : vector<16x16x16xbf16>, vector<16x16x16xbf16> -> vector<16x16x32xbf16>
      %c1_88 = arith.constant 1 : index
      %c1_89 = arith.constant 1 : index
      %c0_90 = arith.constant 0 : index
      %108 = vector.load %arg9[%c1_88, %c1_89, %c0_90] : memref<18x18x32xbf16, #tpu.memory_space<vmem>>, vector<16x16x32xbf16>
      tpu.vector_store %arg9[%c1_88, %c1_89, %c0_90], %107 {strides = array<i32>} : memref<18x18x32xbf16, #tpu.memory_space<vmem>>, vector<16x16x32xbf16>,
    } else {
    }
    %cst = arith.constant 0.000000e+00 : f32
    %4 = vector.broadcast %cst : f32 to vector<256x16xf32>
    %c0_i32_1 = arith.constant 0 : i32
    %5 = arith.addi %0, %c0_i32_1 : i32
    %6 = arith.index_cast %5 : i32 to index
    %c0 = arith.constant 0 : index
    %c0_2 = arith.constant 0 : index
    %7 = vector.load %arg9[%6, %c0, %c0_2] : memref<18x18x32xbf16, #tpu.memory_space<vmem>>, vector<16x16x32xbf16>
    %8 = vector.shape_cast %7 : vector<16x16x32xbf16> to vector<256x32xbf16>
    %c0_3 = arith.constant 0 : index
    %c0_4 = arith.constant 0 : index
    %c0_5 = arith.constant 0 : index
    %9 = vector.load %arg4[%c0_3, %c0_4, %c0_5] : memref<9x32x16xbf16, #tpu.memory_space<vmem>>, vector<1x32x16xbf16>
    %10 = vector.shape_cast %9 : vector<1x32x16xbf16> to vector<32x16xbf16>
    %cst_6 = arith.constant dense<0.000000e+00> : vector<256x16xf32>
    %11 = tpu.matmul %8, %10, %cst_6 {dimension_numbers = #tpu.dot_dimension_numbers<[1], [0], [0], [1], [0, 0, 1, 1], [], []>} : vector<256x32xbf16>, vector<32x16xbf16>, vector<256x16xf32> -> vector<256x16xf32>
    %12 = arith.addf %4, %11 : vector<256x16xf32>
    %c0_i32_7 = arith.constant 0 : i32
    %13 = arith.addi %0, %c0_i32_7 : i32
    %14 = arith.index_cast %13 : i32 to index
    %c1 = arith.constant 1 : index
    %c0_8 = arith.constant 0 : index
    %15 = vector.load %arg9[%14, %c1, %c0_8] : memref<18x18x32xbf16, #tpu.memory_space<vmem>>, vector<16x16x32xbf16>
    %16 = vector.shape_cast %15 : vector<16x16x32xbf16> to vector<256x32xbf16>
    %c1_9 = arith.constant 1 : index
    %c0_10 = arith.constant 0 : index
    %c0_11 = arith.constant 0 : index
    %17 = vector.load %arg4[%c1_9, %c0_10, %c0_11] : memref<9x32x16xbf16, #tpu.memory_space<vmem>>, vector<1x32x16xbf16>
    %18 = vector.shape_cast %17 : vector<1x32x16xbf16> to vector<32x16xbf16>
    %cst_12 = arith.constant dense<0.000000e+00> : vector<256x16xf32>
    %19 = tpu.matmul %16, %18, %cst_12 {dimension_numbers = #tpu.dot_dimension_numbers<[1], [0], [0], [1], [0, 0, 1, 1], [], []>} : vector<256x32xbf16>, vector<32x16xbf16>, vector<256x16xf32> -> vector<256x16xf32>
    %20 = arith.addf %12, %19 : vector<256x16xf32>
    %c0_i32_13 = arith.constant 0 : i32
    %21 = arith.addi %0, %c0_i32_13 : i32
    %22 = arith.index_cast %21 : i32 to index
    %c2 = arith.constant 2 : index
    %c0_14 = arith.constant 0 : index
    %23 = vector.load %arg9[%22, %c2, %c0_14] : memref<18x18x32xbf16, #tpu.memory_space<vmem>>, vector<16x16x32xbf16>
    %24 = vector.shape_cast %23 : vector<16x16x32xbf16> to vector<256x32xbf16>
    %c2_15 = arith.constant 2 : index
    %c0_16 = arith.constant 0 : index
    %c0_17 = arith.constant 0 : index
    %25 = vector.load %arg4[%c2_15, %c0_16, %c0_17] : memref<9x32x16xbf16, #tpu.memory_space<vmem>>, vector<1x32x16xbf16>
    %26 = vector.shape_cast %25 : vector<1x32x16xbf16> to vector<32x16xbf16>
    %cst_18 = arith.constant dense<0.000000e+00> : vector<256x16xf32>
    %27 = tpu.matmul %24, %26, %cst_18 {dimension_numbers = #tpu.dot_dimension_numbers<[1], [0], [0], [1], [0, 0, 1, 1], [], []>} : vector<256x32xbf16>, vector<32x16xbf16>, vector<256x16xf32> -> vector<256x16xf32>
    %28 = arith.addf %20, %27 : vector<256x16xf32>
    %c1_i32 = arith.constant 1 : i32
    %29 = arith.addi %0, %c1_i32 : i32
    %30 = arith.index_cast %29 : i32 to index
    %c0_19 = arith.constant 0 : index
    %c0_20 = arith.constant 0 : index
    %31 = vector.load %arg9[%30, %c0_19, %c0_20] : memref<18x18x32xbf16, #tpu.memory_space<vmem>>, vector<16x16x32xbf16>
    %32 = vector.shape_cast %31 : vector<16x16x32xbf16> to vector<256x32xbf16>
    %c3 = arith.constant 3 : index
    %c0_21 = arith.constant 0 : index
    %c0_22 = arith.constant 0 : index
    %33 = vector.load %arg4[%c3, %c0_21, %c0_22] : memref<9x32x16xbf16, #tpu.memory_space<vmem>>, vector<1x32x16xbf16>
    %34 = vector.shape_cast %33 : vector<1x32x16xbf16> to vector<32x16xbf16>
    %cst_23 = arith.constant dense<0.000000e+00> : vector<256x16xf32>
    %35 = tpu.matmul %32, %34, %cst_23 {dimension_numbers = #tpu.dot_dimension_numbers<[1], [0], [0], [1], [0, 0, 1, 1], [], []>} : vector<256x32xbf16>, vector<32x16xbf16>, vector<256x16xf32> -> vector<256x16xf32>
    %36 = arith.addf %28, %35 : vector<256x16xf32>
    %c1_i32_24 = arith.constant 1 : i32
    %37 = arith.addi %0, %c1_i32_24 : i32
    %38 = arith.index_cast %37 : i32 to index
    %c1_25 = arith.constant 1 : index
    %c0_26 = arith.constant 0 : index
    %39 = vector.load %arg9[%38, %c1_25, %c0_26] : memref<18x18x32xbf16, #tpu.memory_space<vmem>>, vector<16x16x32xbf16>
    %40 = vector.shape_cast %39 : vector<16x16x32xbf16> to vector<256x32xbf16>
    %c4 = arith.constant 4 : index
    %c0_27 = arith.constant 0 : index
    %c0_28 = arith.constant 0 : index
    %41 = vector.load %arg4[%c4, %c0_27, %c0_28] : memref<9x32x16xbf16, #tpu.memory_space<vmem>>, vector<1x32x16xbf16>
    %42 = vector.shape_cast %41 : vector<1x32x16xbf16> to vector<32x16xbf16>
    %cst_29 = arith.constant dense<0.000000e+00> : vector<256x16xf32>
    %43 = tpu.matmul %40, %42, %cst_29 {dimension_numbers = #tpu.dot_dimension_numbers<[1], [0], [0], [1], [0, 0, 1, 1], [], []>} : vector<256x32xbf16>, vector<32x16xbf16>, vector<256x16xf32> -> vector<256x16xf32>
    %44 = arith.addf %36, %43 : vector<256x16xf32>
    %c1_i32_30 = arith.constant 1 : i32
    %45 = arith.addi %0, %c1_i32_30 : i32
    %46 = arith.index_cast %45 : i32 to index
    %c2_31 = arith.constant 2 : index
    %c0_32 = arith.constant 0 : index
    %47 = vector.load %arg9[%46, %c2_31, %c0_32] : memref<18x18x32xbf16, #tpu.memory_space<vmem>>, vector<16x16x32xbf16>
    %48 = vector.shape_cast %47 : vector<16x16x32xbf16> to vector<256x32xbf16>
    %c5 = arith.constant 5 : index
    %c0_33 = arith.constant 0 : index
    %c0_34 = arith.constant 0 : index
    %49 = vector.load %arg4[%c5, %c0_33, %c0_34] : memref<9x32x16xbf16, #tpu.memory_space<vmem>>, vector<1x32x16xbf16>
    %50 = vector.shape_cast %49 : vector<1x32x16xbf16> to vector<32x16xbf16>
    %cst_35 = arith.constant dense<0.000000e+00> : vector<256x16xf32>
    %51 = tpu.matmul %48, %50, %cst_35 {dimension_numbers = #tpu.dot_dimension_numbers<[1], [0], [0], [1], [0, 0, 1, 1], [], []>} : vector<256x32xbf16>, vector<32x16xbf16>, vector<256x16xf32> -> vector<256x16xf32>
    %52 = arith.addf %44, %51 : vector<256x16xf32>
    %c2_i32 = arith.constant 2 : i32
    %53 = arith.addi %0, %c2_i32 : i32
    %54 = arith.index_cast %53 : i32 to index
    %c0_36 = arith.constant 0 : index
    %c0_37 = arith.constant 0 : index
    %55 = vector.load %arg9[%54, %c0_36, %c0_37] : memref<18x18x32xbf16, #tpu.memory_space<vmem>>, vector<16x16x32xbf16>
    %56 = vector.shape_cast %55 : vector<16x16x32xbf16> to vector<256x32xbf16>
    %c6 = arith.constant 6 : index
    %c0_38 = arith.constant 0 : index
    %c0_39 = arith.constant 0 : index
    %57 = vector.load %arg4[%c6, %c0_38, %c0_39] : memref<9x32x16xbf16, #tpu.memory_space<vmem>>, vector<1x32x16xbf16>
    %58 = vector.shape_cast %57 : vector<1x32x16xbf16> to vector<32x16xbf16>
    %cst_40 = arith.constant dense<0.000000e+00> : vector<256x16xf32>
    %59 = tpu.matmul %56, %58, %cst_40 {dimension_numbers = #tpu.dot_dimension_numbers<[1], [0], [0], [1], [0, 0, 1, 1], [], []>} : vector<256x32xbf16>, vector<32x16xbf16>, vector<256x16xf32> -> vector<256x16xf32>
    %60 = arith.addf %52, %59 : vector<256x16xf32>
    %c2_i32_41 = arith.constant 2 : i32
    %61 = arith.addi %0, %c2_i32_41 : i32
    %62 = arith.index_cast %61 : i32 to index
    %c1_42 = arith.constant 1 : index
    %c0_43 = arith.constant 0 : index
    %63 = vector.load %arg9[%62, %c1_42, %c0_43] : memref<18x18x32xbf16, #tpu.memory_space<vmem>>, vector<16x16x32xbf16>
    %64 = vector.shape_cast %63 : vector<16x16x32xbf16> to vector<256x32xbf16>
    %c7 = arith.constant 7 : index
    %c0_44 = arith.constant 0 : index
    %c0_45 = arith.constant 0 : index
    %65 = vector.load %arg4[%c7, %c0_44, %c0_45] : memref<9x32x16xbf16, #tpu.memory_space<vmem>>, vector<1x32x16xbf16>
    %66 = vector.shape_cast %65 : vector<1x32x16xbf16> to vector<32x16xbf16>
    %cst_46 = arith.constant dense<0.000000e+00> : vector<256x16xf32>
    %67 = tpu.matmul %64, %66, %cst_46 {dimension_numbers = #tpu.dot_dimension_numbers<[1], [0], [0], [1], [0, 0, 1, 1], [], []>} : vector<256x32xbf16>, vector<32x16xbf16>, vector<256x16xf32> -> vector<256x16xf32>
    %68 = arith.addf %60, %67 : vector<256x16xf32>
    %c2_i32_47 = arith.constant 2 : i32
    %69 = arith.addi %0, %c2_i32_47 : i32
    %70 = arith.index_cast %69 : i32 to index
    %c2_48 = arith.constant 2 : index
    %c0_49 = arith.constant 0 : index
    %71 = vector.load %arg9[%70, %c2_48, %c0_49] : memref<18x18x32xbf16, #tpu.memory_space<vmem>>, vector<16x16x32xbf16>
    %72 = vector.shape_cast %71 : vector<16x16x32xbf16> to vector<256x32xbf16>
    %c8 = arith.constant 8 : index
    %c0_50 = arith.constant 0 : index
    %c0_51 = arith.constant 0 : index
    %73 = vector.load %arg4[%c8, %c0_50, %c0_51] : memref<9x32x16xbf16, #tpu.memory_space<vmem>>, vector<1x32x16xbf16>
    %74 = vector.shape_cast %73 : vector<1x32x16xbf16> to vector<32x16xbf16>
    %cst_52 = arith.constant dense<0.000000e+00> : vector<256x16xf32>
    %75 = tpu.matmul %72, %74, %cst_52 {dimension_numbers = #tpu.dot_dimension_numbers<[1], [0], [0], [1], [0, 0, 1, 1], [], []>} : vector<256x32xbf16>, vector<32x16xbf16>, vector<256x16xf32> -> vector<256x16xf32>
    %76 = arith.addf %68, %75 : vector<256x16xf32>
    %c0_53 = arith.constant 0 : index
    %c0_54 = arith.constant 0 : index
    %77 = vector.load %arg5[%c0_53, %c0_54] : memref<1x16xf32, #tpu.memory_space<vmem>>, vector<1x16xf32>
    %78 = vector.broadcast %77 : vector<1x16xf32> to vector<256x16xf32>
    %79 = arith.addf %76, %78 : vector<256x16xf32>
    %80 = arith.truncf %79 : vector<256x16xf32> to vector<256x16xbf16>
    %c0_55 = arith.constant 0 : index
    %c0_56 = arith.constant 0 : index
    %c0_57 = arith.constant 0 : index
    %c0_58 = arith.constant 0 : index
    %81 = vector.load %arg6[%c0_55, %c0_56, %c0_57, %c0_58] : memref<1x1x256x16xbf16, #tpu.memory_space<vmem>>, vector<1x1x256x16xbf16>
    %82 = vector.shape_cast %81 : vector<1x1x256x16xbf16> to vector<256x16xbf16>
    %83 = vector.shape_cast %80 : vector<256x16xbf16> to vector<1x1x256x16xbf16>
    tpu.vector_store %arg6[%c0_55, %c0_56, %c0_57, %c0_58], %83 {strides = array<i32>} : memref<1x1x256x16xbf16, #tpu.memory_space<vmem>>, vector<1x1x256x16xbf16>,
    %cst_59 = arith.constant dense<0.000000e+00> : vector<16xf32>
    %84 = vector.multi_reduction <add>, %79, %cst_59 [0] : vector<256x16xf32> to vector<16xf32>
    %85 = vector.shape_cast %84 : vector<16xf32> to vector<1x16xf32>
    %86 = arith.mulf %79, %79 : vector<256x16xf32>
    %cst_60 = arith.constant dense<0.000000e+00> : vector<16xf32>
    %87 = vector.multi_reduction <add>, %86, %cst_60 [0] : vector<256x16xf32> to vector<16xf32>
    %88 = vector.shape_cast %87 : vector<16xf32> to vector<1x16xf32>
    %c0_i32_61 = arith.constant 0 : i32
    %89 = arith.cmpi eq, %arg1, %c0_i32_61 : i32
    %90 = arith.extui %89 : i1 to i32
    %c0_i32_62 = arith.constant 0 : i32
    %91 = arith.cmpi ne, %90, %c0_i32_62 : i32
    scf.if %91 {
      %c0_65 = arith.constant 0 : index
      %c0_66 = arith.constant 0 : index
      %c0_67 = arith.constant 0 : index
      %95 = vector.load %arg7[%c0_65, %c0_66, %c0_67] : memref<1x1x16xf32, #tpu.memory_space<vmem>>, vector<1x1x16xf32>
      %96 = vector.shape_cast %95 : vector<1x1x16xf32> to vector<1x16xf32>
      %97 = vector.shape_cast %85 : vector<1x16xf32> to vector<1x1x16xf32>
      tpu.vector_store %arg7[%c0_65, %c0_66, %c0_67], %97 {strides = array<i32>} : memref<1x1x16xf32, #tpu.memory_space<vmem>>, vector<1x1x16xf32>,
      %c0_68 = arith.constant 0 : index
      %c0_69 = arith.constant 0 : index
      %c0_70 = arith.constant 0 : index
      %98 = vector.load %arg8[%c0_68, %c0_69, %c0_70] : memref<1x1x16xf32, #tpu.memory_space<vmem>>, vector<1x1x16xf32>
      %99 = vector.shape_cast %98 : vector<1x1x16xf32> to vector<1x16xf32>
      %100 = vector.shape_cast %88 : vector<1x16xf32> to vector<1x1x16xf32>
      tpu.vector_store %arg8[%c0_68, %c0_69, %c0_70], %100 {strides = array<i32>} : memref<1x1x16xf32, #tpu.memory_space<vmem>>, vector<1x1x16xf32>,
    } else {
    }
    %c0_i32_63 = arith.constant 0 : i32
    %92 = arith.cmpi sgt, %arg1, %c0_i32_63 : i32
    %93 = arith.extui %92 : i1 to i32
    %c0_i32_64 = arith.constant 0 : i32
    %94 = arith.cmpi ne, %93, %c0_i32_64 : i32
    scf.if %94 {
      %c0_65 = arith.constant 0 : index
      %c0_66 = arith.constant 0 : index
      %c0_67 = arith.constant 0 : index
      %95 = vector.load %arg7[%c0_65, %c0_66, %c0_67] : memref<1x1x16xf32, #tpu.memory_space<vmem>>, vector<1x1x16xf32>
      %96 = vector.shape_cast %95 : vector<1x1x16xf32> to vector<1x16xf32>
      %97 = arith.addf %96, %85 : vector<1x16xf32>
      %c0_68 = arith.constant 0 : index
      %c0_69 = arith.constant 0 : index
      %c0_70 = arith.constant 0 : index
      %98 = vector.load %arg7[%c0_68, %c0_69, %c0_70] : memref<1x1x16xf32, #tpu.memory_space<vmem>>, vector<1x1x16xf32>
      %99 = vector.shape_cast %98 : vector<1x1x16xf32> to vector<1x16xf32>
      %100 = vector.shape_cast %97 : vector<1x16xf32> to vector<1x1x16xf32>
      tpu.vector_store %arg7[%c0_68, %c0_69, %c0_70], %100 {strides = array<i32>} : memref<1x1x16xf32, #tpu.memory_space<vmem>>, vector<1x1x16xf32>,
      %c0_71 = arith.constant 0 : index
      %c0_72 = arith.constant 0 : index
      %c0_73 = arith.constant 0 : index
      %101 = vector.load %arg8[%c0_71, %c0_72, %c0_73] : memref<1x1x16xf32, #tpu.memory_space<vmem>>, vector<1x1x16xf32>
      %102 = vector.shape_cast %101 : vector<1x1x16xf32> to vector<1x16xf32>
      %103 = arith.addf %102, %88 : vector<1x16xf32>
      %c0_74 = arith.constant 0 : index
      %c0_75 = arith.constant 0 : index
      %c0_76 = arith.constant 0 : index
      %104 = vector.load %arg8[%c0_74, %c0_75, %c0_76] : memref<1x1x16xf32, #tpu.memory_space<vmem>>, vector<1x1x16xf32>
      %105 = vector.shape_cast %104 : vector<1x1x16xf32> to vector<1x16xf32>
      %106 = vector.shape_cast %103 : vector<1x16xf32> to vector<1x1x16xf32>
      tpu.vector_store %arg8[%c0_74, %c0_75, %c0_76], %106 {strides = array<i32>} : memref<1x1x16xf32, #tpu.memory_space<vmem>>, vector<1x1x16xf32>,
    } else {
    }
    return
  }
  func.func @transform_0(%arg0: i32, %arg1: i32) -> (i32, i32, i32, i32) {
    %c0_i32 = arith.constant 0 : i32
    %c0_i32_0 = arith.constant 0 : i32
    %c0_i32_1 = arith.constant 0 : i32
    %c0_i32_2 = arith.constant 0 : i32
    return %arg0, %c0_i32, %c0_i32_0, %c0_i32_1 : i32, i32, i32, i32
  }
  func.func @transform_1(%arg0: i32, %arg1: i32) -> (i32, i32, i32, i32) {
    %c0_i32 = arith.constant 0 : i32
    %c0_i32_0 = arith.constant 0 : i32
    %c0_i32_1 = arith.constant 0 : i32
    %c0_i32_2 = arith.constant 0 : i32
    return %arg0, %c0_i32, %c0_i32_0, %c0_i32_1 : i32, i32, i32, i32
  }
  func.func @transform_2(%arg0: i32, %arg1: i32) -> (i32, i32, i32) {
    %c0_i32 = arith.constant 0 : i32
    %c0_i32_0 = arith.constant 0 : i32
    %c0_i32_1 = arith.constant 0 : i32
    %c0_i32_2 = arith.constant 0 : i32
    return %c0_i32, %c0_i32_0, %c0_i32_1 : i32, i32, i32
  }
  func.func @transform_3(%arg0: i32, %arg1: i32) -> (i32, i32) {
    %c0_i32 = arith.constant 0 : i32
    %c0_i32_0 = arith.constant 0 : i32
    %c0_i32_1 = arith.constant 0 : i32
    return %c0_i32, %c0_i32_0 : i32, i32
  }
  func.func @transform_4(%arg0: i32, %arg1: i32) -> (i32, i32, i32, i32) {
    %c0_i32 = arith.constant 0 : i32
    %c0_i32_0 = arith.constant 0 : i32
    %c0_i32_1 = arith.constant 0 : i32
    return %arg0, %arg1, %c0_i32, %c0_i32_0 : i32, i32, i32, i32
  }
  func.func @transform_5(%arg0: i32, %arg1: i32) -> (i32, i32, i32) {
    %c0_i32 = arith.constant 0 : i32
    %c0_i32_0 = arith.constant 0 : i32
    %c0_i32_1 = arith.constant 0 : i32
    return %arg0, %c0_i32, %c0_i32_0 : i32, i32, i32
  }
  func.func @transform_6(%arg0: i32, %arg1: i32) -> (i32, i32, i32) {
    %c0_i32 = arith.constant 0 : i32
    %c0_i32_0 = arith.constant 0 : i32
    %c0_i32_1 = arith.constant 0 : i32
    return %arg0, %c0_i32, %c0_i32_0 : i32, i32, i32
  }
}

module attributes {stable_mosaic.version = 11 : i64} {
  func.func @_conv3x3_act1_kernel(%arg0: i32, %arg1: i32, %arg2: memref<1x16x16x16xbf16, #tpu.memory_space<vmem>>, %arg3: memref<1x16xf32, #tpu.memory_space<vmem>>, %arg4: memref<1x16xf32, #tpu.memory_space<vmem>>, %arg5: memref<9x16x16xbf16, #tpu.memory_space<vmem>>, %arg6: memref<1x16xf32, #tpu.memory_space<vmem>>, %arg7: memref<1x1x256x16xbf16, #tpu.memory_space<vmem>>, %arg8: memref<1x1x16xf32, #tpu.memory_space<vmem>>, %arg9: memref<1x1x16xf32, #tpu.memory_space<vmem>>, %arg10: memref<18x18x16xbf16, #tpu.memory_space<vmem>>) attributes {dimension_semantics = [#tpu.dimension_semantics<parallel>, #tpu.dimension_semantics<arbitrary>], iteration_bounds = array<i64: 2, 1>, scalar_prefetch = 0 : i64, scratch_operands = 1 : i64, tpu.core_type = #tpu.core_type<tc>, window_params = [{transform_indices = @transform_0, window_bounds = array<i64: 1, 16, 16, 16>}, {pipeline_mode = #tpu.pipeline_mode<synchronous>, transform_indices = @transform_1, window_bounds = array<i64: 1, 16>}, {pipeline_mode = #tpu.pipeline_mode<synchronous>, transform_indices = @transform_2, window_bounds = array<i64: 1, 16>}, {pipeline_mode = #tpu.pipeline_mode<synchronous>, transform_indices = @transform_3, window_bounds = array<i64: 9, 16, 16>}, {pipeline_mode = #tpu.pipeline_mode<synchronous>, transform_indices = @transform_4, window_bounds = array<i64: 1, 16>}, {transform_indices = @transform_5, window_bounds = array<i64: 1, 1, 256, 16>}, {transform_indices = @transform_6, window_bounds = array<i64: 1, 1, 16>}, {transform_indices = @transform_7, window_bounds = array<i64: 1, 1, 16>}]} {
    %c16_i32 = arith.constant 16 : i32
    %0 = arith.muli %arg1, %c16_i32 : i32
    %c0_i32 = arith.constant 0 : i32
    %1 = arith.cmpi eq, %arg1, %c0_i32 : i32
    %2 = arith.extui %1 : i1 to i32
    %c0_i32_0 = arith.constant 0 : i32
    %3 = arith.cmpi ne, %2, %c0_i32_0 : i32
    scf.if %3 {
      %cst_65 = arith.constant 0.000000e+00 : bf16
      %95 = vector.broadcast %cst_65 : bf16 to vector<1x18x16xbf16>
      %c0_66 = arith.constant 0 : index
      %c0_67 = arith.constant 0 : index
      %c0_68 = arith.constant 0 : index
      %96 = vector.load %arg10[%c0_66, %c0_67, %c0_68] : memref<18x18x16xbf16, #tpu.memory_space<vmem>>, vector<1x18x16xbf16>
      tpu.vector_store %arg10[%c0_66, %c0_67, %c0_68], %95 {strides = array<i32>} : memref<18x18x16xbf16, #tpu.memory_space<vmem>>, vector<1x18x16xbf16>,
      %cst_69 = arith.constant 0.000000e+00 : bf16
      %97 = vector.broadcast %cst_69 : bf16 to vector<1x18x16xbf16>
      %c17 = arith.constant 17 : index
      %c0_70 = arith.constant 0 : index
      %c0_71 = arith.constant 0 : index
      %98 = vector.load %arg10[%c17, %c0_70, %c0_71] : memref<18x18x16xbf16, #tpu.memory_space<vmem>>, vector<1x18x16xbf16>
      tpu.vector_store %arg10[%c17, %c0_70, %c0_71], %97 {strides = array<i32>} : memref<18x18x16xbf16, #tpu.memory_space<vmem>>, vector<1x18x16xbf16>,
      %cst_72 = arith.constant 0.000000e+00 : bf16
      %99 = vector.broadcast %cst_72 : bf16 to vector<18x1x16xbf16>
      %c0_73 = arith.constant 0 : index
      %c0_74 = arith.constant 0 : index
      %c0_75 = arith.constant 0 : index
      %100 = vector.load %arg10[%c0_73, %c0_74, %c0_75] : memref<18x18x16xbf16, #tpu.memory_space<vmem>>, vector<18x1x16xbf16>
      tpu.vector_store %arg10[%c0_73, %c0_74, %c0_75], %99 {strides = array<i32>} : memref<18x18x16xbf16, #tpu.memory_space<vmem>>, vector<18x1x16xbf16>,
      %cst_76 = arith.constant 0.000000e+00 : bf16
      %101 = vector.broadcast %cst_76 : bf16 to vector<18x1x16xbf16>
      %c0_77 = arith.constant 0 : index
      %c17_78 = arith.constant 17 : index
      %c0_79 = arith.constant 0 : index
      %102 = vector.load %arg10[%c0_77, %c17_78, %c0_79] : memref<18x18x16xbf16, #tpu.memory_space<vmem>>, vector<18x1x16xbf16>
      tpu.vector_store %arg10[%c0_77, %c17_78, %c0_79], %101 {strides = array<i32>} : memref<18x18x16xbf16, #tpu.memory_space<vmem>>, vector<18x1x16xbf16>,
      %c0_80 = arith.constant 0 : index
      %c0_81 = arith.constant 0 : index
      %c0_82 = arith.constant 0 : index
      %c0_83 = arith.constant 0 : index
      %103 = vector.load %arg2[%c0_80, %c0_81, %c0_82, %c0_83] : memref<1x16x16x16xbf16, #tpu.memory_space<vmem>>, vector<1x16x16x16xbf16>
      %104 = vector.shape_cast %103 : vector<1x16x16x16xbf16> to vector<16x16x16xbf16>
      %105 = arith.extf %104 : vector<16x16x16xbf16> to vector<16x16x16xf32>
      %c0_84 = arith.constant 0 : index
      %c0_85 = arith.constant 0 : index
      %106 = vector.load %arg3[%c0_84, %c0_85] : memref<1x16xf32, #tpu.memory_space<vmem>>, vector<1x16xf32>
      %107 = vector.shape_cast %106 : vector<1x16xf32> to vector<1x1x16xf32>
      %108 = vector.broadcast %107 : vector<1x1x16xf32> to vector<16x16x16xf32>
      %109 = arith.mulf %105, %108 : vector<16x16x16xf32>
      %c0_86 = arith.constant 0 : index
      %c0_87 = arith.constant 0 : index
      %110 = vector.load %arg4[%c0_86, %c0_87] : memref<1x16xf32, #tpu.memory_space<vmem>>, vector<1x16xf32>
      %111 = vector.shape_cast %110 : vector<1x16xf32> to vector<1x1x16xf32>
      %112 = vector.broadcast %111 : vector<1x1x16xf32> to vector<16x16x16xf32>
      %113 = arith.addf %109, %112 : vector<16x16x16xf32>
      %cst_88 = arith.constant 0.000000e+00 : f32
      %114 = vector.broadcast %cst_88 : f32 to vector<16x16x16xf32>
      %115 = arith.maximumf %113, %114 : vector<16x16x16xf32>
      %116 = arith.truncf %115 : vector<16x16x16xf32> to vector<16x16x16xbf16>
      %c1_89 = arith.constant 1 : index
      %c1_90 = arith.constant 1 : index
      %c0_91 = arith.constant 0 : index
      %117 = vector.load %arg10[%c1_89, %c1_90, %c0_91] : memref<18x18x16xbf16, #tpu.memory_space<vmem>>, vector<16x16x16xbf16>
      tpu.vector_store %arg10[%c1_89, %c1_90, %c0_91], %116 {strides = array<i32>} : memref<18x18x16xbf16, #tpu.memory_space<vmem>>, vector<16x16x16xbf16>,
    } else {
    }
    %cst = arith.constant 0.000000e+00 : f32
    %4 = vector.broadcast %cst : f32 to vector<256x16xf32>
    %c0_i32_1 = arith.constant 0 : i32
    %5 = arith.addi %0, %c0_i32_1 : i32
    %6 = arith.index_cast %5 : i32 to index
    %c0 = arith.constant 0 : index
    %c0_2 = arith.constant 0 : index
    %7 = vector.load %arg10[%6, %c0, %c0_2] : memref<18x18x16xbf16, #tpu.memory_space<vmem>>, vector<16x16x16xbf16>
    %8 = vector.shape_cast %7 : vector<16x16x16xbf16> to vector<256x16xbf16>
    %c0_3 = arith.constant 0 : index
    %c0_4 = arith.constant 0 : index
    %c0_5 = arith.constant 0 : index
    %9 = vector.load %arg5[%c0_3, %c0_4, %c0_5] : memref<9x16x16xbf16, #tpu.memory_space<vmem>>, vector<1x16x16xbf16>
    %10 = vector.shape_cast %9 : vector<1x16x16xbf16> to vector<16x16xbf16>
    %cst_6 = arith.constant dense<0.000000e+00> : vector<256x16xf32>
    %11 = tpu.matmul %8, %10, %cst_6 {dimension_numbers = #tpu.dot_dimension_numbers<[1], [0], [0], [1], [0, 0, 1, 1], [], []>} : vector<256x16xbf16>, vector<16x16xbf16>, vector<256x16xf32> -> vector<256x16xf32>
    %12 = arith.addf %4, %11 : vector<256x16xf32>
    %c0_i32_7 = arith.constant 0 : i32
    %13 = arith.addi %0, %c0_i32_7 : i32
    %14 = arith.index_cast %13 : i32 to index
    %c1 = arith.constant 1 : index
    %c0_8 = arith.constant 0 : index
    %15 = vector.load %arg10[%14, %c1, %c0_8] : memref<18x18x16xbf16, #tpu.memory_space<vmem>>, vector<16x16x16xbf16>
    %16 = vector.shape_cast %15 : vector<16x16x16xbf16> to vector<256x16xbf16>
    %c1_9 = arith.constant 1 : index
    %c0_10 = arith.constant 0 : index
    %c0_11 = arith.constant 0 : index
    %17 = vector.load %arg5[%c1_9, %c0_10, %c0_11] : memref<9x16x16xbf16, #tpu.memory_space<vmem>>, vector<1x16x16xbf16>
    %18 = vector.shape_cast %17 : vector<1x16x16xbf16> to vector<16x16xbf16>
    %cst_12 = arith.constant dense<0.000000e+00> : vector<256x16xf32>
    %19 = tpu.matmul %16, %18, %cst_12 {dimension_numbers = #tpu.dot_dimension_numbers<[1], [0], [0], [1], [0, 0, 1, 1], [], []>} : vector<256x16xbf16>, vector<16x16xbf16>, vector<256x16xf32> -> vector<256x16xf32>
    %20 = arith.addf %12, %19 : vector<256x16xf32>
    %c0_i32_13 = arith.constant 0 : i32
    %21 = arith.addi %0, %c0_i32_13 : i32
    %22 = arith.index_cast %21 : i32 to index
    %c2 = arith.constant 2 : index
    %c0_14 = arith.constant 0 : index
    %23 = vector.load %arg10[%22, %c2, %c0_14] : memref<18x18x16xbf16, #tpu.memory_space<vmem>>, vector<16x16x16xbf16>
    %24 = vector.shape_cast %23 : vector<16x16x16xbf16> to vector<256x16xbf16>
    %c2_15 = arith.constant 2 : index
    %c0_16 = arith.constant 0 : index
    %c0_17 = arith.constant 0 : index
    %25 = vector.load %arg5[%c2_15, %c0_16, %c0_17] : memref<9x16x16xbf16, #tpu.memory_space<vmem>>, vector<1x16x16xbf16>
    %26 = vector.shape_cast %25 : vector<1x16x16xbf16> to vector<16x16xbf16>
    %cst_18 = arith.constant dense<0.000000e+00> : vector<256x16xf32>
    %27 = tpu.matmul %24, %26, %cst_18 {dimension_numbers = #tpu.dot_dimension_numbers<[1], [0], [0], [1], [0, 0, 1, 1], [], []>} : vector<256x16xbf16>, vector<16x16xbf16>, vector<256x16xf32> -> vector<256x16xf32>
    %28 = arith.addf %20, %27 : vector<256x16xf32>
    %c1_i32 = arith.constant 1 : i32
    %29 = arith.addi %0, %c1_i32 : i32
    %30 = arith.index_cast %29 : i32 to index
    %c0_19 = arith.constant 0 : index
    %c0_20 = arith.constant 0 : index
    %31 = vector.load %arg10[%30, %c0_19, %c0_20] : memref<18x18x16xbf16, #tpu.memory_space<vmem>>, vector<16x16x16xbf16>
    %32 = vector.shape_cast %31 : vector<16x16x16xbf16> to vector<256x16xbf16>
    %c3 = arith.constant 3 : index
    %c0_21 = arith.constant 0 : index
    %c0_22 = arith.constant 0 : index
    %33 = vector.load %arg5[%c3, %c0_21, %c0_22] : memref<9x16x16xbf16, #tpu.memory_space<vmem>>, vector<1x16x16xbf16>
    %34 = vector.shape_cast %33 : vector<1x16x16xbf16> to vector<16x16xbf16>
    %cst_23 = arith.constant dense<0.000000e+00> : vector<256x16xf32>
    %35 = tpu.matmul %32, %34, %cst_23 {dimension_numbers = #tpu.dot_dimension_numbers<[1], [0], [0], [1], [0, 0, 1, 1], [], []>} : vector<256x16xbf16>, vector<16x16xbf16>, vector<256x16xf32> -> vector<256x16xf32>
    %36 = arith.addf %28, %35 : vector<256x16xf32>
    %c1_i32_24 = arith.constant 1 : i32
    %37 = arith.addi %0, %c1_i32_24 : i32
    %38 = arith.index_cast %37 : i32 to index
    %c1_25 = arith.constant 1 : index
    %c0_26 = arith.constant 0 : index
    %39 = vector.load %arg10[%38, %c1_25, %c0_26] : memref<18x18x16xbf16, #tpu.memory_space<vmem>>, vector<16x16x16xbf16>
    %40 = vector.shape_cast %39 : vector<16x16x16xbf16> to vector<256x16xbf16>
    %c4 = arith.constant 4 : index
    %c0_27 = arith.constant 0 : index
    %c0_28 = arith.constant 0 : index
    %41 = vector.load %arg5[%c4, %c0_27, %c0_28] : memref<9x16x16xbf16, #tpu.memory_space<vmem>>, vector<1x16x16xbf16>
    %42 = vector.shape_cast %41 : vector<1x16x16xbf16> to vector<16x16xbf16>
    %cst_29 = arith.constant dense<0.000000e+00> : vector<256x16xf32>
    %43 = tpu.matmul %40, %42, %cst_29 {dimension_numbers = #tpu.dot_dimension_numbers<[1], [0], [0], [1], [0, 0, 1, 1], [], []>} : vector<256x16xbf16>, vector<16x16xbf16>, vector<256x16xf32> -> vector<256x16xf32>
    %44 = arith.addf %36, %43 : vector<256x16xf32>
    %c1_i32_30 = arith.constant 1 : i32
    %45 = arith.addi %0, %c1_i32_30 : i32
    %46 = arith.index_cast %45 : i32 to index
    %c2_31 = arith.constant 2 : index
    %c0_32 = arith.constant 0 : index
    %47 = vector.load %arg10[%46, %c2_31, %c0_32] : memref<18x18x16xbf16, #tpu.memory_space<vmem>>, vector<16x16x16xbf16>
    %48 = vector.shape_cast %47 : vector<16x16x16xbf16> to vector<256x16xbf16>
    %c5 = arith.constant 5 : index
    %c0_33 = arith.constant 0 : index
    %c0_34 = arith.constant 0 : index
    %49 = vector.load %arg5[%c5, %c0_33, %c0_34] : memref<9x16x16xbf16, #tpu.memory_space<vmem>>, vector<1x16x16xbf16>
    %50 = vector.shape_cast %49 : vector<1x16x16xbf16> to vector<16x16xbf16>
    %cst_35 = arith.constant dense<0.000000e+00> : vector<256x16xf32>
    %51 = tpu.matmul %48, %50, %cst_35 {dimension_numbers = #tpu.dot_dimension_numbers<[1], [0], [0], [1], [0, 0, 1, 1], [], []>} : vector<256x16xbf16>, vector<16x16xbf16>, vector<256x16xf32> -> vector<256x16xf32>
    %52 = arith.addf %44, %51 : vector<256x16xf32>
    %c2_i32 = arith.constant 2 : i32
    %53 = arith.addi %0, %c2_i32 : i32
    %54 = arith.index_cast %53 : i32 to index
    %c0_36 = arith.constant 0 : index
    %c0_37 = arith.constant 0 : index
    %55 = vector.load %arg10[%54, %c0_36, %c0_37] : memref<18x18x16xbf16, #tpu.memory_space<vmem>>, vector<16x16x16xbf16>
    %56 = vector.shape_cast %55 : vector<16x16x16xbf16> to vector<256x16xbf16>
    %c6 = arith.constant 6 : index
    %c0_38 = arith.constant 0 : index
    %c0_39 = arith.constant 0 : index
    %57 = vector.load %arg5[%c6, %c0_38, %c0_39] : memref<9x16x16xbf16, #tpu.memory_space<vmem>>, vector<1x16x16xbf16>
    %58 = vector.shape_cast %57 : vector<1x16x16xbf16> to vector<16x16xbf16>
    %cst_40 = arith.constant dense<0.000000e+00> : vector<256x16xf32>
    %59 = tpu.matmul %56, %58, %cst_40 {dimension_numbers = #tpu.dot_dimension_numbers<[1], [0], [0], [1], [0, 0, 1, 1], [], []>} : vector<256x16xbf16>, vector<16x16xbf16>, vector<256x16xf32> -> vector<256x16xf32>
    %60 = arith.addf %52, %59 : vector<256x16xf32>
    %c2_i32_41 = arith.constant 2 : i32
    %61 = arith.addi %0, %c2_i32_41 : i32
    %62 = arith.index_cast %61 : i32 to index
    %c1_42 = arith.constant 1 : index
    %c0_43 = arith.constant 0 : index
    %63 = vector.load %arg10[%62, %c1_42, %c0_43] : memref<18x18x16xbf16, #tpu.memory_space<vmem>>, vector<16x16x16xbf16>
    %64 = vector.shape_cast %63 : vector<16x16x16xbf16> to vector<256x16xbf16>
    %c7 = arith.constant 7 : index
    %c0_44 = arith.constant 0 : index
    %c0_45 = arith.constant 0 : index
    %65 = vector.load %arg5[%c7, %c0_44, %c0_45] : memref<9x16x16xbf16, #tpu.memory_space<vmem>>, vector<1x16x16xbf16>
    %66 = vector.shape_cast %65 : vector<1x16x16xbf16> to vector<16x16xbf16>
    %cst_46 = arith.constant dense<0.000000e+00> : vector<256x16xf32>
    %67 = tpu.matmul %64, %66, %cst_46 {dimension_numbers = #tpu.dot_dimension_numbers<[1], [0], [0], [1], [0, 0, 1, 1], [], []>} : vector<256x16xbf16>, vector<16x16xbf16>, vector<256x16xf32> -> vector<256x16xf32>
    %68 = arith.addf %60, %67 : vector<256x16xf32>
    %c2_i32_47 = arith.constant 2 : i32
    %69 = arith.addi %0, %c2_i32_47 : i32
    %70 = arith.index_cast %69 : i32 to index
    %c2_48 = arith.constant 2 : index
    %c0_49 = arith.constant 0 : index
    %71 = vector.load %arg10[%70, %c2_48, %c0_49] : memref<18x18x16xbf16, #tpu.memory_space<vmem>>, vector<16x16x16xbf16>
    %72 = vector.shape_cast %71 : vector<16x16x16xbf16> to vector<256x16xbf16>
    %c8 = arith.constant 8 : index
    %c0_50 = arith.constant 0 : index
    %c0_51 = arith.constant 0 : index
    %73 = vector.load %arg5[%c8, %c0_50, %c0_51] : memref<9x16x16xbf16, #tpu.memory_space<vmem>>, vector<1x16x16xbf16>
    %74 = vector.shape_cast %73 : vector<1x16x16xbf16> to vector<16x16xbf16>
    %cst_52 = arith.constant dense<0.000000e+00> : vector<256x16xf32>
    %75 = tpu.matmul %72, %74, %cst_52 {dimension_numbers = #tpu.dot_dimension_numbers<[1], [0], [0], [1], [0, 0, 1, 1], [], []>} : vector<256x16xbf16>, vector<16x16xbf16>, vector<256x16xf32> -> vector<256x16xf32>
    %76 = arith.addf %68, %75 : vector<256x16xf32>
    %c0_53 = arith.constant 0 : index
    %c0_54 = arith.constant 0 : index
    %77 = vector.load %arg6[%c0_53, %c0_54] : memref<1x16xf32, #tpu.memory_space<vmem>>, vector<1x16xf32>
    %78 = vector.broadcast %77 : vector<1x16xf32> to vector<256x16xf32>
    %79 = arith.addf %76, %78 : vector<256x16xf32>
    %80 = arith.truncf %79 : vector<256x16xf32> to vector<256x16xbf16>
    %c0_55 = arith.constant 0 : index
    %c0_56 = arith.constant 0 : index
    %c0_57 = arith.constant 0 : index
    %c0_58 = arith.constant 0 : index
    %81 = vector.load %arg7[%c0_55, %c0_56, %c0_57, %c0_58] : memref<1x1x256x16xbf16, #tpu.memory_space<vmem>>, vector<1x1x256x16xbf16>
    %82 = vector.shape_cast %81 : vector<1x1x256x16xbf16> to vector<256x16xbf16>
    %83 = vector.shape_cast %80 : vector<256x16xbf16> to vector<1x1x256x16xbf16>
    tpu.vector_store %arg7[%c0_55, %c0_56, %c0_57, %c0_58], %83 {strides = array<i32>} : memref<1x1x256x16xbf16, #tpu.memory_space<vmem>>, vector<1x1x256x16xbf16>,
    %cst_59 = arith.constant dense<0.000000e+00> : vector<16xf32>
    %84 = vector.multi_reduction <add>, %79, %cst_59 [0] : vector<256x16xf32> to vector<16xf32>
    %85 = vector.shape_cast %84 : vector<16xf32> to vector<1x16xf32>
    %86 = arith.mulf %79, %79 : vector<256x16xf32>
    %cst_60 = arith.constant dense<0.000000e+00> : vector<16xf32>
    %87 = vector.multi_reduction <add>, %86, %cst_60 [0] : vector<256x16xf32> to vector<16xf32>
    %88 = vector.shape_cast %87 : vector<16xf32> to vector<1x16xf32>
    %c0_i32_61 = arith.constant 0 : i32
    %89 = arith.cmpi eq, %arg1, %c0_i32_61 : i32
    %90 = arith.extui %89 : i1 to i32
    %c0_i32_62 = arith.constant 0 : i32
    %91 = arith.cmpi ne, %90, %c0_i32_62 : i32
    scf.if %91 {
      %c0_65 = arith.constant 0 : index
      %c0_66 = arith.constant 0 : index
      %c0_67 = arith.constant 0 : index
      %95 = vector.load %arg8[%c0_65, %c0_66, %c0_67] : memref<1x1x16xf32, #tpu.memory_space<vmem>>, vector<1x1x16xf32>
      %96 = vector.shape_cast %95 : vector<1x1x16xf32> to vector<1x16xf32>
      %97 = vector.shape_cast %85 : vector<1x16xf32> to vector<1x1x16xf32>
      tpu.vector_store %arg8[%c0_65, %c0_66, %c0_67], %97 {strides = array<i32>} : memref<1x1x16xf32, #tpu.memory_space<vmem>>, vector<1x1x16xf32>,
      %c0_68 = arith.constant 0 : index
      %c0_69 = arith.constant 0 : index
      %c0_70 = arith.constant 0 : index
      %98 = vector.load %arg9[%c0_68, %c0_69, %c0_70] : memref<1x1x16xf32, #tpu.memory_space<vmem>>, vector<1x1x16xf32>
      %99 = vector.shape_cast %98 : vector<1x1x16xf32> to vector<1x16xf32>
      %100 = vector.shape_cast %88 : vector<1x16xf32> to vector<1x1x16xf32>
      tpu.vector_store %arg9[%c0_68, %c0_69, %c0_70], %100 {strides = array<i32>} : memref<1x1x16xf32, #tpu.memory_space<vmem>>, vector<1x1x16xf32>,
    } else {
    }
    %c0_i32_63 = arith.constant 0 : i32
    %92 = arith.cmpi sgt, %arg1, %c0_i32_63 : i32
    %93 = arith.extui %92 : i1 to i32
    %c0_i32_64 = arith.constant 0 : i32
    %94 = arith.cmpi ne, %93, %c0_i32_64 : i32
    scf.if %94 {
      %c0_65 = arith.constant 0 : index
      %c0_66 = arith.constant 0 : index
      %c0_67 = arith.constant 0 : index
      %95 = vector.load %arg8[%c0_65, %c0_66, %c0_67] : memref<1x1x16xf32, #tpu.memory_space<vmem>>, vector<1x1x16xf32>
      %96 = vector.shape_cast %95 : vector<1x1x16xf32> to vector<1x16xf32>
      %97 = arith.addf %96, %85 : vector<1x16xf32>
      %c0_68 = arith.constant 0 : index
      %c0_69 = arith.constant 0 : index
      %c0_70 = arith.constant 0 : index
      %98 = vector.load %arg8[%c0_68, %c0_69, %c0_70] : memref<1x1x16xf32, #tpu.memory_space<vmem>>, vector<1x1x16xf32>
      %99 = vector.shape_cast %98 : vector<1x1x16xf32> to vector<1x16xf32>
      %100 = vector.shape_cast %97 : vector<1x16xf32> to vector<1x1x16xf32>
      tpu.vector_store %arg8[%c0_68, %c0_69, %c0_70], %100 {strides = array<i32>} : memref<1x1x16xf32, #tpu.memory_space<vmem>>, vector<1x1x16xf32>,
      %c0_71 = arith.constant 0 : index
      %c0_72 = arith.constant 0 : index
      %c0_73 = arith.constant 0 : index
      %101 = vector.load %arg9[%c0_71, %c0_72, %c0_73] : memref<1x1x16xf32, #tpu.memory_space<vmem>>, vector<1x1x16xf32>
      %102 = vector.shape_cast %101 : vector<1x1x16xf32> to vector<1x16xf32>
      %103 = arith.addf %102, %88 : vector<1x16xf32>
      %c0_74 = arith.constant 0 : index
      %c0_75 = arith.constant 0 : index
      %c0_76 = arith.constant 0 : index
      %104 = vector.load %arg9[%c0_74, %c0_75, %c0_76] : memref<1x1x16xf32, #tpu.memory_space<vmem>>, vector<1x1x16xf32>
      %105 = vector.shape_cast %104 : vector<1x1x16xf32> to vector<1x16xf32>
      %106 = vector.shape_cast %103 : vector<1x16xf32> to vector<1x1x16xf32>
      tpu.vector_store %arg9[%c0_74, %c0_75, %c0_76], %106 {strides = array<i32>} : memref<1x1x16xf32, #tpu.memory_space<vmem>>, vector<1x1x16xf32>,
    } else {
    }
    return
  }
  func.func @transform_0(%arg0: i32, %arg1: i32) -> (i32, i32, i32, i32) {
    %c0_i32 = arith.constant 0 : i32
    %c0_i32_0 = arith.constant 0 : i32
    %c0_i32_1 = arith.constant 0 : i32
    %c0_i32_2 = arith.constant 0 : i32
    return %arg0, %c0_i32, %c0_i32_0, %c0_i32_1 : i32, i32, i32, i32
  }
  func.func @transform_1(%arg0: i32, %arg1: i32) -> (i32, i32) {
    %c0_i32 = arith.constant 0 : i32
    %c0_i32_0 = arith.constant 0 : i32
    %c0_i32_1 = arith.constant 0 : i32
    return %c0_i32, %c0_i32_0 : i32, i32
  }
  func.func @transform_2(%arg0: i32, %arg1: i32) -> (i32, i32) {
    %c0_i32 = arith.constant 0 : i32
    %c0_i32_0 = arith.constant 0 : i32
    %c0_i32_1 = arith.constant 0 : i32
    return %c0_i32, %c0_i32_0 : i32, i32
  }
  func.func @transform_3(%arg0: i32, %arg1: i32) -> (i32, i32, i32) {
    %c0_i32 = arith.constant 0 : i32
    %c0_i32_0 = arith.constant 0 : i32
    %c0_i32_1 = arith.constant 0 : i32
    %c0_i32_2 = arith.constant 0 : i32
    return %c0_i32, %c0_i32_0, %c0_i32_1 : i32, i32, i32
  }
  func.func @transform_4(%arg0: i32, %arg1: i32) -> (i32, i32) {
    %c0_i32 = arith.constant 0 : i32
    %c0_i32_0 = arith.constant 0 : i32
    %c0_i32_1 = arith.constant 0 : i32
    return %c0_i32, %c0_i32_0 : i32, i32
  }
  func.func @transform_5(%arg0: i32, %arg1: i32) -> (i32, i32, i32, i32) {
    %c0_i32 = arith.constant 0 : i32
    %c0_i32_0 = arith.constant 0 : i32
    %c0_i32_1 = arith.constant 0 : i32
    return %arg0, %arg1, %c0_i32, %c0_i32_0 : i32, i32, i32, i32
  }
  func.func @transform_6(%arg0: i32, %arg1: i32) -> (i32, i32, i32) {
    %c0_i32 = arith.constant 0 : i32
    %c0_i32_0 = arith.constant 0 : i32
    %c0_i32_1 = arith.constant 0 : i32
    return %arg0, %c0_i32, %c0_i32_0 : i32, i32, i32
  }
  func.func @transform_7(%arg0: i32, %arg1: i32) -> (i32, i32, i32) {
    %c0_i32 = arith.constant 0 : i32
    %c0_i32_0 = arith.constant 0 : i32
    %c0_i32_1 = arith.constant 0 : i32
    return %arg0, %c0_i32, %c0_i32_0 : i32, i32, i32
  }
}

module attributes {stable_mosaic.version = 11 : i64} {
  func.func @_bn_relu_kernel(%arg0: i32, %arg1: memref<64x128xbf16, #tpu.memory_space<vmem>>, %arg2: memref<1x128xf32, #tpu.memory_space<vmem>>, %arg3: memref<1x128xf32, #tpu.memory_space<vmem>>, %arg4: memref<64x128xf32, #tpu.memory_space<vmem>>) attributes {dimension_semantics = [#tpu.dimension_semantics<parallel>], iteration_bounds = array<i64: 1>, scalar_prefetch = 0 : i64, scratch_operands = 0 : i64, tpu.core_type = #tpu.core_type<tc>, window_params = [{transform_indices = @transform_0, window_bounds = array<i64: 64, 128>}, {pipeline_mode = #tpu.pipeline_mode<synchronous>, transform_indices = @transform_1, window_bounds = array<i64: 1, 128>}, {pipeline_mode = #tpu.pipeline_mode<synchronous>, transform_indices = @transform_2, window_bounds = array<i64: 1, 128>}, {transform_indices = @transform_3, window_bounds = array<i64: 64, 128>}]} {
    %c0 = arith.constant 0 : index
    %c0_0 = arith.constant 0 : index
    %0 = vector.load %arg1[%c0, %c0_0] : memref<64x128xbf16, #tpu.memory_space<vmem>>, vector<64x128xbf16>
    %1 = arith.extf %0 : vector<64x128xbf16> to vector<64x128xf32>
    %c0_1 = arith.constant 0 : index
    %c0_2 = arith.constant 0 : index
    %2 = vector.load %arg2[%c0_1, %c0_2] : memref<1x128xf32, #tpu.memory_space<vmem>>, vector<1x128xf32>
    %3 = vector.broadcast %2 : vector<1x128xf32> to vector<64x128xf32>
    %4 = arith.mulf %1, %3 : vector<64x128xf32>
    %c0_3 = arith.constant 0 : index
    %c0_4 = arith.constant 0 : index
    %5 = vector.load %arg3[%c0_3, %c0_4] : memref<1x128xf32, #tpu.memory_space<vmem>>, vector<1x128xf32>
    %6 = vector.broadcast %5 : vector<1x128xf32> to vector<64x128xf32>
    %7 = arith.addf %4, %6 : vector<64x128xf32>
    %cst = arith.constant 0.000000e+00 : f32
    %8 = vector.broadcast %cst : f32 to vector<64x128xf32>
    %9 = arith.maximumf %7, %8 : vector<64x128xf32>
    %c0_5 = arith.constant 0 : index
    %c0_6 = arith.constant 0 : index
    %10 = vector.load %arg4[%c0_5, %c0_6] : memref<64x128xf32, #tpu.memory_space<vmem>>, vector<64x128xf32>
    tpu.vector_store %arg4[%c0_5, %c0_6], %9 {strides = array<i32>} : memref<64x128xf32, #tpu.memory_space<vmem>>, vector<64x128xf32>,
    return
  }
  func.func @transform_0(%arg0: i32) -> (i32, i32) {
    %c0_i32 = arith.constant 0 : i32
    %c0_i32_0 = arith.constant 0 : i32
    return %arg0, %c0_i32 : i32, i32
  }
  func.func @transform_1(%arg0: i32) -> (i32, i32) {
    %c0_i32 = arith.constant 0 : i32
    %c0_i32_0 = arith.constant 0 : i32
    %c0_i32_1 = arith.constant 0 : i32
    return %c0_i32, %c0_i32_0 : i32, i32
  }
  func.func @transform_2(%arg0: i32) -> (i32, i32) {
    %c0_i32 = arith.constant 0 : i32
    %c0_i32_0 = arith.constant 0 : i32
    %c0_i32_1 = arith.constant 0 : i32
    return %c0_i32, %c0_i32_0 : i32, i32
  }
  func.func @transform_3(%arg0: i32) -> (i32, i32) {
    %c0_i32 = arith.constant 0 : i32
    %c0_i32_0 = arith.constant 0 : i32
    return %arg0, %c0_i32 : i32, i32
  }
}

</mosaic_0001>

<llo_original>
// kernel: decoder_block_forward.4
$region0: #{decoder_block_forward.4}
  #allocation0 [shape = 'u32[]', space=smem, size = 0x4, offset = 0x4, fixed_abs, tag = 'smem constant byte address 0x4 - core index']
  #allocation1 [shape = 'u32[72,128]{1,0:T(1,128)}', space=vmem, size = 0x9000, scoped, tag = 'internal scratch']
  %s0 = inlined_call_operand.hbm [shape: f32[2,8,8,32], index: 0, kind: input, shape index: {}]
  %s1 = inlined_call_operand.hbm [shape: bf16[2,32,32], index: 1, kind: input, shape index: {}]
  %s2 = inlined_call_operand.vmem [shape: f32[1,32], index: 2, kind: input, shape index: {}]
  %s3 = inlined_call_operand.vmem [shape: bf16[2,8,2,8,32], index: 3, kind: output, shape index: {}]
  %s4 = sld [smem:[#allocation0]]
  $region53: #{decoder_block_forward.4} parent=0
    _
  %s6 = ssub.s32 1, %s4
  %s7 = scalar_select 0, %s6, %s4
  $region1: #{decoder_block_forward.4} parent=0
    #allocation2 [shape = 'u8[65536]{0}', space=vmem, size = 0x10000, scoped, tag = 'input window, operand 0']
    #allocation3 [shape = 's32[2]{0}', space=sflag, size = 0x8, scoped, tag = 'scoped memory for decoder_block_forward.4']
    #allocation4 [shape = 'u8[16384]{0}', space=vmem, size = 0x4000, scoped, tag = 'input window, operand 1, single buffered']
    #allocation5 [shape = 's32[1]{0}', space=sflag, size = 0x4, scoped, tag = 'scoped memory for decoder_block_forward.4']
    %8 = vsyncpa [#allocation3], 0
    %s9 = scalar_lea.sflag [#allocation3], 1
    %10 = vsyncpa %s9, 0
    %11 = vsyncpa [#allocation5], 0
    loop: start=0, step=1, limit=4
    $region2: #{decoder_block_forward.4} parent=1 // loop_pre_header
      _
    $region3: #{decoder_block_forward.4} parent=1 // loop_header
      %s13 = sphi 0, %s17
      %p14 = scmp.ge.s32.totalorder %s13, 4
      %s20 = sphi 0, %s32
      %s21 = sphi 0, %s28
      %s22 = sphi 0, %s20
      %s23 = sphi 0, %s21
      %s24 = sphi 0, %s22
      %s25 = sphi 0, %s23
      %s37 = sphi 0, %s39
      %s40 = sphi 0, %s37
      %s41 = sphi 0, %s40
      %s57 = sphi 0, %s41
      %s61 = sphi 0, %s61
      %s63 = sphi 0, %s61
      %s64 = sphi 0, %s63
      %s78 = sphi 0, %s64
      %s82 = sphi 0, %s82
      %s84 = sphi 0, %s82
      %s85 = sphi 0, %s84
      %s99 = sphi 0, %s85
      %s107 = sphi 0, %s109
      %s110 = sphi 0, %s107
      %s111 = sphi 0, %s110
      %s127 = sphi 0, %s111
    $region4: #{decoder_block_forward.4} parent=1 // loop_header_branch
      %16 = sbr.rel (%p14) target = $region8
    $region5: #{decoder_block_forward.4} parent=1 // loop_body
      %s18 = ssub.s32 %s13, 1
      %s19 = ssub.s32 %s13, 2
      %s26 = sadd.s32 1, %s21
      %p27 = scmp.ge.s32.totalorder %s26, 1
      %s28 = scalar_select %p27, 0, %s26
      %s29 = sadd.s32 1, %s20
      %s30 = scalar_select %p27, %s29, %s20
      %p31 = scmp.ge.s32.totalorder %s30, 2
      %s32 = scalar_select %p31, 0, %s30
      %s33 = ssub.s32 %s20, %s32
      %s34 = ssub.s32 %s21, %s28
      %s35 = sor.u32 %s33, %s34
      %p36 = scmp.eq.s32.totalorder %s35, 0
      %s38 = sadd.s32 %s37, 1
      %s39 = scalar_select %p36, %s37, %s38
      %p42 = pneg %p36
      %p43 = scmp.eq.s32.totalorder %s13, 1
      %p44 = por %p42, %p43
      %p45 = scmp.ne.s32.totalorder %s37, %s40
      %p46 = scmp.eq.s32.totalorder %s13, 0
      %p47 = por %p45, %p46
      %p48 = scmp.ne.s32.totalorder %s37, %s40
      %p49 = scmp.eq.s32.totalorder %s18, 1
      %p50 = por %p48, %p49
      %p51 = scmp.ne.s32.totalorder %s40, %s41
      %p52 = scmp.eq.s32.totalorder %s18, 0
      %p53 = por %p51, %p52
      %p54 = scmp.ne.s32.totalorder %s40, %s41
      %p55 = scmp.eq.s32.totalorder %s19, 1
      %p56 = por %p54, %p55
      %p58 = scmp.ne.s32.totalorder %s41, %s57
      %p59 = scmp.eq.s32.totalorder %s19, 0
      %p60 = por %p58, %p59
      %s62 = sadd.s32 %s61, 1
      %p65 = scmp.eq.s32.totalorder %s13, 1
      %p66 = scmp.ne.s32.totalorder %s61, %s63
      %p67 = scmp.eq.s32.totalorder %s13, 0
      %p68 = por %p66, %p67
      %p69 = scmp.ne.s32.totalorder %s61, %s63
      %p70 = scmp.eq.s32.totalorder %s18, 1
      %p71 = por %p69, %p70
      %p72 = scmp.ne.s32.totalorder %s63, %s64
      %p73 = scmp.eq.s32.totalorder %s18, 0
      %p74 = por %p72, %p73
      %p75 = scmp.ne.s32.totalorder %s63, %s64
      %p76 = scmp.eq.s32.totalorder %s19, 1
      %p77 = por %p75, %p76
      %p79 = scmp.ne.s32.totalorder %s64, %s78
      %p80 = scmp.eq.s32.totalorder %s19, 0
      %p81 = por %p79, %p80
      %s83 = sadd.s32 %s82, 1
      %p86 = scmp.eq.s32.totalorder %s13, 1
      %p87 = scmp.ne.s32.totalorder %s82, %s84
      %p88 = scmp.eq.s32.totalorder %s13, 0
      %p89 = por %p87, %p88
      %p90 = scmp.ne.s32.totalorder %s82, %s84
      %p91 = scmp.eq.s32.totalorder %s18, 1
      %p92 = por %p90, %p91
      %p93 = scmp.ne.s32.totalorder %s84, %s85
      %p94 = scmp.eq.s32.totalorder %s18, 0
      %p95 = por %p93, %p94
      %p96 = scmp.ne.s32.totalorder %s84, %s85
      %p97 = scmp.eq.s32.totalorder %s19, 1
      %p98 = por %p96, %p97
      %p100 = scmp.ne.s32.totalorder %s85, %s99
      %p101 = scmp.eq.s32.totalorder %s19, 0
      %p102 = por %p100, %p101
      %s103 = sadd.s32 %s20, %s21
      %s104 = sadd.s32 %s32, %s28
      %s105 = ssub.s32 %s103, %s104
      %p106 = scmp.eq.s32.totalorder %s105, 0
      %s108 = sadd.s32 %s107, 1
      %s109 = scalar_select %p106, %s107, %s108
      %p112 = pneg %p106
      %p113 = scmp.eq.s32.totalorder %s13, 1
      %p114 = por %p112, %p113
      %p115 = scmp.ne.s32.totalorder %s107, %s110
      %p116 = scmp.eq.s32.totalorder %s13, 0
      %p117 = por %p115, %p116
      %p118 = scmp.ne.s32.totalorder %s107, %s110
      %p119 = scmp.eq.s32.totalorder %s18, 1
      %p120 = por %p118, %p119
      %p121 = scmp.ne.s32.totalorder %s110, %s111
      %p122 = scmp.eq.s32.totalorder %s18, 0
      %p123 = por %p121, %p122
      %p124 = scmp.ne.s32.totalorder %s110, %s111
      %p125 = scmp.eq.s32.totalorder %s19, 1
      %p126 = por %p124, %p125
      %p128 = scmp.ne.s32.totalorder %s111, %s127
      %p129 = scmp.eq.s32.totalorder %s19, 0
      %p130 = por %p128, %p129
      %p131 = scmp.le.s32.totalorder 1, %s13
      %p132 = scmp.lt.s32.totalorder %s13, 3
      %p133 = pnand %p131, %p132
      %p134 = pneg %p133
      // Predicated region
      $region9: #{decoder_block_forward.4} parent=5 // pred_check
        _
      $region10: #{decoder_block_forward.4} parent=5 // pred_check_branch
        %136 = sbr.rel (%p133) target = $region12
      $region11: #{decoder_block_forward.4} parent=5 // pred_region
        %s137 = ssub.s32 %s13, 1
        // Predicated region
        $region13: #{decoder_block_forward.4} parent=11 // pred_check
          %p138 = pneg %p74
        $region14: #{decoder_block_forward.4} parent=11 // pred_check_branch
          %140 = sbr.rel (%p138) target = $region16
        $region15: #{decoder_block_forward.4} parent=11 // pred_region
          %142 = vsyncadd [#allocation5], 0
          %s143 = sshll.u32 %s1, 4
          %s144 = int_to_ptr.hbm [resolvable:$true] %s143
          %s145 = sshll.u32 [#allocation4], 4
          %s146 = int_to_ptr.vmem [resolvable:$true] %s145
          %151 = dma.hbm_to_vmem [thread:$0]  %s144, 512, %s146, [#allocation5], 64, 64, 4
        $region16: #{decoder_block_forward.4} parent=11 // pred_fallthru
          _
        // Predicated region
        $region17: #{decoder_block_forward.4} parent=11 // pred_check
          %p152 = pneg %p95
        $region18: #{decoder_block_forward.4} parent=11 // pred_check_branch
          %154 = sbr.rel (%p152) target = $region20
        $region19: #{decoder_block_forward.4} parent=11 // pred_region
          _
        $region20: #{decoder_block_forward.4} parent=11 // pred_fallthru
          _
      $region12: #{decoder_block_forward.4} parent=5 // pred_fallthru
        _
      %p155 = scmp.lt.s32.totalorder %s13, 2
      // Predicated region
      $region21: #{decoder_block_forward.4} parent=5 // pred_check
        %p156 = pneg %p155
      $region22: #{decoder_block_forward.4} parent=5 // pred_check_branch
        %158 = sbr.rel (%p156) target = $region24
      $region23: #{decoder_block_forward.4} parent=5 // pred_region
        // Predicated region
        $region25: #{decoder_block_forward.4} parent=23 // pred_check
          %p159 = pneg %p47
        $region26: #{decoder_block_forward.4} parent=23 // pred_check_branch
          %161 = sbr.rel (%p159) target = $region28
        $region27: #{decoder_block_forward.4} parent=23 // pred_region
          %s162 = sand.u32 %s37, 1
          %s163 = scalar_lea.sflag [#allocation3], %s162
          %s164 = sand.u32 %s37, 1
          %s165 = smul.addr %s164, 64
          %s166 = scalar_lea.vmem [#allocation2], %s165
          %s167 = smul.u32 8, %s21
          %169 = vsyncadd %s163, 0
          %s170 = smul.addr %s20, 8
          %s171 = sadd.s32 %s167, %s170
          %s172 = smul.addr %s171, 8
          %s173 = scalar_lea.hbm %s0, %s172
          %s174 = sshll.u32 %s173, 4
          %s175 = int_to_ptr.hbm [resolvable:$true] %s174
          %s176 = sshll.u32 %s166, 4
          %s177 = int_to_ptr.vmem [resolvable:$true] %s176
          %182 = dma.hbm_to_vmem [thread:$0]  %s175, 1024, %s177, %s163, 128, 128, 8
        $region28: #{decoder_block_forward.4} parent=23 // pred_fallthru
          _
      $region24: #{decoder_block_forward.4} parent=5 // pred_fallthru
        _
      %p183 = scmp.le.s32.totalorder 1, %s13
      %p184 = scmp.lt.s32.totalorder %s13, 3
      %p185 = pnand %p183, %p184
      %p186 = pneg %p185
      // Predicated region
      $region29: #{decoder_block_forward.4} parent=5 // pred_check
        _
      $region30: #{decoder_block_forward.4} parent=5 // pred_check_branch
        %188 = sbr.rel (%p185) target = $region32
      $region31: #{decoder_block_forward.4} parent=5 // pred_region
        %s189 = ssub.s32 %s13, 1
        %s190 = sand.u32 %s40, 1
        %s191 = scalar_lea.sflag [#allocation3], %s190
        %s192 = sand.u32 %s40, 1
        %s193 = smul.addr %s192, 64
        %s194 = scalar_lea.vmem [#allocation2], %s193
        // Predicated region
        $region33: #{decoder_block_forward.4} parent=31 // pred_check
          %p195 = pneg %p53
        $region34: #{decoder_block_forward.4} parent=31 // pred_check_branch
          %197 = sbr.rel (%p195) target = $region36
        $region35: #{decoder_block_forward.4} parent=31 // pred_region
          %199 = dma.done %s191, 1024
        $region36: #{decoder_block_forward.4} parent=31 // pred_fallthru
          _
        // Predicated region
        $region37: #{decoder_block_forward.4} parent=31 // pred_check
          %p200 = pneg %p74
        $region38: #{decoder_block_forward.4} parent=31 // pred_check_branch
          %202 = sbr.rel (%p200) target = $region40
        $region39: #{decoder_block_forward.4} parent=31 // pred_region
          %204 = dma.done [#allocation5], 512
        $region40: #{decoder_block_forward.4} parent=31 // pred_fallthru
          _
        %s205 = sand.u32 %s40, 1
        %s206 = scalar_lea.sflag [#allocation3], %s205
        %s207 = sand.u32 %s40, 1
        %s208 = smul.addr %s207, 64
        %s209 = scalar_lea.vmem [#allocation2], %s208
        %p210 = pneg %p53
        %p211 = pneg %p50
        %p212 = pneg %p74
        %p213 = pneg %p71
        %p214 = pneg %p95
        %p215 = pneg %p92
        %p216 = pneg %p123
        %p217 = pneg %p120
        %s218 = sadd.s32 %s22, %s23
        %p219 = scmp.lt.s32.totalorder %s218, 1
        %s220 = scalar_select %p219, %s218, 1
        %s221 = smul.addr %s220, 16
        %s222 = smul.addr %s221, 4
        %s223 = scalar_lea.vmem %s3, %s222
        %s224 = smul.u32 8, %s23
        %s225 = sadd.s32 %s22, %s23
        %p226 = scmp.lt.s32.totalorder %s225, 1
        %s227 = scalar_select %p226, %s225, 1
        %s228 = smul.addr %s227, 16
        %s229 = smul.addr %s228, 4
        %s230 = scalar_lea.vmem %s3, %s229
        %s231 = sadd.s32 %s22, %s23
        %v233 = vld [vmem:[%s194] sm:$0xff]
        %v234 = vld [vmem:[%s194 + $0x8] sm:$0xff]
        %v235 = vld [vmem:[%s194 + $0x10] sm:$0xff]
        %v236 = vld [vmem:[%s194 + $0x18] sm:$0xff]
        %v237 = vld [vmem:[%s194 + $0x20] sm:$0xff]
        %v238 = vld [vmem:[%s194 + $0x28] sm:$0xff]
        %v239 = vld [vmem:[%s194 + $0x30] sm:$0xff]
        %v240 = vld [vmem:[%s194 + $0x38] sm:$0xff]
        %v241 = vpack.c.bf16 %v234, %v233
        %v242 = vpack.c.bf16 %v236, %v235
        %v243 = vpack.c.bf16 %v238, %v237
        %v244 = vpack.c.bf16 %v240, %v239
        %v245 = vld [vmem:[#allocation4] sm:$0xf]
        %v246 = vld [vmem:[#allocation4 + $0x4] sm:$0xf]
        %v247 = vld [vmem:[#allocation4 + $0x8] sm:$0xf]
        %v248 = vld [vmem:[#allocation4 + $0xc] sm:$0xf]
        %v249 = vld [vmem:[%s2] sm:$0x1]
        %v251 = vperm.slane %v249, 0
        %v257 = vunpack.c.l.b16 %v245
        %v258 = vunpack.c.l.b16 %v246
        %v259 = vunpack.c.l.b16 %v247
        %v260 = vunpack.c.l.b16 %v248
        %v261 = vpack.c.b16 %v258, %v257
        %v262 = vpack.c.b16 %v260, %v259
        %vm265 = vcmask 261120
        %v267 = vsel %vm265, %v241, 0
        %v270 = vsel %vm265, %v242, 0
        %v273 = vsel %vm265, %v243, 0
        %v276 = vsel %vm265, %v244, 0
        %278 = vmatpush.bf16.msra.mxu0 0
        %279 = vmatpush.bf16.msra.mxu0 0
        %280 = vmatpush.bf16.msra.mxu0 0
        %281 = vmatpush.bf16.msra.mxu0 0
        %282 = vmatpush.bf16.msra.mxu0 0
        %283 = vmatpush.bf16.msra.mxu0 0
        %284 = vmatpush.bf16.msra.mxu0 %v262
        %285 = vmatpush.bf16.msra.mxu0 %v261
        %286 = vmatmul.bf16.gmra.mxu0 %v267
        %v287 = vpop.f32.mrf.mxu0
        %v288 = vadd.f32 %v251, %v287
        %v289 = vpop.f32.mrf.mxu0
        %v290 = vadd.f32 %v251, %v289
        %291 = vmatmul.bf16.gmra.mxu0 %v270
        %v292 = vpop.f32.mrf.mxu0
        %v293 = vadd.f32 %v251, %v292
        %v294 = vpop.f32.mrf.mxu0
        %v295 = vadd.f32 %v251, %v294
        %296 = vmatmul.bf16.gmra.mxu0 %v273
        %v297 = vpop.f32.mrf.mxu0
        %v298 = vadd.f32 %v251, %v297
        %v299 = vpop.f32.mrf.mxu0
        %v300 = vadd.f32 %v251, %v299
        %301 = vmatmul.bf16.gmra.mxu0 %v276
        %v302 = vpop.f32.mrf.mxu0
        %v303 = vadd.f32 %v251, %v302
        %v304 = vpop.f32.mrf.mxu0
        %v305 = vadd.f32 %v251, %v304
        %306 = vdwg.mxu0
        %v307 = vpack.c.bf16 %v288, %v288
        %v308 = vpack.c.bf16 %v290, %v290
        %v309 = vpack.c.bf16 %v293, %v293
        %v310 = vpack.c.bf16 %v295, %v295
        %v311 = vpack.c.bf16 %v298, %v298
        %v312 = vpack.c.bf16 %v300, %v300
        %v313 = vpack.c.bf16 %v303, %v303
        %v314 = vpack.c.bf16 %v305, %v305
        %vm315 = vcmask 257024
        %316 = vst.msk [vmem:[%s230] sm:$0xf] %vm315, %v307
        %317 = vst.msk [vmem:[%s230 + $0x8] sm:$0xf] %vm315, %v308
        %318 = vst.msk [vmem:[%s230 + $0x10] sm:$0xf] %vm315, %v309
        %319 = vst.msk [vmem:[%s230 + $0x18] sm:$0xf] %vm315, %v310
        %320 = vst.msk [vmem:[%s230 + $0x20] sm:$0xf] %vm315, %v311
        %321 = vst.msk [vmem:[%s230 + $0x28] sm:$0xf] %vm315, %v312
        %322 = vst.msk [vmem:[%s230 + $0x30] sm:$0xf] %vm315, %v313
        %323 = vst.msk [vmem:[%s230 + $0x38] sm:$0xf] %vm315, %v314
        %s324 = scalar_lea.vmem [#allocation4], 16
        %v325 = vld [vmem:[%s324] sm:$0xf]
        %v326 = vld [vmem:[%s324 + $0x4] sm:$0xf]
        %v327 = vld [vmem:[%s324 + $0x8] sm:$0xf]
        %v328 = vld [vmem:[%s324 + $0xc] sm:$0xf]
        %v329 = vld [vmem:[%s2] sm:$0x1]
        %v331 = vperm.slane %v329, 0
        %v337 = vunpack.c.l.b16 %v325
        %v338 = vunpack.c.l.b16 %v326
        %v339 = vunpack.c.l.b16 %v327
        %v340 = vunpack.c.l.b16 %v328
        %v341 = vpack.c.b16 %v338, %v337
        %v342 = vpack.c.b16 %v340, %v339
        %345 = vmatpush.bf16.msra.mxu0 0
        %346 = vmatpush.bf16.msra.mxu0 0
        %347 = vmatpush.bf16.msra.mxu0 0
        %348 = vmatpush.bf16.msra.mxu0 0
        %349 = vmatpush.bf16.msra.mxu0 0
        %350 = vmatpush.bf16.msra.mxu0 0
        %351 = vmatpush.bf16.msra.mxu0 %v342
        %352 = vmatpush.bf16.msra.mxu0 %v341
        %353 = vmatmul.bf16.gmra.mxu0 %v267
        %v354 = vpop.f32.mrf.mxu0
        %v355 = vadd.f32 %v331, %v354
        %v356 = vpop.f32.mrf.mxu0
        %v357 = vadd.f32 %v331, %v356
        %358 = vmatmul.bf16.gmra.mxu0 %v270
        %v359 = vpop.f32.mrf.mxu0
        %v360 = vadd.f32 %v331, %v359
        %v361 = vpop.f32.mrf.mxu0
        %v362 = vadd.f32 %v331, %v361
        %363 = vmatmul.bf16.gmra.mxu0 %v273
        %v364 = vpop.f32.mrf.mxu0
        %v365 = vadd.f32 %v331, %v364
        %v366 = vpop.f32.mrf.mxu0
        %v367 = vadd.f32 %v331, %v366
        %368 = vmatmul.bf16.gmra.mxu0 %v276
        %v369 = vpop.f32.mrf.mxu0
        %v370 = vadd.f32 %v331, %v369
        %v371 = vpop.f32.mrf.mxu0
        %v372 = vadd.f32 %v331, %v371
        %373 = vdwg.mxu0
        %v374 = vpack.c.bf16 %v355, %v355
        %v375 = vpack.c.bf16 %v357, %v357
        %v376 = vpack.c.bf16 %v360, %v360
        %v377 = vpack.c.bf16 %v362, %v362
        %v378 = vpack.c.bf16 %v365, %v365
        %v379 = vpack.c.bf16 %v367, %v367
        %v380 = vpack.c.bf16 %v370, %v370
        %v381 = vpack.c.bf16 %v372, %v372
        %s382 = scalar_lea.vmem %s230, 4
        %383 = vst.msk [vmem:[%s382] sm:$0xf] %vm315, %v374
        %384 = vst.msk [vmem:[%s382 + $0x8] sm:$0xf] %vm315, %v375
        %385 = vst.msk [vmem:[%s382 + $0x10] sm:$0xf] %vm315, %v376
        %386 = vst.msk [vmem:[%s382 + $0x18] sm:$0xf] %vm315, %v377
        %387 = vst.msk [vmem:[%s382 + $0x20] sm:$0xf] %vm315, %v378
        %388 = vst.msk [vmem:[%s382 + $0x28] sm:$0xf] %vm315, %v379
        %389 = vst.msk [vmem:[%s382 + $0x30] sm:$0xf] %vm315, %v380
        %390 = vst.msk [vmem:[%s382 + $0x38] sm:$0xf] %vm315, %v381
        %s391 = sadd.s32 %s22, %s23
        %p392 = scmp.lt.s32.totalorder %s391, 1
        %s393 = scalar_select %p392, %s391, 1
        %s394 = smul.addr %s393, 16
        %s395 = smul.addr %s394, 4
        %s396 = scalar_lea.vmem %s3, %s395
        // Predicated region
        $region41: #{decoder_block_forward.4} parent=31 // pred_check
          %p397 = pneg %p120
        $region42: #{decoder_block_forward.4} parent=31 // pred_check_branch
          %399 = sbr.rel (%p397) target = $region44
        $region43: #{decoder_block_forward.4} parent=31 // pred_region
          %s400 = sadd.s32 %s22, %s23
        $region44: #{decoder_block_forward.4} parent=31 // pred_fallthru
          _
      $region32: #{decoder_block_forward.4} parent=5 // pred_fallthru
        _
      %p401 = scmp.le.s32.totalorder 2, %s13
      // Predicated region
      $region45: #{decoder_block_forward.4} parent=5 // pred_check
        %p402 = pneg %p401
      $region46: #{decoder_block_forward.4} parent=5 // pred_check_branch
        %404 = sbr.rel (%p402) target = $region48
      $region47: #{decoder_block_forward.4} parent=5 // pred_region
        %s405 = ssub.s32 %s13, 2
        // Predicated region
        $region49: #{decoder_block_forward.4} parent=47 // pred_check
          %p406 = pneg %p126
        $region50: #{decoder_block_forward.4} parent=47 // pred_check_branch
          %408 = sbr.rel (%p406) target = $region52
        $region51: #{decoder_block_forward.4} parent=47 // pred_region
          %s409 = sadd.s32 %s24, %s25
          %p410 = scmp.lt.s32.totalorder %s409, 1
          %s411 = scalar_select %p410, %s409, 1
          %s412 = smul.addr %s411, 16
          %s413 = smul.addr %s412, 4
          %s414 = scalar_lea.vmem %s3, %s413
        $region52: #{decoder_block_forward.4} parent=47 // pred_fallthru
          _
      $region48: #{decoder_block_forward.4} parent=5 // pred_fallthru
        _
    $region6: #{decoder_block_forward.4} parent=1 // loop_footer
      %s17 = sadd.s32 1, %s13
    $region7: #{decoder_block_forward.4} parent=1 // loop_footer_branch
      %12 = sbr.rel target = $region3
    $region8: #{decoder_block_forward.4} parent=1 // loop_exit
      _
    %415 = vsyncpa [#allocation3], 1
    %s416 = scalar_lea.sflag [#allocation3], 1
    %417 = vsyncpa %s416, 1
    %418 = vsyncpa [#allocation5], 1

// kernel: decoder_block_forward.7
$region0: #{decoder_block_forward.7}
  #allocation0 [shape = 'u32[]', space=smem, size = 0x4, offset = 0x4, fixed_abs, tag = 'smem constant byte address 0x4 - core index']
  #allocation1 [shape = 'u32[72,128]{1,0:T(1,128)}', space=vmem, size = 0x9000, scoped, tag = 'internal scratch']
  %s0 = inlined_call_operand.vmem [shape: bf16[64,128], index: 0, kind: input, shape index: {}]
  %s1 = inlined_call_operand.vmem [shape: f32[1,128], index: 1, kind: input, shape index: {}]
  %s2 = inlined_call_operand.vmem [shape: f32[1,128], index: 2, kind: input, shape index: {}]
  %s3 = inlined_call_operand.vmem [shape: f32[64,128], index: 3, kind: output, shape index: {}]
  %s4 = sld [smem:[#allocation0]]
  $region22: #{decoder_block_forward.7} parent=0
    _
  %s6 = ssub.s32 1, %s4
  %s7 = scalar_select 0, %s6, %s4
  // Predicated region
  $region2: #{decoder_block_forward.7} parent=0 // pred_check
    _
  $region3: #{decoder_block_forward.7} parent=0 // pred_check_branch
    %9 = sbr.rel (0) target = $region5
  $region4: #{decoder_block_forward.7} parent=0 // pred_region
    _
  $region5: #{decoder_block_forward.7} parent=0 // pred_fallthru
    _
  // Predicated region
  $region6: #{decoder_block_forward.7} parent=0 // pred_check
    _
  $region7: #{decoder_block_forward.7} parent=0 // pred_check_branch
    %11 = sbr.rel (0) target = $region9
  $region8: #{decoder_block_forward.7} parent=0 // pred_region
    _
  $region9: #{decoder_block_forward.7} parent=0 // pred_fallthru
    _
  // Predicated region
  $region10: #{decoder_block_forward.7} parent=0 // pred_check
    _
  $region11: #{decoder_block_forward.7} parent=0 // pred_check_branch
    %13 = sbr.rel (0) target = $region13
  $region12: #{decoder_block_forward.7} parent=0 // pred_region
    _
  $region13: #{decoder_block_forward.7} parent=0 // pred_fallthru
    _
  %v14 = vld [vmem:[%s0] sm:$0xf]
  %v15 = vld [vmem:[%s0 + $0x4] sm:$0xf]
  %v16 = vld [vmem:[%s0 + $0x8] sm:$0xf]
  %v17 = vld [vmem:[%s0 + $0xc] sm:$0xf]
  %v18 = vld [vmem:[%s0 + $0x10] sm:$0xf]
  %v19 = vld [vmem:[%s0 + $0x14] sm:$0xf]
  %v20 = vld [vmem:[%s0 + $0x18] sm:$0xf]
  %v21 = vld [vmem:[%s0 + $0x1c] sm:$0xf]
  %v22 = vunpack.c.l.bf16 %v14
  %v23 = vunpack.c.l.bf16 %v15
  %v24 = vunpack.c.l.bf16 %v16
  %v25 = vunpack.c.l.bf16 %v17
  %v26 = vunpack.c.l.bf16 %v18
  %v27 = vunpack.c.l.bf16 %v19
  %v28 = vunpack.c.l.bf16 %v20
  %v29 = vunpack.c.l.bf16 %v21
  %v30 = vld [vmem:[%s1] sm:$0x1]
  %v32 = vperm.slane %v30, 0
  %v34 = vmul.f32 %v22, %v32
  %v35 = vmul.f32 %v23, %v32
  %v36 = vmul.f32 %v24, %v32
  %v37 = vmul.f32 %v25, %v32
  %v38 = vmul.f32 %v26, %v32
  %v39 = vmul.f32 %v27, %v32
  %v40 = vmul.f32 %v28, %v32
  %v41 = vmul.f32 %v29, %v32
  %v42 = vld [vmem:[%s2] sm:$0x1]
  %v44 = vperm.slane %v42, 0
  %v46 = vadd.f32 %v34, %v44
  %v47 = vadd.f32 %v35, %v44
  %v48 = vadd.f32 %v36, %v44
  %v49 = vadd.f32 %v37, %v44
  %v50 = vadd.f32 %v38, %v44
  %v51 = vadd.f32 %v39, %v44
  %v52 = vadd.f32 %v40, %v44
  %v53 = vadd.f32 %v41, %v44
  %v54 = vmax.f32 %v46, 0.0
  %v55 = vmax.f32 %v47, 0.0
  %v56 = vmax.f32 %v48, 0.0
  %v57 = vmax.f32 %v49, 0.0
  %v58 = vmax.f32 %v50, 0.0
  %v59 = vmax.f32 %v51, 0.0
  %v60 = vmax.f32 %v52, 0.0
  %v61 = vmax.f32 %v53, 0.0
  %62 = vst [vmem:[%s3] sm:$0xff] %v54
  %63 = vst [vmem:[%s3 + $0x8] sm:$0xff] %v55
  %64 = vst [vmem:[%s3 + $0x10] sm:$0xff] %v56
  %65 = vst [vmem:[%s3 + $0x18] sm:$0xff] %v57
  %66 = vst [vmem:[%s3 + $0x20] sm:$0xff] %v58
  %67 = vst [vmem:[%s3 + $0x28] sm:$0xff] %v59
  %68 = vst [vmem:[%s3 + $0x30] sm:$0xff] %v60
  %69 = vst [vmem:[%s3 + $0x38] sm:$0xff] %v61
  // Predicated region
  $region14: #{decoder_block_forward.7} parent=0 // pred_check
    _
  $region15: #{decoder_block_forward.7} parent=0 // pred_check_branch
    %71 = sbr.rel (0) target = $region17
  $region16: #{decoder_block_forward.7} parent=0 // pred_region
    _
  $region17: #{decoder_block_forward.7} parent=0 // pred_fallthru
    _
  // Predicated region
  $region18: #{decoder_block_forward.7} parent=0 // pred_check
    _
  $region19: #{decoder_block_forward.7} parent=0 // pred_check_branch
    %73 = sbr.rel (0) target = $region21
  $region20: #{decoder_block_forward.7} parent=0 // pred_region
    _
  $region21: #{decoder_block_forward.7} parent=0 // pred_fallthru
    _

// kernel: decoder_block_forward.6
$region0: #{decoder_block_forward.6}
  #allocation0 [shape = 'u32[]', space=smem, size = 0x4, offset = 0x4, fixed_abs, tag = 'smem constant byte address 0x4 - core index']
  #allocation1 [shape = 'u32[72,128]{1,0:T(1,128)}', space=vmem, size = 0x9000, scoped, tag = 'internal scratch']
  #allocation2 [shape = 'bf16[18,18,16]{2,1,0:T(8,128)(2,1)}', space=vmem, size = 0x1b000, scoped, tag = 'scratch operand']
  %s0 = inlined_call_operand.vmem [shape: bf16[2,16,16,16], index: 0, kind: input, shape index: {}]
  %s1 = inlined_call_operand.vmem [shape: f32[1,16], index: 1, kind: input, shape index: {}]
  %s2 = inlined_call_operand.vmem [shape: f32[1,16], index: 2, kind: input, shape index: {}]
  %s3 = inlined_call_operand.vmem [shape: bf16[9,16,16], index: 3, kind: input, shape index: {}]
  %s4 = inlined_call_operand.vmem [shape: f32[1,16], index: 4, kind: input, shape index: {}]
  %s5 = inlined_call_operand.vmem [shape: bf16[2,1,256,16], index: 5, kind: output, shape index: {0}]
  %s6 = inlined_call_operand.vmem [shape: f32[2,1,16], index: 6, kind: output, shape index: {1}]
  %s7 = inlined_call_operand.vmem [shape: f32[2,1,16], index: 7, kind: output, shape index: {2}]
  %8 = xla_tuple %s5, %s6, %s7
  %s9 = sld [smem:[#allocation0]]
  $region81: #{decoder_block_forward.6} parent=0
    _
  %s11 = ssub.s32 1, %s9
  %s12 = scalar_select 0, %s11, %s9
  loop: start=0, step=1, limit=4
  $region2: #{decoder_block_forward.6} parent=0 // loop_pre_header
    _
  $region3: #{decoder_block_forward.6} parent=0 // loop_header
    %s14 = sphi 0, %s18
    %p15 = scmp.ge.s32.totalorder %s14, 4
    %s21 = sphi 0, %s33
    %s22 = sphi 0, %s29
    %s23 = sphi 0, %s21
    %s24 = sphi 0, %s22
    %s25 = sphi 0, %s23
    %s26 = sphi 0, %s24
    %s36 = sphi 0, %s38
    %s39 = sphi 0, %s36
    %s40 = sphi 0, %s39
    %s56 = sphi 0, %s40
    %s60 = sphi 0, %s60
    %s62 = sphi 0, %s60
    %s63 = sphi 0, %s62
    %s77 = sphi 0, %s63
    %s81 = sphi 0, %s81
    %s83 = sphi 0, %s81
    %s84 = sphi 0, %s83
    %s98 = sphi 0, %s84
    %s102 = sphi 0, %s102
    %s104 = sphi 0, %s102
    %s105 = sphi 0, %s104
    %s119 = sphi 0, %s105
    %s123 = sphi 0, %s123
    %s125 = sphi 0, %s123
    %s126 = sphi 0, %s125
    %s140 = sphi 0, %s126
    %s148 = sphi 0, %s150
    %s151 = sphi 0, %s148
    %s152 = sphi 0, %s151
    %s168 = sphi 0, %s152
    %s174 = sphi 0, %s176
    %s177 = sphi 0, %s174
    %s178 = sphi 0, %s177
    %s194 = sphi 0, %s178
    %s200 = sphi 0, %s202
    %s203 = sphi 0, %s200
    %s204 = sphi 0, %s203
    %s220 = sphi 0, %s204
  $region4: #{decoder_block_forward.6} parent=0 // loop_header_branch
    %17 = sbr.rel (%p15) target = $region8
  $region5: #{decoder_block_forward.6} parent=0 // loop_body
    %s19 = ssub.s32 %s14, 1
    %s20 = ssub.s32 %s14, 2
    %s27 = sadd.s32 1, %s22
    %p28 = scmp.ge.s32.totalorder %s27, 1
    %s29 = scalar_select %p28, 0, %s27
    %s30 = sadd.s32 1, %s21
    %s31 = scalar_select %p28, %s30, %s21
    %p32 = scmp.ge.s32.totalorder %s31, 2
    %s33 = scalar_select %p32, 0, %s31
    %s34 = ssub.s32 %s21, %s33
    %p35 = scmp.eq.s32.totalorder %s34, 0
    %s37 = sadd.s32 %s36, 1
    %s38 = scalar_select %p35, %s36, %s37
    %p41 = pneg %p35
    %p42 = scmp.eq.s32.totalorder %s14, 1
    %p43 = por %p41, %p42
    %p44 = scmp.ne.s32.totalorder %s36, %s39
    %p45 = scmp.eq.s32.totalorder %s14, 0
    %p46 = por %p44, %p45
    %p47 = scmp.ne.s32.totalorder %s36, %s39
    %p48 = scmp.eq.s32.totalorder %s19, 1
    %p49 = por %p47, %p48
    %p50 = scmp.ne.s32.totalorder %s39, %s40
    %p51 = scmp.eq.s32.totalorder %s19, 0
    %p52 = por %p50, %p51
    %p53 = scmp.ne.s32.totalorder %s39, %s40
    %p54 = scmp.eq.s32.totalorder %s20, 1
    %p55 = por %p53, %p54
    %p57 = scmp.ne.s32.totalorder %s40, %s56
    %p58 = scmp.eq.s32.totalorder %s20, 0
    %p59 = por %p57, %p58
    %s61 = sadd.s32 %s60, 1
    %p64 = scmp.eq.s32.totalorder %s14, 1
    %p65 = scmp.ne.s32.totalorder %s60, %s62
    %p66 = scmp.eq.s32.totalorder %s14, 0
    %p67 = por %p65, %p66
    %p68 = scmp.ne.s32.totalorder %s60, %s62
    %p69 = scmp.eq.s32.totalorder %s19, 1
    %p70 = por %p68, %p69
    %p71 = scmp.ne.s32.totalorder %s62, %s63
    %p72 = scmp.eq.s32.totalorder %s19, 0
    %p73 = por %p71, %p72
    %p74 = scmp.ne.s32.totalorder %s62, %s63
    %p75 = scmp.eq.s32.totalorder %s20, 1
    %p76 = por %p74, %p75
    %p78 = scmp.ne.s32.totalorder %s63, %s77
    %p79 = scmp.eq.s32.totalorder %s20, 0
    %p80 = por %p78, %p79
    %s82 = sadd.s32 %s81, 1
    %p85 = scmp.eq.s32.totalorder %s14, 1
    %p86 = scmp.ne.s32.totalorder %s81, %s83
    %p87 = scmp.eq.s32.totalorder %s14, 0
    %p88 = por %p86, %p87
    %p89 = scmp.ne.s32.totalorder %s81, %s83
    %p90 = scmp.eq.s32.totalorder %s19, 1
    %p91 = por %p89, %p90
    %p92 = scmp.ne.s32.totalorder %s83, %s84
    %p93 = scmp.eq.s32.totalorder %s19, 0
    %p94 = por %p92, %p93
    %p95 = scmp.ne.s32.totalorder %s83, %s84
    %p96 = scmp.eq.s32.totalorder %s20, 1
    %p97 = por %p95, %p96
    %p99 = scmp.ne.s32.totalorder %s84, %s98
    %p100 = scmp.eq.s32.totalorder %s20, 0
    %p101 = por %p99, %p100
    %s103 = sadd.s32 %s102, 1
    %p106 = scmp.eq.s32.totalorder %s14, 1
    %p107 = scmp.ne.s32.totalorder %s102, %s104
    %p108 = scmp.eq.s32.totalorder %s14, 0
    %p109 = por %p107, %p108
    %p110 = scmp.ne.s32.totalorder %s102, %s104
    %p111 = scmp.eq.s32.totalorder %s19, 1
    %p112 = por %p110, %p111
    %p113 = scmp.ne.s32.totalorder %s104, %s105
    %p114 = scmp.eq.s32.totalorder %s19, 0
    %p115 = por %p113, %p114
    %p116 = scmp.ne.s32.totalorder %s104, %s105
    %p117 = scmp.eq.s32.totalorder %s20, 1
    %p118 = por %p116, %p117
    %p120 = scmp.ne.s32.totalorder %s105, %s119
    %p121 = scmp.eq.s32.totalorder %s20, 0
    %p122 = por %p120, %p121
    %s124 = sadd.s32 %s123, 1
    %p127 = scmp.eq.s32.totalorder %s14, 1
    %p128 = scmp.ne.s32.totalorder %s123, %s125
    %p129 = scmp.eq.s32.totalorder %s14, 0
    %p130 = por %p128, %p129
    %p131 = scmp.ne.s32.totalorder %s123, %s125
    %p132 = scmp.eq.s32.totalorder %s19, 1
    %p133 = por %p131, %p132
    %p134 = scmp.ne.s32.totalorder %s125, %s126
    %p135 = scmp.eq.s32.totalorder %s19, 0
    %p136 = por %p134, %p135
    %p137 = scmp.ne.s32.totalorder %s125, %s126
    %p138 = scmp.eq.s32.totalorder %s20, 1
    %p139 = por %p137, %p138
    %p141 = scmp.ne.s32.totalorder %s126, %s140
    %p142 = scmp.eq.s32.totalorder %s20, 0
    %p143 = por %p141, %p142
    %s144 = ssub.s32 %s21, %s33
    %s145 = ssub.s32 %s22, %s29
    %s146 = sor.u32 %s144, %s145
    %p147 = scmp.eq.s32.totalorder %s146, 0
    %s149 = sadd.s32 %s148, 1
    %s150 = scalar_select %p147, %s148, %s149
    %p153 = pneg %p147
    %p154 = scmp.eq.s32.totalorder %s14, 1
    %p155 = por %p153, %p154
    %p156 = scmp.ne.s32.totalorder %s148, %s151
    %p157 = scmp.eq.s32.totalorder %s14, 0
    %p158 = por %p156, %p157
    %p159 = scmp.ne.s32.totalorder %s148, %s151
    %p160 = scmp.eq.s32.totalorder %s19, 1
    %p161 = por %p159, %p160
    %p162 = scmp.ne.s32.totalorder %s151, %s152
    %p163 = scmp.eq.s32.totalorder %s19, 0
    %p164 = por %p162, %p163
    %p165 = scmp.ne.s32.totalorder %s151, %s152
    %p166 = scmp.eq.s32.totalorder %s20, 1
    %p167 = por %p165, %p166
    %p169 = scmp.ne.s32.totalorder %s152, %s168
    %p170 = scmp.eq.s32.totalorder %s20, 0
    %p171 = por %p169, %p170
    %s172 = ssub.s32 %s21, %s33
    %p173 = scmp.eq.s32.totalorder %s172, 0
    %s175 = sadd.s32 %s174, 1
    %s176 = scalar_select %p173, %s174, %s175
    %p179 = pneg %p173
    %p180 = scmp.eq.s32.totalorder %s14, 1
    %p181 = por %p179, %p180
    %p182 = scmp.ne.s32.totalorder %s174, %s177
    %p183 = scmp.eq.s32.totalorder %s14, 0
    %p184 = por %p182, %p183
    %p185 = scmp.ne.s32.totalorder %s174, %s177
    %p186 = scmp.eq.s32.totalorder %s19, 1
    %p187 = por %p185, %p186
    %p188 = scmp.ne.s32.totalorder %s177, %s178
    %p189 = scmp.eq.s32.totalorder %s19, 0
    %p190 = por %p188, %p189
    %p191 = scmp.ne.s32.totalorder %s177, %s178
    %p192 = scmp.eq.s32.totalorder %s20, 1
    %p193 = por %p191, %p192
    %p195 = scmp.ne.s32.totalorder %s178, %s194
    %p196 = scmp.eq.s32.totalorder %s20, 0
    %p197 = por %p195, %p196
    %s198 = ssub.s32 %s21, %s33
    %p199 = scmp.eq.s32.totalorder %s198, 0
    %s201 = sadd.s32 %s200, 1
    %s202 = scalar_select %p199, %s200, %s201
    %p205 = pneg %p199
    %p206 = scmp.eq.s32.totalorder %s14, 1
    %p207 = por %p205, %p206
    %p208 = scmp.ne.s32.totalorder %s200, %s203
    %p209 = scmp.eq.s32.totalorder %s14, 0
    %p210 = por %p208, %p209
    %p211 = scmp.ne.s32.totalorder %s200, %s203
    %p212 = scmp.eq.s32.totalorder %s19, 1
    %p213 = por %p211, %p212
    %p214 = scmp.ne.s32.totalorder %s203, %s204
    %p215 = scmp.eq.s32.totalorder %s19, 0
    %p216 = por %p214, %p215
    %p217 = scmp.ne.s32.totalorder %s203, %s204
    %p218 = scmp.eq.s32.totalorder %s20, 1
    %p219 = por %p217, %p218
    %p221 = scmp.ne.s32.totalorder %s204, %s220
    %p222 = scmp.eq.s32.totalorder %s20, 0
    %p223 = por %p221, %p222
    %p224 = scmp.le.s32.totalorder 1, %s14
    %p225 = scmp.lt.s32.totalorder %s14, 3
    %p226 = pnand %p224, %p225
    %p227 = pneg %p226
    // Predicated region
    $region9: #{decoder_block_forward.6} parent=5 // pred_check
      _
    $region10: #{decoder_block_forward.6} parent=5 // pred_check_branch
      %229 = sbr.rel (%p226) target = $region12
    $region11: #{decoder_block_forward.6} parent=5 // pred_region
      %s230 = ssub.s32 %s14, 1
      // Predicated region
      $region13: #{decoder_block_forward.6} parent=11 // pred_check
        %p231 = pneg %p73
      $region14: #{decoder_block_forward.6} parent=11 // pred_check_branch
        %233 = sbr.rel (%p231) target = $region16
      $region15: #{decoder_block_forward.6} parent=11 // pred_region
        _
      $region16: #{decoder_block_forward.6} parent=11 // pred_fallthru
        _
      // Predicated region
      $region17: #{decoder_block_forward.6} parent=11 // pred_check
        %p234 = pneg %p94
      $region18: #{decoder_block_forward.6} parent=11 // pred_check_branch
        %236 = sbr.rel (%p234) target = $region20
      $region19: #{decoder_block_forward.6} parent=11 // pred_region
        _
      $region20: #{decoder_block_forward.6} parent=11 // pred_fallthru
        _
      // Predicated region
      $region21: #{decoder_block_forward.6} parent=11 // pred_check
        %p237 = pneg %p115
      $region22: #{decoder_block_forward.6} parent=11 // pred_check_branch
        %239 = sbr.rel (%p237) target = $region24
      $region23: #{decoder_block_forward.6} parent=11 // pred_region
        _
      $region24: #{decoder_block_forward.6} parent=11 // pred_fallthru
        _
      // Predicated region
      $region25: #{decoder_block_forward.6} parent=11 // pred_check
        %p240 = pneg %p136
      $region26: #{decoder_block_forward.6} parent=11 // pred_check_branch
        %242 = sbr.rel (%p240) target = $region28
      $region27: #{decoder_block_forward.6} parent=11 // pred_region
        _
      $region28: #{decoder_block_forward.6} parent=11 // pred_fallthru
        _
    $region12: #{decoder_block_forward.6} parent=5 // pred_fallthru
      _
    %p243 = scmp.lt.s32.totalorder %s14, 2
    // Predicated region
    $region29: #{decoder_block_forward.6} parent=5 // pred_check
      %p244 = pneg %p243
    $region30: #{decoder_block_forward.6} parent=5 // pred_check_branch
      %246 = sbr.rel (%p244) target = $region32
    $region31: #{decoder_block_forward.6} parent=5 // pred_region
      // Predicated region
      $region33: #{decoder_block_forward.6} parent=31 // pred_check
        %p247 = pneg %p46
      $region34: #{decoder_block_forward.6} parent=31 // pred_check_branch
        %249 = sbr.rel (%p247) target = $region36
      $region35: #{decoder_block_forward.6} parent=31 // pred_region
        %p250 = scmp.lt.s32.totalorder %s21, 1
        %s251 = scalar_select %p250, %s21, 1
        %s252 = smul.addr %s251, 32
        %s253 = smul.addr %s252, 4
        %s254 = scalar_lea.vmem %s0, %s253
      $region36: #{decoder_block_forward.6} parent=31 // pred_fallthru
        _
    $region32: #{decoder_block_forward.6} parent=5 // pred_fallthru
      _
    %p255 = scmp.le.s32.totalorder 1, %s14
    %p256 = scmp.lt.s32.totalorder %s14, 3
    %p257 = pnand %p255, %p256
    %p258 = pneg %p257
    // Predicated region
    $region37: #{decoder_block_forward.6} parent=5 // pred_check
      _
    $region38: #{decoder_block_forward.6} parent=5 // pred_check_branch
      %260 = sbr.rel (%p257) target = $region40
    $region39: #{decoder_block_forward.6} parent=5 // pred_region
      %s261 = ssub.s32 %s14, 1
      %p262 = scmp.lt.s32.totalorder %s23, 1
      %s263 = scalar_select %p262, %s23, 1
      %s264 = smul.addr %s263, 32
      %s265 = smul.addr %s264, 4
      %s266 = scalar_lea.vmem %s0, %s265
      %p267 = pneg %p52
      %p268 = pneg %p49
      %p269 = pneg %p73
      %p270 = pneg %p70
      %p271 = pneg %p94
      %p272 = pneg %p91
      %p273 = pneg %p115
      %p274 = pneg %p112
      %p275 = pneg %p136
      %p276 = pneg %p133
      %p277 = pneg %p164
      %p278 = pneg %p161
      %p279 = scmp.lt.s32.totalorder %s23, 1
      %s280 = scalar_select %p279, %s23, 1
      %p281 = scmp.lt.s32.totalorder %s24, 0
      %s282 = scalar_select %p281, %s24, 0
      %s283 = smul.addr %s282, 32
      %s284 = smul.addr %s280, 32
      %s285 = sadd.s32 %s283, %s284
      %s286 = smul.addr %s285, 4
      %s287 = scalar_lea.vmem %s5, %s286
      %p288 = pneg %p190
      %p289 = pneg %p187
      %p290 = scmp.lt.s32.totalorder %s23, 1
      %s291 = scalar_select %p290, %s23, 1
      %s292 = scalar_lea.vmem %s6, %s291
      %p293 = pneg %p216
      %p294 = pneg %p213
      %p295 = scmp.lt.s32.totalorder %s23, 1
      %s296 = scalar_select %p295, %s23, 1
      %s297 = scalar_lea.vmem %s7, %s296
      %p298 = scmp.lt.s32.totalorder %s23, 1
      %s299 = scalar_select %p298, %s23, 1
      %s300 = smul.addr %s299, 32
      %s301 = smul.addr %s300, 4
      %s302 = scalar_lea.vmem %s0, %s301
      %p303 = scmp.lt.s32.totalorder %s23, 1
      %s304 = scalar_select %p303, %s23, 1
      %p305 = scmp.lt.s32.totalorder %s24, 0
      %s306 = scalar_select %p305, %s24, 0
      %s307 = smul.addr %s306, 32
      %s308 = smul.addr %s304, 32
      %s309 = sadd.s32 %s307, %s308
      %s310 = smul.addr %s309, 4
      %s311 = scalar_lea.vmem %s5, %s310
      %p312 = scmp.lt.s32.totalorder %s23, 1
      %s313 = scalar_select %p312, %s23, 1
      %s314 = scalar_lea.vmem %s6, %s313
      %p315 = scmp.lt.s32.totalorder %s23, 1
      %s316 = scalar_select %p315, %s23, 1
      %s317 = scalar_lea.vmem %s7, %s316
      %s319 = smul.u32 %s24, 16
      %p320 = scmp.eq.s32.totalorder %s24, 0
      // Predicated region
      $region41: #{decoder_block_forward.6} parent=39 // pred_check
        %p321 = pneg %p320
      $region42: #{decoder_block_forward.6} parent=39 // pred_check_branch
        %323 = sbr.rel (%p321) target = $region44
      $region43: #{decoder_block_forward.6} parent=39 // pred_region
        %vm324 = vcmask 125952
        %325 = vst.msk [vmem:[#allocation2] sm:$0xf] %vm324, 0
        %326 = vst.msk [vmem:[#allocation2 + $0x4] sm:$0xf] %vm324, 0
        %vm327 = vcmask 122880
        %328 = vst.msk [vmem:[#allocation2 + $0x8] sm:$0x1] %vm327, 0
        %s329 = scalar_lea.vmem [#allocation2], 204
        %330 = vst.msk [vmem:[%s329] sm:$0xf] %vm324, 0
        %331 = vst.msk [vmem:[%s329 + $0x4] sm:$0xf] %vm324, 0
        %332 = vst.msk [vmem:[%s329 + $0x8] sm:$0x1] %vm327, 0
        %vm333 = vcmask 122880
        %vm334 = vsmask.f32 256
        %vm335 = vmand %vm333, %vm334
        %v336 = vld [vmem:[#allocation2] sm:$0x1]
        %v337 = vsel %vm335, 0, %v336
        %338 = vst [vmem:[#allocation2] sm:$0x1] %v337
        %v339 = vld [vmem:[#allocation2 + $0xc] sm:$0x1]
        %v340 = vsel %vm335, 0, %v339
        %341 = vst [vmem:[#allocation2 + $0xc] sm:$0x1] %v340
        %v342 = vld [vmem:[#allocation2 + $0x18] sm:$0x1]
        %v343 = vsel %vm335, 0, %v342
        %344 = vst [vmem:[#allocation2 + $0x18] sm:$0x1] %v343
        %v345 = vld [vmem:[#allocation2 + $0x24] sm:$0x1]
        %v346 = vsel %vm335, 0, %v345
        %347 = vst [vmem:[#allocation2 + $0x24] sm:$0x1] %v346
        %v348 = vld [vmem:[#allocation2 + $0x30] sm:$0x1]
        %v349 = vsel %vm335, 0, %v348
        %350 = vst [vmem:[#allocation2 + $0x30] sm:$0x1] %v349
        %v351 = vld [vmem:[#allocation2 + $0x3c] sm:$0x1]
        %v352 = vsel %vm335, 0, %v351
        %353 = vst [vmem:[#allocation2 + $0x3c] sm:$0x1] %v352
        %v354 = vld [vmem:[#allocation2 + $0x48] sm:$0x1]
        %v355 = vsel %vm335, 0, %v354
        %356 = vst [vmem:[#allocation2 + $0x48] sm:$0x1] %v355
        %v357 = vld [vmem:[#allocation2 + $0x54] sm:$0x1]
        %v358 = vsel %vm335, 0, %v357
        %359 = vst [vmem:[#allocation2 + $0x54] sm:$0x1] %v358
        %v360 = vld [vmem:[#allocation2 + $0x60] sm:$0x1]
        %v361 = vsel %vm335, 0, %v360
        %362 = vst [vmem:[#allocation2 + $0x60] sm:$0x1] %v361
        %v363 = vld [vmem:[#allocation2 + $0x6c] sm:$0x1]
        %v364 = vsel %vm335, 0, %v363
        %365 = vst [vmem:[#allocation2 + $0x6c] sm:$0x1] %v364
        %v366 = vld [vmem:[#allocation2 + $0x78] sm:$0x1]
        %v367 = vsel %vm335, 0, %v366
        %368 = vst [vmem:[#allocation2 + $0x78] sm:$0x1] %v367
        %v369 = vld [vmem:[#allocation2 + $0x84] sm:$0x1]
        %v370 = vsel %vm335, 0, %v369
        %371 = vst [vmem:[#allocation2 + $0x84] sm:$0x1] %v370
        %v372 = vld [vmem:[#allocation2 + $0x90] sm:$0x1]
        %v373 = vsel %vm335, 0, %v372
        %374 = vst [vmem:[#allocation2 + $0x90] sm:$0x1] %v373
        %v375 = vld [vmem:[#allocation2 + $0x9c] sm:$0x1]
        %v376 = vsel %vm335, 0, %v375
        %377 = vst [vmem:[#allocation2 + $0x9c] sm:$0x1] %v376
        %v378 = vld [vmem:[#allocation2 + $0xa8] sm:$0x1]
        %v379 = vsel %vm335, 0, %v378
        %380 = vst [vmem:[#allocation2 + $0xa8] sm:$0x1] %v379
        %v381 = vld [vmem:[#allocation2 + $0xb4] sm:$0x1]
        %v382 = vsel %vm335, 0, %v381
        %383 = vst [vmem:[#allocation2 + $0xb4] sm:$0x1] %v382
        %v384 = vld [vmem:[#allocation2 + $0xc0] sm:$0x1]
        %v385 = vsel %vm335, 0, %v384
        %386 = vst [vmem:[#allocation2 + $0xc0] sm:$0x1] %v385
        %v387 = vld [vmem:[#allocation2 + $0xcc] sm:$0x1]
        %v388 = vsel %vm335, 0, %v387
        %389 = vst [vmem:[#allocation2 + $0xcc] sm:$0x1] %v388
        %vm390 = vsmask.f32 7938
        %vm391 = vmand %vm333, %vm390
        %v392 = vld [vmem:[#allocation2 + $0x8] sm:$0x1]
        %v393 = vsel %vm391, 0, %v392
        %394 = vst [vmem:[#allocation2 + $0x8] sm:$0x1] %v393
        %v395 = vld [vmem:[#allocation2 + $0x14] sm:$0x1]
        %v396 = vsel %vm391, 0, %v395
        %397 = vst [vmem:[#allocation2 + $0x14] sm:$0x1] %v396
        %v398 = vld [vmem:[#allocation2 + $0x20] sm:$0x1]
        %v399 = vsel %vm391, 0, %v398
        %400 = vst [vmem:[#allocation2 + $0x20] sm:$0x1] %v399
        %v401 = vld [vmem:[#allocation2 + $0x2c] sm:$0x1]
        %v402 = vsel %vm391, 0, %v401
        %403 = vst [vmem:[#allocation2 + $0x2c] sm:$0x1] %v402
        %v404 = vld [vmem:[#allocation2 + $0x38] sm:$0x1]
        %v405 = vsel %vm391, 0, %v404
        %406 = vst [vmem:[#allocation2 + $0x38] sm:$0x1] %v405
        %v407 = vld [vmem:[#allocation2 + $0x44] sm:$0x1]
        %v408 = vsel %vm391, 0, %v407
        %409 = vst [vmem:[#allocation2 + $0x44] sm:$0x1] %v408
        %v410 = vld [vmem:[#allocation2 + $0x50] sm:$0x1]
        %v411 = vsel %vm391, 0, %v410
        %412 = vst [vmem:[#allocation2 + $0x50] sm:$0x1] %v411
        %v413 = vld [vmem:[#allocation2 + $0x5c] sm:$0x1]
        %v414 = vsel %vm391, 0, %v413
        %415 = vst [vmem:[#allocation2 + $0x5c] sm:$0x1] %v414
        %v416 = vld [vmem:[#allocation2 + $0x68] sm:$0x1]
        %v417 = vsel %vm391, 0, %v416
        %418 = vst [vmem:[#allocation2 + $0x68] sm:$0x1] %v417
        %v419 = vld [vmem:[#allocation2 + $0x74] sm:$0x1]
        %v420 = vsel %vm391, 0, %v419
        %421 = vst [vmem:[#allocation2 + $0x74] sm:$0x1] %v420
        %v422 = vld [vmem:[#allocation2 + $0x80] sm:$0x1]
        %v423 = vsel %vm391, 0, %v422
        %424 = vst [vmem:[#allocation2 + $0x80] sm:$0x1] %v423
        %v425 = vld [vmem:[#allocation2 + $0x8c] sm:$0x1]
        %v426 = vsel %vm391, 0, %v425
        %427 = vst [vmem:[#allocation2 + $0x8c] sm:$0x1] %v426
        %v428 = vld [vmem:[#allocation2 + $0x98] sm:$0x1]
        %v429 = vsel %vm391, 0, %v428
        %430 = vst [vmem:[#allocation2 + $0x98] sm:$0x1] %v429
        %v431 = vld [vmem:[#allocation2 + $0xa4] sm:$0x1]
        %v432 = vsel %vm391, 0, %v431
        %433 = vst [vmem:[#allocation2 + $0xa4] sm:$0x1] %v432
        %v434 = vld [vmem:[#allocation2 + $0xb0] sm:$0x1]
        %v435 = vsel %vm391, 0, %v434
        %436 = vst [vmem:[#allocation2 + $0xb0] sm:$0x1] %v435
        %v437 = vld [vmem:[#allocation2 + $0xbc] sm:$0x1]
        %v438 = vsel %vm391, 0, %v437
        %439 = vst [vmem:[#allocation2 + $0xbc] sm:$0x1] %v438
        %v440 = vld [vmem:[#allocation2 + $0xc8] sm:$0x1]
        %v441 = vsel %vm391, 0, %v440
        %442 = vst [vmem:[#allocation2 + $0xc8] sm:$0x1] %v441
        %v443 = vld [vmem:[#allocation2 + $0xd4] sm:$0x1]
        %v444 = vsel %vm391, 0, %v443
        %445 = vst [vmem:[#allocation2 + $0xd4] sm:$0x1] %v444
        %v446 = vld [vmem:[%s302] sm:$0xf]
        %v447 = vld [vmem:[%s302 + $0x4] sm:$0xf]
        %v448 = vld [vmem:[%s302 + $0x8] sm:$0xf]
        %v449 = vld [vmem:[%s302 + $0xc] sm:$0xf]
        %v450 = vld [vmem:[%s302 + $0x10] sm:$0xf]
        %v451 = vld [vmem:[%s302 + $0x14] sm:$0xf]
        %v452 = vld [vmem:[%s302 + $0x18] sm:$0xf]
        %v453 = vld [vmem:[%s302 + $0x1c] sm:$0xf]
        %v454 = vld [vmem:[%s302 + $0x20] sm:$0xf]
        %v455 = vld [vmem:[%s302 + $0x24] sm:$0xf]
        %v456 = vld [vmem:[%s302 + $0x28] sm:$0xf]
        %v457 = vld [vmem:[%s302 + $0x2c] sm:$0xf]
        %v458 = vld [vmem:[%s302 + $0x30] sm:$0xf]
        %v459 = vld [vmem:[%s302 + $0x34] sm:$0xf]
        %v460 = vld [vmem:[%s302 + $0x38] sm:$0xf]
        %v461 = vld [vmem:[%s302 + $0x3c] sm:$0xf]
        %v462 = vld [vmem:[%s302 + $0x40] sm:$0xf]
        %v463 = vld [vmem:[%s302 + $0x44] sm:$0xf]
        %v464 = vld [vmem:[%s302 + $0x48] sm:$0xf]
        %v465 = vld [vmem:[%s302 + $0x4c] sm:$0xf]
        %v466 = vld [vmem:[%s302 + $0x50] sm:$0xf]
        %v467 = vld [vmem:[%s302 + $0x54] sm:$0xf]
        %v468 = vld [vmem:[%s302 + $0x58] sm:$0xf]
        %v469 = vld [vmem:[%s302 + $0x5c] sm:$0xf]
        %v470 = vld [vmem:[%s302 + $0x60] sm:$0xf]
        %v471 = vld [vmem:[%s302 + $0x64] sm:$0xf]
        %v472 = vld [vmem:[%s302 + $0x68] sm:$0xf]
        %v473 = vld [vmem:[%s302 + $0x6c] sm:$0xf]
        %v474 = vld [vmem:[%s302 + $0x70] sm:$0xf]
        %v475 = vld [vmem:[%s302 + $0x74] sm:$0xf]
        %v476 = vld [vmem:[%s302 + $0x78] sm:$0xf]
        %v477 = vld [vmem:[%s302 + $0x7c] sm:$0xf]
        %v478 = vunpack.c.l.bf16 %v446
        %v479 = vunpack.c.l.bf16 %v447
        %v480 = vunpack.c.l.bf16 %v448
        %v481 = vunpack.c.l.bf16 %v449
        %v482 = vunpack.c.l.bf16 %v450
        %v483 = vunpack.c.l.bf16 %v451
        %v484 = vunpack.c.l.bf16 %v452
        %v485 = vunpack.c.l.bf16 %v453
        %v486 = vunpack.c.l.bf16 %v454
        %v487 = vunpack.c.l.bf16 %v455
        %v488 = vunpack.c.l.bf16 %v456
        %v489 = vunpack.c.l.bf16 %v457
        %v490 = vunpack.c.l.bf16 %v458
        %v491 = vunpack.c.l.bf16 %v459
        %v492 = vunpack.c.l.bf16 %v460
        %v493 = vunpack.c.l.bf16 %v461
        %v494 = vunpack.c.l.bf16 %v462
        %v495 = vunpack.c.l.bf16 %v463
        %v496 = vunpack.c.l.bf16 %v464
        %v497 = vunpack.c.l.bf16 %v465
        %v498 = vunpack.c.l.bf16 %v466
        %v499 = vunpack.c.l.bf16 %v467
        %v500 = vunpack.c.l.bf16 %v468
        %v501 = vunpack.c.l.bf16 %v469
        %v502 = vunpack.c.l.bf16 %v470
        %v503 = vunpack.c.l.bf16 %v471
        %v504 = vunpack.c.l.bf16 %v472
        %v505 = vunpack.c.l.bf16 %v473
        %v506 = vunpack.c.l.bf16 %v474
        %v507 = vunpack.c.l.bf16 %v475
        %v508 = vunpack.c.l.bf16 %v476
        %v509 = vunpack.c.l.bf16 %v477
        %v510 = vld [vmem:[%s1] sm:$0x1]
        %v512 = vperm.slane %v510, 0
        %v514 = vmul.f32 %v478, %v512
        %v515 = vmul.f32 %v479, %v512
        %v516 = vmul.f32 %v480, %v512
        %v517 = vmul.f32 %v481, %v512
        %v518 = vmul.f32 %v482, %v512
        %v519 = vmul.f32 %v483, %v512
        %v520 = vmul.f32 %v484, %v512
        %v521 = vmul.f32 %v485, %v512
        %v522 = vmul.f32 %v486, %v512
        %v523 = vmul.f32 %v487, %v512
        %v524 = vmul.f32 %v488, %v512
        %v525 = vmul.f32 %v489, %v512
        %v526 = vmul.f32 %v490, %v512
        %v527 = vmul.f32 %v491, %v512
        %v528 = vmul.f32 %v492, %v512
        %v529 = vmul.f32 %v493, %v512
        %v530 = vmul.f32 %v494, %v512
        %v531 = vmul.f32 %v495, %v512
        %v532 = vmul.f32 %v496, %v512
        %v533 = vmul.f32 %v497, %v512
        %v534 = vmul.f32 %v498, %v512
        %v535 = vmul.f32 %v499, %v512
        %v536 = vmul.f32 %v500, %v512
        %v537 = vmul.f32 %v501, %v512
        %v538 = vmul.f32 %v502, %v512
        %v539 = vmul.f32 %v503, %v512
        %v540 = vmul.f32 %v504, %v512
        %v541 = vmul.f32 %v505, %v512
        %v542 = vmul.f32 %v506, %v512
        %v543 = vmul.f32 %v507, %v512
        %v544 = vmul.f32 %v508, %v512
        %v545 = vmul.f32 %v509, %v512
        %v546 = vld [vmem:[%s2] sm:$0x1]
        %v548 = vperm.slane %v546, 0
        %v550 = vadd.f32 %v514, %v548
        %v551 = vadd.f32 %v515, %v548
        %v552 = vadd.f32 %v516, %v548
        %v553 = vadd.f32 %v517, %v548
        %v554 = vadd.f32 %v518, %v548
        %v555 = vadd.f32 %v519, %v548
        %v556 = vadd.f32 %v520, %v548
        %v557 = vadd.f32 %v521, %v548
        %v558 = vadd.f32 %v522, %v548
        %v559 = vadd.f32 %v523, %v548
        %v560 = vadd.f32 %v524, %v548
        %v561 = vadd.f32 %v525, %v548
        %v562 = vadd.f32 %v526, %v548
        %v563 = vadd.f32 %v527, %v548
        %v564 = vadd.f32 %v528, %v548
        %v565 = vadd.f32 %v529, %v548
        %v566 = vadd.f32 %v530, %v548
        %v567 = vadd.f32 %v531, %v548
        %v568 = vadd.f32 %v532, %v548
        %v569 = vadd.f32 %v533, %v548
        %v570 = vadd.f32 %v534, %v548
        %v571 = vadd.f32 %v535, %v548
        %v572 = vadd.f32 %v536, %v548
        %v573 = vadd.f32 %v537, %v548
        %v574 = vadd.f32 %v538, %v548
        %v575 = vadd.f32 %v539, %v548
        %v576 = vadd.f32 %v540, %v548
        %v577 = vadd.f32 %v541, %v548
        %v578 = vadd.f32 %v542, %v548
        %v579 = vadd.f32 %v543, %v548
        %v580 = vadd.f32 %v544, %v548
        %v581 = vadd.f32 %v545, %v548
        %v582 = vmax.f32 %v550, 0.0
        %v583 = vmax.f32 %v551, 0.0
        %v584 = vmax.f32 %v552, 0.0
        %v585 = vmax.f32 %v553, 0.0
        %v586 = vmax.f32 %v554, 0.0
        %v587 = vmax.f32 %v555, 0.0
        %v588 = vmax.f32 %v556, 0.0
        %v589 = vmax.f32 %v557, 0.0
        %v590 = vmax.f32 %v558, 0.0
        %v591 = vmax.f32 %v559, 0.0
        %v592 = vmax.f32 %v560, 0.0
        %v593 = vmax.f32 %v561, 0.0
        %v594 = vmax.f32 %v562, 0.0
        %v595 = vmax.f32 %v563, 0.0
        %v596 = vmax.f32 %v564, 0.0
        %v597 = vmax.f32 %v565, 0.0
        %v598 = vmax.f32 %v566, 0.0
        %v599 = vmax.f32 %v567, 0.0
        %v600 = vmax.f32 %v568, 0.0
        %v601 = vmax.f32 %v569, 0.0
        %v602 = vmax.f32 %v570, 0.0
        %v603 = vmax.f32 %v571, 0.0
        %v604 = vmax.f32 %v572, 0.0
        %v605 = vmax.f32 %v573, 0.0
        %v606 = vmax.f32 %v574, 0.0
        %v607 = vmax.f32 %v575, 0.0
        %v608 = vmax.f32 %v576, 0.0
        %v609 = vmax.f32 %v577, 0.0
        %v610 = vmax.f32 %v578, 0.0
        %v611 = vmax.f32 %v579, 0.0
        %v612 = vmax.f32 %v580, 0.0
        %v613 = vmax.f32 %v581, 0.0
        %v614 = vpack.c.bf16 %v582, %v582
        %v615 = vpack.c.bf16 %v583, %v583
        %v616 = vpack.c.bf16 %v584, %v584
        %v617 = vpack.c.bf16 %v585, %v585
        %v618 = vpack.c.bf16 %v586, %v586
        %v619 = vpack.c.bf16 %v587, %v587
        %v620 = vpack.c.bf16 %v588, %v588
        %v621 = vpack.c.bf16 %v589, %v589
        %v622 = vpack.c.bf16 %v590, %v590
        %v623 = vpack.c.bf16 %v591, %v591
        %v624 = vpack.c.bf16 %v592, %v592
        %v625 = vpack.c.bf16 %v593, %v593
        %v626 = vpack.c.bf16 %v594, %v594
        %v627 = vpack.c.bf16 %v595, %v595
        %v628 = vpack.c.bf16 %v596, %v596
        %v629 = vpack.c.bf16 %v597, %v597
        %v630 = vpack.c.bf16 %v598, %v598
        %v631 = vpack.c.bf16 %v599, %v599
        %v632 = vpack.c.bf16 %v600, %v600
        %v633 = vpack.c.bf16 %v601, %v601
        %v634 = vpack.c.bf16 %v602, %v602
        %v635 = vpack.c.bf16 %v603, %v603
        %v636 = vpack.c.bf16 %v604, %v604
        %v637 = vpack.c.bf16 %v605, %v605
        %v638 = vpack.c.bf16 %v606, %v606
        %v639 = vpack.c.bf16 %v607, %v607
        %v640 = vpack.c.bf16 %v608, %v608
        %v641 = vpack.c.bf16 %v609, %v609
        %v642 = vpack.c.bf16 %v610, %v610
        %v643 = vpack.c.bf16 %v611, %v611
        %v644 = vpack.c.bf16 %v612, %v612
        %v645 = vpack.c.bf16 %v613, %v613
        %vm646 = vsmask.f32 4368
        %vm647 = vmor %vm334, %vm646
        %v649 = vshrl.u32 %v614, 16
        %v651 = vrot.slane %v649, 7
        %v652 = vshll.u32 %v614, 16
        %v654 = vor.u32 %v651, %v652
        %v655 = vrot.slane %v651, 4
        %v657 = vshrl.u32 %v615, 16
        %v659 = vrot.slane %v657, 7
        %v660 = vshll.u32 %v615, 16
        %v662 = vor.u32 %v659, %v660
        %v663 = vsel %vm647, %v655, %v662
        %v664 = vrot.slane %v659, 4
        %v666 = vshrl.u32 %v616, 16
        %v668 = vrot.slane %v666, 7
        %v669 = vshll.u32 %v616, 16
        %v671 = vor.u32 %v668, %v669
        %v672 = vrot.slane %v668, 4
        %v674 = vshrl.u32 %v617, 16
        %v676 = vrot.slane %v674, 7
        %v677 = vshll.u32 %v617, 16
        %v679 = vor.u32 %v676, %v677
        %v680 = vsel %vm647, %v672, %v679
        %v681 = vrot.slane %v676, 4
        %v683 = vshrl.u32 %v618, 16
        %v685 = vrot.slane %v683, 7
        %v686 = vshll.u32 %v618, 16
        %v688 = vor.u32 %v685, %v686
        %v689 = vrot.slane %v685, 4
        %v691 = vshrl.u32 %v619, 16
        %v693 = vrot.slane %v691, 7
        %v694 = vshll.u32 %v619, 16
        %v696 = vor.u32 %v693, %v694
        %v697 = vsel %vm647, %v689, %v696
        %v698 = vrot.slane %v693, 4
        %v700 = vshrl.u32 %v620, 16
        %v702 = vrot.slane %v700, 7
        %v703 = vshll.u32 %v620, 16
        %v705 = vor.u32 %v702, %v703
        %v706 = vrot.slane %v702, 4
        %v708 = vshrl.u32 %v621, 16
        %v710 = vrot.slane %v708, 7
        %v711 = vshll.u32 %v621, 16
        %v713 = vor.u32 %v710, %v711
        %v714 = vsel %vm647, %v706, %v713
        %v715 = vrot.slane %v710, 4
        %v717 = vshrl.u32 %v622, 16
        %v719 = vrot.slane %v717, 7
        %v720 = vshll.u32 %v622, 16
        %v722 = vor.u32 %v719, %v720
        %v723 = vrot.slane %v719, 4
        %v725 = vshrl.u32 %v623, 16
        %v727 = vrot.slane %v725, 7
        %v728 = vshll.u32 %v623, 16
        %v730 = vor.u32 %v727, %v728
        %v731 = vsel %vm647, %v723, %v730
        %v732 = vrot.slane %v727, 4
        %v734 = vshrl.u32 %v624, 16
        %v736 = vrot.slane %v734, 7
        %v737 = vshll.u32 %v624, 16
        %v739 = vor.u32 %v736, %v737
        %v740 = vrot.slane %v736, 4
        %v742 = vshrl.u32 %v625, 16
        %v744 = vrot.slane %v742, 7
        %v745 = vshll.u32 %v625, 16
        %v747 = vor.u32 %v744, %v745
        %v748 = vsel %vm647, %v740, %v747
        %v749 = vrot.slane %v744, 4
        %v751 = vshrl.u32 %v626, 16
        %v753 = vrot.slane %v751, 7
        %v754 = vshll.u32 %v626, 16
        %v756 = vor.u32 %v753, %v754
        %v757 = vrot.slane %v753, 4
        %v759 = vshrl.u32 %v627, 16
        %v761 = vrot.slane %v759, 7
        %v762 = vshll.u32 %v627, 16
        %v764 = vor.u32 %v761, %v762
        %v765 = vsel %vm647, %v757, %v764
        %v766 = vrot.slane %v761, 4
        %v768 = vshrl.u32 %v628, 16
        %v770 = vrot.slane %v768, 7
        %v771 = vshll.u32 %v628, 16
        %v773 = vor.u32 %v770, %v771
        %v774 = vrot.slane %v770, 4
        %v776 = vshrl.u32 %v629, 16
        %v778 = vrot.slane %v776, 7
        %v779 = vshll.u32 %v629, 16
        %v781 = vor.u32 %v778, %v779
        %v782 = vsel %vm647, %v774, %v781
        %v783 = vrot.slane %v778, 4
        %v785 = vshrl.u32 %v630, 16
        %v787 = vrot.slane %v785, 7
        %v788 = vshll.u32 %v630, 16
        %v790 = vor.u32 %v787, %v788
        %v791 = vrot.slane %v787, 4
        %v793 = vshrl.u32 %v631, 16
        %v795 = vrot.slane %v793, 7
        %v796 = vshll.u32 %v631, 16
        %v798 = vor.u32 %v795, %v796
        %v799 = vsel %vm647, %v791, %v798
        %v800 = vrot.slane %v795, 4
        %v802 = vshrl.u32 %v632, 16
        %v804 = vrot.slane %v802, 7
        %v805 = vshll.u32 %v632, 16
        %v807 = vor.u32 %v804, %v805
        %v808 = vrot.slane %v804, 4
        %v810 = vshrl.u32 %v633, 16
        %v812 = vrot.slane %v810, 7
        %v813 = vshll.u32 %v633, 16
        %v815 = vor.u32 %v812, %v813
        %v816 = vsel %vm647, %v808, %v815
        %v817 = vrot.slane %v812, 4
        %v819 = vshrl.u32 %v634, 16
        %v821 = vrot.slane %v819, 7
        %v822 = vshll.u32 %v634, 16
        %v824 = vor.u32 %v821, %v822
        %v825 = vrot.slane %v821, 4
        %v827 = vshrl.u32 %v635, 16
        %v829 = vrot.slane %v827, 7
        %v830 = vshll.u32 %v635, 16
        %v832 = vor.u32 %v829, %v830
        %v833 = vsel %vm647, %v825, %v832
        %v834 = vrot.slane %v829, 4
        %v836 = vshrl.u32 %v636, 16
        %v838 = vrot.slane %v836, 7
        %v839 = vshll.u32 %v636, 16
        %v841 = vor.u32 %v838, %v839
        %v842 = vrot.slane %v838, 4
        %v844 = vshrl.u32 %v637, 16
        %v846 = vrot.slane %v844, 7
        %v847 = vshll.u32 %v637, 16
        %v849 = vor.u32 %v846, %v847
        %v850 = vsel %vm647, %v842, %v849
        %v851 = vrot.slane %v846, 4
        %v853 = vshrl.u32 %v638, 16
        %v855 = vrot.slane %v853, 7
        %v856 = vshll.u32 %v638, 16
        %v858 = vor.u32 %v855, %v856
        %v859 = vrot.slane %v855, 4
        %v861 = vshrl.u32 %v639, 16
        %v863 = vrot.slane %v861, 7
        %v864 = vshll.u32 %v639, 16
        %v866 = vor.u32 %v863, %v864
        %v867 = vsel %vm647, %v859, %v866
        %v868 = vrot.slane %v863, 4
        %v870 = vshrl.u32 %v640, 16
        %v872 = vrot.slane %v870, 7
        %v873 = vshll.u32 %v640, 16
        %v875 = vor.u32 %v872, %v873
        %v876 = vrot.slane %v872, 4
        %v878 = vshrl.u32 %v641, 16
        %v880 = vrot.slane %v878, 7
        %v881 = vshll.u32 %v641, 16
        %v883 = vor.u32 %v880, %v881
        %v884 = vsel %vm647, %v876, %v883
        %v885 = vrot.slane %v880, 4
        %v887 = vshrl.u32 %v642, 16
        %v889 = vrot.slane %v887, 7
        %v890 = vshll.u32 %v642, 16
        %v892 = vor.u32 %v889, %v890
        %v893 = vrot.slane %v889, 4
        %v895 = vshrl.u32 %v643, 16
        %v897 = vrot.slane %v895, 7
        %v898 = vshll.u32 %v643, 16
        %v900 = vor.u32 %v897, %v898
        %v901 = vsel %vm647, %v893, %v900
        %v902 = vrot.slane %v897, 4
        %v904 = vshrl.u32 %v644, 16
        %v906 = vrot.slane %v904, 7
        %v907 = vshll.u32 %v644, 16
        %v909 = vor.u32 %v906, %v907
        %v910 = vrot.slane %v906, 4
        %v912 = vshrl.u32 %v645, 16
        %v914 = vrot.slane %v912, 7
        %v915 = vshll.u32 %v645, 16
        %v917 = vor.u32 %v914, %v915
        %v918 = vsel %vm647, %v910, %v917
        %v919 = vrot.slane %v914, 4
        %s968 = scalar_lea.vmem [#allocation2], 12
        %vm969 = vcmask 125952
        %vm970 = vmand %vm969, %vm390
        %v971 = vld [vmem:[%s968] sm:$0xf]
        %v972 = vsel %vm970, %v654, %v971
        %973 = vst [vmem:[%s968] sm:$0xf] %v972
        %974 = vst.msk [vmem:[%s968 + $0x4] sm:$0xf] %vm324, %v663
        %v975 = vld [vmem:[%s968 + $0x8] sm:$0x1]
        %v976 = vsel %vm335, %v664, %v975
        %977 = vst [vmem:[%s968 + $0x8] sm:$0x1] %v976
        %v978 = vld [vmem:[%s968 + $0xc] sm:$0xf]
        %v979 = vsel %vm970, %v671, %v978
        %980 = vst [vmem:[%s968 + $0xc] sm:$0xf] %v979
        %981 = vst.msk [vmem:[%s968 + $0x10] sm:$0xf] %vm324, %v680
        %v982 = vld [vmem:[%s968 + $0x14] sm:$0x1]
        %v983 = vsel %vm335, %v681, %v982
        %984 = vst [vmem:[%s968 + $0x14] sm:$0x1] %v983
        %v985 = vld [vmem:[%s968 + $0x18] sm:$0xf]
        %v986 = vsel %vm970, %v688, %v985
        %987 = vst [vmem:[%s968 + $0x18] sm:$0xf] %v986
        %988 = vst.msk [vmem:[%s968 + $0x1c] sm:$0xf] %vm324, %v697
        %v989 = vld [vmem:[%s968 + $0x20] sm:$0x1]
        %v990 = vsel %vm335, %v698, %v989
        %991 = vst [vmem:[%s968 + $0x20] sm:$0x1] %v990
        %v992 = vld [vmem:[%s968 + $0x24] sm:$0xf]
        %v993 = vsel %vm970, %v705, %v992
        %994 = vst [vmem:[%s968 + $0x24] sm:$0xf] %v993
        %995 = vst.msk [vmem:[%s968 + $0x28] sm:$0xf] %vm324, %v714
        %v996 = vld [vmem:[%s968 + $0x2c] sm:$0x1]
        %v997 = vsel %vm335, %v715, %v996
        %998 = vst [vmem:[%s968 + $0x2c] sm:$0x1] %v997
        %v999 = vld [vmem:[%s968 + $0x30] sm:$0xf]
        %v1000 = vsel %vm970, %v722, %v999
        %1001 = vst [vmem:[%s968 + $0x30] sm:$0xf] %v1000
        %1002 = vst.msk [vmem:[%s968 + $0x34] sm:$0xf] %vm324, %v731
        %v1003 = vld [vmem:[%s968 + $0x38] sm:$0x1]
        %v1004 = vsel %vm335, %v732, %v1003
        %1005 = vst [vmem:[%s968 + $0x38] sm:$0x1] %v1004
        %v1006 = vld [vmem:[%s968 + $0x3c] sm:$0xf]
        %v1007 = vsel %vm970, %v739, %v1006
        %1008 = vst [vmem:[%s968 + $0x3c] sm:$0xf] %v1007
        %1009 = vst.msk [vmem:[%s968 + $0x40] sm:$0xf] %vm324, %v748
        %v1010 = vld [vmem:[%s968 + $0x44] sm:$0x1]
        %v1011 = vsel %vm335, %v749, %v1010
        %1012 = vst [vmem:[%s968 + $0x44] sm:$0x1] %v1011
        %v1013 = vld [vmem:[%s968 + $0x48] sm:$0xf]
        %v1014 = vsel %vm970, %v756, %v1013
        %1015 = vst [vmem:[%s968 + $0x48] sm:$0xf] %v1014
        %1016 = vst.msk [vmem:[%s968 + $0x4c] sm:$0xf] %vm324, %v765
        %v1017 = vld [vmem:[%s968 + $0x50] sm:$0x1]
        %v1018 = vsel %vm335, %v766, %v1017
        %1019 = vst [vmem:[%s968 + $0x50] sm:$0x1] %v1018
        %v1020 = vld [vmem:[%s968 + $0x54] sm:$0xf]
        %v1021 = vsel %vm970, %v773, %v1020
        %1022 = vst [vmem:[%s968 + $0x54] sm:$0xf] %v1021
        %1023 = vst.msk [vmem:[%s968 + $0x58] sm:$0xf] %vm324, %v782
        %v1024 = vld [vmem:[%s968 + $0x5c] sm:$0x1]
        %v1025 = vsel %vm335, %v783, %v1024
        %1026 = vst [vmem:[%s968 + $0x5c] sm:$0x1] %v1025
        %v1027 = vld [vmem:[%s968 + $0x60] sm:$0xf]
        %v1028 = vsel %vm970, %v790, %v1027
        %1029 = vst [vmem:[%s968 + $0x60] sm:$0xf] %v1028
        %1030 = vst.msk [vmem:[%s968 + $0x64] sm:$0xf] %vm324, %v799
        %v1031 = vld [vmem:[%s968 + $0x68] sm:$0x1]
        %v1032 = vsel %vm335, %v800, %v1031
        %1033 = vst [vmem:[%s968 + $0x68] sm:$0x1] %v1032
        %v1034 = vld [vmem:[%s968 + $0x6c] sm:$0xf]
        %v1035 = vsel %vm970, %v807, %v1034
        %1036 = vst [vmem:[%s968 + $0x6c] sm:$0xf] %v1035
        %1037 = vst.msk [vmem:[%s968 + $0x70] sm:$0xf] %vm324, %v816
        %v1038 = vld [vmem:[%s968 + $0x74] sm:$0x1]
        %v1039 = vsel %vm335, %v817, %v1038
        %1040 = vst [vmem:[%s968 + $0x74] sm:$0x1] %v1039
        %v1041 = vld [vmem:[%s968 + $0x78] sm:$0xf]
        %v1042 = vsel %vm970, %v824, %v1041
        %1043 = vst [vmem:[%s968 + $0x78] sm:$0xf] %v1042
        %1044 = vst.msk [vmem:[%s968 + $0x7c] sm:$0xf] %vm324, %v833
        %v1045 = vld [vmem:[%s968 + $0x80] sm:$0x1]
        %v1046 = vsel %vm335, %v834, %v1045
        %1047 = vst [vmem:[%s968 + $0x80] sm:$0x1] %v1046
        %v1048 = vld [vmem:[%s968 + $0x84] sm:$0xf]
        %v1049 = vsel %vm970, %v841, %v1048
        %1050 = vst [vmem:[%s968 + $0x84] sm:$0xf] %v1049
        %1051 = vst.msk [vmem:[%s968 + $0x88] sm:$0xf] %vm324, %v850
        %v1052 = vld [vmem:[%s968 + $0x8c] sm:$0x1]
        %v1053 = vsel %vm335, %v851, %v1052
        %1054 = vst [vmem:[%s968 + $0x8c] sm:$0x1] %v1053
        %v1055 = vld [vmem:[%s968 + $0x90] sm:$0xf]
        %v1056 = vsel %vm970, %v858, %v1055
        %1057 = vst [vmem:[%s968 + $0x90] sm:$0xf] %v1056
        %1058 = vst.msk [vmem:[%s968 + $0x94] sm:$0xf] %vm324, %v867
        %v1059 = vld [vmem:[%s968 + $0x98] sm:$0x1]
        %v1060 = vsel %vm335, %v868, %v1059
        %1061 = vst [vmem:[%s968 + $0x98] sm:$0x1] %v1060
        %v1062 = vld [vmem:[%s968 + $0x9c] sm:$0xf]
        %v1063 = vsel %vm970, %v875, %v1062
        %1064 = vst [vmem:[%s968 + $0x9c] sm:$0xf] %v1063
        %1065 = vst.msk [vmem:[%s968 + $0xa0] sm:$0xf] %vm324, %v884
        %v1066 = vld [vmem:[%s968 + $0xa4] sm:$0x1]
        %v1067 = vsel %vm335, %v885, %v1066
        %1068 = vst [vmem:[%s968 + $0xa4] sm:$0x1] %v1067
        %v1069 = vld [vmem:[%s968 + $0xa8] sm:$0xf]
        %v1070 = vsel %vm970, %v892, %v1069
        %1071 = vst [vmem:[%s968 + $0xa8] sm:$0xf] %v1070
        %1072 = vst.msk [vmem:[%s968 + $0xac] sm:$0xf] %vm324, %v901
        %v1073 = vld [vmem:[%s968 + $0xb0] sm:$0x1]
        %v1074 = vsel %vm335, %v902, %v1073
        %1075 = vst [vmem:[%s968 + $0xb0] sm:$0x1] %v1074
        %v1076 = vld [vmem:[%s968 + $0xb4] sm:$0xf]
        %v1077 = vsel %vm970, %v909, %v1076
        %1078 = vst [vmem:[%s968 + $0xb4] sm:$0xf] %v1077
        %1079 = vst.msk [vmem:[%s968 + $0xb8] sm:$0xf] %vm324, %v918
        %v1080 = vld [vmem:[%s968 + $0xbc] sm:$0x1]
        %v1081 = vsel %vm335, %v919, %v1080
        %1082 = vst [vmem:[%s968 + $0xbc] sm:$0x1] %v1081
      $region44: #{decoder_block_forward.6} parent=39 // pred_fallthru
        _
      %s1083 = smul.u32 %s319, 3
      %s1084 = smul.addr %s1083, 4
      %s1085 = scalar_lea.vmem [#allocation2], %s1084
      %v1086 = vld [vmem:[%s1085] sm:$0xf]
      %v1087 = vld [vmem:[%s1085 + $0x4] sm:$0xf]
      %v1088 = vld [vmem:[%s1085 + $0xc] sm:$0xf]
      %v1089 = vld [vmem:[%s1085 + $0x10] sm:$0xf]
      %v1090 = vld [vmem:[%s1085 + $0x18] sm:$0xf]
      %v1091 = vld [vmem:[%s1085 + $0x1c] sm:$0xf]
      %v1092 = vld [vmem:[%s1085 + $0x24] sm:$0xf]
      %v1093 = vld [vmem:[%s1085 + $0x28] sm:$0xf]
      %v1094 = vld [vmem:[%s1085 + $0x30] sm:$0xf]
      %v1095 = vld [vmem:[%s1085 + $0x34] sm:$0xf]
      %v1096 = vld [vmem:[%s1085 + $0x3c] sm:$0xf]
      %v1097 = vld [vmem:[%s1085 + $0x40] sm:$0xf]
      %v1098 = vld [vmem:[%s1085 + $0x48] sm:$0xf]
      %v1099 = vld [vmem:[%s1085 + $0x4c] sm:$0xf]
      %v1100 = vld [vmem:[%s1085 + $0x54] sm:$0xf]
      %v1101 = vld [vmem:[%s1085 + $0x58] sm:$0xf]
      %v1102 = vld [vmem:[%s1085 + $0x60] sm:$0xf]
      %v1103 = vld [vmem:[%s1085 + $0x64] sm:$0xf]
      %v1104 = vld [vmem:[%s1085 + $0x6c] sm:$0xf]
      %v1105 = vld [vmem:[%s1085 + $0x70] sm:$0xf]
      %v1106 = vld [vmem:[%s1085 + $0x78] sm:$0xf]
      %v1107 = vld [vmem:[%s1085 + $0x7c] sm:$0xf]
      %v1108 = vld [vmem:[%s1085 + $0x84] sm:$0xf]
      %v1109 = vld [vmem:[%s1085 + $0x88] sm:$0xf]
      %v1110 = vld [vmem:[%s1085 + $0x90] sm:$0xf]
      %v1111 = vld [vmem:[%s1085 + $0x94] sm:$0xf]
      %v1112 = vld [vmem:[%s1085 + $0x9c] sm:$0xf]
      %v1113 = vld [vmem:[%s1085 + $0xa0] sm:$0xf]
      %v1114 = vld [vmem:[%s1085 + $0xa8] sm:$0xf]
      %v1115 = vld [vmem:[%s1085 + $0xac] sm:$0xf]
      %v1116 = vld [vmem:[%s1085 + $0xb4] sm:$0xf]
      %v1117 = vld [vmem:[%s1085 + $0xb8] sm:$0xf]
      %v1118 = vld [vmem:[%s3] sm:$0xf]
      %v1119 = vld [vmem:[%s3 + $0x4] sm:$0xf]
      %v1120 = vld [vmem:[%s1085 + $0x8] sm:$0x1]
      %v1121 = vld [vmem:[%s1085 + $0x14] sm:$0x1]
      %v1122 = vld [vmem:[%s1085 + $0x20] sm:$0x1]
      %v1123 = vld [vmem:[%s1085 + $0x2c] sm:$0x1]
      %v1124 = vld [vmem:[%s1085 + $0x38] sm:$0x1]
      %v1125 = vld [vmem:[%s1085 + $0x44] sm:$0x1]
      %v1126 = vld [vmem:[%s1085 + $0x50] sm:$0x1]
      %v1127 = vld [vmem:[%s1085 + $0x5c] sm:$0x1]
      %v1128 = vld [vmem:[%s1085 + $0x68] sm:$0x1]
      %v1129 = vld [vmem:[%s1085 + $0x74] sm:$0x1]
      %v1130 = vld [vmem:[%s1085 + $0x80] sm:$0x1]
      %v1131 = vld [vmem:[%s1085 + $0x8c] sm:$0x1]
      %v1132 = vld [vmem:[%s1085 + $0x98] sm:$0x1]
      %v1133 = vld [vmem:[%s1085 + $0xa4] sm:$0x1]
      %v1134 = vld [vmem:[%s1085 + $0xb0] sm:$0x1]
      %v1135 = vld [vmem:[%s1085 + $0xbc] sm:$0x1]
      %vm1136 = vsmask.f32 3328
      %vm1137 = vsmask.f32 7440
      %vm1138 = vmor %vm1136, %vm1137
      %v1140 = vshrl.u32 %v1086, 16
      %v1142 = vrot.slane %v1140, 4
      %v1143 = vshll.u32 %v1086, 16
      %v1145 = vrot.slane %v1143, 5
      %v1146 = vor.u32 %v1142, %v1145
      %v1147 = vrot.slane %v1146, 4
      %v1149 = vshll.u32 %v1087, 16
      %v1151 = vrot.slane %v1149, 5
      %v1152 = vsel %vm1138, %v1147, %v1151
      %v1153 = vshrl.u32 %v1087, 16
      %v1155 = vrot.slane %v1153, 4
      %v1156 = vor.u32 %v1155, %v1151
      %v1157 = vrot.slane %v1156, 4
      %v1159 = vshll.u32 %v1120, 16
      %v1161 = vrot.slane %v1159, 5
      %v1162 = vsel %vm1138, %v1157, %v1161
      %v1164 = vshrl.u32 %v1088, 16
      %v1166 = vrot.slane %v1164, 4
      %v1167 = vshll.u32 %v1088, 16
      %v1169 = vrot.slane %v1167, 5
      %v1170 = vor.u32 %v1166, %v1169
      %v1171 = vrot.slane %v1170, 4
      %v1173 = vshll.u32 %v1089, 16
      %v1175 = vrot.slane %v1173, 5
      %v1176 = vsel %vm1138, %v1171, %v1175
      %v1177 = vshrl.u32 %v1089, 16
      %v1179 = vrot.slane %v1177, 4
      %v1180 = vor.u32 %v1179, %v1175
      %v1181 = vrot.slane %v1180, 4
      %v1183 = vshll.u32 %v1121, 16
      %v1185 = vrot.slane %v1183, 5
      %v1186 = vsel %vm1138, %v1181, %v1185
      %v1188 = vshrl.u32 %v1090, 16
      %v1190 = vrot.slane %v1188, 4
      %v1191 = vshll.u32 %v1090, 16
      %v1193 = vrot.slane %v1191, 5
      %v1194 = vor.u32 %v1190, %v1193
      %v1195 = vrot.slane %v1194, 4
      %v1197 = vshll.u32 %v1091, 16
      %v1199 = vrot.slane %v1197, 5
      %v1200 = vsel %vm1138, %v1195, %v1199
      %v1201 = vshrl.u32 %v1091, 16
      %v1203 = vrot.slane %v1201, 4
      %v1204 = vor.u32 %v1203, %v1199
      %v1205 = vrot.slane %v1204, 4
      %v1207 = vshll.u32 %v1122, 16
      %v1209 = vrot.slane %v1207, 5
      %v1210 = vsel %vm1138, %v1205, %v1209
      %v1212 = vshrl.u32 %v1092, 16
      %v1214 = vrot.slane %v1212, 4
      %v1215 = vshll.u32 %v1092, 16
      %v1217 = vrot.slane %v1215, 5
      %v1218 = vor.u32 %v1214, %v1217
      %v1219 = vrot.slane %v1218, 4
      %v1221 = vshll.u32 %v1093, 16
      %v1223 = vrot.slane %v1221, 5
      %v1224 = vsel %vm1138, %v1219, %v1223
      %v1225 = vshrl.u32 %v1093, 16
      %v1227 = vrot.slane %v1225, 4
      %v1228 = vor.u32 %v1227, %v1223
      %v1229 = vrot.slane %v1228, 4
      %v1231 = vshll.u32 %v1123, 16
      %v1233 = vrot.slane %v1231, 5
      %v1234 = vsel %vm1138, %v1229, %v1233
      %v1236 = vshrl.u32 %v1094, 16
      %v1238 = vrot.slane %v1236, 4
      %v1239 = vshll.u32 %v1094, 16
      %v1241 = vrot.slane %v1239, 5
      %v1242 = vor.u32 %v1238, %v1241
      %v1243 = vrot.slane %v1242, 4
      %v1245 = vshll.u32 %v1095, 16
      %v1247 = vrot.slane %v1245, 5
      %v1248 = vsel %vm1138, %v1243, %v1247
      %v1249 = vshrl.u32 %v1095, 16
      %v1251 = vrot.slane %v1249, 4
      %v1252 = vor.u32 %v1251, %v1247
      %v1253 = vrot.slane %v1252, 4
      %v1255 = vshll.u32 %v1124, 16
      %v1257 = vrot.slane %v1255, 5
      %v1258 = vsel %vm1138, %v1253, %v1257
      %v1260 = vshrl.u32 %v1096, 16
      %v1262 = vrot.slane %v1260, 4
      %v1263 = vshll.u32 %v1096, 16
      %v1265 = vrot.slane %v1263, 5
      %v1266 = vor.u32 %v1262, %v1265
      %v1267 = vrot.slane %v1266, 4
      %v1269 = vshll.u32 %v1097, 16
      %v1271 = vrot.slane %v1269, 5
      %v1272 = vsel %vm1138, %v1267, %v1271
      %v1273 = vshrl.u32 %v1097, 16
      %v1275 = vrot.slane %v1273, 4
      %v1276 = vor.u32 %v1275, %v1271
      %v1277 = vrot.slane %v1276, 4
      %v1279 = vshll.u32 %v1125, 16
      %v1281 = vrot.slane %v1279, 5
      %v1282 = vsel %vm1138, %v1277, %v1281
      %v1284 = vshrl.u32 %v1098, 16
      %v1286 = vrot.slane %v1284, 4
      %v1287 = vshll.u32 %v1098, 16
      %v1289 = vrot.slane %v1287, 5
      %v1290 = vor.u32 %v1286, %v1289
      %v1291 = vrot.slane %v1290, 4
      %v1293 = vshll.u32 %v1099, 16
      %v1295 = vrot.slane %v1293, 5
      %v1296 = vsel %vm1138, %v1291, %v1295
      %v1297 = vshrl.u32 %v1099, 16
      %v1299 = vrot.slane %v1297, 4
      %v1300 = vor.u32 %v1299, %v1295
      %v1301 = vrot.slane %v1300, 4
      %v1303 = vshll.u32 %v1126, 16
      %v1305 = vrot.slane %v1303, 5
      %v1306 = vsel %vm1138, %v1301, %v1305
      %v1308 = vshrl.u32 %v1100, 16
      %v1310 = vrot.slane %v1308, 4
      %v1311 = vshll.u32 %v1100, 16
      %v1313 = vrot.slane %v1311, 5
      %v1314 = vor.u32 %v1310, %v1313
      %v1315 = vrot.slane %v1314, 4
      %v1317 = vshll.u32 %v1101, 16
      %v1319 = vrot.slane %v1317, 5
      %v1320 = vsel %vm1138, %v1315, %v1319
      %v1321 = vshrl.u32 %v1101, 16
      %v1323 = vrot.slane %v1321, 4
      %v1324 = vor.u32 %v1323, %v1319
      %v1325 = vrot.slane %v1324, 4
      %v1327 = vshll.u32 %v1127, 16
      %v1329 = vrot.slane %v1327, 5
      %v1330 = vsel %vm1138, %v1325, %v1329
      %v1332 = vshrl.u32 %v1102, 16
      %v1334 = vrot.slane %v1332, 4
      %v1335 = vshll.u32 %v1102, 16
      %v1337 = vrot.slane %v1335, 5
      %v1338 = vor.u32 %v1334, %v1337
      %v1339 = vrot.slane %v1338, 4
      %v1341 = vshll.u32 %v1103, 16
      %v1343 = vrot.slane %v1341, 5
      %v1344 = vsel %vm1138, %v1339, %v1343
      %v1345 = vshrl.u32 %v1103, 16
      %v1347 = vrot.slane %v1345, 4
      %v1348 = vor.u32 %v1347, %v1343
      %v1349 = vrot.slane %v1348, 4
      %v1351 = vshll.u32 %v1128, 16
      %v1353 = vrot.slane %v1351, 5
      %v1354 = vsel %vm1138, %v1349, %v1353
      %v1356 = vshrl.u32 %v1104, 16
      %v1358 = vrot.slane %v1356, 4
      %v1359 = vshll.u32 %v1104, 16
      %v1361 = vrot.slane %v1359, 5
      %v1362 = vor.u32 %v1358, %v1361
      %v1363 = vrot.slane %v1362, 4
      %v1365 = vshll.u32 %v1105, 16
      %v1367 = vrot.slane %v1365, 5
      %v1368 = vsel %vm1138, %v1363, %v1367
      %v1369 = vshrl.u32 %v1105, 16
      %v1371 = vrot.slane %v1369, 4
      %v1372 = vor.u32 %v1371, %v1367
      %v1373 = vrot.slane %v1372, 4
      %v1375 = vshll.u32 %v1129, 16
      %v1377 = vrot.slane %v1375, 5
      %v1378 = vsel %vm1138, %v1373, %v1377
      %v1380 = vshrl.u32 %v1106, 16
      %v1382 = vrot.slane %v1380, 4
      %v1383 = vshll.u32 %v1106, 16
      %v1385 = vrot.slane %v1383, 5
      %v1386 = vor.u32 %v1382, %v1385
      %v1387 = vrot.slane %v1386, 4
      %v1389 = vshll.u32 %v1107, 16
      %v1391 = vrot.slane %v1389, 5
      %v1392 = vsel %vm1138, %v1387, %v1391
      %v1393 = vshrl.u32 %v1107, 16
      %v1395 = vrot.slane %v1393, 4
      %v1396 = vor.u32 %v1395, %v1391
      %v1397 = vrot.slane %v1396, 4
      %v1399 = vshll.u32 %v1130, 16
      %v1401 = vrot.slane %v1399, 5
      %v1402 = vsel %vm1138, %v1397, %v1401
      %v1404 = vshrl.u32 %v1108, 16
      %v1406 = vrot.slane %v1404, 4
      %v1407 = vshll.u32 %v1108, 16
      %v1409 = vrot.slane %v1407, 5
      %v1410 = vor.u32 %v1406, %v1409
      %v1411 = vrot.slane %v1410, 4
      %v1413 = vshll.u32 %v1109, 16
      %v1415 = vrot.slane %v1413, 5
      %v1416 = vsel %vm1138, %v1411, %v1415
      %v1417 = vshrl.u32 %v1109, 16
      %v1419 = vrot.slane %v1417, 4
      %v1420 = vor.u32 %v1419, %v1415
      %v1421 = vrot.slane %v1420, 4
      %v1423 = vshll.u32 %v1131, 16
      %v1425 = vrot.slane %v1423, 5
      %v1426 = vsel %vm1138, %v1421, %v1425
      %v1428 = vshrl.u32 %v1110, 16
      %v1430 = vrot.slane %v1428, 4
      %v1431 = vshll.u32 %v1110, 16
      %v1433 = vrot.slane %v1431, 5
      %v1434 = vor.u32 %v1430, %v1433
      %v1435 = vrot.slane %v1434, 4
      %v1437 = vshll.u32 %v1111, 16
      %v1439 = vrot.slane %v1437, 5
      %v1440 = vsel %vm1138, %v1435, %v1439
      %v1441 = vshrl.u32 %v1111, 16
      %v1443 = vrot.slane %v1441, 4
      %v1444 = vor.u32 %v1443, %v1439
      %v1445 = vrot.slane %v1444, 4
      %v1447 = vshll.u32 %v1132, 16
      %v1449 = vrot.slane %v1447, 5
      %v1450 = vsel %vm1138, %v1445, %v1449
      %v1452 = vshrl.u32 %v1112, 16
      %v1454 = vrot.slane %v1452, 4
      %v1455 = vshll.u32 %v1112, 16
      %v1457 = vrot.slane %v1455, 5
      %v1458 = vor.u32 %v1454, %v1457
      %v1459 = vrot.slane %v1458, 4
      %v1461 = vshll.u32 %v1113, 16
      %v1463 = vrot.slane %v1461, 5
      %v1464 = vsel %vm1138, %v1459, %v1463
      %v1465 = vshrl.u32 %v1113, 16
      %v1467 = vrot.slane %v1465, 4
      %v1468 = vor.u32 %v1467, %v1463
      %v1469 = vrot.slane %v1468, 4
      %v1471 = vshll.u32 %v1133, 16
      %v1473 = vrot.slane %v1471, 5
      %v1474 = vsel %vm1138, %v1469, %v1473
      %v1476 = vshrl.u32 %v1114, 16
      %v1478 = vrot.slane %v1476, 4
      %v1479 = vshll.u32 %v1114, 16
      %v1481 = vrot.slane %v1479, 5
      %v1482 = vor.u32 %v1478, %v1481
      %v1483 = vrot.slane %v1482, 4
      %v1485 = vshll.u32 %v1115, 16
      %v1487 = vrot.slane %v1485, 5
      %v1488 = vsel %vm1138, %v1483, %v1487
      %v1489 = vshrl.u32 %v1115, 16
      %v1491 = vrot.slane %v1489, 4
      %v1492 = vor.u32 %v1491, %v1487
      %v1493 = vrot.slane %v1492, 4
      %v1495 = vshll.u32 %v1134, 16
      %v1497 = vrot.slane %v1495, 5
      %v1498 = vsel %vm1138, %v1493, %v1497
      %v1500 = vshrl.u32 %v1116, 16
      %v1502 = vrot.slane %v1500, 4
      %v1503 = vshll.u32 %v1116, 16
      %v1505 = vrot.slane %v1503, 5
      %v1506 = vor.u32 %v1502, %v1505
      %v1507 = vrot.slane %v1506, 4
      %v1509 = vshll.u32 %v1117, 16
      %v1511 = vrot.slane %v1509, 5
      %v1512 = vsel %vm1138, %v1507, %v1511
      %v1513 = vshrl.u32 %v1117, 16
      %v1515 = vrot.slane %v1513, 4
      %v1516 = vor.u32 %v1515, %v1511
      %v1517 = vrot.slane %v1516, 4
      %v1519 = vshll.u32 %v1135, 16
      %v1521 = vrot.slane %v1519, 5
      %v1522 = vsel %vm1138, %v1517, %v1521
      %s1523 = scalar_lea.vmem %s3, 8
      %v1524 = vld [vmem:[%s1523] sm:$0xf]
      %v1525 = vld [vmem:[%s1523 + $0x4] sm:$0xf]
      %v1526 = vunpack.c.l.b16 %v1152
      %v1527 = vunpack.c.l.b16 %v1162
      %v1528 = vunpack.c.l.b16 %v1176
      %v1529 = vunpack.c.l.b16 %v1186
      %v1530 = vunpack.c.l.b16 %v1200
      %v1531 = vunpack.c.l.b16 %v1210
      %v1532 = vunpack.c.l.b16 %v1224
      %v1533 = vunpack.c.l.b16 %v1234
      %v1534 = vunpack.c.l.b16 %v1248
      %v1535 = vunpack.c.l.b16 %v1258
      %v1536 = vunpack.c.l.b16 %v1272
      %v1537 = vunpack.c.l.b16 %v1282
      %v1538 = vunpack.c.l.b16 %v1296
      %v1539 = vunpack.c.l.b16 %v1306
      %v1540 = vunpack.c.l.b16 %v1320
      %v1541 = vunpack.c.l.b16 %v1330
      %v1542 = vunpack.c.l.b16 %v1344
      %v1543 = vunpack.c.l.b16 %v1354
      %v1544 = vunpack.c.l.b16 %v1368
      %v1545 = vunpack.c.l.b16 %v1378
      %v1546 = vunpack.c.l.b16 %v1392
      %v1547 = vunpack.c.l.b16 %v1402
      %v1548 = vunpack.c.l.b16 %v1416
      %v1549 = vunpack.c.l.b16 %v1426
      %v1550 = vunpack.c.l.b16 %v1440
      %v1551 = vunpack.c.l.b16 %v1450
      %v1552 = vunpack.c.l.b16 %v1464
      %v1553 = vunpack.c.l.b16 %v1474
      %v1554 = vunpack.c.l.b16 %v1488
      %v1555 = vunpack.c.l.b16 %v1498
      %v1556 = vunpack.c.l.b16 %v1512
      %v1557 = vunpack.c.l.b16 %v1522
      %v1558 = vpack.c.b16 %v1527, %v1526
      %v1559 = vpack.c.b16 %v1529, %v1528
      %v1560 = vpack.c.b16 %v1531, %v1530
      %v1561 = vpack.c.b16 %v1533, %v1532
      %v1562 = vpack.c.b16 %v1535, %v1534
      %v1563 = vpack.c.b16 %v1537, %v1536
      %v1564 = vpack.c.b16 %v1539, %v1538
      %v1565 = vpack.c.b16 %v1541, %v1540
      %v1566 = vpack.c.b16 %v1543, %v1542
      %v1567 = vpack.c.b16 %v1545, %v1544
      %v1568 = vpack.c.b16 %v1547, %v1546
      %v1569 = vpack.c.b16 %v1549, %v1548
      %v1570 = vpack.c.b16 %v1551, %v1550
      %v1571 = vpack.c.b16 %v1553, %v1552
      %v1572 = vpack.c.b16 %v1555, %v1554
      %v1573 = vpack.c.b16 %v1557, %v1556
      %v1576 = vunpack.c.l.b16 %v1524
      %v1577 = vunpack.c.l.b16 %v1525
      %v1578 = vpack.c.b16 %v1577, %v1576
      %vm1580 = vcmask 130048
      %v1582 = vsel %vm1580, %v1558, 0
      %v1585 = vsel %vm1580, %v1559, 0
      %v1588 = vsel %vm1580, %v1560, 0
      %v1591 = vsel %vm1580, %v1561, 0
      %v1594 = vsel %vm1580, %v1562, 0
      %v1597 = vsel %vm1580, %v1563, 0
      %v1600 = vsel %vm1580, %v1564, 0
      %v1603 = vsel %vm1580, %v1565, 0
      %v1606 = vsel %vm1580, %v1566, 0
      %v1609 = vsel %vm1580, %v1567, 0
      %v1612 = vsel %vm1580, %v1568, 0
      %v1615 = vsel %vm1580, %v1569, 0
      %v1618 = vsel %vm1580, %v1570, 0
      %v1621 = vsel %vm1580, %v1571, 0
      %v1624 = vsel %vm1580, %v1572, 0
      %v1627 = vsel %vm1580, %v1573, 0
      %1629 = vmatpush.bf16.msra.mxu0 0
      %1630 = vmatpush.bf16.msra.mxu0 0
      %1631 = vmatpush.bf16.msra.mxu0 0
      %1632 = vmatpush.bf16.msra.mxu0 0
      %1633 = vmatpush.bf16.msra.mxu0 0
      %1634 = vmatpush.bf16.msra.mxu0 0
      %1635 = vmatpush.bf16.msra.mxu0 0
      %1636 = vmatpush.bf16.msra.mxu0 %v1578
      %1637 = vmatmul.bf16.gmra.mxu0 %v1582
      %v1638 = vpop.f32.mrf.mxu0
      %v1639 = vadd.f32 0.0, %v1638
      %v1640 = vpop.f32.mrf.mxu0
      %v1641 = vadd.f32 0.0, %v1640
      %1642 = vmatmul.bf16.gmra.mxu0 %v1585
      %v1643 = vpop.f32.mrf.mxu0
      %v1644 = vadd.f32 0.0, %v1643
      %v1645 = vpop.f32.mrf.mxu0
      %v1646 = vadd.f32 0.0, %v1645
      %1647 = vmatmul.bf16.gmra.mxu0 %v1588
      %v1648 = vpop.f32.mrf.mxu0
      %v1649 = vadd.f32 0.0, %v1648
      %v1650 = vpop.f32.mrf.mxu0
      %v1651 = vadd.f32 0.0, %v1650
      %1652 = vmatmul.bf16.gmra.mxu0 %v1591
      %v1653 = vpop.f32.mrf.mxu0
      %v1654 = vadd.f32 0.0, %v1653
      %v1655 = vpop.f32.mrf.mxu0
      %v1656 = vadd.f32 0.0, %v1655
      %1657 = vmatmul.bf16.gmra.mxu0 %v1594
      %v1658 = vpop.f32.mrf.mxu0
      %v1659 = vadd.f32 0.0, %v1658
      %v1660 = vpop.f32.mrf.mxu0
      %v1661 = vadd.f32 0.0, %v1660
      %1662 = vmatmul.bf16.gmra.mxu0 %v1597
      %v1663 = vpop.f32.mrf.mxu0
      %v1664 = vadd.f32 0.0, %v1663
      %v1665 = vpop.f32.mrf.mxu0
      %v1666 = vadd.f32 0.0, %v1665
      %1667 = vmatmul.bf16.gmra.mxu0 %v1600
      %v1668 = vpop.f32.mrf.mxu0
      %v1669 = vadd.f32 0.0, %v1668
      %v1670 = vpop.f32.mrf.mxu0
      %v1671 = vadd.f32 0.0, %v1670
      %1672 = vmatmul.bf16.gmra.mxu0 %v1603
      %v1673 = vpop.f32.mrf.mxu0
      %v1674 = vadd.f32 0.0, %v1673
      %v1675 = vpop.f32.mrf.mxu0
      %v1676 = vadd.f32 0.0, %v1675
      %1677 = vmatmul.bf16.gmra.mxu0 %v1606
      %v1678 = vpop.f32.mrf.mxu0
      %v1679 = vadd.f32 0.0, %v1678
      %v1680 = vpop.f32.mrf.mxu0
      %v1681 = vadd.f32 0.0, %v1680
      %1682 = vmatmul.bf16.gmra.mxu0 %v1609
      %v1683 = vpop.f32.mrf.mxu0
      %v1684 = vadd.f32 0.0, %v1683
      %v1685 = vpop.f32.mrf.mxu0
      %v1686 = vadd.f32 0.0, %v1685
      %1687 = vmatmul.bf16.gmra.mxu0 %v1612
      %v1688 = vpop.f32.mrf.mxu0
      %v1689 = vadd.f32 0.0, %v1688
      %v1690 = vpop.f32.mrf.mxu0
      %v1691 = vadd.f32 0.0, %v1690
      %1692 = vmatmul.bf16.gmra.mxu0 %v1615
      %v1693 = vpop.f32.mrf.mxu0
      %v1694 = vadd.f32 0.0, %v1693
      %v1695 = vpop.f32.mrf.mxu0
      %v1696 = vadd.f32 0.0, %v1695
      %1697 = vmatmul.bf16.gmra.mxu0 %v1618
      %v1698 = vpop.f32.mrf.mxu0
      %v1699 = vadd.f32 0.0, %v1698
      %v1700 = vpop.f32.mrf.mxu0
      %v1701 = vadd.f32 0.0, %v1700
      %1702 = vmatmul.bf16.gmra.mxu0 %v1621
      %v1703 = vpop.f32.mrf.mxu0
      %v1704 = vadd.f32 0.0, %v1703
      %v1705 = vpop.f32.mrf.mxu0
      %v1706 = vadd.f32 0.0, %v1705
      %1707 = vmatmul.bf16.gmra.mxu0 %v1624
      %v1708 = vpop.f32.mrf.mxu0
      %v1709 = vadd.f32 0.0, %v1708
      %v1710 = vpop.f32.mrf.mxu0
      %v1711 = vadd.f32 0.0, %v1710
      %1712 = vmatmul.bf16.gmra.mxu0 %v1627
      %v1713 = vpop.f32.mrf.mxu0
      %v1714 = vadd.f32 0.0, %v1713
      %v1715 = vpop.f32.mrf.mxu0
      %v1716 = vadd.f32 0.0, %v1715
      %1717 = vdwg.mxu0
      %v1750 = vunpack.c.l.b16 %v1086
      %v1751 = vunpack.c.l.b16 %v1087
      %v1752 = vunpack.c.l.b16 %v1088
      %v1753 = vunpack.c.l.b16 %v1089
      %v1754 = vunpack.c.l.b16 %v1090
      %v1755 = vunpack.c.l.b16 %v1091
      %v1756 = vunpack.c.l.b16 %v1092
      %v1757 = vunpack.c.l.b16 %v1093
      %v1758 = vunpack.c.l.b16 %v1094
      %v1759 = vunpack.c.l.b16 %v1095
      %v1760 = vunpack.c.l.b16 %v1096
      %v1761 = vunpack.c.l.b16 %v1097
      %v1762 = vunpack.c.l.b16 %v1098
      %v1763 = vunpack.c.l.b16 %v1099
      %v1764 = vunpack.c.l.b16 %v1100
      %v1765 = vunpack.c.l.b16 %v1101
      %v1766 = vunpack.c.l.b16 %v1102
      %v1767 = vunpack.c.l.b16 %v1103
      %v1768 = vunpack.c.l.b16 %v1104
      %v1769 = vunpack.c.l.b16 %v1105
      %v1770 = vunpack.c.l.b16 %v1106
      %v1771 = vunpack.c.l.b16 %v1107
      %v1772 = vunpack.c.l.b16 %v1108
      %v1773 = vunpack.c.l.b16 %v1109
      %v1774 = vunpack.c.l.b16 %v1110
      %v1775 = vunpack.c.l.b16 %v1111
      %v1776 = vunpack.c.l.b16 %v1112
      %v1777 = vunpack.c.l.b16 %v1113
      %v1778 = vunpack.c.l.b16 %v1114
      %v1779 = vunpack.c.l.b16 %v1115
      %v1780 = vunpack.c.l.b16 %v1116
      %v1781 = vunpack.c.l.b16 %v1117
      %v1782 = vpack.c.b16 %v1751, %v1750
      %v1783 = vpack.c.b16 %v1753, %v1752
      %v1784 = vpack.c.b16 %v1755, %v1754
      %v1785 = vpack.c.b16 %v1757, %v1756
      %v1786 = vpack.c.b16 %v1759, %v1758
      %v1787 = vpack.c.b16 %v1761, %v1760
      %v1788 = vpack.c.b16 %v1763, %v1762
      %v1789 = vpack.c.b16 %v1765, %v1764
      %v1790 = vpack.c.b16 %v1767, %v1766
      %v1791 = vpack.c.b16 %v1769, %v1768
      %v1792 = vpack.c.b16 %v1771, %v1770
      %v1793 = vpack.c.b16 %v1773, %v1772
      %v1794 = vpack.c.b16 %v1775, %v1774
      %v1795 = vpack.c.b16 %v1777, %v1776
      %v1796 = vpack.c.b16 %v1779, %v1778
      %v1797 = vpack.c.b16 %v1781, %v1780
      %v1800 = vunpack.c.l.b16 %v1118
      %v1801 = vunpack.c.l.b16 %v1119
      %v1802 = vpack.c.b16 %v1801, %v1800
      %v1805 = vsel %vm1580, %v1782, 0
      %v1808 = vsel %vm1580, %v1783, 0
      %v1811 = vsel %vm1580, %v1784, 0
      %v1814 = vsel %vm1580, %v1785, 0
      %v1817 = vsel %vm1580, %v1786, 0
      %v1820 = vsel %vm1580, %v1787, 0
      %v1823 = vsel %vm1580, %v1788, 0
      %v1826 = vsel %vm1580, %v1789, 0
      %v1829 = vsel %vm1580, %v1790, 0
      %v1832 = vsel %vm1580, %v1791, 0
      %v1835 = vsel %vm1580, %v1792, 0
      %v1838 = vsel %vm1580, %v1793, 0
      %v1841 = vsel %vm1580, %v1794, 0
      %v1844 = vsel %vm1580, %v1795, 0
      %v1847 = vsel %vm1580, %v1796, 0
      %v1850 = vsel %vm1580, %v1797, 0
      %1852 = vmatpush.bf16.msra.mxu0 0
      %1853 = vmatpush.bf16.msra.mxu0 0
      %1854 = vmatpush.bf16.msra.mxu0 0
      %1855 = vmatpush.bf16.msra.mxu0 0
      %1856 = vmatpush.bf16.msra.mxu0 0
      %1857 = vmatpush.bf16.msra.mxu0 0
      %1858 = vmatpush.bf16.msra.mxu0 0
      %1859 = vmatpush.bf16.msra.mxu0 %v1802
      %1860 = vmatmul.bf16.gmra.mxu0 %v1805
      %v1861 = vpop.f32.mrf.mxu0
      %v1862 = vadd.f32 %v1639, %v1861
      %v1863 = vpop.f32.mrf.mxu0
      %v1864 = vadd.f32 %v1641, %v1863
      %1865 = vmatmul.bf16.gmra.mxu0 %v1808
      %v1866 = vpop.f32.mrf.mxu0
      %v1867 = vadd.f32 %v1644, %v1866
      %v1868 = vpop.f32.mrf.mxu0
      %v1869 = vadd.f32 %v1646, %v1868
      %1870 = vmatmul.bf16.gmra.mxu0 %v1811
      %v1871 = vpop.f32.mrf.mxu0
      %v1872 = vadd.f32 %v1649, %v1871
      %v1873 = vpop.f32.mrf.mxu0
      %v1874 = vadd.f32 %v1651, %v1873
      %1875 = vmatmul.bf16.gmra.mxu0 %v1814
      %v1876 = vpop.f32.mrf.mxu0
      %v1877 = vadd.f32 %v1654, %v1876
      %v1878 = vpop.f32.mrf.mxu0
      %v1879 = vadd.f32 %v1656, %v1878
      %1880 = vmatmul.bf16.gmra.mxu0 %v1817
      %v1881 = vpop.f32.mrf.mxu0
      %v1882 = vadd.f32 %v1659, %v1881
      %v1883 = vpop.f32.mrf.mxu0
      %v1884 = vadd.f32 %v1661, %v1883
      %1885 = vmatmul.bf16.gmra.mxu0 %v1820
      %v1886 = vpop.f32.mrf.mxu0
      %v1887 = vadd.f32 %v1664, %v1886
      %v1888 = vpop.f32.mrf.mxu0
      %v1889 = vadd.f32 %v1666, %v1888
      %1890 = vmatmul.bf16.gmra.mxu0 %v1823
      %v1891 = vpop.f32.mrf.mxu0
      %v1892 = vadd.f32 %v1669, %v1891
      %v1893 = vpop.f32.mrf.mxu0
      %v1894 = vadd.f32 %v1671, %v1893
      %1895 = vmatmul.bf16.gmra.mxu0 %v1826
      %v1896 = vpop.f32.mrf.mxu0
      %v1897 = vadd.f32 %v1674, %v1896
      %v1898 = vpop.f32.mrf.mxu0
      %v1899 = vadd.f32 %v1676, %v1898
      %1900 = vmatmul.bf16.gmra.mxu0 %v1829
      %v1901 = vpop.f32.mrf.mxu0
      %v1902 = vadd.f32 %v1679, %v1901
      %v1903 = vpop.f32.mrf.mxu0
      %v1904 = vadd.f32 %v1681, %v1903
      %1905 = vmatmul.bf16.gmra.mxu0 %v1832
      %v1906 = vpop.f32.mrf.mxu0
      %v1907 = vadd.f32 %v1684, %v1906
      %v1908 = vpop.f32.mrf.mxu0
      %v1909 = vadd.f32 %v1686, %v1908
      %1910 = vmatmul.bf16.gmra.mxu0 %v1835
      %v1911 = vpop.f32.mrf.mxu0
      %v1912 = vadd.f32 %v1689, %v1911
      %v1913 = vpop.f32.mrf.mxu0
      %v1914 = vadd.f32 %v1691, %v1913
      %1915 = vmatmul.bf16.gmra.mxu0 %v1838
      %v1916 = vpop.f32.mrf.mxu0
      %v1917 = vadd.f32 %v1694, %v1916
      %v1918 = vpop.f32.mrf.mxu0
      %v1919 = vadd.f32 %v1696, %v1918
      %1920 = vmatmul.bf16.gmra.mxu0 %v1841
      %v1921 = vpop.f32.mrf.mxu0
      %v1922 = vadd.f32 %v1699, %v1921
      %v1923 = vpop.f32.mrf.mxu0
      %v1924 = vadd.f32 %v1701, %v1923
      %1925 = vmatmul.bf16.gmra.mxu0 %v1844
      %v1926 = vpop.f32.mrf.mxu0
      %v1927 = vadd.f32 %v1704, %v1926
      %v1928 = vpop.f32.mrf.mxu0
      %v1929 = vadd.f32 %v1706, %v1928
      %1930 = vmatmul.bf16.gmra.mxu0 %v1847
      %v1931 = vpop.f32.mrf.mxu0
      %v1932 = vadd.f32 %v1709, %v1931
      %v1933 = vpop.f32.mrf.mxu0
      %v1934 = vadd.f32 %v1711, %v1933
      %1935 = vmatmul.bf16.gmra.mxu0 %v1850
      %v1936 = vpop.f32.mrf.mxu0
      %v1937 = vadd.f32 %v1714, %v1936
      %v1938 = vpop.f32.mrf.mxu0
      %v1939 = vadd.f32 %v1716, %v1938
      %1940 = vdwg.mxu0
      %v1941 = vld [vmem:[%s1085] sm:$0xe]
      %v1942 = vld [vmem:[%s1085 + $0xc] sm:$0xe]
      %v1943 = vld [vmem:[%s1085 + $0x18] sm:$0xe]
      %v1944 = vld [vmem:[%s1085 + $0x24] sm:$0xe]
      %v1945 = vld [vmem:[%s1085 + $0x30] sm:$0xe]
      %v1946 = vld [vmem:[%s1085 + $0x3c] sm:$0xe]
      %v1947 = vld [vmem:[%s1085 + $0x48] sm:$0xe]
      %v1948 = vld [vmem:[%s1085 + $0x54] sm:$0xe]
      %v1949 = vld [vmem:[%s1085 + $0x60] sm:$0xe]
      %v1950 = vld [vmem:[%s1085 + $0x6c] sm:$0xe]
      %v1951 = vld [vmem:[%s1085 + $0x78] sm:$0xe]
      %v1952 = vld [vmem:[%s1085 + $0x84] sm:$0xe]
      %v1953 = vld [vmem:[%s1085 + $0x90] sm:$0xe]
      %v1954 = vld [vmem:[%s1085 + $0x9c] sm:$0xe]
      %v1955 = vld [vmem:[%s1085 + $0xa8] sm:$0xe]
      %v1956 = vld [vmem:[%s1085 + $0xb4] sm:$0xe]
      %vm1989 = vcmask 1042432
      %vm1990 = vcmask 1046532
      %vm1991 = vmor %vm1989, %vm1990
      %v1992 = vrot.slane %v1941, 5
      %v1993 = vrot.slane %v1992, 4
      %v1994 = vrot.slane %v1087, 5
      %v1995 = vsel %vm1991, %v1993, %v1994
      %v1996 = vrot.slane %v1994, 4
      %v1997 = vrot.slane %v1120, 5
      %v1998 = vsel %vm1991, %v1996, %v1997
      %v1999 = vrot.slane %v1942, 5
      %v2000 = vrot.slane %v1999, 4
      %v2001 = vrot.slane %v1089, 5
      %v2002 = vsel %vm1991, %v2000, %v2001
      %v2003 = vrot.slane %v2001, 4
      %v2004 = vrot.slane %v1121, 5
      %v2005 = vsel %vm1991, %v2003, %v2004
      %v2006 = vrot.slane %v1943, 5
      %v2007 = vrot.slane %v2006, 4
      %v2008 = vrot.slane %v1091, 5
      %v2009 = vsel %vm1991, %v2007, %v2008
      %v2010 = vrot.slane %v2008, 4
      %v2011 = vrot.slane %v1122, 5
      %v2012 = vsel %vm1991, %v2010, %v2011
      %v2013 = vrot.slane %v1944, 5
      %v2014 = vrot.slane %v2013, 4
      %v2015 = vrot.slane %v1093, 5
      %v2016 = vsel %vm1991, %v2014, %v2015
      %v2017 = vrot.slane %v2015, 4
      %v2018 = vrot.slane %v1123, 5
      %v2019 = vsel %vm1991, %v2017, %v2018
      %v2020 = vrot.slane %v1945, 5
      %v2021 = vrot.slane %v2020, 4
      %v2022 = vrot.slane %v1095, 5
      %v2023 = vsel %vm1991, %v2021, %v2022
      %v2024 = vrot.slane %v2022, 4
      %v2025 = vrot.slane %v1124, 5
      %v2026 = vsel %vm1991, %v2024, %v2025
      %v2027 = vrot.slane %v1946, 5
      %v2028 = vrot.slane %v2027, 4
      %v2029 = vrot.slane %v1097, 5
      %v2030 = vsel %vm1991, %v2028, %v2029
      %v2031 = vrot.slane %v2029, 4
      %v2032 = vrot.slane %v1125, 5
      %v2033 = vsel %vm1991, %v2031, %v2032
      %v2034 = vrot.slane %v1947, 5
      %v2035 = vrot.slane %v2034, 4
      %v2036 = vrot.slane %v1099, 5
      %v2037 = vsel %vm1991, %v2035, %v2036
      %v2038 = vrot.slane %v2036, 4
      %v2039 = vrot.slane %v1126, 5
      %v2040 = vsel %vm1991, %v2038, %v2039
      %v2041 = vrot.slane %v1948, 5
      %v2042 = vrot.slane %v2041, 4
      %v2043 = vrot.slane %v1101, 5
      %v2044 = vsel %vm1991, %v2042, %v2043
      %v2045 = vrot.slane %v2043, 4
      %v2046 = vrot.slane %v1127, 5
      %v2047 = vsel %vm1991, %v2045, %v2046
      %v2048 = vrot.slane %v1949, 5
      %v2049 = vrot.slane %v2048, 4
      %v2050 = vrot.slane %v1103, 5
      %v2051 = vsel %vm1991, %v2049, %v2050
      %v2052 = vrot.slane %v2050, 4
      %v2053 = vrot.slane %v1128, 5
      %v2054 = vsel %vm1991, %v2052, %v2053
      %v2055 = vrot.slane %v1950, 5
      %v2056 = vrot.slane %v2055, 4
      %v2057 = vrot.slane %v1105, 5
      %v2058 = vsel %vm1991, %v2056, %v2057
      %v2059 = vrot.slane %v2057, 4
      %v2060 = vrot.slane %v1129, 5
      %v2061 = vsel %vm1991, %v2059, %v2060
      %v2062 = vrot.slane %v1951, 5
      %v2063 = vrot.slane %v2062, 4
      %v2064 = vrot.slane %v1107, 5
      %v2065 = vsel %vm1991, %v2063, %v2064
      %v2066 = vrot.slane %v2064, 4
      %v2067 = vrot.slane %v1130, 5
      %v2068 = vsel %vm1991, %v2066, %v2067
      %v2069 = vrot.slane %v1952, 5
      %v2070 = vrot.slane %v2069, 4
      %v2071 = vrot.slane %v1109, 5
      %v2072 = vsel %vm1991, %v2070, %v2071
      %v2073 = vrot.slane %v2071, 4
      %v2074 = vrot.slane %v1131, 5
      %v2075 = vsel %vm1991, %v2073, %v2074
      %v2076 = vrot.slane %v1953, 5
      %v2077 = vrot.slane %v2076, 4
      %v2078 = vrot.slane %v1111, 5
      %v2079 = vsel %vm1991, %v2077, %v2078
      %v2080 = vrot.slane %v2078, 4
      %v2081 = vrot.slane %v1132, 5
      %v2082 = vsel %vm1991, %v2080, %v2081
      %v2083 = vrot.slane %v1954, 5
      %v2084 = vrot.slane %v2083, 4
      %v2085 = vrot.slane %v1113, 5
      %v2086 = vsel %vm1991, %v2084, %v2085
      %v2087 = vrot.slane %v2085, 4
      %v2088 = vrot.slane %v1133, 5
      %v2089 = vsel %vm1991, %v2087, %v2088
      %v2090 = vrot.slane %v1955, 5
      %v2091 = vrot.slane %v2090, 4
      %v2092 = vrot.slane %v1115, 5
      %v2093 = vsel %vm1991, %v2091, %v2092
      %v2094 = vrot.slane %v2092, 4
      %v2095 = vrot.slane %v1134, 5
      %v2096 = vsel %vm1991, %v2094, %v2095
      %v2097 = vrot.slane %v1956, 5
      %v2098 = vrot.slane %v2097, 4
      %v2099 = vrot.slane %v1117, 5
      %v2100 = vsel %vm1991, %v2098, %v2099
      %v2101 = vrot.slane %v2099, 4
      %v2102 = vrot.slane %v1135, 5
      %v2103 = vsel %vm1991, %v2101, %v2102
      %s2104 = scalar_lea.vmem %s3, 16
      %v2105 = vld [vmem:[%s2104] sm:$0xf]
      %v2106 = vld [vmem:[%s2104 + $0x4] sm:$0xf]
      %v2107 = vunpack.c.l.b16 %v1995
      %v2108 = vunpack.c.l.b16 %v1998
      %v2109 = vunpack.c.l.b16 %v2002
      %v2110 = vunpack.c.l.b16 %v2005
      %v2111 = vunpack.c.l.b16 %v2009
      %v2112 = vunpack.c.l.b16 %v2012
      %v2113 = vunpack.c.l.b16 %v2016
      %v2114 = vunpack.c.l.b16 %v2019
      %v2115 = vunpack.c.l.b16 %v2023
      %v2116 = vunpack.c.l.b16 %v2026
      %v2117 = vunpack.c.l.b16 %v2030
      %v2118 = vunpack.c.l.b16 %v2033
      %v2119 = vunpack.c.l.b16 %v2037
      %v2120 = vunpack.c.l.b16 %v2040
      %v2121 = vunpack.c.l.b16 %v2044
      %v2122 = vunpack.c.l.b16 %v2047
      %v2123 = vunpack.c.l.b16 %v2051
      %v2124 = vunpack.c.l.b16 %v2054
      %v2125 = vunpack.c.l.b16 %v2058
      %v2126 = vunpack.c.l.b16 %v2061
      %v2127 = vunpack.c.l.b16 %v2065
      %v2128 = vunpack.c.l.b16 %v2068
      %v2129 = vunpack.c.l.b16 %v2072
      %v2130 = vunpack.c.l.b16 %v2075
      %v2131 = vunpack.c.l.b16 %v2079
      %v2132 = vunpack.c.l.b16 %v2082
      %v2133 = vunpack.c.l.b16 %v2086
      %v2134 = vunpack.c.l.b16 %v2089
      %v2135 = vunpack.c.l.b16 %v2093
      %v2136 = vunpack.c.l.b16 %v2096
      %v2137 = vunpack.c.l.b16 %v2100
      %v2138 = vunpack.c.l.b16 %v2103
      %v2139 = vpack.c.b16 %v2108, %v2107
      %v2140 = vpack.c.b16 %v2110, %v2109
      %v2141 = vpack.c.b16 %v2112, %v2111
      %v2142 = vpack.c.b16 %v2114, %v2113
      %v2143 = vpack.c.b16 %v2116, %v2115
      %v2144 = vpack.c.b16 %v2118, %v2117
      %v2145 = vpack.c.b16 %v2120, %v2119
      %v2146 = vpack.c.b16 %v2122, %v2121
      %v2147 = vpack.c.b16 %v2124, %v2123
      %v2148 = vpack.c.b16 %v2126, %v2125
      %v2149 = vpack.c.b16 %v2128, %v2127
      %v2150 = vpack.c.b16 %v2130, %v2129
      %v2151 = vpack.c.b16 %v2132, %v2131
      %v2152 = vpack.c.b16 %v2134, %v2133
      %v2153 = vpack.c.b16 %v2136, %v2135
      %v2154 = vpack.c.b16 %v2138, %v2137
      %v2157 = vunpack.c.l.b16 %v2105
      %v2158 = vunpack.c.l.b16 %v2106
      %v2159 = vpack.c.b16 %v2158, %v2157
      %v2162 = vsel %vm1580, %v2139, 0
      %v2165 = vsel %vm1580, %v2140, 0
      %v2168 = vsel %vm1580, %v2141, 0
      %v2171 = vsel %vm1580, %v2142, 0
      %v2174 = vsel %vm1580, %v2143, 0
      %v2177 = vsel %vm1580, %v2144, 0
      %v2180 = vsel %vm1580, %v2145, 0
      %v2183 = vsel %vm1580, %v2146, 0
      %v2186 = vsel %vm1580, %v2147, 0
      %v2189 = vsel %vm1580, %v2148, 0
      %v2192 = vsel %vm1580, %v2149, 0
      %v2195 = vsel %vm1580, %v2150, 0
      %v2198 = vsel %vm1580, %v2151, 0
      %v2201 = vsel %vm1580, %v2152, 0
      %v2204 = vsel %vm1580, %v2153, 0
      %v2207 = vsel %vm1580, %v2154, 0
      %2209 = vmatpush.bf16.msra.mxu0 0
      %2210 = vmatpush.bf16.msra.mxu0 0
      %2211 = vmatpush.bf16.msra.mxu0 0
      %2212 = vmatpush.bf16.msra.mxu0 0
      %2213 = vmatpush.bf16.msra.mxu0 0
      %2214 = vmatpush.bf16.msra.mxu0 0
      %2215 = vmatpush.bf16.msra.mxu0 0
      %2216 = vmatpush.bf16.msra.mxu0 %v2159
      %2217 = vmatmul.bf16.gmra.mxu0 %v2162
      %v2218 = vpop.f32.mrf.mxu0
      %v2219 = vadd.f32 0.0, %v2218
      %v2220 = vpop.f32.mrf.mxu0
      %v2221 = vadd.f32 0.0, %v2220
      %2222 = vmatmul.bf16.gmra.mxu0 %v2165
      %v2223 = vpop.f32.mrf.mxu0
      %v2224 = vadd.f32 0.0, %v2223
      %v2225 = vpop.f32.mrf.mxu0
      %v2226 = vadd.f32 0.0, %v2225
      %2227 = vmatmul.bf16.gmra.mxu0 %v2168
      %v2228 = vpop.f32.mrf.mxu0
      %v2229 = vadd.f32 0.0, %v2228
      %v2230 = vpop.f32.mrf.mxu0
      %v2231 = vadd.f32 0.0, %v2230
      %2232 = vmatmul.bf16.gmra.mxu0 %v2171
      %v2233 = vpop.f32.mrf.mxu0
      %v2234 = vadd.f32 0.0, %v2233
      %v2235 = vpop.f32.mrf.mxu0
      %v2236 = vadd.f32 0.0, %v2235
      %2237 = vmatmul.bf16.gmra.mxu0 %v2174
      %v2238 = vpop.f32.mrf.mxu0
      %v2239 = vadd.f32 0.0, %v2238
      %v2240 = vpop.f32.mrf.mxu0
      %v2241 = vadd.f32 0.0, %v2240
      %2242 = vmatmul.bf16.gmra.mxu0 %v2177
      %v2243 = vpop.f32.mrf.mxu0
      %v2244 = vadd.f32 0.0, %v2243
      %v2245 = vpop.f32.mrf.mxu0
      %v2246 = vadd.f32 0.0, %v2245
      %2247 = vmatmul.bf16.gmra.mxu0 %v2180
      %v2248 = vpop.f32.mrf.mxu0
      %v2249 = vadd.f32 0.0, %v2248
      %v2250 = vpop.f32.mrf.mxu0
      %v2251 = vadd.f32 0.0, %v2250
      %2252 = vmatmul.bf16.gmra.mxu0 %v2183
      %v2253 = vpop.f32.mrf.mxu0
      %v2254 = vadd.f32 0.0, %v2253
      %v2255 = vpop.f32.mrf.mxu0
      %v2256 = vadd.f32 0.0, %v2255
      %2257 = vmatmul.bf16.gmra.mxu0 %v2186
      %v2258 = vpop.f32.mrf.mxu0
      %v2259 = vadd.f32 0.0, %v2258
      %v2260 = vpop.f32.mrf.mxu0
      %v2261 = vadd.f32 0.0, %v2260
      %2262 = vmatmul.bf16.gmra.mxu0 %v2189
      %v2263 = vpop.f32.mrf.mxu0
      %v2264 = vadd.f32 0.0, %v2263
      %v2265 = vpop.f32.mrf.mxu0
      %v2266 = vadd.f32 0.0, %v2265
      %2267 = vmatmul.bf16.gmra.mxu0 %v2192
      %v2268 = vpop.f32.mrf.mxu0
      %v2269 = vadd.f32 0.0, %v2268
      %v2270 = vpop.f32.mrf.mxu0
      %v2271 = vadd.f32 0.0, %v2270
      %2272 = vmatmul.bf16.gmra.mxu0 %v2195
      %v2273 = vpop.f32.mrf.mxu0
      %v2274 = vadd.f32 0.0, %v2273
      %v2275 = vpop.f32.mrf.mxu0
      %v2276 = vadd.f32 0.0, %v2275
      %2277 = vmatmul.bf16.gmra.mxu0 %v2198
      %v2278 = vpop.f32.mrf.mxu0
      %v2279 = vadd.f32 0.0, %v2278
      %v2280 = vpop.f32.mrf.mxu0
      %v2281 = vadd.f32 0.0, %v2280
      %2282 = vmatmul.bf16.gmra.mxu0 %v2201
      %v2283 = vpop.f32.mrf.mxu0
      %v2284 = vadd.f32 0.0, %v2283
      %v2285 = vpop.f32.mrf.mxu0
      %v2286 = vadd.f32 0.0, %v2285
      %2287 = vmatmul.bf16.gmra.mxu0 %v2204
      %v2288 = vpop.f32.mrf.mxu0
      %v2289 = vadd.f32 0.0, %v2288
      %v2290 = vpop.f32.mrf.mxu0
      %v2291 = vadd.f32 0.0, %v2290
      %2292 = vmatmul.bf16.gmra.mxu0 %v2207
      %v2293 = vpop.f32.mrf.mxu0
      %v2294 = vadd.f32 0.0, %v2293
      %v2295 = vpop.f32.mrf.mxu0
      %v2296 = vadd.f32 0.0, %v2295
      %2297 = vdwg.mxu0
      %v2298 = vadd.f32 %v1862, %v2219
      %v2299 = vadd.f32 %v1864, %v2221
      %v2300 = vadd.f32 %v1867, %v2224
      %v2301 = vadd.f32 %v1869, %v2226
      %v2302 = vadd.f32 %v1872, %v2229
      %v2303 = vadd.f32 %v1874, %v2231
      %v2304 = vadd.f32 %v1877, %v2234
      %v2305 = vadd.f32 %v1879, %v2236
      %v2306 = vadd.f32 %v1882, %v2239
      %v2307 = vadd.f32 %v1884, %v2241
      %v2308 = vadd.f32 %v1887, %v2244
      %v2309 = vadd.f32 %v1889, %v2246
      %v2310 = vadd.f32 %v1892, %v2249
      %v2311 = vadd.f32 %v1894, %v2251
      %v2312 = vadd.f32 %v1897, %v2254
      %v2313 = vadd.f32 %v1899, %v2256
      %v2314 = vadd.f32 %v1902, %v2259
      %v2315 = vadd.f32 %v1904, %v2261
      %v2316 = vadd.f32 %v1907, %v2264
      %v2317 = vadd.f32 %v1909, %v2266
      %v2318 = vadd.f32 %v1912, %v2269
      %v2319 = vadd.f32 %v1914, %v2271
      %v2320 = vadd.f32 %v1917, %v2274
      %v2321 = vadd.f32 %v1919, %v2276
      %v2322 = vadd.f32 %v1922, %v2279
      %v2323 = vadd.f32 %v1924, %v2281
      %v2324 = vadd.f32 %v1927, %v2284
      %v2325 = vadd.f32 %v1929, %v2286
      %v2326 = vadd.f32 %v1932, %v2289
      %v2327 = vadd.f32 %v1934, %v2291
      %v2328 = vadd.f32 %v1937, %v2294
      %v2329 = vadd.f32 %v1939, %v2296
      %s2330 = sadd.s32 %s319, 1
      %s2331 = smul.u32 %s2330, 3
      %s2332 = smul.addr %s2331, 4
      %s2333 = scalar_lea.vmem [#allocation2], %s2332
      %v2334 = vld [vmem:[%s2333] sm:$0xf]
      %v2335 = vld [vmem:[%s2333 + $0x4] sm:$0xf]
      %v2336 = vld [vmem:[%s2333 + $0xc] sm:$0xf]
      %v2337 = vld [vmem:[%s2333 + $0x10] sm:$0xf]
      %v2338 = vld [vmem:[%s2333 + $0x18] sm:$0xf]
      %v2339 = vld [vmem:[%s2333 + $0x1c] sm:$0xf]
      %v2340 = vld [vmem:[%s2333 + $0x24] sm:$0xf]
      %v2341 = vld [vmem:[%s2333 + $0x28] sm:$0xf]
      %v2342 = vld [vmem:[%s2333 + $0x30] sm:$0xf]
      %v2343 = vld [vmem:[%s2333 + $0x34] sm:$0xf]
      %v2344 = vld [vmem:[%s2333 + $0x3c] sm:$0xf]
      %v2345 = vld [vmem:[%s2333 + $0x40] sm:$0xf]
      %v2346 = vld [vmem:[%s2333 + $0x48] sm:$0xf]
      %v2347 = vld [vmem:[%s2333 + $0x4c] sm:$0xf]
      %v2348 = vld [vmem:[%s2333 + $0x54] sm:$0xf]
      %v2349 = vld [vmem:[%s2333 + $0x58] sm:$0xf]
      %v2350 = vld [vmem:[%s2333 + $0x60] sm:$0xf]
      %v2351 = vld [vmem:[%s2333 + $0x64] sm:$0xf]
      %v2352 = vld [vmem:[%s2333 + $0x6c] sm:$0xf]
      %v2353 = vld [vmem:[%s2333 + $0x70] sm:$0xf]
      %v2354 = vld [vmem:[%s2333 + $0x78] sm:$0xf]
      %v2355 = vld [vmem:[%s2333 + $0x7c] sm:$0xf]
      %v2356 = vld [vmem:[%s2333 + $0x84] sm:$0xf]
      %v2357 = vld [vmem:[%s2333 + $0x88] sm:$0xf]
      %v2358 = vld [vmem:[%s2333 + $0x90] sm:$0xf]
      %v2359 = vld [vmem:[%s2333 + $0x94] sm:$0xf]
      %v2360 = vld [vmem:[%s2333 + $0x9c] sm:$0xf]
      %v2361 = vld [vmem:[%s2333 + $0xa0] sm:$0xf]
      %v2362 = vld [vmem:[%s2333 + $0xa8] sm:$0xf]
      %v2363 = vld [vmem:[%s2333 + $0xac] sm:$0xf]
      %v2364 = vld [vmem:[%s2333 + $0xb4] sm:$0xf]
      %v2365 = vld [vmem:[%s2333 + $0xb8] sm:$0xf]
      %s2366 = scalar_lea.vmem %s3, 24
      %v2367 = vld [vmem:[%s2366] sm:$0xf]
      %v2368 = vld [vmem:[%s2366 + $0x4] sm:$0xf]
      %v2401 = vunpack.c.l.b16 %v2334
      %v2402 = vunpack.c.l.b16 %v2335
      %v2403 = vunpack.c.l.b16 %v2336
      %v2404 = vunpack.c.l.b16 %v2337
      %v2405 = vunpack.c.l.b16 %v2338
      %v2406 = vunpack.c.l.b16 %v2339
      %v2407 = vunpack.c.l.b16 %v2340
      %v2408 = vunpack.c.l.b16 %v2341
      %v2409 = vunpack.c.l.b16 %v2342
      %v2410 = vunpack.c.l.b16 %v2343
      %v2411 = vunpack.c.l.b16 %v2344
      %v2412 = vunpack.c.l.b16 %v2345
      %v2413 = vunpack.c.l.b16 %v2346
      %v2414 = vunpack.c.l.b16 %v2347
      %v2415 = vunpack.c.l.b16 %v2348
      %v2416 = vunpack.c.l.b16 %v2349
      %v2417 = vunpack.c.l.b16 %v2350
      %v2418 = vunpack.c.l.b16 %v2351
      %v2419 = vunpack.c.l.b16 %v2352
      %v2420 = vunpack.c.l.b16 %v2353
      %v2421 = vunpack.c.l.b16 %v2354
      %v2422 = vunpack.c.l.b16 %v2355
      %v2423 = vunpack.c.l.b16 %v2356
      %v2424 = vunpack.c.l.b16 %v2357
      %v2425 = vunpack.c.l.b16 %v2358
      %v2426 = vunpack.c.l.b16 %v2359
      %v2427 = vunpack.c.l.b16 %v2360
      %v2428 = vunpack.c.l.b16 %v2361
      %v2429 = vunpack.c.l.b16 %v2362
      %v2430 = vunpack.c.l.b16 %v2363
      %v2431 = vunpack.c.l.b16 %v2364
      %v2432 = vunpack.c.l.b16 %v2365
      %v2433 = vpack.c.b16 %v2402, %v2401
      %v2434 = vpack.c.b16 %v2404, %v2403
      %v2435 = vpack.c.b16 %v2406, %v2405
      %v2436 = vpack.c.b16 %v2408, %v2407
      %v2437 = vpack.c.b16 %v2410, %v2409
      %v2438 = vpack.c.b16 %v2412, %v2411
      %v2439 = vpack.c.b16 %v2414, %v2413
      %v2440 = vpack.c.b16 %v2416, %v2415
      %v2441 = vpack.c.b16 %v2418, %v2417
      %v2442 = vpack.c.b16 %v2420, %v2419
      %v2443 = vpack.c.b16 %v2422, %v2421
      %v2444 = vpack.c.b16 %v2424, %v2423
      %v2445 = vpack.c.b16 %v2426, %v2425
      %v2446 = vpack.c.b16 %v2428, %v2427
      %v2447 = vpack.c.b16 %v2430, %v2429
      %v2448 = vpack.c.b16 %v2432, %v2431
      %v2451 = vunpack.c.l.b16 %v2367
      %v2452 = vunpack.c.l.b16 %v2368
      %v2453 = vpack.c.b16 %v2452, %v2451
      %v2456 = vsel %vm1580, %v2433, 0
      %v2459 = vsel %vm1580, %v2434, 0
      %v2462 = vsel %vm1580, %v2435, 0
      %v2465 = vsel %vm1580, %v2436, 0
      %v2468 = vsel %vm1580, %v2437, 0
      %v2471 = vsel %vm1580, %v2438, 0
      %v2474 = vsel %vm1580, %v2439, 0
      %v2477 = vsel %vm1580, %v2440, 0
      %v2480 = vsel %vm1580, %v2441, 0
      %v2483 = vsel %vm1580, %v2442, 0
      %v2486 = vsel %vm1580, %v2443, 0
      %v2489 = vsel %vm1580, %v2444, 0
      %v2492 = vsel %vm1580, %v2445, 0
      %v2495 = vsel %vm1580, %v2446, 0
      %v2498 = vsel %vm1580, %v2447, 0
      %v2501 = vsel %vm1580, %v2448, 0
      %2503 = vmatpush.bf16.msra.mxu0 0
      %2504 = vmatpush.bf16.msra.mxu0 0
      %2505 = vmatpush.bf16.msra.mxu0 0
      %2506 = vmatpush.bf16.msra.mxu0 0
      %2507 = vmatpush.bf16.msra.mxu0 0
      %2508 = vmatpush.bf16.msra.mxu0 0
      %2509 = vmatpush.bf16.msra.mxu0 0
      %2510 = vmatpush.bf16.msra.mxu0 %v2453
      %2511 = vmatmul.bf16.gmra.mxu0 %v2456
      %v2512 = vpop.f32.mrf.mxu0
      %v2513 = vadd.f32 0.0, %v2512
      %v2514 = vpop.f32.mrf.mxu0
      %v2515 = vadd.f32 0.0, %v2514
      %2516 = vmatmul.bf16.gmra.mxu0 %v2459
      %v2517 = vpop.f32.mrf.mxu0
      %v2518 = vadd.f32 0.0, %v2517
      %v2519 = vpop.f32.mrf.mxu0
      %v2520 = vadd.f32 0.0, %v2519
      %2521 = vmatmul.bf16.gmra.mxu0 %v2462
      %v2522 = vpop.f32.mrf.mxu0
      %v2523 = vadd.f32 0.0, %v2522
      %v2524 = vpop.f32.mrf.mxu0
      %v2525 = vadd.f32 0.0, %v2524
      %2526 = vmatmul.bf16.gmra.mxu0 %v2465
      %v2527 = vpop.f32.mrf.mxu0
      %v2528 = vadd.f32 0.0, %v2527
      %v2529 = vpop.f32.mrf.mxu0
      %v2530 = vadd.f32 0.0, %v2529
      %2531 = vmatmul.bf16.gmra.mxu0 %v2468
      %v2532 = vpop.f32.mrf.mxu0
      %v2533 = vadd.f32 0.0, %v2532
      %v2534 = vpop.f32.mrf.mxu0
      %v2535 = vadd.f32 0.0, %v2534
      %2536 = vmatmul.bf16.gmra.mxu0 %v2471
      %v2537 = vpop.f32.mrf.mxu0
      %v2538 = vadd.f32 0.0, %v2537
      %v2539 = vpop.f32.mrf.mxu0
      %v2540 = vadd.f32 0.0, %v2539
      %2541 = vmatmul.bf16.gmra.mxu0 %v2474
      %v2542 = vpop.f32.mrf.mxu0
      %v2543 = vadd.f32 0.0, %v2542
      %v2544 = vpop.f32.mrf.mxu0
      %v2545 = vadd.f32 0.0, %v2544
      %2546 = vmatmul.bf16.gmra.mxu0 %v2477
      %v2547 = vpop.f32.mrf.mxu0
      %v2548 = vadd.f32 0.0, %v2547
      %v2549 = vpop.f32.mrf.mxu0
      %v2550 = vadd.f32 0.0, %v2549
      %2551 = vmatmul.bf16.gmra.mxu0 %v2480
      %v2552 = vpop.f32.mrf.mxu0
      %v2553 = vadd.f32 0.0, %v2552
      %v2554 = vpop.f32.mrf.mxu0
      %v2555 = vadd.f32 0.0, %v2554
      %2556 = vmatmul.bf16.gmra.mxu0 %v2483
      %v2557 = vpop.f32.mrf.mxu0
      %v2558 = vadd.f32 0.0, %v2557
      %v2559 = vpop.f32.mrf.mxu0
      %v2560 = vadd.f32 0.0, %v2559
      %2561 = vmatmul.bf16.gmra.mxu0 %v2486
      %v2562 = vpop.f32.mrf.mxu0
      %v2563 = vadd.f32 0.0, %v2562
      %v2564 = vpop.f32.mrf.mxu0
      %v2565 = vadd.f32 0.0, %v2564
      %2566 = vmatmul.bf16.gmra.mxu0 %v2489
      %v2567 = vpop.f32.mrf.mxu0
      %v2568 = vadd.f32 0.0, %v2567
      %v2569 = vpop.f32.mrf.mxu0
      %v2570 = vadd.f32 0.0, %v2569
      %2571 = vmatmul.bf16.gmra.mxu0 %v2492
      %v2572 = vpop.f32.mrf.mxu0
      %v2573 = vadd.f32 0.0, %v2572
      %v2574 = vpop.f32.mrf.mxu0
      %v2575 = vadd.f32 0.0, %v2574
      %2576 = vmatmul.bf16.gmra.mxu0 %v2495
      %v2577 = vpop.f32.mrf.mxu0
      %v2578 = vadd.f32 0.0, %v2577
      %v2579 = vpop.f32.mrf.mxu0
      %v2580 = vadd.f32 0.0, %v2579
      %2581 = vmatmul.bf16.gmra.mxu0 %v2498
      %v2582 = vpop.f32.mrf.mxu0
      %v2583 = vadd.f32 0.0, %v2582
      %v2584 = vpop.f32.mrf.mxu0
      %v2585 = vadd.f32 0.0, %v2584
      %2586 = vmatmul.bf16.gmra.mxu0 %v2501
      %v2587 = vpop.f32.mrf.mxu0
      %v2588 = vadd.f32 0.0, %v2587
      %v2589 = vpop.f32.mrf.mxu0
      %v2590 = vadd.f32 0.0, %v2589
      %2591 = vdwg.mxu0
      %v2592 = vadd.f32 %v2298, %v2513
      %v2593 = vadd.f32 %v2299, %v2515
      %v2594 = vadd.f32 %v2300, %v2518
      %v2595 = vadd.f32 %v2301, %v2520
      %v2596 = vadd.f32 %v2302, %v2523
      %v2597 = vadd.f32 %v2303, %v2525
      %v2598 = vadd.f32 %v2304, %v2528
      %v2599 = vadd.f32 %v2305, %v2530
      %v2600 = vadd.f32 %v2306, %v2533
      %v2601 = vadd.f32 %v2307, %v2535
      %v2602 = vadd.f32 %v2308, %v2538
      %v2603 = vadd.f32 %v2309, %v2540
      %v2604 = vadd.f32 %v2310, %v2543
      %v2605 = vadd.f32 %v2311, %v2545
      %v2606 = vadd.f32 %v2312, %v2548
      %v2607 = vadd.f32 %v2313, %v2550
      %v2608 = vadd.f32 %v2314, %v2553
      %v2609 = vadd.f32 %v2315, %v2555
      %v2610 = vadd.f32 %v2316, %v2558
      %v2611 = vadd.f32 %v2317, %v2560
      %v2612 = vadd.f32 %v2318, %v2563
      %v2613 = vadd.f32 %v2319, %v2565
      %v2614 = vadd.f32 %v2320, %v2568
      %v2615 = vadd.f32 %v2321, %v2570
      %v2616 = vadd.f32 %v2322, %v2573
      %v2617 = vadd.f32 %v2323, %v2575
      %v2618 = vadd.f32 %v2324, %v2578
      %v2619 = vadd.f32 %v2325, %v2580
      %v2620 = vadd.f32 %v2326, %v2583
      %v2621 = vadd.f32 %v2327, %v2585
      %v2622 = vadd.f32 %v2328, %v2588
      %v2623 = vadd.f32 %v2329, %v2590
      %v2624 = vld [vmem:[%s2333] sm:$0xf]
      %v2625 = vld [vmem:[%s2333 + $0x4] sm:$0xf]
      %v2626 = vld [vmem:[%s2333 + $0x8] sm:$0x1]
      %v2627 = vld [vmem:[%s2333 + $0xc] sm:$0xf]
      %v2628 = vld [vmem:[%s2333 + $0x10] sm:$0xf]
      %v2629 = vld [vmem:[%s2333 + $0x14] sm:$0x1]
      %v2630 = vld [vmem:[%s2333 + $0x18] sm:$0xf]
      %v2631 = vld [vmem:[%s2333 + $0x1c] sm:$0xf]
      %v2632 = vld [vmem:[%s2333 + $0x20] sm:$0x1]
      %v2633 = vld [vmem:[%s2333 + $0x24] sm:$0xf]
      %v2634 = vld [vmem:[%s2333 + $0x28] sm:$0xf]
      %v2635 = vld [vmem:[%s2333 + $0x2c] sm:$0x1]
      %v2636 = vld [vmem:[%s2333 + $0x30] sm:$0xf]
      %v2637 = vld [vmem:[%s2333 + $0x34] sm:$0xf]
      %v2638 = vld [vmem:[%s2333 + $0x38] sm:$0x1]
      %v2639 = vld [vmem:[%s2333 + $0x3c] sm:$0xf]
      %v2640 = vld [vmem:[%s2333 + $0x40] sm:$0xf]
      %v2641 = vld [vmem:[%s2333 + $0x44] sm:$0x1]
      %v2642 = vld [vmem:[%s2333 + $0x48] sm:$0xf]
      %v2643 = vld [vmem:[%s2333 + $0x4c] sm:$0xf]
      %v2644 = vld [vmem:[%s2333 + $0x50] sm:$0x1]
      %v2645 = vld [vmem:[%s2333 + $0x54] sm:$0xf]
      %v2646 = vld [vmem:[%s2333 + $0x58] sm:$0xf]
      %v2647 = vld [vmem:[%s2333 + $0x5c] sm:$0x1]
      %v2648 = vld [vmem:[%s2333 + $0x60] sm:$0xf]
      %v2649 = vld [vmem:[%s2333 + $0x64] sm:$0xf]
      %v2650 = vld [vmem:[%s2333 + $0x68] sm:$0x1]
      %v2651 = vld [vmem:[%s2333 + $0x6c] sm:$0xf]
      %v2652 = vld [vmem:[%s2333 + $0x70] sm:$0xf]
      %v2653 = vld [vmem:[%s2333 + $0x74] sm:$0x1]
      %v2654 = vld [vmem:[%s2333 + $0x78] sm:$0xf]
      %v2655 = vld [vmem:[%s2333 + $0x7c] sm:$0xf]
      %v2656 = vld [vmem:[%s2333 + $0x80] sm:$0x1]
      %v2657 = vld [vmem:[%s2333 + $0x84] sm:$0xf]
      %v2658 = vld [vmem:[%s2333 + $0x88] sm:$0xf]
      %v2659 = vld [vmem:[%s2333 + $0x8c] sm:$0x1]
      %v2660 = vld [vmem:[%s2333 + $0x90] sm:$0xf]
      %v2661 = vld [vmem:[%s2333 + $0x94] sm:$0xf]
      %v2662 = vld [vmem:[%s2333 + $0x98] sm:$0x1]
      %v2663 = vld [vmem:[%s2333 + $0x9c] sm:$0xf]
      %v2664 = vld [vmem:[%s2333 + $0xa0] sm:$0xf]
      %v2665 = vld [vmem:[%s2333 + $0xa4] sm:$0x1]
      %v2666 = vld [vmem:[%s2333 + $0xa8] sm:$0xf]
      %v2667 = vld [vmem:[%s2333 + $0xac] sm:$0xf]
      %v2668 = vld [vmem:[%s2333 + $0xb0] sm:$0x1]
      %v2669 = vld [vmem:[%s2333 + $0xb4] sm:$0xf]
      %v2670 = vld [vmem:[%s2333 + $0xb8] sm:$0xf]
      %v2671 = vld [vmem:[%s2333 + $0xbc] sm:$0x1]
      %v2673 = vshrl.u32 %v2624, 16
      %v2675 = vrot.slane %v2673, 4
      %v2676 = vshll.u32 %v2624, 16
      %v2678 = vrot.slane %v2676, 5
      %v2679 = vor.u32 %v2675, %v2678
      %v2680 = vrot.slane %v2679, 4
      %v2682 = vshll.u32 %v2625, 16
      %v2684 = vrot.slane %v2682, 5
      %v2685 = vsel %vm1138, %v2680, %v2684
      %v2686 = vshrl.u32 %v2625, 16
      %v2688 = vrot.slane %v2686, 4
      %v2689 = vor.u32 %v2688, %v2684
      %v2690 = vrot.slane %v2689, 4
      %v2692 = vshll.u32 %v2626, 16
      %v2694 = vrot.slane %v2692, 5
      %v2695 = vsel %vm1138, %v2690, %v2694
      %v2697 = vshrl.u32 %v2627, 16
      %v2699 = vrot.slane %v2697, 4
      %v2700 = vshll.u32 %v2627, 16
      %v2702 = vrot.slane %v2700, 5
      %v2703 = vor.u32 %v2699, %v2702
      %v2704 = vrot.slane %v2703, 4
      %v2706 = vshll.u32 %v2628, 16
      %v2708 = vrot.slane %v2706, 5
      %v2709 = vsel %vm1138, %v2704, %v2708
      %v2710 = vshrl.u32 %v2628, 16
      %v2712 = vrot.slane %v2710, 4
      %v2713 = vor.u32 %v2712, %v2708
      %v2714 = vrot.slane %v2713, 4
      %v2716 = vshll.u32 %v2629, 16
      %v2718 = vrot.slane %v2716, 5
      %v2719 = vsel %vm1138, %v2714, %v2718
      %v2721 = vshrl.u32 %v2630, 16
      %v2723 = vrot.slane %v2721, 4
      %v2724 = vshll.u32 %v2630, 16
      %v2726 = vrot.slane %v2724, 5
      %v2727 = vor.u32 %v2723, %v2726
      %v2728 = vrot.slane %v2727, 4
      %v2730 = vshll.u32 %v2631, 16
      %v2732 = vrot.slane %v2730, 5
      %v2733 = vsel %vm1138, %v2728, %v2732
      %v2734 = vshrl.u32 %v2631, 16
      %v2736 = vrot.slane %v2734, 4
      %v2737 = vor.u32 %v2736, %v2732
      %v2738 = vrot.slane %v2737, 4
      %v2740 = vshll.u32 %v2632, 16
      %v2742 = vrot.slane %v2740, 5
      %v2743 = vsel %vm1138, %v2738, %v2742
      %v2745 = vshrl.u32 %v2633, 16
      %v2747 = vrot.slane %v2745, 4
      %v2748 = vshll.u32 %v2633, 16
      %v2750 = vrot.slane %v2748, 5
      %v2751 = vor.u32 %v2747, %v2750
      %v2752 = vrot.slane %v2751, 4
      %v2754 = vshll.u32 %v2634, 16
      %v2756 = vrot.slane %v2754, 5
      %v2757 = vsel %vm1138, %v2752, %v2756
      %v2758 = vshrl.u32 %v2634, 16
      %v2760 = vrot.slane %v2758, 4
      %v2761 = vor.u32 %v2760, %v2756
      %v2762 = vrot.slane %v2761, 4
      %v2764 = vshll.u32 %v2635, 16
      %v2766 = vrot.slane %v2764, 5
      %v2767 = vsel %vm1138, %v2762, %v2766
      %v2769 = vshrl.u32 %v2636, 16
      %v2771 = vrot.slane %v2769, 4
      %v2772 = vshll.u32 %v2636, 16
      %v2774 = vrot.slane %v2772, 5
      %v2775 = vor.u32 %v2771, %v2774
      %v2776 = vrot.slane %v2775, 4
      %v2778 = vshll.u32 %v2637, 16
      %v2780 = vrot.slane %v2778, 5
      %v2781 = vsel %vm1138, %v2776, %v2780
      %v2782 = vshrl.u32 %v2637, 16
      %v2784 = vrot.slane %v2782, 4
      %v2785 = vor.u32 %v2784, %v2780
      %v2786 = vrot.slane %v2785, 4
      %v2788 = vshll.u32 %v2638, 16
      %v2790 = vrot.slane %v2788, 5
      %v2791 = vsel %vm1138, %v2786, %v2790
      %v2793 = vshrl.u32 %v2639, 16
      %v2795 = vrot.slane %v2793, 4
      %v2796 = vshll.u32 %v2639, 16
      %v2798 = vrot.slane %v2796, 5
      %v2799 = vor.u32 %v2795, %v2798
      %v2800 = vrot.slane %v2799, 4
      %v2802 = vshll.u32 %v2640, 16
      %v2804 = vrot.slane %v2802, 5
      %v2805 = vsel %vm1138, %v2800, %v2804
      %v2806 = vshrl.u32 %v2640, 16
      %v2808 = vrot.slane %v2806, 4
      %v2809 = vor.u32 %v2808, %v2804
      %v2810 = vrot.slane %v2809, 4
      %v2812 = vshll.u32 %v2641, 16
      %v2814 = vrot.slane %v2812, 5
      %v2815 = vsel %vm1138, %v2810, %v2814
      %v2817 = vshrl.u32 %v2642, 16
      %v2819 = vrot.slane %v2817, 4
      %v2820 = vshll.u32 %v2642, 16
      %v2822 = vrot.slane %v2820, 5
      %v2823 = vor.u32 %v2819, %v2822
      %v2824 = vrot.slane %v2823, 4
      %v2826 = vshll.u32 %v2643, 16
      %v2828 = vrot.slane %v2826, 5
      %v2829 = vsel %vm1138, %v2824, %v2828
      %v2830 = vshrl.u32 %v2643, 16
      %v2832 = vrot.slane %v2830, 4
      %v2833 = vor.u32 %v2832, %v2828
      %v2834 = vrot.slane %v2833, 4
      %v2836 = vshll.u32 %v2644, 16
      %v2838 = vrot.slane %v2836, 5
      %v2839 = vsel %vm1138, %v2834, %v2838
      %v2841 = vshrl.u32 %v2645, 16
      %v2843 = vrot.slane %v2841, 4
      %v2844 = vshll.u32 %v2645, 16
      %v2846 = vrot.slane %v2844, 5
      %v2847 = vor.u32 %v2843, %v2846
      %v2848 = vrot.slane %v2847, 4
      %v2850 = vshll.u32 %v2646, 16
      %v2852 = vrot.slane %v2850, 5
      %v2853 = vsel %vm1138, %v2848, %v2852
      %v2854 = vshrl.u32 %v2646, 16
      %v2856 = vrot.slane %v2854, 4
      %v2857 = vor.u32 %v2856, %v2852
      %v2858 = vrot.slane %v2857, 4
      %v2860 = vshll.u32 %v2647, 16
      %v2862 = vrot.slane %v2860, 5
      %v2863 = vsel %vm1138, %v2858, %v2862
      %v2865 = vshrl.u32 %v2648, 16
      %v2867 = vrot.slane %v2865, 4
      %v2868 = vshll.u32 %v2648, 16
      %v2870 = vrot.slane %v2868, 5
      %v2871 = vor.u32 %v2867, %v2870
      %v2872 = vrot.slane %v2871, 4
      %v2874 = vshll.u32 %v2649, 16
      %v2876 = vrot.slane %v2874, 5
      %v2877 = vsel %vm1138, %v2872, %v2876
      %v2878 = vshrl.u32 %v2649, 16
      %v2880 = vrot.slane %v2878, 4
      %v2881 = vor.u32 %v2880, %v2876
      %v2882 = vrot.slane %v2881, 4
      %v2884 = vshll.u32 %v2650, 16
      %v2886 = vrot.slane %v2884, 5
      %v2887 = vsel %vm1138, %v2882, %v2886
      %v2889 = vshrl.u32 %v2651, 16
      %v2891 = vrot.slane %v2889, 4
      %v2892 = vshll.u32 %v2651, 16
      %v2894 = vrot.slane %v2892, 5
      %v2895 = vor.u32 %v2891, %v2894
      %v2896 = vrot.slane %v2895, 4
      %v2898 = vshll.u32 %v2652, 16
      %v2900 = vrot.slane %v2898, 5
      %v2901 = vsel %vm1138, %v2896, %v2900
      %v2902 = vshrl.u32 %v2652, 16
      %v2904 = vrot.slane %v2902, 4
      %v2905 = vor.u32 %v2904, %v2900
      %v2906 = vrot.slane %v2905, 4
      %v2908 = vshll.u32 %v2653, 16
      %v2910 = vrot.slane %v2908, 5
      %v2911 = vsel %vm1138, %v2906, %v2910
      %v2913 = vshrl.u32 %v2654, 16
      %v2915 = vrot.slane %v2913, 4
      %v2916 = vshll.u32 %v2654, 16
      %v2918 = vrot.slane %v2916, 5
      %v2919 = vor.u32 %v2915, %v2918
      %v2920 = vrot.slane %v2919, 4
      %v2922 = vshll.u32 %v2655, 16
      %v2924 = vrot.slane %v2922, 5
      %v2925 = vsel %vm1138, %v2920, %v2924
      %v2926 = vshrl.u32 %v2655, 16
      %v2928 = vrot.slane %v2926, 4
      %v2929 = vor.u32 %v2928, %v2924
      %v2930 = vrot.slane %v2929, 4
      %v2932 = vshll.u32 %v2656, 16
      %v2934 = vrot.slane %v2932, 5
      %v2935 = vsel %vm1138, %v2930, %v2934
      %v2937 = vshrl.u32 %v2657, 16
      %v2939 = vrot.slane %v2937, 4
      %v2940 = vshll.u32 %v2657, 16
      %v2942 = vrot.slane %v2940, 5
      %v2943 = vor.u32 %v2939, %v2942
      %v2944 = vrot.slane %v2943, 4
      %v2946 = vshll.u32 %v2658, 16
      %v2948 = vrot.slane %v2946, 5
      %v2949 = vsel %vm1138, %v2944, %v2948
      %v2950 = vshrl.u32 %v2658, 16
      %v2952 = vrot.slane %v2950, 4
      %v2953 = vor.u32 %v2952, %v2948
      %v2954 = vrot.slane %v2953, 4
      %v2956 = vshll.u32 %v2659, 16
      %v2958 = vrot.slane %v2956, 5
      %v2959 = vsel %vm1138, %v2954, %v2958
      %v2961 = vshrl.u32 %v2660, 16
      %v2963 = vrot.slane %v2961, 4
      %v2964 = vshll.u32 %v2660, 16
      %v2966 = vrot.slane %v2964, 5
      %v2967 = vor.u32 %v2963, %v2966
      %v2968 = vrot.slane %v2967, 4
      %v2970 = vshll.u32 %v2661, 16
      %v2972 = vrot.slane %v2970, 5
      %v2973 = vsel %vm1138, %v2968, %v2972
      %v2974 = vshrl.u32 %v2661, 16
      %v2976 = vrot.slane %v2974, 4
      %v2977 = vor.u32 %v2976, %v2972
      %v2978 = vrot.slane %v2977, 4
      %v2980 = vshll.u32 %v2662, 16
      %v2982 = vrot.slane %v2980, 5
      %v2983 = vsel %vm1138, %v2978, %v2982
      %v2985 = vshrl.u32 %v2663, 16
      %v2987 = vrot.slane %v2985, 4
      %v2988 = vshll.u32 %v2663, 16
      %v2990 = vrot.slane %v2988, 5
      %v2991 = vor.u32 %v2987, %v2990
      %v2992 = vrot.slane %v2991, 4
      %v2994 = vshll.u32 %v2664, 16
      %v2996 = vrot.slane %v2994, 5
      %v2997 = vsel %vm1138, %v2992, %v2996
      %v2998 = vshrl.u32 %v2664, 16
      %v3000 = vrot.slane %v2998, 4
      %v3001 = vor.u32 %v3000, %v2996
      %v3002 = vrot.slane %v3001, 4
      %v3004 = vshll.u32 %v2665, 16
      %v3006 = vrot.slane %v3004, 5
      %v3007 = vsel %vm1138, %v3002, %v3006
      %v3009 = vshrl.u32 %v2666, 16
      %v3011 = vrot.slane %v3009, 4
      %v3012 = vshll.u32 %v2666, 16
      %v3014 = vrot.slane %v3012, 5
      %v3015 = vor.u32 %v3011, %v3014
      %v3016 = vrot.slane %v3015, 4
      %v3018 = vshll.u32 %v2667, 16
      %v3020 = vrot.slane %v3018, 5
      %v3021 = vsel %vm1138, %v3016, %v3020
      %v3022 = vshrl.u32 %v2667, 16
      %v3024 = vrot.slane %v3022, 4
      %v3025 = vor.u32 %v3024, %v3020
      %v3026 = vrot.slane %v3025, 4
      %v3028 = vshll.u32 %v2668, 16
      %v3030 = vrot.slane %v3028, 5
      %v3031 = vsel %vm1138, %v3026, %v3030
      %v3033 = vshrl.u32 %v2669, 16
      %v3035 = vrot.slane %v3033, 4
      %v3036 = vshll.u32 %v2669, 16
      %v3038 = vrot.slane %v3036, 5
      %v3039 = vor.u32 %v3035, %v3038
      %v3040 = vrot.slane %v3039, 4
      %v3042 = vshll.u32 %v2670, 16
      %v3044 = vrot.slane %v3042, 5
      %v3045 = vsel %vm1138, %v3040, %v3044
      %v3046 = vshrl.u32 %v2670, 16
      %v3048 = vrot.slane %v3046, 4
      %v3049 = vor.u32 %v3048, %v3044
      %v3050 = vrot.slane %v3049, 4
      %v3052 = vshll.u32 %v2671, 16
      %v3054 = vrot.slane %v3052, 5
      %v3055 = vsel %vm1138, %v3050, %v3054
      %s3056 = scalar_lea.vmem %s3, 32
      %v3057 = vld [vmem:[%s3056] sm:$0xf]
      %v3058 = vld [vmem:[%s3056 + $0x4] sm:$0xf]
      %v3059 = vunpack.c.l.b16 %v2685
      %v3060 = vunpack.c.l.b16 %v2695
      %v3061 = vunpack.c.l.b16 %v2709
      %v3062 = vunpack.c.l.b16 %v2719
      %v3063 = vunpack.c.l.b16 %v2733
      %v3064 = vunpack.c.l.b16 %v2743
      %v3065 = vunpack.c.l.b16 %v2757
      %v3066 = vunpack.c.l.b16 %v2767
      %v3067 = vunpack.c.l.b16 %v2781
      %v3068 = vunpack.c.l.b16 %v2791
      %v3069 = vunpack.c.l.b16 %v2805
      %v3070 = vunpack.c.l.b16 %v2815
      %v3071 = vunpack.c.l.b16 %v2829
      %v3072 = vunpack.c.l.b16 %v2839
      %v3073 = vunpack.c.l.b16 %v2853
      %v3074 = vunpack.c.l.b16 %v2863
      %v3075 = vunpack.c.l.b16 %v2877
      %v3076 = vunpack.c.l.b16 %v2887
      %v3077 = vunpack.c.l.b16 %v2901
      %v3078 = vunpack.c.l.b16 %v2911
      %v3079 = vunpack.c.l.b16 %v2925
      %v3080 = vunpack.c.l.b16 %v2935
      %v3081 = vunpack.c.l.b16 %v2949
      %v3082 = vunpack.c.l.b16 %v2959
      %v3083 = vunpack.c.l.b16 %v2973
      %v3084 = vunpack.c.l.b16 %v2983
      %v3085 = vunpack.c.l.b16 %v2997
      %v3086 = vunpack.c.l.b16 %v3007
      %v3087 = vunpack.c.l.b16 %v3021
      %v3088 = vunpack.c.l.b16 %v3031
      %v3089 = vunpack.c.l.b16 %v3045
      %v3090 = vunpack.c.l.b16 %v3055
      %v3091 = vpack.c.b16 %v3060, %v3059
      %v3092 = vpack.c.b16 %v3062, %v3061
      %v3093 = vpack.c.b16 %v3064, %v3063
      %v3094 = vpack.c.b16 %v3066, %v3065
      %v3095 = vpack.c.b16 %v3068, %v3067
      %v3096 = vpack.c.b16 %v3070, %v3069
      %v3097 = vpack.c.b16 %v3072, %v3071
      %v3098 = vpack.c.b16 %v3074, %v3073
      %v3099 = vpack.c.b16 %v3076, %v3075
      %v3100 = vpack.c.b16 %v3078, %v3077
      %v3101 = vpack.c.b16 %v3080, %v3079
      %v3102 = vpack.c.b16 %v3082, %v3081
      %v3103 = vpack.c.b16 %v3084, %v3083
      %v3104 = vpack.c.b16 %v3086, %v3085
      %v3105 = vpack.c.b16 %v3088, %v3087
      %v3106 = vpack.c.b16 %v3090, %v3089
      %v3109 = vunpack.c.l.b16 %v3057
      %v3110 = vunpack.c.l.b16 %v3058
      %v3111 = vpack.c.b16 %v3110, %v3109
      %v3114 = vsel %vm1580, %v3091, 0
      %v3117 = vsel %vm1580, %v3092, 0
      %v3120 = vsel %vm1580, %v3093, 0
      %v3123 = vsel %vm1580, %v3094, 0
      %v3126 = vsel %vm1580, %v3095, 0
      %v3129 = vsel %vm1580, %v3096, 0
      %v3132 = vsel %vm1580, %v3097, 0
      %v3135 = vsel %vm1580, %v3098, 0
      %v3138 = vsel %vm1580, %v3099, 0
      %v3141 = vsel %vm1580, %v3100, 0
      %v3144 = vsel %vm1580, %v3101, 0
      %v3147 = vsel %vm1580, %v3102, 0
      %v3150 = vsel %vm1580, %v3103, 0
      %v3153 = vsel %vm1580, %v3104, 0
      %v3156 = vsel %vm1580, %v3105, 0
      %v3159 = vsel %vm1580, %v3106, 0
      %3161 = vmatpush.bf16.msra.mxu0 0
      %3162 = vmatpush.bf16.msra.mxu0 0
      %3163 = vmatpush.bf16.msra.mxu0 0
      %3164 = vmatpush.bf16.msra.mxu0 0
      %3165 = vmatpush.bf16.msra.mxu0 0
      %3166 = vmatpush.bf16.msra.mxu0 0
      %3167 = vmatpush.bf16.msra.mxu0 0
      %3168 = vmatpush.bf16.msra.mxu0 %v3111
      %3169 = vmatmul.bf16.gmra.mxu0 %v3114
      %v3170 = vpop.f32.mrf.mxu0
      %v3171 = vadd.f32 0.0, %v3170
      %v3172 = vpop.f32.mrf.mxu0
      %v3173 = vadd.f32 0.0, %v3172
      %3174 = vmatmul.bf16.gmra.mxu0 %v3117
      %v3175 = vpop.f32.mrf.mxu0
      %v3176 = vadd.f32 0.0, %v3175
      %v3177 = vpop.f32.mrf.mxu0
      %v3178 = vadd.f32 0.0, %v3177
      %3179 = vmatmul.bf16.gmra.mxu0 %v3120
      %v3180 = vpop.f32.mrf.mxu0
      %v3181 = vadd.f32 0.0, %v3180
      %v3182 = vpop.f32.mrf.mxu0
      %v3183 = vadd.f32 0.0, %v3182
      %3184 = vmatmul.bf16.gmra.mxu0 %v3123
      %v3185 = vpop.f32.mrf.mxu0
      %v3186 = vadd.f32 0.0, %v3185
      %v3187 = vpop.f32.mrf.mxu0
      %v3188 = vadd.f32 0.0, %v3187
      %3189 = vmatmul.bf16.gmra.mxu0 %v3126
      %v3190 = vpop.f32.mrf.mxu0
      %v3191 = vadd.f32 0.0, %v3190
      %v3192 = vpop.f32.mrf.mxu0
      %v3193 = vadd.f32 0.0, %v3192
      %3194 = vmatmul.bf16.gmra.mxu0 %v3129
      %v3195 = vpop.f32.mrf.mxu0
      %v3196 = vadd.f32 0.0, %v3195
      %v3197 = vpop.f32.mrf.mxu0
      %v3198 = vadd.f32 0.0, %v3197
      %3199 = vmatmul.bf16.gmra.mxu0 %v3132
      %v3200 = vpop.f32.mrf.mxu0
      %v3201 = vadd.f32 0.0, %v3200
      %v3202 = vpop.f32.mrf.mxu0
      %v3203 = vadd.f32 0.0, %v3202
      %3204 = vmatmul.bf16.gmra.mxu0 %v3135
      %v3205 = vpop.f32.mrf.mxu0
      %v3206 = vadd.f32 0.0, %v3205
      %v3207 = vpop.f32.mrf.mxu0
      %v3208 = vadd.f32 0.0, %v3207
      %3209 = vmatmul.bf16.gmra.mxu0 %v3138
      %v3210 = vpop.f32.mrf.mxu0
      %v3211 = vadd.f32 0.0, %v3210
      %v3212 = vpop.f32.mrf.mxu0
      %v3213 = vadd.f32 0.0, %v3212
      %3214 = vmatmul.bf16.gmra.mxu0 %v3141
      %v3215 = vpop.f32.mrf.mxu0
      %v3216 = vadd.f32 0.0, %v3215
      %v3217 = vpop.f32.mrf.mxu0
      %v3218 = vadd.f32 0.0, %v3217
      %3219 = vmatmul.bf16.gmra.mxu0 %v3144
      %v3220 = vpop.f32.mrf.mxu0
      %v3221 = vadd.f32 0.0, %v3220
      %v3222 = vpop.f32.mrf.mxu0
      %v3223 = vadd.f32 0.0, %v3222
      %3224 = vmatmul.bf16.gmra.mxu0 %v3147
      %v3225 = vpop.f32.mrf.mxu0
      %v3226 = vadd.f32 0.0, %v3225
      %v3227 = vpop.f32.mrf.mxu0
      %v3228 = vadd.f32 0.0, %v3227
      %3229 = vmatmul.bf16.gmra.mxu0 %v3150
      %v3230 = vpop.f32.mrf.mxu0
      %v3231 = vadd.f32 0.0, %v3230
      %v3232 = vpop.f32.mrf.mxu0
      %v3233 = vadd.f32 0.0, %v3232
      %3234 = vmatmul.bf16.gmra.mxu0 %v3153
      %v3235 = vpop.f32.mrf.mxu0
      %v3236 = vadd.f32 0.0, %v3235
      %v3237 = vpop.f32.mrf.mxu0
      %v3238 = vadd.f32 0.0, %v3237
      %3239 = vmatmul.bf16.gmra.mxu0 %v3156
      %v3240 = vpop.f32.mrf.mxu0
      %v3241 = vadd.f32 0.0, %v3240
      %v3242 = vpop.f32.mrf.mxu0
      %v3243 = vadd.f32 0.0, %v3242
      %3244 = vmatmul.bf16.gmra.mxu0 %v3159
      %v3245 = vpop.f32.mrf.mxu0
      %v3246 = vadd.f32 0.0, %v3245
      %v3247 = vpop.f32.mrf.mxu0
      %v3248 = vadd.f32 0.0, %v3247
      %3249 = vdwg.mxu0
      %v3250 = vadd.f32 %v2592, %v3171
      %v3251 = vadd.f32 %v2593, %v3173
      %v3252 = vadd.f32 %v2594, %v3176
      %v3253 = vadd.f32 %v2595, %v3178
      %v3254 = vadd.f32 %v2596, %v3181
      %v3255 = vadd.f32 %v2597, %v3183
      %v3256 = vadd.f32 %v2598, %v3186
      %v3257 = vadd.f32 %v2599, %v3188
      %v3258 = vadd.f32 %v2600, %v3191
      %v3259 = vadd.f32 %v2601, %v3193
      %v3260 = vadd.f32 %v2602, %v3196
      %v3261 = vadd.f32 %v2603, %v3198
      %v3262 = vadd.f32 %v2604, %v3201
      %v3263 = vadd.f32 %v2605, %v3203
      %v3264 = vadd.f32 %v2606, %v3206
      %v3265 = vadd.f32 %v2607, %v3208
      %v3266 = vadd.f32 %v2608, %v3211
      %v3267 = vadd.f32 %v2609, %v3213
      %v3268 = vadd.f32 %v2610, %v3216
      %v3269 = vadd.f32 %v2611, %v3218
      %v3270 = vadd.f32 %v2612, %v3221
      %v3271 = vadd.f32 %v2613, %v3223
      %v3272 = vadd.f32 %v2614, %v3226
      %v3273 = vadd.f32 %v2615, %v3228
      %v3274 = vadd.f32 %v2616, %v3231
      %v3275 = vadd.f32 %v2617, %v3233
      %v3276 = vadd.f32 %v2618, %v3236
      %v3277 = vadd.f32 %v2619, %v3238
      %v3278 = vadd.f32 %v2620, %v3241
      %v3279 = vadd.f32 %v2621, %v3243
      %v3280 = vadd.f32 %v2622, %v3246
      %v3281 = vadd.f32 %v2623, %v3248
      %v3282 = vld [vmem:[%s2333] sm:$0xe]
      %v3283 = vld [vmem:[%s2333 + $0xc] sm:$0xe]
      %v3284 = vld [vmem:[%s2333 + $0x18] sm:$0xe]
      %v3285 = vld [vmem:[%s2333 + $0x24] sm:$0xe]
      %v3286 = vld [vmem:[%s2333 + $0x30] sm:$0xe]
      %v3287 = vld [vmem:[%s2333 + $0x3c] sm:$0xe]
      %v3288 = vld [vmem:[%s2333 + $0x48] sm:$0xe]
      %v3289 = vld [vmem:[%s2333 + $0x54] sm:$0xe]
      %v3290 = vld [vmem:[%s2333 + $0x60] sm:$0xe]
      %v3291 = vld [vmem:[%s2333 + $0x6c] sm:$0xe]
      %v3292 = vld [vmem:[%s2333 + $0x78] sm:$0xe]
      %v3293 = vld [vmem:[%s2333 + $0x84] sm:$0xe]
      %v3294 = vld [vmem:[%s2333 + $0x90] sm:$0xe]
      %v3295 = vld [vmem:[%s2333 + $0x9c] sm:$0xe]
      %v3296 = vld [vmem:[%s2333 + $0xa8] sm:$0xe]
      %v3297 = vld [vmem:[%s2333 + $0xb4] sm:$0xe]
      %v3346 = vrot.slane %v3282, 5
      %v3347 = vrot.slane %v3346, 4
      %v3348 = vrot.slane %v2625, 5
      %v3349 = vsel %vm1991, %v3347, %v3348
      %v3350 = vrot.slane %v3348, 4
      %v3351 = vrot.slane %v2626, 5
      %v3352 = vsel %vm1991, %v3350, %v3351
      %v3353 = vrot.slane %v3283, 5
      %v3354 = vrot.slane %v3353, 4
      %v3355 = vrot.slane %v2628, 5
      %v3356 = vsel %vm1991, %v3354, %v3355
      %v3357 = vrot.slane %v3355, 4
      %v3358 = vrot.slane %v2629, 5
      %v3359 = vsel %vm1991, %v3357, %v3358
      %v3360 = vrot.slane %v3284, 5
      %v3361 = vrot.slane %v3360, 4
      %v3362 = vrot.slane %v2631, 5
      %v3363 = vsel %vm1991, %v3361, %v3362
      %v3364 = vrot.slane %v3362, 4
      %v3365 = vrot.slane %v2632, 5
      %v3366 = vsel %vm1991, %v3364, %v3365
      %v3367 = vrot.slane %v3285, 5
      %v3368 = vrot.slane %v3367, 4
      %v3369 = vrot.slane %v2634, 5
      %v3370 = vsel %vm1991, %v3368, %v3369
      %v3371 = vrot.slane %v3369, 4
      %v3372 = vrot.slane %v2635, 5
      %v3373 = vsel %vm1991, %v3371, %v3372
      %v3374 = vrot.slane %v3286, 5
      %v3375 = vrot.slane %v3374, 4
      %v3376 = vrot.slane %v2637, 5
      %v3377 = vsel %vm1991, %v3375, %v3376
      %v3378 = vrot.slane %v3376, 4
      %v3379 = vrot.slane %v2638, 5
      %v3380 = vsel %vm1991, %v3378, %v3379
      %v3381 = vrot.slane %v3287, 5
      %v3382 = vrot.slane %v3381, 4
      %v3383 = vrot.slane %v2640, 5
      %v3384 = vsel %vm1991, %v3382, %v3383
      %v3385 = vrot.slane %v3383, 4
      %v3386 = vrot.slane %v2641, 5
      %v3387 = vsel %vm1991, %v3385, %v3386
      %v3388 = vrot.slane %v3288, 5
      %v3389 = vrot.slane %v3388, 4
      %v3390 = vrot.slane %v2643, 5
      %v3391 = vsel %vm1991, %v3389, %v3390
      %v3392 = vrot.slane %v3390, 4
      %v3393 = vrot.slane %v2644, 5
      %v3394 = vsel %vm1991, %v3392, %v3393
      %v3395 = vrot.slane %v3289, 5
      %v3396 = vrot.slane %v3395, 4
      %v3397 = vrot.slane %v2646, 5
      %v3398 = vsel %vm1991, %v3396, %v3397
      %v3399 = vrot.slane %v3397, 4
      %v3400 = vrot.slane %v2647, 5
      %v3401 = vsel %vm1991, %v3399, %v3400
      %v3402 = vrot.slane %v3290, 5
      %v3403 = vrot.slane %v3402, 4
      %v3404 = vrot.slane %v2649, 5
      %v3405 = vsel %vm1991, %v3403, %v3404
      %v3406 = vrot.slane %v3404, 4
      %v3407 = vrot.slane %v2650, 5
      %v3408 = vsel %vm1991, %v3406, %v3407
      %v3409 = vrot.slane %v3291, 5
      %v3410 = vrot.slane %v3409, 4
      %v3411 = vrot.slane %v2652, 5
      %v3412 = vsel %vm1991, %v3410, %v3411
      %v3413 = vrot.slane %v3411, 4
      %v3414 = vrot.slane %v2653, 5
      %v3415 = vsel %vm1991, %v3413, %v3414
      %v3416 = vrot.slane %v3292, 5
      %v3417 = vrot.slane %v3416, 4
      %v3418 = vrot.slane %v2655, 5
      %v3419 = vsel %vm1991, %v3417, %v3418
      %v3420 = vrot.slane %v3418, 4
      %v3421 = vrot.slane %v2656, 5
      %v3422 = vsel %vm1991, %v3420, %v3421
      %v3423 = vrot.slane %v3293, 5
      %v3424 = vrot.slane %v3423, 4
      %v3425 = vrot.slane %v2658, 5
      %v3426 = vsel %vm1991, %v3424, %v3425
      %v3427 = vrot.slane %v3425, 4
      %v3428 = vrot.slane %v2659, 5
      %v3429 = vsel %vm1991, %v3427, %v3428
      %v3430 = vrot.slane %v3294, 5
      %v3431 = vrot.slane %v3430, 4
      %v3432 = vrot.slane %v2661, 5
      %v3433 = vsel %vm1991, %v3431, %v3432
      %v3434 = vrot.slane %v3432, 4
      %v3435 = vrot.slane %v2662, 5
      %v3436 = vsel %vm1991, %v3434, %v3435
      %v3437 = vrot.slane %v3295, 5
      %v3438 = vrot.slane %v3437, 4
      %v3439 = vrot.slane %v2664, 5
      %v3440 = vsel %vm1991, %v3438, %v3439
      %v3441 = vrot.slane %v3439, 4
      %v3442 = vrot.slane %v2665, 5
      %v3443 = vsel %vm1991, %v3441, %v3442
      %v3444 = vrot.slane %v3296, 5
      %v3445 = vrot.slane %v3444, 4
      %v3446 = vrot.slane %v2667, 5
      %v3447 = vsel %vm1991, %v3445, %v3446
      %v3448 = vrot.slane %v3446, 4
      %v3449 = vrot.slane %v2668, 5
      %v3450 = vsel %vm1991, %v3448, %v3449
      %v3451 = vrot.slane %v3297, 5
      %v3452 = vrot.slane %v3451, 4
      %v3453 = vrot.slane %v2670, 5
      %v3454 = vsel %vm1991, %v3452, %v3453
      %v3455 = vrot.slane %v3453, 4
      %v3456 = vrot.slane %v2671, 5
      %v3457 = vsel %vm1991, %v3455, %v3456
      %s3458 = scalar_lea.vmem %s3, 40
      %v3459 = vld [vmem:[%s3458] sm:$0xf]
      %v3460 = vld [vmem:[%s3458 + $0x4] sm:$0xf]
      %v3461 = vunpack.c.l.b16 %v3349
      %v3462 = vunpack.c.l.b16 %v3352
      %v3463 = vunpack.c.l.b16 %v3356
      %v3464 = vunpack.c.l.b16 %v3359
      %v3465 = vunpack.c.l.b16 %v3363
      %v3466 = vunpack.c.l.b16 %v3366
      %v3467 = vunpack.c.l.b16 %v3370
      %v3468 = vunpack.c.l.b16 %v3373
      %v3469 = vunpack.c.l.b16 %v3377
      %v3470 = vunpack.c.l.b16 %v3380
      %v3471 = vunpack.c.l.b16 %v3384
      %v3472 = vunpack.c.l.b16 %v3387
      %v3473 = vunpack.c.l.b16 %v3391
      %v3474 = vunpack.c.l.b16 %v3394
      %v3475 = vunpack.c.l.b16 %v3398
      %v3476 = vunpack.c.l.b16 %v3401
      %v3477 = vunpack.c.l.b16 %v3405
      %v3478 = vunpack.c.l.b16 %v3408
      %v3479 = vunpack.c.l.b16 %v3412
      %v3480 = vunpack.c.l.b16 %v3415
      %v3481 = vunpack.c.l.b16 %v3419
      %v3482 = vunpack.c.l.b16 %v3422
      %v3483 = vunpack.c.l.b16 %v3426
      %v3484 = vunpack.c.l.b16 %v3429
      %v3485 = vunpack.c.l.b16 %v3433
      %v3486 = vunpack.c.l.b16 %v3436
      %v3487 = vunpack.c.l.b16 %v3440
      %v3488 = vunpack.c.l.b16 %v3443
      %v3489 = vunpack.c.l.b16 %v3447
      %v3490 = vunpack.c.l.b16 %v3450
      %v3491 = vunpack.c.l.b16 %v3454
      %v3492 = vunpack.c.l.b16 %v3457
      %v3493 = vpack.c.b16 %v3462, %v3461
      %v3494 = vpack.c.b16 %v3464, %v3463
      %v3495 = vpack.c.b16 %v3466, %v3465
      %v3496 = vpack.c.b16 %v3468, %v3467
      %v3497 = vpack.c.b16 %v3470, %v3469
      %v3498 = vpack.c.b16 %v3472, %v3471
      %v3499 = vpack.c.b16 %v3474, %v3473
      %v3500 = vpack.c.b16 %v3476, %v3475
      %v3501 = vpack.c.b16 %v3478, %v3477
      %v3502 = vpack.c.b16 %v3480, %v3479
      %v3503 = vpack.c.b16 %v3482, %v3481
      %v3504 = vpack.c.b16 %v3484, %v3483
      %v3505 = vpack.c.b16 %v3486, %v3485
      %v3506 = vpack.c.b16 %v3488, %v3487
      %v3507 = vpack.c.b16 %v3490, %v3489
      %v3508 = vpack.c.b16 %v3492, %v3491
      %v3511 = vunpack.c.l.b16 %v3459
      %v3512 = vunpack.c.l.b16 %v3460
      %v3513 = vpack.c.b16 %v3512, %v3511
      %v3516 = vsel %vm1580, %v3493, 0
      %v3519 = vsel %vm1580, %v3494, 0
      %v3522 = vsel %vm1580, %v3495, 0
      %v3525 = vsel %vm1580, %v3496, 0
      %v3528 = vsel %vm1580, %v3497, 0
      %v3531 = vsel %vm1580, %v3498, 0
      %v3534 = vsel %vm1580, %v3499, 0
      %v3537 = vsel %vm1580, %v3500, 0
      %v3540 = vsel %vm1580, %v3501, 0
      %v3543 = vsel %vm1580, %v3502, 0
      %v3546 = vsel %vm1580, %v3503, 0
      %v3549 = vsel %vm1580, %v3504, 0
      %v3552 = vsel %vm1580, %v3505, 0
      %v3555 = vsel %vm1580, %v3506, 0
      %v3558 = vsel %vm1580, %v3507, 0
      %v3561 = vsel %vm1580, %v3508, 0
      %3563 = vmatpush.bf16.msra.mxu0 0
      %3564 = vmatpush.bf16.msra.mxu0 0
      %3565 = vmatpush.bf16.msra.mxu0 0
      %3566 = vmatpush.bf16.msra.mxu0 0
      %3567 = vmatpush.bf16.msra.mxu0 0
      %3568 = vmatpush.bf16.msra.mxu0 0
      %3569 = vmatpush.bf16.msra.mxu0 0
      %3570 = vmatpush.bf16.msra.mxu0 %v3513
      %3571 = vmatmul.bf16.gmra.mxu0 %v3516
      %v3572 = vpop.f32.mrf.mxu0
      %v3573 = vadd.f32 0.0, %v3572
      %v3574 = vpop.f32.mrf.mxu0
      %v3575 = vadd.f32 0.0, %v3574
      %3576 = vmatmul.bf16.gmra.mxu0 %v3519
      %v3577 = vpop.f32.mrf.mxu0
      %v3578 = vadd.f32 0.0, %v3577
      %v3579 = vpop.f32.mrf.mxu0
      %v3580 = vadd.f32 0.0, %v3579
      %3581 = vmatmul.bf16.gmra.mxu0 %v3522
      %v3582 = vpop.f32.mrf.mxu0
      %v3583 = vadd.f32 0.0, %v3582
      %v3584 = vpop.f32.mrf.mxu0
      %v3585 = vadd.f32 0.0, %v3584
      %3586 = vmatmul.bf16.gmra.mxu0 %v3525
      %v3587 = vpop.f32.mrf.mxu0
      %v3588 = vadd.f32 0.0, %v3587
      %v3589 = vpop.f32.mrf.mxu0
      %v3590 = vadd.f32 0.0, %v3589
      %3591 = vmatmul.bf16.gmra.mxu0 %v3528
      %v3592 = vpop.f32.mrf.mxu0
      %v3593 = vadd.f32 0.0, %v3592
      %v3594 = vpop.f32.mrf.mxu0
      %v3595 = vadd.f32 0.0, %v3594
      %3596 = vmatmul.bf16.gmra.mxu0 %v3531
      %v3597 = vpop.f32.mrf.mxu0
      %v3598 = vadd.f32 0.0, %v3597
      %v3599 = vpop.f32.mrf.mxu0
      %v3600 = vadd.f32 0.0, %v3599
      %3601 = vmatmul.bf16.gmra.mxu0 %v3534
      %v3602 = vpop.f32.mrf.mxu0
      %v3603 = vadd.f32 0.0, %v3602
      %v3604 = vpop.f32.mrf.mxu0
      %v3605 = vadd.f32 0.0, %v3604
      %3606 = vmatmul.bf16.gmra.mxu0 %v3537
      %v3607 = vpop.f32.mrf.mxu0
      %v3608 = vadd.f32 0.0, %v3607
      %v3609 = vpop.f32.mrf.mxu0
      %v3610 = vadd.f32 0.0, %v3609
      %3611 = vmatmul.bf16.gmra.mxu0 %v3540
      %v3612 = vpop.f32.mrf.mxu0
      %v3613 = vadd.f32 0.0, %v3612
      %v3614 = vpop.f32.mrf.mxu0
      %v3615 = vadd.f32 0.0, %v3614
      %3616 = vmatmul.bf16.gmra.mxu0 %v3543
      %v3617 = vpop.f32.mrf.mxu0
      %v3618 = vadd.f32 0.0, %v3617
      %v3619 = vpop.f32.mrf.mxu0
      %v3620 = vadd.f32 0.0, %v3619
      %3621 = vmatmul.bf16.gmra.mxu0 %v3546
      %v3622 = vpop.f32.mrf.mxu0
      %v3623 = vadd.f32 0.0, %v3622
      %v3624 = vpop.f32.mrf.mxu0
      %v3625 = vadd.f32 0.0, %v3624
      %3626 = vmatmul.bf16.gmra.mxu0 %v3549
      %v3627 = vpop.f32.mrf.mxu0
      %v3628 = vadd.f32 0.0, %v3627
      %v3629 = vpop.f32.mrf.mxu0
      %v3630 = vadd.f32 0.0, %v3629
      %3631 = vmatmul.bf16.gmra.mxu0 %v3552
      %v3632 = vpop.f32.mrf.mxu0
      %v3633 = vadd.f32 0.0, %v3632
      %v3634 = vpop.f32.mrf.mxu0
      %v3635 = vadd.f32 0.0, %v3634
      %3636 = vmatmul.bf16.gmra.mxu0 %v3555
      %v3637 = vpop.f32.mrf.mxu0
      %v3638 = vadd.f32 0.0, %v3637
      %v3639 = vpop.f32.mrf.mxu0
      %v3640 = vadd.f32 0.0, %v3639
      %3641 = vmatmul.bf16.gmra.mxu0 %v3558
      %v3642 = vpop.f32.mrf.mxu0
      %v3643 = vadd.f32 0.0, %v3642
      %v3644 = vpop.f32.mrf.mxu0
      %v3645 = vadd.f32 0.0, %v3644
      %3646 = vmatmul.bf16.gmra.mxu0 %v3561
      %v3647 = vpop.f32.mrf.mxu0
      %v3648 = vadd.f32 0.0, %v3647
      %v3649 = vpop.f32.mrf.mxu0
      %v3650 = vadd.f32 0.0, %v3649
      %3651 = vdwg.mxu0
      %v3652 = vadd.f32 %v3250, %v3573
      %v3653 = vadd.f32 %v3251, %v3575
      %v3654 = vadd.f32 %v3252, %v3578
      %v3655 = vadd.f32 %v3253, %v3580
      %v3656 = vadd.f32 %v3254, %v3583
      %v3657 = vadd.f32 %v3255, %v3585
      %v3658 = vadd.f32 %v3256, %v3588
      %v3659 = vadd.f32 %v3257, %v3590
      %v3660 = vadd.f32 %v3258, %v3593
      %v3661 = vadd.f32 %v3259, %v3595
      %v3662 = vadd.f32 %v3260, %v3598
      %v3663 = vadd.f32 %v3261, %v3600
      %v3664 = vadd.f32 %v3262, %v3603
      %v3665 = vadd.f32 %v3263, %v3605
      %v3666 = vadd.f32 %v3264, %v3608
      %v3667 = vadd.f32 %v3265, %v3610
      %v3668 = vadd.f32 %v3266, %v3613
      %v3669 = vadd.f32 %v3267, %v3615
      %v3670 = vadd.f32 %v3268, %v3618
      %v3671 = vadd.f32 %v3269, %v3620
      %v3672 = vadd.f32 %v3270, %v3623
      %v3673 = vadd.f32 %v3271, %v3625
      %v3674 = vadd.f32 %v3272, %v3628
      %v3675 = vadd.f32 %v3273, %v3630
      %v3676 = vadd.f32 %v3274, %v3633
      %v3677 = vadd.f32 %v3275, %v3635
      %v3678 = vadd.f32 %v3276, %v3638
      %v3679 = vadd.f32 %v3277, %v3640
      %v3680 = vadd.f32 %v3278, %v3643
      %v3681 = vadd.f32 %v3279, %v3645
      %v3682 = vadd.f32 %v3280, %v3648
      %v3683 = vadd.f32 %v3281, %v3650
      %s3684 = sadd.s32 %s319, 2
      %s3685 = smul.u32 %s3684, 3
      %s3686 = smul.addr %s3685, 4
      %s3687 = scalar_lea.vmem [#allocation2], %s3686
      %v3688 = vld [vmem:[%s3687] sm:$0xf]
      %v3689 = vld [vmem:[%s3687 + $0x4] sm:$0xf]
      %v3690 = vld [vmem:[%s3687 + $0xc] sm:$0xf]
      %v3691 = vld [vmem:[%s3687 + $0x10] sm:$0xf]
      %v3692 = vld [vmem:[%s3687 + $0x18] sm:$0xf]
      %v3693 = vld [vmem:[%s3687 + $0x1c] sm:$0xf]
      %v3694 = vld [vmem:[%s3687 + $0x24] sm:$0xf]
      %v3695 = vld [vmem:[%s3687 + $0x28] sm:$0xf]
      %v3696 = vld [vmem:[%s3687 + $0x30] sm:$0xf]
      %v3697 = vld [vmem:[%s3687 + $0x34] sm:$0xf]
      %v3698 = vld [vmem:[%s3687 + $0x3c] sm:$0xf]
      %v3699 = vld [vmem:[%s3687 + $0x40] sm:$0xf]
      %v3700 = vld [vmem:[%s3687 + $0x48] sm:$0xf]
      %v3701 = vld [vmem:[%s3687 + $0x4c] sm:$0xf]
      %v3702 = vld [vmem:[%s3687 + $0x54] sm:$0xf]
      %v3703 = vld [vmem:[%s3687 + $0x58] sm:$0xf]
      %v3704 = vld [vmem:[%s3687 + $0x60] sm:$0xf]
      %v3705 = vld [vmem:[%s3687 + $0x64] sm:$0xf]
      %v3706 = vld [vmem:[%s3687 + $0x6c] sm:$0xf]
      %v3707 = vld [vmem:[%s3687 + $0x70] sm:$0xf]
      %v3708 = vld [vmem:[%s3687 + $0x78] sm:$0xf]
      %v3709 = vld [vmem:[%s3687 + $0x7c] sm:$0xf]
      %v3710 = vld [vmem:[%s3687 + $0x84] sm:$0xf]
      %v3711 = vld [vmem:[%s3687 + $0x88] sm:$0xf]
      %v3712 = vld [vmem:[%s3687 + $0x90] sm:$0xf]
      %v3713 = vld [vmem:[%s3687 + $0x94] sm:$0xf]
      %v3714 = vld [vmem:[%s3687 + $0x9c] sm:$0xf]
      %v3715 = vld [vmem:[%s3687 + $0xa0] sm:$0xf]
      %v3716 = vld [vmem:[%s3687 + $0xa8] sm:$0xf]
      %v3717 = vld [vmem:[%s3687 + $0xac] sm:$0xf]
      %v3718 = vld [vmem:[%s3687 + $0xb4] sm:$0xf]
      %v3719 = vld [vmem:[%s3687 + $0xb8] sm:$0xf]
      %s3720 = scalar_lea.vmem %s3, 48
      %v3721 = vld [vmem:[%s3720] sm:$0xf]
      %v3722 = vld [vmem:[%s3720 + $0x4] sm:$0xf]
      %v3755 = vunpack.c.l.b16 %v3688
      %v3756 = vunpack.c.l.b16 %v3689
      %v3757 = vunpack.c.l.b16 %v3690
      %v3758 = vunpack.c.l.b16 %v3691
      %v3759 = vunpack.c.l.b16 %v3692
      %v3760 = vunpack.c.l.b16 %v3693
      %v3761 = vunpack.c.l.b16 %v3694
      %v3762 = vunpack.c.l.b16 %v3695
      %v3763 = vunpack.c.l.b16 %v3696
      %v3764 = vunpack.c.l.b16 %v3697
      %v3765 = vunpack.c.l.b16 %v3698
      %v3766 = vunpack.c.l.b16 %v3699
      %v3767 = vunpack.c.l.b16 %v3700
      %v3768 = vunpack.c.l.b16 %v3701
      %v3769 = vunpack.c.l.b16 %v3702
      %v3770 = vunpack.c.l.b16 %v3703
      %v3771 = vunpack.c.l.b16 %v3704
      %v3772 = vunpack.c.l.b16 %v3705
      %v3773 = vunpack.c.l.b16 %v3706
      %v3774 = vunpack.c.l.b16 %v3707
      %v3775 = vunpack.c.l.b16 %v3708
      %v3776 = vunpack.c.l.b16 %v3709
      %v3777 = vunpack.c.l.b16 %v3710
      %v3778 = vunpack.c.l.b16 %v3711
      %v3779 = vunpack.c.l.b16 %v3712
      %v3780 = vunpack.c.l.b16 %v3713
      %v3781 = vunpack.c.l.b16 %v3714
      %v3782 = vunpack.c.l.b16 %v3715
      %v3783 = vunpack.c.l.b16 %v3716
      %v3784 = vunpack.c.l.b16 %v3717
      %v3785 = vunpack.c.l.b16 %v3718
      %v3786 = vunpack.c.l.b16 %v3719
      %v3787 = vpack.c.b16 %v3756, %v3755
      %v3788 = vpack.c.b16 %v3758, %v3757
      %v3789 = vpack.c.b16 %v3760, %v3759
      %v3790 = vpack.c.b16 %v3762, %v3761
      %v3791 = vpack.c.b16 %v3764, %v3763
      %v3792 = vpack.c.b16 %v3766, %v3765
      %v3793 = vpack.c.b16 %v3768, %v3767
      %v3794 = vpack.c.b16 %v3770, %v3769
      %v3795 = vpack.c.b16 %v3772, %v3771
      %v3796 = vpack.c.b16 %v3774, %v3773
      %v3797 = vpack.c.b16 %v3776, %v3775
      %v3798 = vpack.c.b16 %v3778, %v3777
      %v3799 = vpack.c.b16 %v3780, %v3779
      %v3800 = vpack.c.b16 %v3782, %v3781
      %v3801 = vpack.c.b16 %v3784, %v3783
      %v3802 = vpack.c.b16 %v3786, %v3785
      %v3805 = vunpack.c.l.b16 %v3721
      %v3806 = vunpack.c.l.b16 %v3722
      %v3807 = vpack.c.b16 %v3806, %v3805
      %v3810 = vsel %vm1580, %v3787, 0
      %v3813 = vsel %vm1580, %v3788, 0
      %v3816 = vsel %vm1580, %v3789, 0
      %v3819 = vsel %vm1580, %v3790, 0
      %v3822 = vsel %vm1580, %v3791, 0
      %v3825 = vsel %vm1580, %v3792, 0
      %v3828 = vsel %vm1580, %v3793, 0
      %v3831 = vsel %vm1580, %v3794, 0
      %v3834 = vsel %vm1580, %v3795, 0
      %v3837 = vsel %vm1580, %v3796, 0
      %v3840 = vsel %vm1580, %v3797, 0
      %v3843 = vsel %vm1580, %v3798, 0
      %v3846 = vsel %vm1580, %v3799, 0
      %v3849 = vsel %vm1580, %v3800, 0
      %v3852 = vsel %vm1580, %v3801, 0
      %v3855 = vsel %vm1580, %v3802, 0
      %3857 = vmatpush.bf16.msra.mxu0 0
      %3858 = vmatpush.bf16.msra.mxu0 0
      %3859 = vmatpush.bf16.msra.mxu0 0
      %3860 = vmatpush.bf16.msra.mxu0 0
      %3861 = vmatpush.bf16.msra.mxu0 0
      %3862 = vmatpush.bf16.msra.mxu0 0
      %3863 = vmatpush.bf16.msra.mxu0 0
      %3864 = vmatpush.bf16.msra.mxu0 %v3807
      %3865 = vmatmul.bf16.gmra.mxu0 %v3810
      %v3866 = vpop.f32.mrf.mxu0
      %v3867 = vadd.f32 0.0, %v3866
      %v3868 = vpop.f32.mrf.mxu0
      %v3869 = vadd.f32 0.0, %v3868
      %3870 = vmatmul.bf16.gmra.mxu0 %v3813
      %v3871 = vpop.f32.mrf.mxu0
      %v3872 = vadd.f32 0.0, %v3871
      %v3873 = vpop.f32.mrf.mxu0
      %v3874 = vadd.f32 0.0, %v3873
      %3875 = vmatmul.bf16.gmra.mxu0 %v3816
      %v3876 = vpop.f32.mrf.mxu0
      %v3877 = vadd.f32 0.0, %v3876
      %v3878 = vpop.f32.mrf.mxu0
      %v3879 = vadd.f32 0.0, %v3878
      %3880 = vmatmul.bf16.gmra.mxu0 %v3819
      %v3881 = vpop.f32.mrf.mxu0
      %v3882 = vadd.f32 0.0, %v3881
      %v3883 = vpop.f32.mrf.mxu0
      %v3884 = vadd.f32 0.0, %v3883
      %3885 = vmatmul.bf16.gmra.mxu0 %v3822
      %v3886 = vpop.f32.mrf.mxu0
      %v3887 = vadd.f32 0.0, %v3886
      %v3888 = vpop.f32.mrf.mxu0
      %v3889 = vadd.f32 0.0, %v3888
      %3890 = vmatmul.bf16.gmra.mxu0 %v3825
      %v3891 = vpop.f32.mrf.mxu0
      %v3892 = vadd.f32 0.0, %v3891
      %v3893 = vpop.f32.mrf.mxu0
      %v3894 = vadd.f32 0.0, %v3893
      %3895 = vmatmul.bf16.gmra.mxu0 %v3828
      %v3896 = vpop.f32.mrf.mxu0
      %v3897 = vadd.f32 0.0, %v3896
      %v3898 = vpop.f32.mrf.mxu0
      %v3899 = vadd.f32 0.0, %v3898
      %3900 = vmatmul.bf16.gmra.mxu0 %v3831
      %v3901 = vpop.f32.mrf.mxu0
      %v3902 = vadd.f32 0.0, %v3901
      %v3903 = vpop.f32.mrf.mxu0
      %v3904 = vadd.f32 0.0, %v3903
      %3905 = vmatmul.bf16.gmra.mxu0 %v3834
      %v3906 = vpop.f32.mrf.mxu0
      %v3907 = vadd.f32 0.0, %v3906
      %v3908 = vpop.f32.mrf.mxu0
      %v3909 = vadd.f32 0.0, %v3908
      %3910 = vmatmul.bf16.gmra.mxu0 %v3837
      %v3911 = vpop.f32.mrf.mxu0
      %v3912 = vadd.f32 0.0, %v3911
      %v3913 = vpop.f32.mrf.mxu0
      %v3914 = vadd.f32 0.0, %v3913
      %3915 = vmatmul.bf16.gmra.mxu0 %v3840
      %v3916 = vpop.f32.mrf.mxu0
      %v3917 = vadd.f32 0.0, %v3916
      %v3918 = vpop.f32.mrf.mxu0
      %v3919 = vadd.f32 0.0, %v3918
      %3920 = vmatmul.bf16.gmra.mxu0 %v3843
      %v3921 = vpop.f32.mrf.mxu0
      %v3922 = vadd.f32 0.0, %v3921
      %v3923 = vpop.f32.mrf.mxu0
      %v3924 = vadd.f32 0.0, %v3923
      %3925 = vmatmul.bf16.gmra.mxu0 %v3846
      %v3926 = vpop.f32.mrf.mxu0
      %v3927 = vadd.f32 0.0, %v3926
      %v3928 = vpop.f32.mrf.mxu0
      %v3929 = vadd.f32 0.0, %v3928
      %3930 = vmatmul.bf16.gmra.mxu0 %v3849
      %v3931 = vpop.f32.mrf.mxu0
      %v3932 = vadd.f32 0.0, %v3931
      %v3933 = vpop.f32.mrf.mxu0
      %v3934 = vadd.f32 0.0, %v3933
      %3935 = vmatmul.bf16.gmra.mxu0 %v3852
      %v3936 = vpop.f32.mrf.mxu0
      %v3937 = vadd.f32 0.0, %v3936
      %v3938 = vpop.f32.mrf.mxu0
      %v3939 = vadd.f32 0.0, %v3938
      %3940 = vmatmul.bf16.gmra.mxu0 %v3855
      %v3941 = vpop.f32.mrf.mxu0
      %v3942 = vadd.f32 0.0, %v3941
      %v3943 = vpop.f32.mrf.mxu0
      %v3944 = vadd.f32 0.0, %v3943
      %3945 = vdwg.mxu0
      %v3946 = vadd.f32 %v3652, %v3867
      %v3947 = vadd.f32 %v3653, %v3869
      %v3948 = vadd.f32 %v3654, %v3872
      %v3949 = vadd.f32 %v3655, %v3874
      %v3950 = vadd.f32 %v3656, %v3877
      %v3951 = vadd.f32 %v3657, %v3879
      %v3952 = vadd.f32 %v3658, %v3882
      %v3953 = vadd.f32 %v3659, %v3884
      %v3954 = vadd.f32 %v3660, %v3887
      %v3955 = vadd.f32 %v3661, %v3889
      %v3956 = vadd.f32 %v3662, %v3892
      %v3957 = vadd.f32 %v3663, %v3894
      %v3958 = vadd.f32 %v3664, %v3897
      %v3959 = vadd.f32 %v3665, %v3899
      %v3960 = vadd.f32 %v3666, %v3902
      %v3961 = vadd.f32 %v3667, %v3904
      %v3962 = vadd.f32 %v3668, %v3907
      %v3963 = vadd.f32 %v3669, %v3909
      %v3964 = vadd.f32 %v3670, %v3912
      %v3965 = vadd.f32 %v3671, %v3914
      %v3966 = vadd.f32 %v3672, %v3917
      %v3967 = vadd.f32 %v3673, %v3919
      %v3968 = vadd.f32 %v3674, %v3922
      %v3969 = vadd.f32 %v3675, %v3924
      %v3970 = vadd.f32 %v3676, %v3927
      %v3971 = vadd.f32 %v3677, %v3929
      %v3972 = vadd.f32 %v3678, %v3932
      %v3973 = vadd.f32 %v3679, %v3934
      %v3974 = vadd.f32 %v3680, %v3937
      %v3975 = vadd.f32 %v3681, %v3939
      %v3976 = vadd.f32 %v3682, %v3942
      %v3977 = vadd.f32 %v3683, %v3944
      %v3978 = vld [vmem:[%s3687] sm:$0xf]
      %v3979 = vld [vmem:[%s3687 + $0x4] sm:$0xf]
      %v3980 = vld [vmem:[%s3687 + $0x8] sm:$0x1]
      %v3981 = vld [vmem:[%s3687 + $0xc] sm:$0xf]
      %v3982 = vld [vmem:[%s3687 + $0x10] sm:$0xf]
      %v3983 = vld [vmem:[%s3687 + $0x14] sm:$0x1]
      %v3984 = vld [vmem:[%s3687 + $0x18] sm:$0xf]
      %v3985 = vld [vmem:[%s3687 + $0x1c] sm:$0xf]
      %v3986 = vld [vmem:[%s3687 + $0x20] sm:$0x1]
      %v3987 = vld [vmem:[%s3687 + $0x24] sm:$0xf]
      %v3988 = vld [vmem:[%s3687 + $0x28] sm:$0xf]
      %v3989 = vld [vmem:[%s3687 + $0x2c] sm:$0x1]
      %v3990 = vld [vmem:[%s3687 + $0x30] sm:$0xf]
      %v3991 = vld [vmem:[%s3687 + $0x34] sm:$0xf]
      %v3992 = vld [vmem:[%s3687 + $0x38] sm:$0x1]
      %v3993 = vld [vmem:[%s3687 + $0x3c] sm:$0xf]
      %v3994 = vld [vmem:[%s3687 + $0x40] sm:$0xf]
      %v3995 = vld [vmem:[%s3687 + $0x44] sm:$0x1]
      %v3996 = vld [vmem:[%s3687 + $0x48] sm:$0xf]
      %v3997 = vld [vmem:[%s3687 + $0x4c] sm:$0xf]
      %v3998 = vld [vmem:[%s3687 + $0x50] sm:$0x1]
      %v3999 = vld [vmem:[%s3687 + $0x54] sm:$0xf]
      %v4000 = vld [vmem:[%s3687 + $0x58] sm:$0xf]
      %v4001 = vld [vmem:[%s3687 + $0x5c] sm:$0x1]
      %v4002 = vld [vmem:[%s3687 + $0x60] sm:$0xf]
      %v4003 = vld [vmem:[%s3687 + $0x64] sm:$0xf]
      %v4004 = vld [vmem:[%s3687 + $0x68] sm:$0x1]
      %v4005 = vld [vmem:[%s3687 + $0x6c] sm:$0xf]
      %v4006 = vld [vmem:[%s3687 + $0x70] sm:$0xf]
      %v4007 = vld [vmem:[%s3687 + $0x74] sm:$0x1]
      %v4008 = vld [vmem:[%s3687 + $0x78] sm:$0xf]
      %v4009 = vld [vmem:[%s3687 + $0x7c] sm:$0xf]
      %v4010 = vld [vmem:[%s3687 + $0x80] sm:$0x1]
      %v4011 = vld [vmem:[%s3687 + $0x84] sm:$0xf]
      %v4012 = vld [vmem:[%s3687 + $0x88] sm:$0xf]
      %v4013 = vld [vmem:[%s3687 + $0x8c] sm:$0x1]
      %v4014 = vld [vmem:[%s3687 + $0x90] sm:$0xf]
      %v4015 = vld [vmem:[%s3687 + $0x94] sm:$0xf]
      %v4016 = vld [vmem:[%s3687 + $0x98] sm:$0x1]
      %v4017 = vld [vmem:[%s3687 + $0x9c] sm:$0xf]
      %v4018 = vld [vmem:[%s3687 + $0xa0] sm:$0xf]
      %v4019 = vld [vmem:[%s3687 + $0xa4] sm:$0x1]
      %v4020 = vld [vmem:[%s3687 + $0xa8] sm:$0xf]
      %v4021 = vld [vmem:[%s3687 + $0xac] sm:$0xf]
      %v4022 = vld [vmem:[%s3687 + $0xb0] sm:$0x1]
      %v4023 = vld [vmem:[%s3687 + $0xb4] sm:$0xf]
      %v4024 = vld [vmem:[%s3687 + $0xb8] sm:$0xf]
      %v4025 = vld [vmem:[%s3687 + $0xbc] sm:$0x1]
      %v4027 = vshrl.u32 %v3978, 16
      %v4029 = vrot.slane %v4027, 4
      %v4030 = vshll.u32 %v3978, 16
      %v4032 = vrot.slane %v4030, 5
      %v4033 = vor.u32 %v4029, %v4032
      %v4034 = vrot.slane %v4033, 4
      %v4036 = vshll.u32 %v3979, 16
      %v4038 = vrot.slane %v4036, 5
      %v4039 = vsel %vm1138, %v4034, %v4038
      %v4040 = vshrl.u32 %v3979, 16
      %v4042 = vrot.slane %v4040, 4
      %v4043 = vor.u32 %v4042, %v4038
      %v4044 = vrot.slane %v4043, 4
      %v4046 = vshll.u32 %v3980, 16
      %v4048 = vrot.slane %v4046, 5
      %v4049 = vsel %vm1138, %v4044, %v4048
      %v4051 = vshrl.u32 %v3981, 16
      %v4053 = vrot.slane %v4051, 4
      %v4054 = vshll.u32 %v3981, 16
      %v4056 = vrot.slane %v4054, 5
      %v4057 = vor.u32 %v4053, %v4056
      %v4058 = vrot.slane %v4057, 4
      %v4060 = vshll.u32 %v3982, 16
      %v4062 = vrot.slane %v4060, 5
      %v4063 = vsel %vm1138, %v4058, %v4062
      %v4064 = vshrl.u32 %v3982, 16
      %v4066 = vrot.slane %v4064, 4
      %v4067 = vor.u32 %v4066, %v4062
      %v4068 = vrot.slane %v4067, 4
      %v4070 = vshll.u32 %v3983, 16
      %v4072 = vrot.slane %v4070, 5
      %v4073 = vsel %vm1138, %v4068, %v4072
      %v4075 = vshrl.u32 %v3984, 16
      %v4077 = vrot.slane %v4075, 4
      %v4078 = vshll.u32 %v3984, 16
      %v4080 = vrot.slane %v4078, 5
      %v4081 = vor.u32 %v4077, %v4080
      %v4082 = vrot.slane %v4081, 4
      %v4084 = vshll.u32 %v3985, 16
      %v4086 = vrot.slane %v4084, 5
      %v4087 = vsel %vm1138, %v4082, %v4086
      %v4088 = vshrl.u32 %v3985, 16
      %v4090 = vrot.slane %v4088, 4
      %v4091 = vor.u32 %v4090, %v4086
      %v4092 = vrot.slane %v4091, 4
      %v4094 = vshll.u32 %v3986, 16
      %v4096 = vrot.slane %v4094, 5
      %v4097 = vsel %vm1138, %v4092, %v4096
      %v4099 = vshrl.u32 %v3987, 16
      %v4101 = vrot.slane %v4099, 4
      %v4102 = vshll.u32 %v3987, 16
      %v4104 = vrot.slane %v4102, 5
      %v4105 = vor.u32 %v4101, %v4104
      %v4106 = vrot.slane %v4105, 4
      %v4108 = vshll.u32 %v3988, 16
      %v4110 = vrot.slane %v4108, 5
      %v4111 = vsel %vm1138, %v4106, %v4110
      %v4112 = vshrl.u32 %v3988, 16
      %v4114 = vrot.slane %v4112, 4
      %v4115 = vor.u32 %v4114, %v4110
      %v4116 = vrot.slane %v4115, 4
      %v4118 = vshll.u32 %v3989, 16
      %v4120 = vrot.slane %v4118, 5
      %v4121 = vsel %vm1138, %v4116, %v4120
      %v4123 = vshrl.u32 %v3990, 16
      %v4125 = vrot.slane %v4123, 4
      %v4126 = vshll.u32 %v3990, 16
      %v4128 = vrot.slane %v4126, 5
      %v4129 = vor.u32 %v4125, %v4128
      %v4130 = vrot.slane %v4129, 4
      %v4132 = vshll.u32 %v3991, 16
      %v4134 = vrot.slane %v4132, 5
      %v4135 = vsel %vm1138, %v4130, %v4134
      %v4136 = vshrl.u32 %v3991, 16
      %v4138 = vrot.slane %v4136, 4
      %v4139 = vor.u32 %v4138, %v4134
      %v4140 = vrot.slane %v4139, 4
      %v4142 = vshll.u32 %v3992, 16
      %v4144 = vrot.slane %v4142, 5
      %v4145 = vsel %vm1138, %v4140, %v4144
      %v4147 = vshrl.u32 %v3993, 16
      %v4149 = vrot.slane %v4147, 4
      %v4150 = vshll.u32 %v3993, 16
      %v4152 = vrot.slane %v4150, 5
      %v4153 = vor.u32 %v4149, %v4152
      %v4154 = vrot.slane %v4153, 4
      %v4156 = vshll.u32 %v3994, 16
      %v4158 = vrot.slane %v4156, 5
      %v4159 = vsel %vm1138, %v4154, %v4158
      %v4160 = vshrl.u32 %v3994, 16
      %v4162 = vrot.slane %v4160, 4
      %v4163 = vor.u32 %v4162, %v4158
      %v4164 = vrot.slane %v4163, 4
      %v4166 = vshll.u32 %v3995, 16
      %v4168 = vrot.slane %v4166, 5
      %v4169 = vsel %vm1138, %v4164, %v4168
      %v4171 = vshrl.u32 %v3996, 16
      %v4173 = vrot.slane %v4171, 4
      %v4174 = vshll.u32 %v3996, 16
      %v4176 = vrot.slane %v4174, 5
      %v4177 = vor.u32 %v4173, %v4176
      %v4178 = vrot.slane %v4177, 4
      %v4180 = vshll.u32 %v3997, 16
      %v4182 = vrot.slane %v4180, 5
      %v4183 = vsel %vm1138, %v4178, %v4182
      %v4184 = vshrl.u32 %v3997, 16
      %v4186 = vrot.slane %v4184, 4
      %v4187 = vor.u32 %v4186, %v4182
      %v4188 = vrot.slane %v4187, 4
      %v4190 = vshll.u32 %v3998, 16
      %v4192 = vrot.slane %v4190, 5
      %v4193 = vsel %vm1138, %v4188, %v4192
      %v4195 = vshrl.u32 %v3999, 16
      %v4197 = vrot.slane %v4195, 4
      %v4198 = vshll.u32 %v3999, 16
      %v4200 = vrot.slane %v4198, 5
      %v4201 = vor.u32 %v4197, %v4200
      %v4202 = vrot.slane %v4201, 4
      %v4204 = vshll.u32 %v4000, 16
      %v4206 = vrot.slane %v4204, 5
      %v4207 = vsel %vm1138, %v4202, %v4206
      %v4208 = vshrl.u32 %v4000, 16
      %v4210 = vrot.slane %v4208, 4
      %v4211 = vor.u32 %v4210, %v4206
      %v4212 = vrot.slane %v4211, 4
      %v4214 = vshll.u32 %v4001, 16
      %v4216 = vrot.slane %v4214, 5
      %v4217 = vsel %vm1138, %v4212, %v4216
      %v4219 = vshrl.u32 %v4002, 16
      %v4221 = vrot.slane %v4219, 4
      %v4222 = vshll.u32 %v4002, 16
      %v4224 = vrot.slane %v4222, 5
      %v4225 = vor.u32 %v4221, %v4224
      %v4226 = vrot.slane %v4225, 4
      %v4228 = vshll.u32 %v4003, 16
      %v4230 = vrot.slane %v4228, 5
      %v4231 = vsel %vm1138, %v4226, %v4230
      %v4232 = vshrl.u32 %v4003, 16
      %v4234 = vrot.slane %v4232, 4
      %v4235 = vor.u32 %v4234, %v4230
      %v4236 = vrot.slane %v4235, 4
      %v4238 = vshll.u32 %v4004, 16
      %v4240 = vrot.slane %v4238, 5
      %v4241 = vsel %vm1138, %v4236, %v4240
      %v4243 = vshrl.u32 %v4005, 16
      %v4245 = vrot.slane %v4243, 4
      %v4246 = vshll.u32 %v4005, 16
      %v4248 = vrot.slane %v4246, 5
      %v4249 = vor.u32 %v4245, %v4248
      %v4250 = vrot.slane %v4249, 4
      %v4252 = vshll.u32 %v4006, 16
      %v4254 = vrot.slane %v4252, 5
      %v4255 = vsel %vm1138, %v4250, %v4254
      %v4256 = vshrl.u32 %v4006, 16
      %v4258 = vrot.slane %v4256, 4
      %v4259 = vor.u32 %v4258, %v4254
      %v4260 = vrot.slane %v4259, 4
      %v4262 = vshll.u32 %v4007, 16
      %v4264 = vrot.slane %v4262, 5
      %v4265 = vsel %vm1138, %v4260, %v4264
      %v4267 = vshrl.u32 %v4008, 16
      %v4269 = vrot.slane %v4267, 4
      %v4270 = vshll.u32 %v4008, 16
      %v4272 = vrot.slane %v4270, 5
      %v4273 = vor.u32 %v4269, %v4272
      %v4274 = vrot.slane %v4273, 4
      %v4276 = vshll.u32 %v4009, 16
      %v4278 = vrot.slane %v4276, 5
      %v4279 = vsel %vm1138, %v4274, %v4278
      %v4280 = vshrl.u32 %v4009, 16
      %v4282 = vrot.slane %v4280, 4
      %v4283 = vor.u32 %v4282, %v4278
      %v4284 = vrot.slane %v4283, 4
      %v4286 = vshll.u32 %v4010, 16
      %v4288 = vrot.slane %v4286, 5
      %v4289 = vsel %vm1138, %v4284, %v4288
      %v4291 = vshrl.u32 %v4011, 16
      %v4293 = vrot.slane %v4291, 4
      %v4294 = vshll.u32 %v4011, 16
      %v4296 = vrot.slane %v4294, 5
      %v4297 = vor.u32 %v4293, %v4296
      %v4298 = vrot.slane %v4297, 4
      %v4300 = vshll.u32 %v4012, 16
      %v4302 = vrot.slane %v4300, 5
      %v4303 = vsel %vm1138, %v4298, %v4302
      %v4304 = vshrl.u32 %v4012, 16
      %v4306 = vrot.slane %v4304, 4
      %v4307 = vor.u32 %v4306, %v4302
      %v4308 = vrot.slane %v4307, 4
      %v4310 = vshll.u32 %v4013, 16
      %v4312 = vrot.slane %v4310, 5
      %v4313 = vsel %vm1138, %v4308, %v4312
      %v4315 = vshrl.u32 %v4014, 16
      %v4317 = vrot.slane %v4315, 4
      %v4318 = vshll.u32 %v4014, 16
      %v4320 = vrot.slane %v4318, 5
      %v4321 = vor.u32 %v4317, %v4320
      %v4322 = vrot.slane %v4321, 4
      %v4324 = vshll.u32 %v4015, 16
      %v4326 = vrot.slane %v4324, 5
      %v4327 = vsel %vm1138, %v4322, %v4326
      %v4328 = vshrl.u32 %v4015, 16
      %v4330 = vrot.slane %v4328, 4
      %v4331 = vor.u32 %v4330, %v4326
      %v4332 = vrot.slane %v4331, 4
      %v4334 = vshll.u32 %v4016, 16
      %v4336 = vrot.slane %v4334, 5
      %v4337 = vsel %vm1138, %v4332, %v4336
      %v4339 = vshrl.u32 %v4017, 16
      %v4341 = vrot.slane %v4339, 4
      %v4342 = vshll.u32 %v4017, 16
      %v4344 = vrot.slane %v4342, 5
      %v4345 = vor.u32 %v4341, %v4344
      %v4346 = vrot.slane %v4345, 4
      %v4348 = vshll.u32 %v4018, 16
      %v4350 = vrot.slane %v4348, 5
      %v4351 = vsel %vm1138, %v4346, %v4350
      %v4352 = vshrl.u32 %v4018, 16
      %v4354 = vrot.slane %v4352, 4
      %v4355 = vor.u32 %v4354, %v4350
      %v4356 = vrot.slane %v4355, 4
      %v4358 = vshll.u32 %v4019, 16
      %v4360 = vrot.slane %v4358, 5
      %v4361 = vsel %vm1138, %v4356, %v4360
      %v4363 = vshrl.u32 %v4020, 16
      %v4365 = vrot.slane %v4363, 4
      %v4366 = vshll.u32 %v4020, 16
      %v4368 = vrot.slane %v4366, 5
      %v4369 = vor.u32 %v4365, %v4368
      %v4370 = vrot.slane %v4369, 4
      %v4372 = vshll.u32 %v4021, 16
      %v4374 = vrot.slane %v4372, 5
      %v4375 = vsel %vm1138, %v4370, %v4374
      %v4376 = vshrl.u32 %v4021, 16
      %v4378 = vrot.slane %v4376, 4
      %v4379 = vor.u32 %v4378, %v4374
      %v4380 = vrot.slane %v4379, 4
      %v4382 = vshll.u32 %v4022, 16
      %v4384 = vrot.slane %v4382, 5
      %v4385 = vsel %vm1138, %v4380, %v4384
      %v4387 = vshrl.u32 %v4023, 16
      %v4389 = vrot.slane %v4387, 4
      %v4390 = vshll.u32 %v4023, 16
      %v4392 = vrot.slane %v4390, 5
      %v4393 = vor.u32 %v4389, %v4392
      %v4394 = vrot.slane %v4393, 4
      %v4396 = vshll.u32 %v4024, 16
      %v4398 = vrot.slane %v4396, 5
      %v4399 = vsel %vm1138, %v4394, %v4398
      %v4400 = vshrl.u32 %v4024, 16
      %v4402 = vrot.slane %v4400, 4
      %v4403 = vor.u32 %v4402, %v4398
      %v4404 = vrot.slane %v4403, 4
      %v4406 = vshll.u32 %v4025, 16
      %v4408 = vrot.slane %v4406, 5
      %v4409 = vsel %vm1138, %v4404, %v4408
      %s4410 = scalar_lea.vmem %s3, 56
      %v4411 = vld [vmem:[%s4410] sm:$0xf]
      %v4412 = vld [vmem:[%s4410 + $0x4] sm:$0xf]
      %v4413 = vunpack.c.l.b16 %v4039
      %v4414 = vunpack.c.l.b16 %v4049
      %v4415 = vunpack.c.l.b16 %v4063
      %v4416 = vunpack.c.l.b16 %v4073
      %v4417 = vunpack.c.l.b16 %v4087
      %v4418 = vunpack.c.l.b16 %v4097
      %v4419 = vunpack.c.l.b16 %v4111
      %v4420 = vunpack.c.l.b16 %v4121
      %v4421 = vunpack.c.l.b16 %v4135
      %v4422 = vunpack.c.l.b16 %v4145
      %v4423 = vunpack.c.l.b16 %v4159
      %v4424 = vunpack.c.l.b16 %v4169
      %v4425 = vunpack.c.l.b16 %v4183
      %v4426 = vunpack.c.l.b16 %v4193
      %v4427 = vunpack.c.l.b16 %v4207
      %v4428 = vunpack.c.l.b16 %v4217
      %v4429 = vunpack.c.l.b16 %v4231
      %v4430 = vunpack.c.l.b16 %v4241
      %v4431 = vunpack.c.l.b16 %v4255
      %v4432 = vunpack.c.l.b16 %v4265
      %v4433 = vunpack.c.l.b16 %v4279
      %v4434 = vunpack.c.l.b16 %v4289
      %v4435 = vunpack.c.l.b16 %v4303
      %v4436 = vunpack.c.l.b16 %v4313
      %v4437 = vunpack.c.l.b16 %v4327
      %v4438 = vunpack.c.l.b16 %v4337
      %v4439 = vunpack.c.l.b16 %v4351
      %v4440 = vunpack.c.l.b16 %v4361
      %v4441 = vunpack.c.l.b16 %v4375
      %v4442 = vunpack.c.l.b16 %v4385
      %v4443 = vunpack.c.l.b16 %v4399
      %v4444 = vunpack.c.l.b16 %v4409
      %v4445 = vpack.c.b16 %v4414, %v4413
      %v4446 = vpack.c.b16 %v4416, %v4415
      %v4447 = vpack.c.b16 %v4418, %v4417
      %v4448 = vpack.c.b16 %v4420, %v4419
      %v4449 = vpack.c.b16 %v4422, %v4421
      %v4450 = vpack.c.b16 %v4424, %v4423
      %v4451 = vpack.c.b16 %v4426, %v4425
      %v4452 = vpack.c.b16 %v4428, %v4427
      %v4453 = vpack.c.b16 %v4430, %v4429
      %v4454 = vpack.c.b16 %v4432, %v4431
      %v4455 = vpack.c.b16 %v4434, %v4433
      %v4456 = vpack.c.b16 %v4436, %v4435
      %v4457 = vpack.c.b16 %v4438, %v4437
      %v4458 = vpack.c.b16 %v4440, %v4439
      %v4459 = vpack.c.b16 %v4442, %v4441
      %v4460 = vpack.c.b16 %v4444, %v4443
      %v4463 = vunpack.c.l.b16 %v4411
      %v4464 = vunpack.c.l.b16 %v4412
      %v4465 = vpack.c.b16 %v4464, %v4463
      %v4468 = vsel %vm1580, %v4445, 0
      %v4471 = vsel %vm1580, %v4446, 0
      %v4474 = vsel %vm1580, %v4447, 0
      %v4477 = vsel %vm1580, %v4448, 0
      %v4480 = vsel %vm1580, %v4449, 0
      %v4483 = vsel %vm1580, %v4450, 0
      %v4486 = vsel %vm1580, %v4451, 0
      %v4489 = vsel %vm1580, %v4452, 0
      %v4492 = vsel %vm1580, %v4453, 0
      %v4495 = vsel %vm1580, %v4454, 0
      %v4498 = vsel %vm1580, %v4455, 0
      %v4501 = vsel %vm1580, %v4456, 0
      %v4504 = vsel %vm1580, %v4457, 0
      %v4507 = vsel %vm1580, %v4458, 0
      %v4510 = vsel %vm1580, %v4459, 0
      %v4513 = vsel %vm1580, %v4460, 0
      %4515 = vmatpush.bf16.msra.mxu0 0
      %4516 = vmatpush.bf16.msra.mxu0 0
      %4517 = vmatpush.bf16.msra.mxu0 0
      %4518 = vmatpush.bf16.msra.mxu0 0
      %4519 = vmatpush.bf16.msra.mxu0 0
      %4520 = vmatpush.bf16.msra.mxu0 0
      %4521 = vmatpush.bf16.msra.mxu0 0
      %4522 = vmatpush.bf16.msra.mxu0 %v4465
      %4523 = vmatmul.bf16.gmra.mxu0 %v4468
      %v4524 = vpop.f32.mrf.mxu0
      %v4525 = vadd.f32 0.0, %v4524
      %v4526 = vpop.f32.mrf.mxu0
      %v4527 = vadd.f32 0.0, %v4526
      %4528 = vmatmul.bf16.gmra.mxu0 %v4471
      %v4529 = vpop.f32.mrf.mxu0
      %v4530 = vadd.f32 0.0, %v4529
      %v4531 = vpop.f32.mrf.mxu0
      %v4532 = vadd.f32 0.0, %v4531
      %4533 = vmatmul.bf16.gmra.mxu0 %v4474
      %v4534 = vpop.f32.mrf.mxu0
      %v4535 = vadd.f32 0.0, %v4534
      %v4536 = vpop.f32.mrf.mxu0
      %v4537 = vadd.f32 0.0, %v4536
      %4538 = vmatmul.bf16.gmra.mxu0 %v4477
      %v4539 = vpop.f32.mrf.mxu0
      %v4540 = vadd.f32 0.0, %v4539
      %v4541 = vpop.f32.mrf.mxu0
      %v4542 = vadd.f32 0.0, %v4541
      %4543 = vmatmul.bf16.gmra.mxu0 %v4480
      %v4544 = vpop.f32.mrf.mxu0
      %v4545 = vadd.f32 0.0, %v4544
      %v4546 = vpop.f32.mrf.mxu0
      %v4547 = vadd.f32 0.0, %v4546
      %4548 = vmatmul.bf16.gmra.mxu0 %v4483
      %v4549 = vpop.f32.mrf.mxu0
      %v4550 = vadd.f32 0.0, %v4549
      %v4551 = vpop.f32.mrf.mxu0
      %v4552 = vadd.f32 0.0, %v4551
      %4553 = vmatmul.bf16.gmra.mxu0 %v4486
      %v4554 = vpop.f32.mrf.mxu0
      %v4555 = vadd.f32 0.0, %v4554
      %v4556 = vpop.f32.mrf.mxu0
      %v4557 = vadd.f32 0.0, %v4556
      %4558 = vmatmul.bf16.gmra.mxu0 %v4489
      %v4559 = vpop.f32.mrf.mxu0
      %v4560 = vadd.f32 0.0, %v4559
      %v4561 = vpop.f32.mrf.mxu0
      %v4562 = vadd.f32 0.0, %v4561
      %4563 = vmatmul.bf16.gmra.mxu0 %v4492
      %v4564 = vpop.f32.mrf.mxu0
      %v4565 = vadd.f32 0.0, %v4564
      %v4566 = vpop.f32.mrf.mxu0
      %v4567 = vadd.f32 0.0, %v4566
      %4568 = vmatmul.bf16.gmra.mxu0 %v4495
      %v4569 = vpop.f32.mrf.mxu0
      %v4570 = vadd.f32 0.0, %v4569
      %v4571 = vpop.f32.mrf.mxu0
      %v4572 = vadd.f32 0.0, %v4571
      %4573 = vmatmul.bf16.gmra.mxu0 %v4498
      %v4574 = vpop.f32.mrf.mxu0
      %v4575 = vadd.f32 0.0, %v4574
      %v4576 = vpop.f32.mrf.mxu0
      %v4577 = vadd.f32 0.0, %v4576
      %4578 = vmatmul.bf16.gmra.mxu0 %v4501
      %v4579 = vpop.f32.mrf.mxu0
      %v4580 = vadd.f32 0.0, %v4579
      %v4581 = vpop.f32.mrf.mxu0
      %v4582 = vadd.f32 0.0, %v4581
      %4583 = vmatmul.bf16.gmra.mxu0 %v4504
      %v4584 = vpop.f32.mrf.mxu0
      %v4585 = vadd.f32 0.0, %v4584
      %v4586 = vpop.f32.mrf.mxu0
      %v4587 = vadd.f32 0.0, %v4586
      %4588 = vmatmul.bf16.gmra.mxu0 %v4507
      %v4589 = vpop.f32.mrf.mxu0
      %v4590 = vadd.f32 0.0, %v4589
      %v4591 = vpop.f32.mrf.mxu0
      %v4592 = vadd.f32 0.0, %v4591
      %4593 = vmatmul.bf16.gmra.mxu0 %v4510
      %v4594 = vpop.f32.mrf.mxu0
      %v4595 = vadd.f32 0.0, %v4594
      %v4596 = vpop.f32.mrf.mxu0
      %v4597 = vadd.f32 0.0, %v4596
      %4598 = vmatmul.bf16.gmra.mxu0 %v4513
      %v4599 = vpop.f32.mrf.mxu0
      %v4600 = vadd.f32 0.0, %v4599
      %v4601 = vpop.f32.mrf.mxu0
      %v4602 = vadd.f32 0.0, %v4601
      %4603 = vdwg.mxu0
      %v4604 = vadd.f32 %v3946, %v4525
      %v4605 = vadd.f32 %v3947, %v4527
      %v4606 = vadd.f32 %v3948, %v4530
      %v4607 = vadd.f32 %v3949, %v4532
      %v4608 = vadd.f32 %v3950, %v4535
      %v4609 = vadd.f32 %v3951, %v4537
      %v4610 = vadd.f32 %v3952, %v4540
      %v4611 = vadd.f32 %v3953, %v4542
      %v4612 = vadd.f32 %v3954, %v4545
      %v4613 = vadd.f32 %v3955, %v4547
      %v4614 = vadd.f32 %v3956, %v4550
      %v4615 = vadd.f32 %v3957, %v4552
      %v4616 = vadd.f32 %v3958, %v4555
      %v4617 = vadd.f32 %v3959, %v4557
      %v4618 = vadd.f32 %v3960, %v4560
      %v4619 = vadd.f32 %v3961, %v4562
      %v4620 = vadd.f32 %v3962, %v4565
      %v4621 = vadd.f32 %v3963, %v4567
      %v4622 = vadd.f32 %v3964, %v4570
      %v4623 = vadd.f32 %v3965, %v4572
      %v4624 = vadd.f32 %v3966, %v4575
      %v4625 = vadd.f32 %v3967, %v4577
      %v4626 = vadd.f32 %v3968, %v4580
      %v4627 = vadd.f32 %v3969, %v4582
      %v4628 = vadd.f32 %v3970, %v4585
      %v4629 = vadd.f32 %v3971, %v4587
      %v4630 = vadd.f32 %v3972, %v4590
      %v4631 = vadd.f32 %v3973, %v4592
      %v4632 = vadd.f32 %v3974, %v4595
      %v4633 = vadd.f32 %v3975, %v4597
      %v4634 = vadd.f32 %v3976, %v4600
      %v4635 = vadd.f32 %v3977, %v4602
      %v4636 = vld [vmem:[%s3687] sm:$0xe]
      %v4637 = vld [vmem:[%s3687 + $0xc] sm:$0xe]
      %v4638 = vld [vmem:[%s3687 + $0x18] sm:$0xe]
      %v4639 = vld [vmem:[%s3687 + $0x24] sm:$0xe]
      %v4640 = vld [vmem:[%s3687 + $0x30] sm:$0xe]
      %v4641 = vld [vmem:[%s3687 + $0x3c] sm:$0xe]
      %v4642 = vld [vmem:[%s3687 + $0x48] sm:$0xe]
      %v4643 = vld [vmem:[%s3687 + $0x54] sm:$0xe]
      %v4644 = vld [vmem:[%s3687 + $0x60] sm:$0xe]
      %v4645 = vld [vmem:[%s3687 + $0x6c] sm:$0xe]
      %v4646 = vld [vmem:[%s3687 + $0x78] sm:$0xe]
      %v4647 = vld [vmem:[%s3687 + $0x84] sm:$0xe]
      %v4648 = vld [vmem:[%s3687 + $0x90] sm:$0xe]
      %v4649 = vld [vmem:[%s3687 + $0x9c] sm:$0xe]
      %v4650 = vld [vmem:[%s3687 + $0xa8] sm:$0xe]
      %v4651 = vld [vmem:[%s3687 + $0xb4] sm:$0xe]
      %v4700 = vrot.slane %v4636, 5
      %v4701 = vrot.slane %v4700, 4
      %v4702 = vrot.slane %v3979, 5
      %v4703 = vsel %vm1991, %v4701, %v4702
      %v4704 = vrot.slane %v4702, 4
      %v4705 = vrot.slane %v3980, 5
      %v4706 = vsel %vm1991, %v4704, %v4705
      %v4707 = vrot.slane %v4637, 5
      %v4708 = vrot.slane %v4707, 4
      %v4709 = vrot.slane %v3982, 5
      %v4710 = vsel %vm1991, %v4708, %v4709
      %v4711 = vrot.slane %v4709, 4
      %v4712 = vrot.slane %v3983, 5
      %v4713 = vsel %vm1991, %v4711, %v4712
      %v4714 = vrot.slane %v4638, 5
      %v4715 = vrot.slane %v4714, 4
      %v4716 = vrot.slane %v3985, 5
      %v4717 = vsel %vm1991, %v4715, %v4716
      %v4718 = vrot.slane %v4716, 4
      %v4719 = vrot.slane %v3986, 5
      %v4720 = vsel %vm1991, %v4718, %v4719
      %v4721 = vrot.slane %v4639, 5
      %v4722 = vrot.slane %v4721, 4
      %v4723 = vrot.slane %v3988, 5
      %v4724 = vsel %vm1991, %v4722, %v4723
      %v4725 = vrot.slane %v4723, 4
      %v4726 = vrot.slane %v3989, 5
      %v4727 = vsel %vm1991, %v4725, %v4726
      %v4728 = vrot.slane %v4640, 5
      %v4729 = vrot.slane %v4728, 4
      %v4730 = vrot.slane %v3991, 5
      %v4731 = vsel %vm1991, %v4729, %v4730
      %v4732 = vrot.slane %v4730, 4
      %v4733 = vrot.slane %v3992, 5
      %v4734 = vsel %vm1991, %v4732, %v4733
      %v4735 = vrot.slane %v4641, 5
      %v4736 = vrot.slane %v4735, 4
      %v4737 = vrot.slane %v3994, 5
      %v4738 = vsel %vm1991, %v4736, %v4737
      %v4739 = vrot.slane %v4737, 4
      %v4740 = vrot.slane %v3995, 5
      %v4741 = vsel %vm1991, %v4739, %v4740
      %v4742 = vrot.slane %v4642, 5
      %v4743 = vrot.slane %v4742, 4
      %v4744 = vrot.slane %v3997, 5
      %v4745 = vsel %vm1991, %v4743, %v4744
      %v4746 = vrot.slane %v4744, 4
      %v4747 = vrot.slane %v3998, 5
      %v4748 = vsel %vm1991, %v4746, %v4747
      %v4749 = vrot.slane %v4643, 5
      %v4750 = vrot.slane %v4749, 4
      %v4751 = vrot.slane %v4000, 5
      %v4752 = vsel %vm1991, %v4750, %v4751
      %v4753 = vrot.slane %v4751, 4
      %v4754 = vrot.slane %v4001, 5
      %v4755 = vsel %vm1991, %v4753, %v4754
      %v4756 = vrot.slane %v4644, 5
      %v4757 = vrot.slane %v4756, 4
      %v4758 = vrot.slane %v4003, 5
      %v4759 = vsel %vm1991, %v4757, %v4758
      %v4760 = vrot.slane %v4758, 4
      %v4761 = vrot.slane %v4004, 5
      %v4762 = vsel %vm1991, %v4760, %v4761
      %v4763 = vrot.slane %v4645, 5
      %v4764 = vrot.slane %v4763, 4
      %v4765 = vrot.slane %v4006, 5
      %v4766 = vsel %vm1991, %v4764, %v4765
      %v4767 = vrot.slane %v4765, 4
      %v4768 = vrot.slane %v4007, 5
      %v4769 = vsel %vm1991, %v4767, %v4768
      %v4770 = vrot.slane %v4646, 5
      %v4771 = vrot.slane %v4770, 4
      %v4772 = vrot.slane %v4009, 5
      %v4773 = vsel %vm1991, %v4771, %v4772
      %v4774 = vrot.slane %v4772, 4
      %v4775 = vrot.slane %v4010, 5
      %v4776 = vsel %vm1991, %v4774, %v4775
      %v4777 = vrot.slane %v4647, 5
      %v4778 = vrot.slane %v4777, 4
      %v4779 = vrot.slane %v4012, 5
      %v4780 = vsel %vm1991, %v4778, %v4779
      %v4781 = vrot.slane %v4779, 4
      %v4782 = vrot.slane %v4013, 5
      %v4783 = vsel %vm1991, %v4781, %v4782
      %v4784 = vrot.slane %v4648, 5
      %v4785 = vrot.slane %v4784, 4
      %v4786 = vrot.slane %v4015, 5
      %v4787 = vsel %vm1991, %v4785, %v4786
      %v4788 = vrot.slane %v4786, 4
      %v4789 = vrot.slane %v4016, 5
      %v4790 = vsel %vm1991, %v4788, %v4789
      %v4791 = vrot.slane %v4649, 5
      %v4792 = vrot.slane %v4791, 4
      %v4793 = vrot.slane %v4018, 5
      %v4794 = vsel %vm1991, %v4792, %v4793
      %v4795 = vrot.slane %v4793, 4
      %v4796 = vrot.slane %v4019, 5
      %v4797 = vsel %vm1991, %v4795, %v4796
      %v4798 = vrot.slane %v4650, 5
      %v4799 = vrot.slane %v4798, 4
      %v4800 = vrot.slane %v4021, 5
      %v4801 = vsel %vm1991, %v4799, %v4800
      %v4802 = vrot.slane %v4800, 4
      %v4803 = vrot.slane %v4022, 5
      %v4804 = vsel %vm1991, %v4802, %v4803
      %v4805 = vrot.slane %v4651, 5
      %v4806 = vrot.slane %v4805, 4
      %v4807 = vrot.slane %v4024, 5
      %v4808 = vsel %vm1991, %v4806, %v4807
      %v4809 = vrot.slane %v4807, 4
      %v4810 = vrot.slane %v4025, 5
      %v4811 = vsel %vm1991, %v4809, %v4810
      %s4812 = scalar_lea.vmem %s3, 64
      %v4813 = vld [vmem:[%s4812] sm:$0xf]
      %v4814 = vld [vmem:[%s4812 + $0x4] sm:$0xf]
      %v4815 = vunpack.c.l.b16 %v4703
      %v4816 = vunpack.c.l.b16 %v4706
      %v4817 = vunpack.c.l.b16 %v4710
      %v4818 = vunpack.c.l.b16 %v4713
      %v4819 = vunpack.c.l.b16 %v4717
      %v4820 = vunpack.c.l.b16 %v4720
      %v4821 = vunpack.c.l.b16 %v4724
      %v4822 = vunpack.c.l.b16 %v4727
      %v4823 = vunpack.c.l.b16 %v4731
      %v4824 = vunpack.c.l.b16 %v4734
      %v4825 = vunpack.c.l.b16 %v4738
      %v4826 = vunpack.c.l.b16 %v4741
      %v4827 = vunpack.c.l.b16 %v4745
      %v4828 = vunpack.c.l.b16 %v4748
      %v4829 = vunpack.c.l.b16 %v4752
      %v4830 = vunpack.c.l.b16 %v4755
      %v4831 = vunpack.c.l.b16 %v4759
      %v4832 = vunpack.c.l.b16 %v4762
      %v4833 = vunpack.c.l.b16 %v4766
      %v4834 = vunpack.c.l.b16 %v4769
      %v4835 = vunpack.c.l.b16 %v4773
      %v4836 = vunpack.c.l.b16 %v4776
      %v4837 = vunpack.c.l.b16 %v4780
      %v4838 = vunpack.c.l.b16 %v4783
      %v4839 = vunpack.c.l.b16 %v4787
      %v4840 = vunpack.c.l.b16 %v4790
      %v4841 = vunpack.c.l.b16 %v4794
      %v4842 = vunpack.c.l.b16 %v4797
      %v4843 = vunpack.c.l.b16 %v4801
      %v4844 = vunpack.c.l.b16 %v4804
      %v4845 = vunpack.c.l.b16 %v4808
      %v4846 = vunpack.c.l.b16 %v4811
      %v4847 = vpack.c.b16 %v4816, %v4815
      %v4848 = vpack.c.b16 %v4818, %v4817
      %v4849 = vpack.c.b16 %v4820, %v4819
      %v4850 = vpack.c.b16 %v4822, %v4821
      %v4851 = vpack.c.b16 %v4824, %v4823
      %v4852 = vpack.c.b16 %v4826, %v4825
      %v4853 = vpack.c.b16 %v4828, %v4827
      %v4854 = vpack.c.b16 %v4830, %v4829
      %v4855 = vpack.c.b16 %v4832, %v4831
      %v4856 = vpack.c.b16 %v4834, %v4833
      %v4857 = vpack.c.b16 %v4836, %v4835
      %v4858 = vpack.c.b16 %v4838, %v4837
      %v4859 = vpack.c.b16 %v4840, %v4839
      %v4860 = vpack.c.b16 %v4842, %v4841
      %v4861 = vpack.c.b16 %v4844, %v4843
      %v4862 = vpack.c.b16 %v4846, %v4845
      %v4865 = vunpack.c.l.b16 %v4813
      %v4866 = vunpack.c.l.b16 %v4814
      %v4867 = vpack.c.b16 %v4866, %v4865
      %v4870 = vsel %vm1580, %v4847, 0
      %v4873 = vsel %vm1580, %v4848, 0
      %v4876 = vsel %vm1580, %v4849, 0
      %v4879 = vsel %vm1580, %v4850, 0
      %v4882 = vsel %vm1580, %v4851, 0
      %v4885 = vsel %vm1580, %v4852, 0
      %v4888 = vsel %vm1580, %v4853, 0
      %v4891 = vsel %vm1580, %v4854, 0
      %v4894 = vsel %vm1580, %v4855, 0
      %v4897 = vsel %vm1580, %v4856, 0
      %v4900 = vsel %vm1580, %v4857, 0
      %v4903 = vsel %vm1580, %v4858, 0
      %v4906 = vsel %vm1580, %v4859, 0
      %v4909 = vsel %vm1580, %v4860, 0
      %v4912 = vsel %vm1580, %v4861, 0
      %v4915 = vsel %vm1580, %v4862, 0
      %4917 = vmatpush.bf16.msra.mxu0 0
      %4918 = vmatpush.bf16.msra.mxu0 0
      %4919 = vmatpush.bf16.msra.mxu0 0
      %4920 = vmatpush.bf16.msra.mxu0 0
      %4921 = vmatpush.bf16.msra.mxu0 0
      %4922 = vmatpush.bf16.msra.mxu0 0
      %4923 = vmatpush.bf16.msra.mxu0 0
      %4924 = vmatpush.bf16.msra.mxu0 %v4867
      %4925 = vmatmul.bf16.gmra.mxu0 %v4870
      %v4926 = vpop.f32.mrf.mxu0
      %v4927 = vadd.f32 0.0, %v4926
      %v4928 = vpop.f32.mrf.mxu0
      %v4929 = vadd.f32 0.0, %v4928
      %4930 = vmatmul.bf16.gmra.mxu0 %v4873
      %v4931 = vpop.f32.mrf.mxu0
      %v4932 = vadd.f32 0.0, %v4931
      %v4933 = vpop.f32.mrf.mxu0
      %v4934 = vadd.f32 0.0, %v4933
      %4935 = vmatmul.bf16.gmra.mxu0 %v4876
      %v4936 = vpop.f32.mrf.mxu0
      %v4937 = vadd.f32 0.0, %v4936
      %v4938 = vpop.f32.mrf.mxu0
      %v4939 = vadd.f32 0.0, %v4938
      %4940 = vmatmul.bf16.gmra.mxu0 %v4879
      %v4941 = vpop.f32.mrf.mxu0
      %v4942 = vadd.f32 0.0, %v4941
      %v4943 = vpop.f32.mrf.mxu0
      %v4944 = vadd.f32 0.0, %v4943
      %4945 = vmatmul.bf16.gmra.mxu0 %v4882
      %v4946 = vpop.f32.mrf.mxu0
      %v4947 = vadd.f32 0.0, %v4946
      %v4948 = vpop.f32.mrf.mxu0
      %v4949 = vadd.f32 0.0, %v4948
      %4950 = vmatmul.bf16.gmra.mxu0 %v4885
      %v4951 = vpop.f32.mrf.mxu0
      %v4952 = vadd.f32 0.0, %v4951
      %v4953 = vpop.f32.mrf.mxu0
      %v4954 = vadd.f32 0.0, %v4953
      %4955 = vmatmul.bf16.gmra.mxu0 %v4888
      %v4956 = vpop.f32.mrf.mxu0
      %v4957 = vadd.f32 0.0, %v4956
      %v4958 = vpop.f32.mrf.mxu0
      %v4959 = vadd.f32 0.0, %v4958
      %4960 = vmatmul.bf16.gmra.mxu0 %v4891
      %v4961 = vpop.f32.mrf.mxu0
      %v4962 = vadd.f32 0.0, %v4961
      %v4963 = vpop.f32.mrf.mxu0
      %v4964 = vadd.f32 0.0, %v4963
      %4965 = vmatmul.bf16.gmra.mxu0 %v4894
      %v4966 = vpop.f32.mrf.mxu0
      %v4967 = vadd.f32 0.0, %v4966
      %v4968 = vpop.f32.mrf.mxu0
      %v4969 = vadd.f32 0.0, %v4968
      %4970 = vmatmul.bf16.gmra.mxu0 %v4897
      %v4971 = vpop.f32.mrf.mxu0
      %v4972 = vadd.f32 0.0, %v4971
      %v4973 = vpop.f32.mrf.mxu0
      %v4974 = vadd.f32 0.0, %v4973
      %4975 = vmatmul.bf16.gmra.mxu0 %v4900
      %v4976 = vpop.f32.mrf.mxu0
      %v4977 = vadd.f32 0.0, %v4976
      %v4978 = vpop.f32.mrf.mxu0
      %v4979 = vadd.f32 0.0, %v4978
      %4980 = vmatmul.bf16.gmra.mxu0 %v4903
      %v4981 = vpop.f32.mrf.mxu0
      %v4982 = vadd.f32 0.0, %v4981
      %v4983 = vpop.f32.mrf.mxu0
      %v4984 = vadd.f32 0.0, %v4983
      %4985 = vmatmul.bf16.gmra.mxu0 %v4906
      %v4986 = vpop.f32.mrf.mxu0
      %v4987 = vadd.f32 0.0, %v4986
      %v4988 = vpop.f32.mrf.mxu0
      %v4989 = vadd.f32 0.0, %v4988
      %4990 = vmatmul.bf16.gmra.mxu0 %v4909
      %v4991 = vpop.f32.mrf.mxu0
      %v4992 = vadd.f32 0.0, %v4991
      %v4993 = vpop.f32.mrf.mxu0
      %v4994 = vadd.f32 0.0, %v4993
      %4995 = vmatmul.bf16.gmra.mxu0 %v4912
      %v4996 = vpop.f32.mrf.mxu0
      %v4997 = vadd.f32 0.0, %v4996
      %v4998 = vpop.f32.mrf.mxu0
      %v4999 = vadd.f32 0.0, %v4998
      %5000 = vmatmul.bf16.gmra.mxu0 %v4915
      %v5001 = vpop.f32.mrf.mxu0
      %v5002 = vadd.f32 0.0, %v5001
      %v5003 = vpop.f32.mrf.mxu0
      %v5004 = vadd.f32 0.0, %v5003
      %5005 = vdwg.mxu0
      %v5006 = vadd.f32 %v4604, %v4927
      %v5007 = vadd.f32 %v4605, %v4929
      %v5008 = vadd.f32 %v4606, %v4932
      %v5009 = vadd.f32 %v4607, %v4934
      %v5010 = vadd.f32 %v4608, %v4937
      %v5011 = vadd.f32 %v4609, %v4939
      %v5012 = vadd.f32 %v4610, %v4942
      %v5013 = vadd.f32 %v4611, %v4944
      %v5014 = vadd.f32 %v4612, %v4947
      %v5015 = vadd.f32 %v4613, %v4949
      %v5016 = vadd.f32 %v4614, %v4952
      %v5017 = vadd.f32 %v4615, %v4954
      %v5018 = vadd.f32 %v4616, %v4957
      %v5019 = vadd.f32 %v4617, %v4959
      %v5020 = vadd.f32 %v4618, %v4962
      %v5021 = vadd.f32 %v4619, %v4964
      %v5022 = vadd.f32 %v4620, %v4967
      %v5023 = vadd.f32 %v4621, %v4969
      %v5024 = vadd.f32 %v4622, %v4972
      %v5025 = vadd.f32 %v4623, %v4974
      %v5026 = vadd.f32 %v4624, %v4977
      %v5027 = vadd.f32 %v4625, %v4979
      %v5028 = vadd.f32 %v4626, %v4982
      %v5029 = vadd.f32 %v4627, %v4984
      %v5030 = vadd.f32 %v4628, %v4987
      %v5031 = vadd.f32 %v4629, %v4989
      %v5032 = vadd.f32 %v4630, %v4992
      %v5033 = vadd.f32 %v4631, %v4994
      %v5034 = vadd.f32 %v4632, %v4997
      %v5035 = vadd.f32 %v4633, %v4999
      %v5036 = vadd.f32 %v4634, %v5002
      %v5037 = vadd.f32 %v4635, %v5004
      %v5038 = vld [vmem:[%s4] sm:$0x1]
      %v5040 = vperm.slane %v5038, 0
      %v5042 = vadd.f32 %v5006, %v5040
      %v5043 = vadd.f32 %v5007, %v5040
      %v5044 = vadd.f32 %v5008, %v5040
      %v5045 = vadd.f32 %v5009, %v5040
      %v5046 = vadd.f32 %v5010, %v5040
      %v5047 = vadd.f32 %v5011, %v5040
      %v5048 = vadd.f32 %v5012, %v5040
      %v5049 = vadd.f32 %v5013, %v5040
      %v5050 = vadd.f32 %v5014, %v5040
      %v5051 = vadd.f32 %v5015, %v5040
      %v5052 = vadd.f32 %v5016, %v5040
      %v5053 = vadd.f32 %v5017, %v5040
      %v5054 = vadd.f32 %v5018, %v5040
      %v5055 = vadd.f32 %v5019, %v5040
      %v5056 = vadd.f32 %v5020, %v5040
      %v5057 = vadd.f32 %v5021, %v5040
      %v5058 = vadd.f32 %v5022, %v5040
      %v5059 = vadd.f32 %v5023, %v5040
      %v5060 = vadd.f32 %v5024, %v5040
      %v5061 = vadd.f32 %v5025, %v5040
      %v5062 = vadd.f32 %v5026, %v5040
      %v5063 = vadd.f32 %v5027, %v5040
      %v5064 = vadd.f32 %v5028, %v5040
      %v5065 = vadd.f32 %v5029, %v5040
      %v5066 = vadd.f32 %v5030, %v5040
      %v5067 = vadd.f32 %v5031, %v5040
      %v5068 = vadd.f32 %v5032, %v5040
      %v5069 = vadd.f32 %v5033, %v5040
      %v5070 = vadd.f32 %v5034, %v5040
      %v5071 = vadd.f32 %v5035, %v5040
      %v5072 = vadd.f32 %v5036, %v5040
      %v5073 = vadd.f32 %v5037, %v5040
      %v5074 = vpack.c.bf16 %v5042, %v5042
      %v5075 = vpack.c.bf16 %v5043, %v5043
      %v5076 = vpack.c.bf16 %v5044, %v5044
      %v5077 = vpack.c.bf16 %v5045, %v5045
      %v5078 = vpack.c.bf16 %v5046, %v5046
      %v5079 = vpack.c.bf16 %v5047, %v5047
      %v5080 = vpack.c.bf16 %v5048, %v5048
      %v5081 = vpack.c.bf16 %v5049, %v5049
      %v5082 = vpack.c.bf16 %v5050, %v5050
      %v5083 = vpack.c.bf16 %v5051, %v5051
      %v5084 = vpack.c.bf16 %v5052, %v5052
      %v5085 = vpack.c.bf16 %v5053, %v5053
      %v5086 = vpack.c.bf16 %v5054, %v5054
      %v5087 = vpack.c.bf16 %v5055, %v5055
      %v5088 = vpack.c.bf16 %v5056, %v5056
      %v5089 = vpack.c.bf16 %v5057, %v5057
      %v5090 = vpack.c.bf16 %v5058, %v5058
      %v5091 = vpack.c.bf16 %v5059, %v5059
      %v5092 = vpack.c.bf16 %v5060, %v5060
      %v5093 = vpack.c.bf16 %v5061, %v5061
      %v5094 = vpack.c.bf16 %v5062, %v5062
      %v5095 = vpack.c.bf16 %v5063, %v5063
      %v5096 = vpack.c.bf16 %v5064, %v5064
      %v5097 = vpack.c.bf16 %v5065, %v5065
      %v5098 = vpack.c.bf16 %v5066, %v5066
      %v5099 = vpack.c.bf16 %v5067, %v5067
      %v5100 = vpack.c.bf16 %v5068, %v5068
      %v5101 = vpack.c.bf16 %v5069, %v5069
      %v5102 = vpack.c.bf16 %v5070, %v5070
      %v5103 = vpack.c.bf16 %v5071, %v5071
      %v5104 = vpack.c.bf16 %v5072, %v5072
      %v5105 = vpack.c.bf16 %v5073, %v5073
      %vm5106 = vcmask 125952
      %5107 = vst.msk [vmem:[%s311] sm:$0xf] %vm5106, %v5074
      %5108 = vst.msk [vmem:[%s311 + $0x4] sm:$0xf] %vm5106, %v5075
      %5109 = vst.msk [vmem:[%s311 + $0x8] sm:$0xf] %vm5106, %v5076
      %5110 = vst.msk [vmem:[%s311 + $0xc] sm:$0xf] %vm5106, %v5077
      %5111 = vst.msk [vmem:[%s311 + $0x10] sm:$0xf] %vm5106, %v5078
      %5112 = vst.msk [vmem:[%s311 + $0x14] sm:$0xf] %vm5106, %v5079
      %5113 = vst.msk [vmem:[%s311 + $0x18] sm:$0xf] %vm5106, %v5080
      %5114 = vst.msk [vmem:[%s311 + $0x1c] sm:$0xf] %vm5106, %v5081
      %5115 = vst.msk [vmem:[%s311 + $0x20] sm:$0xf] %vm5106, %v5082
      %5116 = vst.msk [vmem:[%s311 + $0x24] sm:$0xf] %vm5106, %v5083
      %5117 = vst.msk [vmem:[%s311 + $0x28] sm:$0xf] %vm5106, %v5084
      %5118 = vst.msk [vmem:[%s311 + $0x2c] sm:$0xf] %vm5106, %v5085
      %5119 = vst.msk [vmem:[%s311 + $0x30] sm:$0xf] %vm5106, %v5086
      %5120 = vst.msk [vmem:[%s311 + $0x34] sm:$0xf] %vm5106, %v5087
      %5121 = vst.msk [vmem:[%s311 + $0x38] sm:$0xf] %vm5106, %v5088
      %5122 = vst.msk [vmem:[%s311 + $0x3c] sm:$0xf] %vm5106, %v5089
      %5123 = vst.msk [vmem:[%s311 + $0x40] sm:$0xf] %vm5106, %v5090
      %5124 = vst.msk [vmem:[%s311 + $0x44] sm:$0xf] %vm5106, %v5091
      %5125 = vst.msk [vmem:[%s311 + $0x48] sm:$0xf] %vm5106, %v5092
      %5126 = vst.msk [vmem:[%s311 + $0x4c] sm:$0xf] %vm5106, %v5093
      %5127 = vst.msk [vmem:[%s311 + $0x50] sm:$0xf] %vm5106, %v5094
      %5128 = vst.msk [vmem:[%s311 + $0x54] sm:$0xf] %vm5106, %v5095
      %5129 = vst.msk [vmem:[%s311 + $0x58] sm:$0xf] %vm5106, %v5096
      %5130 = vst.msk [vmem:[%s311 + $0x5c] sm:$0xf] %vm5106, %v5097
      %5131 = vst.msk [vmem:[%s311 + $0x60] sm:$0xf] %vm5106, %v5098
      %5132 = vst.msk [vmem:[%s311 + $0x64] sm:$0xf] %vm5106, %v5099
      %5133 = vst.msk [vmem:[%s311 + $0x68] sm:$0xf] %vm5106, %v5100
      %5134 = vst.msk [vmem:[%s311 + $0x6c] sm:$0xf] %vm5106, %v5101
      %5135 = vst.msk [vmem:[%s311 + $0x70] sm:$0xf] %vm5106, %v5102
      %5136 = vst.msk [vmem:[%s311 + $0x74] sm:$0xf] %vm5106, %v5103
      %5137 = vst.msk [vmem:[%s311 + $0x78] sm:$0xf] %vm5106, %v5104
      %5138 = vst.msk [vmem:[%s311 + $0x7c] sm:$0xf] %vm5106, %v5105
      %v5139 = vsel %vm1580, %v5042, 0.0
      %v5140 = vsel %vm1580, %v5043, 0.0
      %v5141 = vadd.f32 %v5139, %v5140
      %v5142 = vsel %vm1580, %v5044, 0.0
      %v5143 = vadd.f32 %v5141, %v5142
      %v5144 = vsel %vm1580, %v5045, 0.0
      %v5145 = vadd.f32 %v5143, %v5144
      %v5146 = vsel %vm1580, %v5046, 0.0
      %v5147 = vadd.f32 %v5145, %v5146
      %v5148 = vsel %vm1580, %v5047, 0.0
      %v5149 = vadd.f32 %v5147, %v5148
      %v5150 = vsel %vm1580, %v5048, 0.0
      %v5151 = vadd.f32 %v5149, %v5150
      %v5152 = vsel %vm1580, %v5049, 0.0
      %v5153 = vadd.f32 %v5151, %v5152
      %v5154 = vsel %vm1580, %v5050, 0.0
      %v5155 = vadd.f32 %v5153, %v5154
      %v5156 = vsel %vm1580, %v5051, 0.0
      %v5157 = vadd.f32 %v5155, %v5156
      %v5158 = vsel %vm1580, %v5052, 0.0
      %v5159 = vadd.f32 %v5157, %v5158
      %v5160 = vsel %vm1580, %v5053, 0.0
      %v5161 = vadd.f32 %v5159, %v5160
      %v5162 = vsel %vm1580, %v5054, 0.0
      %v5163 = vadd.f32 %v5161, %v5162
      %v5164 = vsel %vm1580, %v5055, 0.0
      %v5165 = vadd.f32 %v5163, %v5164
      %v5166 = vsel %vm1580, %v5056, 0.0
      %v5167 = vadd.f32 %v5165, %v5166
      %v5168 = vsel %vm1580, %v5057, 0.0
      %v5169 = vadd.f32 %v5167, %v5168
      %v5170 = vsel %vm1580, %v5058, 0.0
      %v5171 = vadd.f32 %v5169, %v5170
      %v5172 = vsel %vm1580, %v5059, 0.0
      %v5173 = vadd.f32 %v5171, %v5172
      %v5174 = vsel %vm1580, %v5060, 0.0
      %v5175 = vadd.f32 %v5173, %v5174
      %v5176 = vsel %vm1580, %v5061, 0.0
      %v5177 = vadd.f32 %v5175, %v5176
      %v5178 = vsel %vm1580, %v5062, 0.0
      %v5179 = vadd.f32 %v5177, %v5178
      %v5180 = vsel %vm1580, %v5063, 0.0
      %v5181 = vadd.f32 %v5179, %v5180
      %v5182 = vsel %vm1580, %v5064, 0.0
      %v5183 = vadd.f32 %v5181, %v5182
      %v5184 = vsel %vm1580, %v5065, 0.0
      %v5185 = vadd.f32 %v5183, %v5184
      %v5186 = vsel %vm1580, %v5066, 0.0
      %v5187 = vadd.f32 %v5185, %v5186
      %v5188 = vsel %vm1580, %v5067, 0.0
      %v5189 = vadd.f32 %v5187, %v5188
      %v5190 = vsel %vm1580, %v5068, 0.0
      %v5191 = vadd.f32 %v5189, %v5190
      %v5192 = vsel %vm1580, %v5069, 0.0
      %v5193 = vadd.f32 %v5191, %v5192
      %v5194 = vsel %vm1580, %v5070, 0.0
      %v5195 = vadd.f32 %v5193, %v5194
      %v5196 = vsel %vm1580, %v5071, 0.0
      %v5197 = vadd.f32 %v5195, %v5196
      %v5198 = vsel %vm1580, %v5072, 0.0
      %v5199 = vadd.f32 %v5197, %v5198
      %v5200 = vsel %vm1580, %v5073, 0.0
      %v5201 = vadd.f32 %v5199, %v5200
      %v5202 = vrot.slane %v5201, 4
      %v5203 = vadd.f32 %v5201, %v5202
      %v5204 = vrot.slane %v5203, 2
      %v5205 = vadd.f32 %v5203, %v5204
      %v5206 = vrot.slane %v5205, 1
      %v5207 = vadd.f32 %v5205, %v5206
      %v5208 = vmul.f32 %v5042, %v5042
      %v5209 = vmul.f32 %v5043, %v5043
      %v5210 = vmul.f32 %v5044, %v5044
      %v5211 = vmul.f32 %v5045, %v5045
      %v5212 = vmul.f32 %v5046, %v5046
      %v5213 = vmul.f32 %v5047, %v5047
      %v5214 = vmul.f32 %v5048, %v5048
      %v5215 = vmul.f32 %v5049, %v5049
      %v5216 = vmul.f32 %v5050, %v5050
      %v5217 = vmul.f32 %v5051, %v5051
      %v5218 = vmul.f32 %v5052, %v5052
      %v5219 = vmul.f32 %v5053, %v5053
      %v5220 = vmul.f32 %v5054, %v5054
      %v5221 = vmul.f32 %v5055, %v5055
      %v5222 = vmul.f32 %v5056, %v5056
      %v5223 = vmul.f32 %v5057, %v5057
      %v5224 = vmul.f32 %v5058, %v5058
      %v5225 = vmul.f32 %v5059, %v5059
      %v5226 = vmul.f32 %v5060, %v5060
      %v5227 = vmul.f32 %v5061, %v5061
      %v5228 = vmul.f32 %v5062, %v5062
      %v5229 = vmul.f32 %v5063, %v5063
      %v5230 = vmul.f32 %v5064, %v5064
      %v5231 = vmul.f32 %v5065, %v5065
      %v5232 = vmul.f32 %v5066, %v5066
      %v5233 = vmul.f32 %v5067, %v5067
      %v5234 = vmul.f32 %v5068, %v5068
      %v5235 = vmul.f32 %v5069, %v5069
      %v5236 = vmul.f32 %v5070, %v5070
      %v5237 = vmul.f32 %v5071, %v5071
      %v5238 = vmul.f32 %v5072, %v5072
      %v5239 = vmul.f32 %v5073, %v5073
      %v5240 = vsel %vm1580, %v5208, 0.0
      %v5241 = vsel %vm1580, %v5209, 0.0
      %v5242 = vadd.f32 %v5240, %v5241
      %v5243 = vsel %vm1580, %v5210, 0.0
      %v5244 = vadd.f32 %v5242, %v5243
      %v5245 = vsel %vm1580, %v5211, 0.0
      %v5246 = vadd.f32 %v5244, %v5245
      %v5247 = vsel %vm1580, %v5212, 0.0
      %v5248 = vadd.f32 %v5246, %v5247
      %v5249 = vsel %vm1580, %v5213, 0.0
      %v5250 = vadd.f32 %v5248, %v5249
      %v5251 = vsel %vm1580, %v5214, 0.0
      %v5252 = vadd.f32 %v5250, %v5251
      %v5253 = vsel %vm1580, %v5215, 0.0
      %v5254 = vadd.f32 %v5252, %v5253
      %v5255 = vsel %vm1580, %v5216, 0.0
      %v5256 = vadd.f32 %v5254, %v5255
      %v5257 = vsel %vm1580, %v5217, 0.0
      %v5258 = vadd.f32 %v5256, %v5257
      %v5259 = vsel %vm1580, %v5218, 0.0
      %v5260 = vadd.f32 %v5258, %v5259
      %v5261 = vsel %vm1580, %v5219, 0.0
      %v5262 = vadd.f32 %v5260, %v5261
      %v5263 = vsel %vm1580, %v5220, 0.0
      %v5264 = vadd.f32 %v5262, %v5263
      %v5265 = vsel %vm1580, %v5221, 0.0
      %v5266 = vadd.f32 %v5264, %v5265
      %v5267 = vsel %vm1580, %v5222, 0.0
      %v5268 = vadd.f32 %v5266, %v5267
      %v5269 = vsel %vm1580, %v5223, 0.0
      %v5270 = vadd.f32 %v5268, %v5269
      %v5271 = vsel %vm1580, %v5224, 0.0
      %v5272 = vadd.f32 %v5270, %v5271
      %v5273 = vsel %vm1580, %v5225, 0.0
      %v5274 = vadd.f32 %v5272, %v5273
      %v5275 = vsel %vm1580, %v5226, 0.0
      %v5276 = vadd.f32 %v5274, %v5275
      %v5277 = vsel %vm1580, %v5227, 0.0
      %v5278 = vadd.f32 %v5276, %v5277
      %v5279 = vsel %vm1580, %v5228, 0.0
      %v5280 = vadd.f32 %v5278, %v5279
      %v5281 = vsel %vm1580, %v5229, 0.0
      %v5282 = vadd.f32 %v5280, %v5281
      %v5283 = vsel %vm1580, %v5230, 0.0
      %v5284 = vadd.f32 %v5282, %v5283
      %v5285 = vsel %vm1580, %v5231, 0.0
      %v5286 = vadd.f32 %v5284, %v5285
      %v5287 = vsel %vm1580, %v5232, 0.0
      %v5288 = vadd.f32 %v5286, %v5287
      %v5289 = vsel %vm1580, %v5233, 0.0
      %v5290 = vadd.f32 %v5288, %v5289
      %v5291 = vsel %vm1580, %v5234, 0.0
      %v5292 = vadd.f32 %v5290, %v5291
      %v5293 = vsel %vm1580, %v5235, 0.0
      %v5294 = vadd.f32 %v5292, %v5293
      %v5295 = vsel %vm1580, %v5236, 0.0
      %v5296 = vadd.f32 %v5294, %v5295
      %v5297 = vsel %vm1580, %v5237, 0.0
      %v5298 = vadd.f32 %v5296, %v5297
      %v5299 = vsel %vm1580, %v5238, 0.0
      %v5300 = vadd.f32 %v5298, %v5299
      %v5301 = vsel %vm1580, %v5239, 0.0
      %v5302 = vadd.f32 %v5300, %v5301
      %v5303 = vrot.slane %v5302, 4
      %v5304 = vadd.f32 %v5302, %v5303
      %v5305 = vrot.slane %v5304, 2
      %v5306 = vadd.f32 %v5304, %v5305
      %v5307 = vrot.slane %v5306, 1
      %v5308 = vadd.f32 %v5306, %v5307
      // Predicated region
      $region45: #{decoder_block_forward.6} parent=39 // pred_check
        %p5309 = pneg %p320
      $region46: #{decoder_block_forward.6} parent=39 // pred_check_branch
        %5311 = sbr.rel (%p5309) target = $region48
      $region47: #{decoder_block_forward.6} parent=39 // pred_region
        %vm5312 = vcmask 122880
        %5313 = vst.msk [vmem:[%s314] sm:$0x1] %vm5312, %v5207
        %5314 = vst.msk [vmem:[%s317] sm:$0x1] %vm5312, %v5308
      $region48: #{decoder_block_forward.6} parent=39 // pred_fallthru
        _
      %p5315 = scmp.gt.s32.totalorder %s24, 0
      // Predicated region
      $region49: #{decoder_block_forward.6} parent=39 // pred_check
        %p5316 = pneg %p5315
      $region50: #{decoder_block_forward.6} parent=39 // pred_check_branch
        %5318 = sbr.rel (%p5316) target = $region52
      $region51: #{decoder_block_forward.6} parent=39 // pred_region
        %v5319 = vld [vmem:[%s314] sm:$0x1]
        %v5320 = vadd.f32 %v5319, %v5207
        %vm5321 = vcmask 122880
        %5322 = vst.msk [vmem:[%s314] sm:$0x1] %vm5321, %v5320
        %v5323 = vld [vmem:[%s317] sm:$0x1]
        %v5324 = vadd.f32 %v5323, %v5308
        %5325 = vst.msk [vmem:[%s317] sm:$0x1] %vm5321, %v5324
      $region52: #{decoder_block_forward.6} parent=39 // pred_fallthru
        _
      %p5326 = scmp.lt.s32.totalorder %s23, 1
      %s5327 = scalar_select %p5326, %s23, 1
      %p5328 = scmp.lt.s32.totalorder %s24, 0
      %s5329 = scalar_select %p5328, %s24, 0
      %s5330 = smul.addr %s5329, 32
      %s5331 = smul.addr %s5327, 32
      %s5332 = sadd.s32 %s5330, %s5331
      %s5333 = smul.addr %s5332, 4
      %s5334 = scalar_lea.vmem %s5, %s5333
      %p5335 = scmp.lt.s32.totalorder %s23, 1
      %s5336 = scalar_select %p5335, %s23, 1
      %s5337 = scalar_lea.vmem %s6, %s5336
      %p5338 = scmp.lt.s32.totalorder %s23, 1
      %s5339 = scalar_select %p5338, %s23, 1
      %s5340 = scalar_lea.vmem %s7, %s5339
      // Predicated region
      $region53: #{decoder_block_forward.6} parent=39 // pred_check
        %p5341 = pneg %p161
      $region54: #{decoder_block_forward.6} parent=39 // pred_check_branch
        %5343 = sbr.rel (%p5341) target = $region56
      $region55: #{decoder_block_forward.6} parent=39 // pred_region
        _
      $region56: #{decoder_block_forward.6} parent=39 // pred_fallthru
        _
      // Predicated region
      $region57: #{decoder_block_forward.6} parent=39 // pred_check
        %p5344 = pneg %p187
      $region58: #{decoder_block_forward.6} parent=39 // pred_check_branch
        %5346 = sbr.rel (%p5344) target = $region60
      $region59: #{decoder_block_forward.6} parent=39 // pred_region
        _
      $region60: #{decoder_block_forward.6} parent=39 // pred_fallthru
        _
      // Predicated region
      $region61: #{decoder_block_forward.6} parent=39 // pred_check
        %p5347 = pneg %p213
      $region62: #{decoder_block_forward.6} parent=39 // pred_check_branch
        %5349 = sbr.rel (%p5347) target = $region64
      $region63: #{decoder_block_forward.6} parent=39 // pred_region
        _
      $region64: #{decoder_block_forward.6} parent=39 // pred_fallthru
        _
    $region40: #{decoder_block_forward.6} parent=5 // pred_fallthru
      _
    %p5350 = scmp.le.s32.totalorder 2, %s14
    // Predicated region
    $region65: #{decoder_block_forward.6} parent=5 // pred_check
      %p5351 = pneg %p5350
    $region66: #{decoder_block_forward.6} parent=5 // pred_check_branch
      %5353 = sbr.rel (%p5351) target = $region68
    $region67: #{decoder_block_forward.6} parent=5 // pred_region
      %s5354 = ssub.s32 %s14, 2
      // Predicated region
      $region69: #{decoder_block_forward.6} parent=67 // pred_check
        %p5355 = pneg %p167
      $region70: #{decoder_block_forward.6} parent=67 // pred_check_branch
        %5357 = sbr.rel (%p5355) target = $region72
      $region71: #{decoder_block_forward.6} parent=67 // pred_region
        %p5358 = scmp.lt.s32.totalorder %s25, 1
        %s5359 = scalar_select %p5358, %s25, 1
        %p5360 = scmp.lt.s32.totalorder %s26, 0
        %s5361 = scalar_select %p5360, %s26, 0
        %s5362 = smul.addr %s5361, 32
        %s5363 = smul.addr %s5359, 32
        %s5364 = sadd.s32 %s5362, %s5363
        %s5365 = smul.addr %s5364, 4
        %s5366 = scalar_lea.vmem %s5, %s5365
      $region72: #{decoder_block_forward.6} parent=67 // pred_fallthru
        _
      // Predicated region
      $region73: #{decoder_block_forward.6} parent=67 // pred_check
        %p5367 = pneg %p193
      $region74: #{decoder_block_forward.6} parent=67 // pred_check_branch
        %5369 = sbr.rel (%p5367) target = $region76
      $region75: #{decoder_block_forward.6} parent=67 // pred_region
        %p5370 = scmp.lt.s32.totalorder %s25, 1
        %s5371 = scalar_select %p5370, %s25, 1
        %s5372 = scalar_lea.vmem %s6, %s5371
      $region76: #{decoder_block_forward.6} parent=67 // pred_fallthru
        _
      // Predicated region
      $region77: #{decoder_block_forward.6} parent=67 // pred_check
        %p5373 = pneg %p219
      $region78: #{decoder_block_forward.6} parent=67 // pred_check_branch
        %5375 = sbr.rel (%p5373) target = $region80
      $region79: #{decoder_block_forward.6} parent=67 // pred_region
        %p5376 = scmp.lt.s32.totalorder %s25, 1
        %s5377 = scalar_select %p5376, %s25, 1
        %s5378 = scalar_lea.vmem %s7, %s5377
      $region80: #{decoder_block_forward.6} parent=67 // pred_fallthru
        _
    $region68: #{decoder_block_forward.6} parent=5 // pred_fallthru
      _
  $region6: #{decoder_block_forward.6} parent=0 // loop_footer
    %s18 = sadd.s32 1, %s14
  $region7: #{decoder_block_forward.6} parent=0 // loop_footer_branch
    %13 = sbr.rel target = $region3
  $region8: #{decoder_block_forward.6} parent=0 // loop_exit
    _

// kernel: decoder_block_forward.5
$region0: #{decoder_block_forward.5}
  #allocation0 [shape = 'u32[]', space=smem, size = 0x4, offset = 0x4, fixed_abs, tag = 'smem constant byte address 0x4 - core index']
  #allocation1 [shape = 'u32[72,128]{1,0:T(1,128)}', space=vmem, size = 0x9000, scoped, tag = 'internal scratch']
  #allocation2 [shape = 'bf16[18,18,32]{2,1,0:T(8,128)(2,1)}', space=vmem, size = 0x1b000, scoped, tag = 'scratch operand']
  %s0 = inlined_call_operand.vmem [shape: bf16[2,16,16,16], index: 0, kind: input, shape index: {}]
  %s1 = inlined_call_operand.vmem [shape: bf16[2,16,16,16], index: 1, kind: input, shape index: {}]
  %s2 = inlined_call_operand.vmem [shape: bf16[9,32,16], index: 2, kind: input, shape index: {}]
  %s3 = inlined_call_operand.vmem [shape: f32[1,16], index: 3, kind: input, shape index: {}]
  %s4 = inlined_call_operand.vmem [shape: bf16[2,1,256,16], index: 4, kind: output, shape index: {0}]
  %s5 = inlined_call_operand.vmem [shape: f32[2,1,16], index: 5, kind: output, shape index: {1}]
  %s6 = inlined_call_operand.vmem [shape: f32[2,1,16], index: 6, kind: output, shape index: {2}]
  %7 = xla_tuple %s4, %s5, %s6
  %s8 = sld [smem:[#allocation0]]
  $region77: #{decoder_block_forward.5} parent=0
    _
  %s10 = ssub.s32 1, %s8
  %s11 = scalar_select 0, %s10, %s8
  loop: start=0, step=1, limit=4
  $region2: #{decoder_block_forward.5} parent=0 // loop_pre_header
    _
  $region3: #{decoder_block_forward.5} parent=0 // loop_header
    %s13 = sphi 0, %s17
    %p14 = scmp.ge.s32.totalorder %s13, 4
    %s20 = sphi 0, %s32
    %s21 = sphi 0, %s28
    %s22 = sphi 0, %s20
    %s23 = sphi 0, %s21
    %s24 = sphi 0, %s22
    %s25 = sphi 0, %s23
    %s35 = sphi 0, %s37
    %s38 = sphi 0, %s35
    %s39 = sphi 0, %s38
    %s55 = sphi 0, %s39
    %s61 = sphi 0, %s63
    %s64 = sphi 0, %s61
    %s65 = sphi 0, %s64
    %s81 = sphi 0, %s65
    %s85 = sphi 0, %s85
    %s87 = sphi 0, %s85
    %s88 = sphi 0, %s87
    %s102 = sphi 0, %s88
    %s106 = sphi 0, %s106
    %s108 = sphi 0, %s106
    %s109 = sphi 0, %s108
    %s123 = sphi 0, %s109
    %s131 = sphi 0, %s133
    %s134 = sphi 0, %s131
    %s135 = sphi 0, %s134
    %s151 = sphi 0, %s135
    %s157 = sphi 0, %s159
    %s160 = sphi 0, %s157
    %s161 = sphi 0, %s160
    %s177 = sphi 0, %s161
    %s183 = sphi 0, %s185
    %s186 = sphi 0, %s183
    %s187 = sphi 0, %s186
    %s203 = sphi 0, %s187
  $region4: #{decoder_block_forward.5} parent=0 // loop_header_branch
    %16 = sbr.rel (%p14) target = $region8
  $region5: #{decoder_block_forward.5} parent=0 // loop_body
    %s18 = ssub.s32 %s13, 1
    %s19 = ssub.s32 %s13, 2
    %s26 = sadd.s32 1, %s21
    %p27 = scmp.ge.s32.totalorder %s26, 1
    %s28 = scalar_select %p27, 0, %s26
    %s29 = sadd.s32 1, %s20
    %s30 = scalar_select %p27, %s29, %s20
    %p31 = scmp.ge.s32.totalorder %s30, 2
    %s32 = scalar_select %p31, 0, %s30
    %s33 = ssub.s32 %s20, %s32
    %p34 = scmp.eq.s32.totalorder %s33, 0
    %s36 = sadd.s32 %s35, 1
    %s37 = scalar_select %p34, %s35, %s36
    %p40 = pneg %p34
    %p41 = scmp.eq.s32.totalorder %s13, 1
    %p42 = por %p40, %p41
    %p43 = scmp.ne.s32.totalorder %s35, %s38
    %p44 = scmp.eq.s32.totalorder %s13, 0
    %p45 = por %p43, %p44
    %p46 = scmp.ne.s32.totalorder %s35, %s38
    %p47 = scmp.eq.s32.totalorder %s18, 1
    %p48 = por %p46, %p47
    %p49 = scmp.ne.s32.totalorder %s38, %s39
    %p50 = scmp.eq.s32.totalorder %s18, 0
    %p51 = por %p49, %p50
    %p52 = scmp.ne.s32.totalorder %s38, %s39
    %p53 = scmp.eq.s32.totalorder %s19, 1
    %p54 = por %p52, %p53
    %p56 = scmp.ne.s32.totalorder %s39, %s55
    %p57 = scmp.eq.s32.totalorder %s19, 0
    %p58 = por %p56, %p57
    %s59 = ssub.s32 %s20, %s32
    %p60 = scmp.eq.s32.totalorder %s59, 0
    %s62 = sadd.s32 %s61, 1
    %s63 = scalar_select %p60, %s61, %s62
    %p66 = pneg %p60
    %p67 = scmp.eq.s32.totalorder %s13, 1
    %p68 = por %p66, %p67
    %p69 = scmp.ne.s32.totalorder %s61, %s64
    %p70 = scmp.eq.s32.totalorder %s13, 0
    %p71 = por %p69, %p70
    %p72 = scmp.ne.s32.totalorder %s61, %s64
    %p73 = scmp.eq.s32.totalorder %s18, 1
    %p74 = por %p72, %p73
    %p75 = scmp.ne.s32.totalorder %s64, %s65
    %p76 = scmp.eq.s32.totalorder %s18, 0
    %p77 = por %p75, %p76
    %p78 = scmp.ne.s32.totalorder %s64, %s65
    %p79 = scmp.eq.s32.totalorder %s19, 1
    %p80 = por %p78, %p79
    %p82 = scmp.ne.s32.totalorder %s65, %s81
    %p83 = scmp.eq.s32.totalorder %s19, 0
    %p84 = por %p82, %p83
    %s86 = sadd.s32 %s85, 1
    %p89 = scmp.eq.s32.totalorder %s13, 1
    %p90 = scmp.ne.s32.totalorder %s85, %s87
    %p91 = scmp.eq.s32.totalorder %s13, 0
    %p92 = por %p90, %p91
    %p93 = scmp.ne.s32.totalorder %s85, %s87
    %p94 = scmp.eq.s32.totalorder %s18, 1
    %p95 = por %p93, %p94
    %p96 = scmp.ne.s32.totalorder %s87, %s88
    %p97 = scmp.eq.s32.totalorder %s18, 0
    %p98 = por %p96, %p97
    %p99 = scmp.ne.s32.totalorder %s87, %s88
    %p100 = scmp.eq.s32.totalorder %s19, 1
    %p101 = por %p99, %p100
    %p103 = scmp.ne.s32.totalorder %s88, %s102
    %p104 = scmp.eq.s32.totalorder %s19, 0
    %p105 = por %p103, %p104
    %s107 = sadd.s32 %s106, 1
    %p110 = scmp.eq.s32.totalorder %s13, 1
    %p111 = scmp.ne.s32.totalorder %s106, %s108
    %p112 = scmp.eq.s32.totalorder %s13, 0
    %p113 = por %p111, %p112
    %p114 = scmp.ne.s32.totalorder %s106, %s108
    %p115 = scmp.eq.s32.totalorder %s18, 1
    %p116 = por %p114, %p115
    %p117 = scmp.ne.s32.totalorder %s108, %s109
    %p118 = scmp.eq.s32.totalorder %s18, 0
    %p119 = por %p117, %p118
    %p120 = scmp.ne.s32.totalorder %s108, %s109
    %p121 = scmp.eq.s32.totalorder %s19, 1
    %p122 = por %p120, %p121
    %p124 = scmp.ne.s32.totalorder %s109, %s123
    %p125 = scmp.eq.s32.totalorder %s19, 0
    %p126 = por %p124, %p125
    %s127 = ssub.s32 %s20, %s32
    %s128 = ssub.s32 %s21, %s28
    %s129 = sor.u32 %s127, %s128
    %p130 = scmp.eq.s32.totalorder %s129, 0
    %s132 = sadd.s32 %s131, 1
    %s133 = scalar_select %p130, %s131, %s132
    %p136 = pneg %p130
    %p137 = scmp.eq.s32.totalorder %s13, 1
    %p138 = por %p136, %p137
    %p139 = scmp.ne.s32.totalorder %s131, %s134
    %p140 = scmp.eq.s32.totalorder %s13, 0
    %p141 = por %p139, %p140
    %p142 = scmp.ne.s32.totalorder %s131, %s134
    %p143 = scmp.eq.s32.totalorder %s18, 1
    %p144 = por %p142, %p143
    %p145 = scmp.ne.s32.totalorder %s134, %s135
    %p146 = scmp.eq.s32.totalorder %s18, 0
    %p147 = por %p145, %p146
    %p148 = scmp.ne.s32.totalorder %s134, %s135
    %p149 = scmp.eq.s32.totalorder %s19, 1
    %p150 = por %p148, %p149
    %p152 = scmp.ne.s32.totalorder %s135, %s151
    %p153 = scmp.eq.s32.totalorder %s19, 0
    %p154 = por %p152, %p153
    %s155 = ssub.s32 %s20, %s32
    %p156 = scmp.eq.s32.totalorder %s155, 0
    %s158 = sadd.s32 %s157, 1
    %s159 = scalar_select %p156, %s157, %s158
    %p162 = pneg %p156
    %p163 = scmp.eq.s32.totalorder %s13, 1
    %p164 = por %p162, %p163
    %p165 = scmp.ne.s32.totalorder %s157, %s160
    %p166 = scmp.eq.s32.totalorder %s13, 0
    %p167 = por %p165, %p166
    %p168 = scmp.ne.s32.totalorder %s157, %s160
    %p169 = scmp.eq.s32.totalorder %s18, 1
    %p170 = por %p168, %p169
    %p171 = scmp.ne.s32.totalorder %s160, %s161
    %p172 = scmp.eq.s32.totalorder %s18, 0
    %p173 = por %p171, %p172
    %p174 = scmp.ne.s32.totalorder %s160, %s161
    %p175 = scmp.eq.s32.totalorder %s19, 1
    %p176 = por %p174, %p175
    %p178 = scmp.ne.s32.totalorder %s161, %s177
    %p179 = scmp.eq.s32.totalorder %s19, 0
    %p180 = por %p178, %p179
    %s181 = ssub.s32 %s20, %s32
    %p182 = scmp.eq.s32.totalorder %s181, 0
    %s184 = sadd.s32 %s183, 1
    %s185 = scalar_select %p182, %s183, %s184
    %p188 = pneg %p182
    %p189 = scmp.eq.s32.totalorder %s13, 1
    %p190 = por %p188, %p189
    %p191 = scmp.ne.s32.totalorder %s183, %s186
    %p192 = scmp.eq.s32.totalorder %s13, 0
    %p193 = por %p191, %p192
    %p194 = scmp.ne.s32.totalorder %s183, %s186
    %p195 = scmp.eq.s32.totalorder %s18, 1
    %p196 = por %p194, %p195
    %p197 = scmp.ne.s32.totalorder %s186, %s187
    %p198 = scmp.eq.s32.totalorder %s18, 0
    %p199 = por %p197, %p198
    %p200 = scmp.ne.s32.totalorder %s186, %s187
    %p201 = scmp.eq.s32.totalorder %s19, 1
    %p202 = por %p200, %p201
    %p204 = scmp.ne.s32.totalorder %s187, %s203
    %p205 = scmp.eq.s32.totalorder %s19, 0
    %p206 = por %p204, %p205
    %p207 = scmp.le.s32.totalorder 1, %s13
    %p208 = scmp.lt.s32.totalorder %s13, 3
    %p209 = pnand %p207, %p208
    %p210 = pneg %p209
    // Predicated region
    $region9: #{decoder_block_forward.5} parent=5 // pred_check
      _
    $region10: #{decoder_block_forward.5} parent=5 // pred_check_branch
      %212 = sbr.rel (%p209) target = $region12
    $region11: #{decoder_block_forward.5} parent=5 // pred_region
      %s213 = ssub.s32 %s13, 1
      // Predicated region
      $region13: #{decoder_block_forward.5} parent=11 // pred_check
        %p214 = pneg %p98
      $region14: #{decoder_block_forward.5} parent=11 // pred_check_branch
        %216 = sbr.rel (%p214) target = $region16
      $region15: #{decoder_block_forward.5} parent=11 // pred_region
        _
      $region16: #{decoder_block_forward.5} parent=11 // pred_fallthru
        _
      // Predicated region
      $region17: #{decoder_block_forward.5} parent=11 // pred_check
        %p217 = pneg %p119
      $region18: #{decoder_block_forward.5} parent=11 // pred_check_branch
        %219 = sbr.rel (%p217) target = $region20
      $region19: #{decoder_block_forward.5} parent=11 // pred_region
        _
      $region20: #{decoder_block_forward.5} parent=11 // pred_fallthru
        _
    $region12: #{decoder_block_forward.5} parent=5 // pred_fallthru
      _
    %p220 = scmp.lt.s32.totalorder %s13, 2
    // Predicated region
    $region21: #{decoder_block_forward.5} parent=5 // pred_check
      %p221 = pneg %p220
    $region22: #{decoder_block_forward.5} parent=5 // pred_check_branch
      %223 = sbr.rel (%p221) target = $region24
    $region23: #{decoder_block_forward.5} parent=5 // pred_region
      // Predicated region
      $region25: #{decoder_block_forward.5} parent=23 // pred_check
        %p224 = pneg %p45
      $region26: #{decoder_block_forward.5} parent=23 // pred_check_branch
        %226 = sbr.rel (%p224) target = $region28
      $region27: #{decoder_block_forward.5} parent=23 // pred_region
        %p227 = scmp.lt.s32.totalorder %s20, 1
        %s228 = scalar_select %p227, %s20, 1
        %s229 = smul.addr %s228, 32
        %s230 = smul.addr %s229, 4
        %s231 = scalar_lea.vmem %s0, %s230
      $region28: #{decoder_block_forward.5} parent=23 // pred_fallthru
        _
      // Predicated region
      $region29: #{decoder_block_forward.5} parent=23 // pred_check
        %p232 = pneg %p71
      $region30: #{decoder_block_forward.5} parent=23 // pred_check_branch
        %234 = sbr.rel (%p232) target = $region32
      $region31: #{decoder_block_forward.5} parent=23 // pred_region
        %p235 = scmp.lt.s32.totalorder %s20, 1
        %s236 = scalar_select %p235, %s20, 1
        %s237 = smul.addr %s236, 32
        %s238 = smul.addr %s237, 4
        %s239 = scalar_lea.vmem %s1, %s238
      $region32: #{decoder_block_forward.5} parent=23 // pred_fallthru
        _
    $region24: #{decoder_block_forward.5} parent=5 // pred_fallthru
      _
    %p240 = scmp.le.s32.totalorder 1, %s13
    %p241 = scmp.lt.s32.totalorder %s13, 3
    %p242 = pnand %p240, %p241
    %p243 = pneg %p242
    // Predicated region
    $region33: #{decoder_block_forward.5} parent=5 // pred_check
      _
    $region34: #{decoder_block_forward.5} parent=5 // pred_check_branch
      %245 = sbr.rel (%p242) target = $region36
    $region35: #{decoder_block_forward.5} parent=5 // pred_region
      %s246 = ssub.s32 %s13, 1
      %p247 = scmp.lt.s32.totalorder %s22, 1
      %s248 = scalar_select %p247, %s22, 1
      %s249 = smul.addr %s248, 32
      %s250 = smul.addr %s249, 4
      %s251 = scalar_lea.vmem %s0, %s250
      %p252 = pneg %p51
      %p253 = pneg %p48
      %p254 = scmp.lt.s32.totalorder %s22, 1
      %s255 = scalar_select %p254, %s22, 1
      %s256 = smul.addr %s255, 32
      %s257 = smul.addr %s256, 4
      %s258 = scalar_lea.vmem %s1, %s257
      %p259 = pneg %p77
      %p260 = pneg %p74
      %p261 = pneg %p98
      %p262 = pneg %p95
      %p263 = pneg %p119
      %p264 = pneg %p116
      %p265 = pneg %p147
      %p266 = pneg %p144
      %p267 = scmp.lt.s32.totalorder %s22, 1
      %s268 = scalar_select %p267, %s22, 1
      %p269 = scmp.lt.s32.totalorder %s23, 0
      %s270 = scalar_select %p269, %s23, 0
      %s271 = smul.addr %s270, 32
      %s272 = smul.addr %s268, 32
      %s273 = sadd.s32 %s271, %s272
      %s274 = smul.addr %s273, 4
      %s275 = scalar_lea.vmem %s4, %s274
      %p276 = pneg %p173
      %p277 = pneg %p170
      %p278 = scmp.lt.s32.totalorder %s22, 1
      %s279 = scalar_select %p278, %s22, 1
      %s280 = scalar_lea.vmem %s5, %s279
      %p281 = pneg %p199
      %p282 = pneg %p196
      %p283 = scmp.lt.s32.totalorder %s22, 1
      %s284 = scalar_select %p283, %s22, 1
      %s285 = scalar_lea.vmem %s6, %s284
      %p286 = scmp.lt.s32.totalorder %s22, 1
      %s287 = scalar_select %p286, %s22, 1
      %s288 = smul.addr %s287, 32
      %s289 = smul.addr %s288, 4
      %s290 = scalar_lea.vmem %s0, %s289
      %p291 = scmp.lt.s32.totalorder %s22, 1
      %s292 = scalar_select %p291, %s22, 1
      %s293 = smul.addr %s292, 32
      %s294 = smul.addr %s293, 4
      %s295 = scalar_lea.vmem %s1, %s294
      %p296 = scmp.lt.s32.totalorder %s22, 1
      %s297 = scalar_select %p296, %s22, 1
      %p298 = scmp.lt.s32.totalorder %s23, 0
      %s299 = scalar_select %p298, %s23, 0
      %s300 = smul.addr %s299, 32
      %s301 = smul.addr %s297, 32
      %s302 = sadd.s32 %s300, %s301
      %s303 = smul.addr %s302, 4
      %s304 = scalar_lea.vmem %s4, %s303
      %p305 = scmp.lt.s32.totalorder %s22, 1
      %s306 = scalar_select %p305, %s22, 1
      %s307 = scalar_lea.vmem %s5, %s306
      %p308 = scmp.lt.s32.totalorder %s22, 1
      %s309 = scalar_select %p308, %s22, 1
      %s310 = scalar_lea.vmem %s6, %s309
      %s312 = smul.u32 %s23, 16
      %p313 = scmp.eq.s32.totalorder %s23, 0
      // Predicated region
      $region37: #{decoder_block_forward.5} parent=35 // pred_check
        %p314 = pneg %p313
      $region38: #{decoder_block_forward.5} parent=35 // pred_check_branch
        %316 = sbr.rel (%p314) target = $region40
      $region39: #{decoder_block_forward.5} parent=35 // pred_region
        %vm317 = vcmask 257024
        %318 = vst.msk [vmem:[#allocation2] sm:$0xf] %vm317, 0
        %319 = vst.msk [vmem:[#allocation2 + $0x4] sm:$0xf] %vm317, 0
        %vm320 = vcmask 253952
        %321 = vst.msk [vmem:[#allocation2 + $0x8] sm:$0x1] %vm320, 0
        %s322 = scalar_lea.vmem [#allocation2], 204
        %323 = vst.msk [vmem:[%s322] sm:$0xf] %vm317, 0
        %324 = vst.msk [vmem:[%s322 + $0x4] sm:$0xf] %vm317, 0
        %325 = vst.msk [vmem:[%s322 + $0x8] sm:$0x1] %vm320, 0
        %vm326 = vcmask 253952
        %vm327 = vsmask.f32 256
        %vm328 = vmand %vm326, %vm327
        %v329 = vld [vmem:[#allocation2] sm:$0x1]
        %v330 = vsel %vm328, 0, %v329
        %331 = vst [vmem:[#allocation2] sm:$0x1] %v330
        %v332 = vld [vmem:[#allocation2 + $0xc] sm:$0x1]
        %v333 = vsel %vm328, 0, %v332
        %334 = vst [vmem:[#allocation2 + $0xc] sm:$0x1] %v333
        %v335 = vld [vmem:[#allocation2 + $0x18] sm:$0x1]
        %v336 = vsel %vm328, 0, %v335
        %337 = vst [vmem:[#allocation2 + $0x18] sm:$0x1] %v336
        %v338 = vld [vmem:[#allocation2 + $0x24] sm:$0x1]
        %v339 = vsel %vm328, 0, %v338
        %340 = vst [vmem:[#allocation2 + $0x24] sm:$0x1] %v339
        %v341 = vld [vmem:[#allocation2 + $0x30] sm:$0x1]
        %v342 = vsel %vm328, 0, %v341
        %343 = vst [vmem:[#allocation2 + $0x30] sm:$0x1] %v342
        %v344 = vld [vmem:[#allocation2 + $0x3c] sm:$0x1]
        %v345 = vsel %vm328, 0, %v344
        %346 = vst [vmem:[#allocation2 + $0x3c] sm:$0x1] %v345
        %v347 = vld [vmem:[#allocation2 + $0x48] sm:$0x1]
        %v348 = vsel %vm328, 0, %v347
        %349 = vst [vmem:[#allocation2 + $0x48] sm:$0x1] %v348
        %v350 = vld [vmem:[#allocation2 + $0x54] sm:$0x1]
        %v351 = vsel %vm328, 0, %v350
        %352 = vst [vmem:[#allocation2 + $0x54] sm:$0x1] %v351
        %v353 = vld [vmem:[#allocation2 + $0x60] sm:$0x1]
        %v354 = vsel %vm328, 0, %v353
        %355 = vst [vmem:[#allocation2 + $0x60] sm:$0x1] %v354
        %v356 = vld [vmem:[#allocation2 + $0x6c] sm:$0x1]
        %v357 = vsel %vm328, 0, %v356
        %358 = vst [vmem:[#allocation2 + $0x6c] sm:$0x1] %v357
        %v359 = vld [vmem:[#allocation2 + $0x78] sm:$0x1]
        %v360 = vsel %vm328, 0, %v359
        %361 = vst [vmem:[#allocation2 + $0x78] sm:$0x1] %v360
        %v362 = vld [vmem:[#allocation2 + $0x84] sm:$0x1]
        %v363 = vsel %vm328, 0, %v362
        %364 = vst [vmem:[#allocation2 + $0x84] sm:$0x1] %v363
        %v365 = vld [vmem:[#allocation2 + $0x90] sm:$0x1]
        %v366 = vsel %vm328, 0, %v365
        %367 = vst [vmem:[#allocation2 + $0x90] sm:$0x1] %v366
        %v368 = vld [vmem:[#allocation2 + $0x9c] sm:$0x1]
        %v369 = vsel %vm328, 0, %v368
        %370 = vst [vmem:[#allocation2 + $0x9c] sm:$0x1] %v369
        %v371 = vld [vmem:[#allocation2 + $0xa8] sm:$0x1]
        %v372 = vsel %vm328, 0, %v371
        %373 = vst [vmem:[#allocation2 + $0xa8] sm:$0x1] %v372
        %v374 = vld [vmem:[#allocation2 + $0xb4] sm:$0x1]
        %v375 = vsel %vm328, 0, %v374
        %376 = vst [vmem:[#allocation2 + $0xb4] sm:$0x1] %v375
        %v377 = vld [vmem:[#allocation2 + $0xc0] sm:$0x1]
        %v378 = vsel %vm328, 0, %v377
        %379 = vst [vmem:[#allocation2 + $0xc0] sm:$0x1] %v378
        %v380 = vld [vmem:[#allocation2 + $0xcc] sm:$0x1]
        %v381 = vsel %vm328, 0, %v380
        %382 = vst [vmem:[#allocation2 + $0xcc] sm:$0x1] %v381
        %vm383 = vsmask.f32 7938
        %vm384 = vmand %vm326, %vm383
        %v385 = vld [vmem:[#allocation2 + $0x8] sm:$0x1]
        %v386 = vsel %vm384, 0, %v385
        %387 = vst [vmem:[#allocation2 + $0x8] sm:$0x1] %v386
        %v388 = vld [vmem:[#allocation2 + $0x14] sm:$0x1]
        %v389 = vsel %vm384, 0, %v388
        %390 = vst [vmem:[#allocation2 + $0x14] sm:$0x1] %v389
        %v391 = vld [vmem:[#allocation2 + $0x20] sm:$0x1]
        %v392 = vsel %vm384, 0, %v391
        %393 = vst [vmem:[#allocation2 + $0x20] sm:$0x1] %v392
        %v394 = vld [vmem:[#allocation2 + $0x2c] sm:$0x1]
        %v395 = vsel %vm384, 0, %v394
        %396 = vst [vmem:[#allocation2 + $0x2c] sm:$0x1] %v395
        %v397 = vld [vmem:[#allocation2 + $0x38] sm:$0x1]
        %v398 = vsel %vm384, 0, %v397
        %399 = vst [vmem:[#allocation2 + $0x38] sm:$0x1] %v398
        %v400 = vld [vmem:[#allocation2 + $0x44] sm:$0x1]
        %v401 = vsel %vm384, 0, %v400
        %402 = vst [vmem:[#allocation2 + $0x44] sm:$0x1] %v401
        %v403 = vld [vmem:[#allocation2 + $0x50] sm:$0x1]
        %v404 = vsel %vm384, 0, %v403
        %405 = vst [vmem:[#allocation2 + $0x50] sm:$0x1] %v404
        %v406 = vld [vmem:[#allocation2 + $0x5c] sm:$0x1]
        %v407 = vsel %vm384, 0, %v406
        %408 = vst [vmem:[#allocation2 + $0x5c] sm:$0x1] %v407
        %v409 = vld [vmem:[#allocation2 + $0x68] sm:$0x1]
        %v410 = vsel %vm384, 0, %v409
        %411 = vst [vmem:[#allocation2 + $0x68] sm:$0x1] %v410
        %v412 = vld [vmem:[#allocation2 + $0x74] sm:$0x1]
        %v413 = vsel %vm384, 0, %v412
        %414 = vst [vmem:[#allocation2 + $0x74] sm:$0x1] %v413
        %v415 = vld [vmem:[#allocation2 + $0x80] sm:$0x1]
        %v416 = vsel %vm384, 0, %v415
        %417 = vst [vmem:[#allocation2 + $0x80] sm:$0x1] %v416
        %v418 = vld [vmem:[#allocation2 + $0x8c] sm:$0x1]
        %v419 = vsel %vm384, 0, %v418
        %420 = vst [vmem:[#allocation2 + $0x8c] sm:$0x1] %v419
        %v421 = vld [vmem:[#allocation2 + $0x98] sm:$0x1]
        %v422 = vsel %vm384, 0, %v421
        %423 = vst [vmem:[#allocation2 + $0x98] sm:$0x1] %v422
        %v424 = vld [vmem:[#allocation2 + $0xa4] sm:$0x1]
        %v425 = vsel %vm384, 0, %v424
        %426 = vst [vmem:[#allocation2 + $0xa4] sm:$0x1] %v425
        %v427 = vld [vmem:[#allocation2 + $0xb0] sm:$0x1]
        %v428 = vsel %vm384, 0, %v427
        %429 = vst [vmem:[#allocation2 + $0xb0] sm:$0x1] %v428
        %v430 = vld [vmem:[#allocation2 + $0xbc] sm:$0x1]
        %v431 = vsel %vm384, 0, %v430
        %432 = vst [vmem:[#allocation2 + $0xbc] sm:$0x1] %v431
        %v433 = vld [vmem:[#allocation2 + $0xc8] sm:$0x1]
        %v434 = vsel %vm384, 0, %v433
        %435 = vst [vmem:[#allocation2 + $0xc8] sm:$0x1] %v434
        %v436 = vld [vmem:[#allocation2 + $0xd4] sm:$0x1]
        %v437 = vsel %vm384, 0, %v436
        %438 = vst [vmem:[#allocation2 + $0xd4] sm:$0x1] %v437
        %v439 = vld [vmem:[%s290] sm:$0xf]
        %v440 = vld [vmem:[%s290 + $0x4] sm:$0xf]
        %v441 = vld [vmem:[%s290 + $0x8] sm:$0xf]
        %v442 = vld [vmem:[%s290 + $0xc] sm:$0xf]
        %v443 = vld [vmem:[%s290 + $0x10] sm:$0xf]
        %v444 = vld [vmem:[%s290 + $0x14] sm:$0xf]
        %v445 = vld [vmem:[%s290 + $0x18] sm:$0xf]
        %v446 = vld [vmem:[%s290 + $0x1c] sm:$0xf]
        %v447 = vld [vmem:[%s290 + $0x20] sm:$0xf]
        %v448 = vld [vmem:[%s290 + $0x24] sm:$0xf]
        %v449 = vld [vmem:[%s290 + $0x28] sm:$0xf]
        %v450 = vld [vmem:[%s290 + $0x2c] sm:$0xf]
        %v451 = vld [vmem:[%s290 + $0x30] sm:$0xf]
        %v452 = vld [vmem:[%s290 + $0x34] sm:$0xf]
        %v453 = vld [vmem:[%s290 + $0x38] sm:$0xf]
        %v454 = vld [vmem:[%s290 + $0x3c] sm:$0xf]
        %v455 = vld [vmem:[%s290 + $0x40] sm:$0xf]
        %v456 = vld [vmem:[%s290 + $0x44] sm:$0xf]
        %v457 = vld [vmem:[%s290 + $0x48] sm:$0xf]
        %v458 = vld [vmem:[%s290 + $0x4c] sm:$0xf]
        %v459 = vld [vmem:[%s290 + $0x50] sm:$0xf]
        %v460 = vld [vmem:[%s290 + $0x54] sm:$0xf]
        %v461 = vld [vmem:[%s290 + $0x58] sm:$0xf]
        %v462 = vld [vmem:[%s290 + $0x5c] sm:$0xf]
        %v463 = vld [vmem:[%s290 + $0x60] sm:$0xf]
        %v464 = vld [vmem:[%s290 + $0x64] sm:$0xf]
        %v465 = vld [vmem:[%s290 + $0x68] sm:$0xf]
        %v466 = vld [vmem:[%s290 + $0x6c] sm:$0xf]
        %v467 = vld [vmem:[%s290 + $0x70] sm:$0xf]
        %v468 = vld [vmem:[%s290 + $0x74] sm:$0xf]
        %v469 = vld [vmem:[%s290 + $0x78] sm:$0xf]
        %v470 = vld [vmem:[%s290 + $0x7c] sm:$0xf]
        %v471 = vld [vmem:[%s295] sm:$0xf]
        %v472 = vld [vmem:[%s295 + $0x4] sm:$0xf]
        %v473 = vld [vmem:[%s295 + $0x8] sm:$0xf]
        %v474 = vld [vmem:[%s295 + $0xc] sm:$0xf]
        %v475 = vld [vmem:[%s295 + $0x10] sm:$0xf]
        %v476 = vld [vmem:[%s295 + $0x14] sm:$0xf]
        %v477 = vld [vmem:[%s295 + $0x18] sm:$0xf]
        %v478 = vld [vmem:[%s295 + $0x1c] sm:$0xf]
        %v479 = vld [vmem:[%s295 + $0x20] sm:$0xf]
        %v480 = vld [vmem:[%s295 + $0x24] sm:$0xf]
        %v481 = vld [vmem:[%s295 + $0x28] sm:$0xf]
        %v482 = vld [vmem:[%s295 + $0x2c] sm:$0xf]
        %v483 = vld [vmem:[%s295 + $0x30] sm:$0xf]
        %v484 = vld [vmem:[%s295 + $0x34] sm:$0xf]
        %v485 = vld [vmem:[%s295 + $0x38] sm:$0xf]
        %v486 = vld [vmem:[%s295 + $0x3c] sm:$0xf]
        %v487 = vld [vmem:[%s295 + $0x40] sm:$0xf]
        %v488 = vld [vmem:[%s295 + $0x44] sm:$0xf]
        %v489 = vld [vmem:[%s295 + $0x48] sm:$0xf]
        %v490 = vld [vmem:[%s295 + $0x4c] sm:$0xf]
        %v491 = vld [vmem:[%s295 + $0x50] sm:$0xf]
        %v492 = vld [vmem:[%s295 + $0x54] sm:$0xf]
        %v493 = vld [vmem:[%s295 + $0x58] sm:$0xf]
        %v494 = vld [vmem:[%s295 + $0x5c] sm:$0xf]
        %v495 = vld [vmem:[%s295 + $0x60] sm:$0xf]
        %v496 = vld [vmem:[%s295 + $0x64] sm:$0xf]
        %v497 = vld [vmem:[%s295 + $0x68] sm:$0xf]
        %v498 = vld [vmem:[%s295 + $0x6c] sm:$0xf]
        %v499 = vld [vmem:[%s295 + $0x70] sm:$0xf]
        %v500 = vld [vmem:[%s295 + $0x74] sm:$0xf]
        %v501 = vld [vmem:[%s295 + $0x78] sm:$0xf]
        %v502 = vld [vmem:[%s295 + $0x7c] sm:$0xf]
        %v535 = vunpack.c.l.b16 %v439
        %v536 = vunpack.c.l.b16 %v440
        %v537 = vunpack.c.l.b16 %v441
        %v538 = vunpack.c.l.b16 %v442
        %v539 = vunpack.c.l.b16 %v443
        %v540 = vunpack.c.l.b16 %v444
        %v541 = vunpack.c.l.b16 %v445
        %v542 = vunpack.c.l.b16 %v446
        %v543 = vunpack.c.l.b16 %v447
        %v544 = vunpack.c.l.b16 %v448
        %v545 = vunpack.c.l.b16 %v449
        %v546 = vunpack.c.l.b16 %v450
        %v547 = vunpack.c.l.b16 %v451
        %v548 = vunpack.c.l.b16 %v452
        %v549 = vunpack.c.l.b16 %v453
        %v550 = vunpack.c.l.b16 %v454
        %v551 = vunpack.c.l.b16 %v455
        %v552 = vunpack.c.l.b16 %v456
        %v553 = vunpack.c.l.b16 %v457
        %v554 = vunpack.c.l.b16 %v458
        %v555 = vunpack.c.l.b16 %v459
        %v556 = vunpack.c.l.b16 %v460
        %v557 = vunpack.c.l.b16 %v461
        %v558 = vunpack.c.l.b16 %v462
        %v559 = vunpack.c.l.b16 %v463
        %v560 = vunpack.c.l.b16 %v464
        %v561 = vunpack.c.l.b16 %v465
        %v562 = vunpack.c.l.b16 %v466
        %v563 = vunpack.c.l.b16 %v467
        %v564 = vunpack.c.l.b16 %v468
        %v565 = vunpack.c.l.b16 %v469
        %v566 = vunpack.c.l.b16 %v470
        %v567 = vpack.c.b16 %v536, %v535
        %v568 = vpack.c.b16 %v538, %v537
        %v569 = vpack.c.b16 %v540, %v539
        %v570 = vpack.c.b16 %v542, %v541
        %v571 = vpack.c.b16 %v544, %v543
        %v572 = vpack.c.b16 %v546, %v545
        %v573 = vpack.c.b16 %v548, %v547
        %v574 = vpack.c.b16 %v550, %v549
        %v575 = vpack.c.b16 %v552, %v551
        %v576 = vpack.c.b16 %v554, %v553
        %v577 = vpack.c.b16 %v556, %v555
        %v578 = vpack.c.b16 %v558, %v557
        %v579 = vpack.c.b16 %v560, %v559
        %v580 = vpack.c.b16 %v562, %v561
        %v581 = vpack.c.b16 %v564, %v563
        %v582 = vpack.c.b16 %v566, %v565
        %v615 = vunpack.c.l.b16 %v471
        %v616 = vunpack.c.l.b16 %v472
        %v617 = vunpack.c.l.b16 %v473
        %v618 = vunpack.c.l.b16 %v474
        %v619 = vunpack.c.l.b16 %v475
        %v620 = vunpack.c.l.b16 %v476
        %v621 = vunpack.c.l.b16 %v477
        %v622 = vunpack.c.l.b16 %v478
        %v623 = vunpack.c.l.b16 %v479
        %v624 = vunpack.c.l.b16 %v480
        %v625 = vunpack.c.l.b16 %v481
        %v626 = vunpack.c.l.b16 %v482
        %v627 = vunpack.c.l.b16 %v483
        %v628 = vunpack.c.l.b16 %v484
        %v629 = vunpack.c.l.b16 %v485
        %v630 = vunpack.c.l.b16 %v486
        %v631 = vunpack.c.l.b16 %v487
        %v632 = vunpack.c.l.b16 %v488
        %v633 = vunpack.c.l.b16 %v489
        %v634 = vunpack.c.l.b16 %v490
        %v635 = vunpack.c.l.b16 %v491
        %v636 = vunpack.c.l.b16 %v492
        %v637 = vunpack.c.l.b16 %v493
        %v638 = vunpack.c.l.b16 %v494
        %v639 = vunpack.c.l.b16 %v495
        %v640 = vunpack.c.l.b16 %v496
        %v641 = vunpack.c.l.b16 %v497
        %v642 = vunpack.c.l.b16 %v498
        %v643 = vunpack.c.l.b16 %v499
        %v644 = vunpack.c.l.b16 %v500
        %v645 = vunpack.c.l.b16 %v501
        %v646 = vunpack.c.l.b16 %v502
        %v647 = vpack.c.b16 %v616, %v615
        %v648 = vpack.c.b16 %v618, %v617
        %v649 = vpack.c.b16 %v620, %v619
        %v650 = vpack.c.b16 %v622, %v621
        %v651 = vpack.c.b16 %v624, %v623
        %v652 = vpack.c.b16 %v626, %v625
        %v653 = vpack.c.b16 %v628, %v627
        %v654 = vpack.c.b16 %v630, %v629
        %v655 = vpack.c.b16 %v632, %v631
        %v656 = vpack.c.b16 %v634, %v633
        %v657 = vpack.c.b16 %v636, %v635
        %v658 = vpack.c.b16 %v638, %v637
        %v659 = vpack.c.b16 %v640, %v639
        %v660 = vpack.c.b16 %v642, %v641
        %v661 = vpack.c.b16 %v644, %v643
        %v662 = vpack.c.b16 %v646, %v645
        %663 = vrot.lane.b32.xlu0 %v647, 16
        %v664 = vpop.permute.xlu0 %663
        %665 = vrot.lane.b32.xlu0 %v648, 16
        %v666 = vpop.permute.xlu0 %665
        %667 = vrot.lane.b32.xlu0 %v649, 16
        %v668 = vpop.permute.xlu0 %667
        %669 = vrot.lane.b32.xlu0 %v650, 16
        %v670 = vpop.permute.xlu0 %669
        %671 = vrot.lane.b32.xlu0 %v651, 16
        %v672 = vpop.permute.xlu0 %671
        %673 = vrot.lane.b32.xlu0 %v652, 16
        %v674 = vpop.permute.xlu0 %673
        %675 = vrot.lane.b32.xlu0 %v653, 16
        %v676 = vpop.permute.xlu0 %675
        %677 = vrot.lane.b32.xlu0 %v654, 16
        %v678 = vpop.permute.xlu0 %677
        %679 = vrot.lane.b32.xlu0 %v655, 16
        %v680 = vpop.permute.xlu0 %679
        %681 = vrot.lane.b32.xlu0 %v656, 16
        %v682 = vpop.permute.xlu0 %681
        %683 = vrot.lane.b32.xlu0 %v657, 16
        %v684 = vpop.permute.xlu0 %683
        %685 = vrot.lane.b32.xlu0 %v658, 16
        %v686 = vpop.permute.xlu0 %685
        %687 = vrot.lane.b32.xlu0 %v659, 16
        %v688 = vpop.permute.xlu0 %687
        %689 = vrot.lane.b32.xlu0 %v660, 16
        %v690 = vpop.permute.xlu0 %689
        %691 = vrot.lane.b32.xlu0 %v661, 16
        %v692 = vpop.permute.xlu0 %691
        %693 = vrot.lane.b32.xlu0 %v662, 16
        %v694 = vpop.permute.xlu0 %693
        %vm695 = vcmask 130048
        %v698 = vsel %vm695, %v567, %v664
        %v701 = vsel %vm695, %v568, %v666
        %v704 = vsel %vm695, %v569, %v668
        %v707 = vsel %vm695, %v570, %v670
        %v710 = vsel %vm695, %v571, %v672
        %v713 = vsel %vm695, %v572, %v674
        %v716 = vsel %vm695, %v573, %v676
        %v719 = vsel %vm695, %v574, %v678
        %v722 = vsel %vm695, %v575, %v680
        %v725 = vsel %vm695, %v576, %v682
        %v728 = vsel %vm695, %v577, %v684
        %v731 = vsel %vm695, %v578, %v686
        %v734 = vsel %vm695, %v579, %v688
        %v737 = vsel %vm695, %v580, %v690
        %v740 = vsel %vm695, %v581, %v692
        %v743 = vsel %vm695, %v582, %v694
        %v760 = vunpack.c.l.b16 %v698
        %v761 = vunpack.c.h.b16 %v698
        %v762 = vunpack.c.l.b16 %v701
        %v763 = vunpack.c.h.b16 %v701
        %v764 = vunpack.c.l.b16 %v704
        %v765 = vunpack.c.h.b16 %v704
        %v766 = vunpack.c.l.b16 %v707
        %v767 = vunpack.c.h.b16 %v707
        %v768 = vunpack.c.l.b16 %v710
        %v769 = vunpack.c.h.b16 %v710
        %v770 = vunpack.c.l.b16 %v713
        %v771 = vunpack.c.h.b16 %v713
        %v772 = vunpack.c.l.b16 %v716
        %v773 = vunpack.c.h.b16 %v716
        %v774 = vunpack.c.l.b16 %v719
        %v775 = vunpack.c.h.b16 %v719
        %v776 = vunpack.c.l.b16 %v722
        %v777 = vunpack.c.h.b16 %v722
        %v778 = vunpack.c.l.b16 %v725
        %v779 = vunpack.c.h.b16 %v725
        %v780 = vunpack.c.l.b16 %v728
        %v781 = vunpack.c.h.b16 %v728
        %v782 = vunpack.c.l.b16 %v731
        %v783 = vunpack.c.h.b16 %v731
        %v784 = vunpack.c.l.b16 %v734
        %v785 = vunpack.c.h.b16 %v734
        %v786 = vunpack.c.l.b16 %v737
        %v787 = vunpack.c.h.b16 %v737
        %v788 = vunpack.c.l.b16 %v740
        %v789 = vunpack.c.h.b16 %v740
        %v790 = vunpack.c.l.b16 %v743
        %v791 = vunpack.c.h.b16 %v743
        %v792 = vpack.c.b16 %v760, %v760
        %v793 = vpack.c.b16 %v761, %v761
        %v794 = vpack.c.b16 %v762, %v762
        %v795 = vpack.c.b16 %v763, %v763
        %v796 = vpack.c.b16 %v764, %v764
        %v797 = vpack.c.b16 %v765, %v765
        %v798 = vpack.c.b16 %v766, %v766
        %v799 = vpack.c.b16 %v767, %v767
        %v800 = vpack.c.b16 %v768, %v768
        %v801 = vpack.c.b16 %v769, %v769
        %v802 = vpack.c.b16 %v770, %v770
        %v803 = vpack.c.b16 %v771, %v771
        %v804 = vpack.c.b16 %v772, %v772
        %v805 = vpack.c.b16 %v773, %v773
        %v806 = vpack.c.b16 %v774, %v774
        %v807 = vpack.c.b16 %v775, %v775
        %v808 = vpack.c.b16 %v776, %v776
        %v809 = vpack.c.b16 %v777, %v777
        %v810 = vpack.c.b16 %v778, %v778
        %v811 = vpack.c.b16 %v779, %v779
        %v812 = vpack.c.b16 %v780, %v780
        %v813 = vpack.c.b16 %v781, %v781
        %v814 = vpack.c.b16 %v782, %v782
        %v815 = vpack.c.b16 %v783, %v783
        %v816 = vpack.c.b16 %v784, %v784
        %v817 = vpack.c.b16 %v785, %v785
        %v818 = vpack.c.b16 %v786, %v786
        %v819 = vpack.c.b16 %v787, %v787
        %v820 = vpack.c.b16 %v788, %v788
        %v821 = vpack.c.b16 %v789, %v789
        %v822 = vpack.c.b16 %v790, %v790
        %v823 = vpack.c.b16 %v791, %v791
        %vm824 = vsmask.f32 4368
        %vm825 = vmor %vm327, %vm824
        %v827 = vshrl.u32 %v792, 16
        %v829 = vrot.slane %v827, 7
        %v830 = vshll.u32 %v792, 16
        %v832 = vor.u32 %v829, %v830
        %v833 = vrot.slane %v829, 4
        %v835 = vshrl.u32 %v793, 16
        %v837 = vrot.slane %v835, 7
        %v838 = vshll.u32 %v793, 16
        %v840 = vor.u32 %v837, %v838
        %v841 = vsel %vm825, %v833, %v840
        %v842 = vrot.slane %v837, 4
        %v844 = vshrl.u32 %v794, 16
        %v846 = vrot.slane %v844, 7
        %v847 = vshll.u32 %v794, 16
        %v849 = vor.u32 %v846, %v847
        %v850 = vrot.slane %v846, 4
        %v852 = vshrl.u32 %v795, 16
        %v854 = vrot.slane %v852, 7
        %v855 = vshll.u32 %v795, 16
        %v857 = vor.u32 %v854, %v855
        %v858 = vsel %vm825, %v850, %v857
        %v859 = vrot.slane %v854, 4
        %v861 = vshrl.u32 %v796, 16
        %v863 = vrot.slane %v861, 7
        %v864 = vshll.u32 %v796, 16
        %v866 = vor.u32 %v863, %v864
        %v867 = vrot.slane %v863, 4
        %v869 = vshrl.u32 %v797, 16
        %v871 = vrot.slane %v869, 7
        %v872 = vshll.u32 %v797, 16
        %v874 = vor.u32 %v871, %v872
        %v875 = vsel %vm825, %v867, %v874
        %v876 = vrot.slane %v871, 4
        %v878 = vshrl.u32 %v798, 16
        %v880 = vrot.slane %v878, 7
        %v881 = vshll.u32 %v798, 16
        %v883 = vor.u32 %v880, %v881
        %v884 = vrot.slane %v880, 4
        %v886 = vshrl.u32 %v799, 16
        %v888 = vrot.slane %v886, 7
        %v889 = vshll.u32 %v799, 16
        %v891 = vor.u32 %v888, %v889
        %v892 = vsel %vm825, %v884, %v891
        %v893 = vrot.slane %v888, 4
        %v895 = vshrl.u32 %v800, 16
        %v897 = vrot.slane %v895, 7
        %v898 = vshll.u32 %v800, 16
        %v900 = vor.u32 %v897, %v898
        %v901 = vrot.slane %v897, 4
        %v903 = vshrl.u32 %v801, 16
        %v905 = vrot.slane %v903, 7
        %v906 = vshll.u32 %v801, 16
        %v908 = vor.u32 %v905, %v906
        %v909 = vsel %vm825, %v901, %v908
        %v910 = vrot.slane %v905, 4
        %v912 = vshrl.u32 %v802, 16
        %v914 = vrot.slane %v912, 7
        %v915 = vshll.u32 %v802, 16
        %v917 = vor.u32 %v914, %v915
        %v918 = vrot.slane %v914, 4
        %v920 = vshrl.u32 %v803, 16
        %v922 = vrot.slane %v920, 7
        %v923 = vshll.u32 %v803, 16
        %v925 = vor.u32 %v922, %v923
        %v926 = vsel %vm825, %v918, %v925
        %v927 = vrot.slane %v922, 4
        %v929 = vshrl.u32 %v804, 16
        %v931 = vrot.slane %v929, 7
        %v932 = vshll.u32 %v804, 16
        %v934 = vor.u32 %v931, %v932
        %v935 = vrot.slane %v931, 4
        %v937 = vshrl.u32 %v805, 16
        %v939 = vrot.slane %v937, 7
        %v940 = vshll.u32 %v805, 16
        %v942 = vor.u32 %v939, %v940
        %v943 = vsel %vm825, %v935, %v942
        %v944 = vrot.slane %v939, 4
        %v946 = vshrl.u32 %v806, 16
        %v948 = vrot.slane %v946, 7
        %v949 = vshll.u32 %v806, 16
        %v951 = vor.u32 %v948, %v949
        %v952 = vrot.slane %v948, 4
        %v954 = vshrl.u32 %v807, 16
        %v956 = vrot.slane %v954, 7
        %v957 = vshll.u32 %v807, 16
        %v959 = vor.u32 %v956, %v957
        %v960 = vsel %vm825, %v952, %v959
        %v961 = vrot.slane %v956, 4
        %v963 = vshrl.u32 %v808, 16
        %v965 = vrot.slane %v963, 7
        %v966 = vshll.u32 %v808, 16
        %v968 = vor.u32 %v965, %v966
        %v969 = vrot.slane %v965, 4
        %v971 = vshrl.u32 %v809, 16
        %v973 = vrot.slane %v971, 7
        %v974 = vshll.u32 %v809, 16
        %v976 = vor.u32 %v973, %v974
        %v977 = vsel %vm825, %v969, %v976
        %v978 = vrot.slane %v973, 4
        %v980 = vshrl.u32 %v810, 16
        %v982 = vrot.slane %v980, 7
        %v983 = vshll.u32 %v810, 16
        %v985 = vor.u32 %v982, %v983
        %v986 = vrot.slane %v982, 4
        %v988 = vshrl.u32 %v811, 16
        %v990 = vrot.slane %v988, 7
        %v991 = vshll.u32 %v811, 16
        %v993 = vor.u32 %v990, %v991
        %v994 = vsel %vm825, %v986, %v993
        %v995 = vrot.slane %v990, 4
        %v997 = vshrl.u32 %v812, 16
        %v999 = vrot.slane %v997, 7
        %v1000 = vshll.u32 %v812, 16
        %v1002 = vor.u32 %v999, %v1000
        %v1003 = vrot.slane %v999, 4
        %v1005 = vshrl.u32 %v813, 16
        %v1007 = vrot.slane %v1005, 7
        %v1008 = vshll.u32 %v813, 16
        %v1010 = vor.u32 %v1007, %v1008
        %v1011 = vsel %vm825, %v1003, %v1010
        %v1012 = vrot.slane %v1007, 4
        %v1014 = vshrl.u32 %v814, 16
        %v1016 = vrot.slane %v1014, 7
        %v1017 = vshll.u32 %v814, 16
        %v1019 = vor.u32 %v1016, %v1017
        %v1020 = vrot.slane %v1016, 4
        %v1022 = vshrl.u32 %v815, 16
        %v1024 = vrot.slane %v1022, 7
        %v1025 = vshll.u32 %v815, 16
        %v1027 = vor.u32 %v1024, %v1025
        %v1028 = vsel %vm825, %v1020, %v1027
        %v1029 = vrot.slane %v1024, 4
        %v1031 = vshrl.u32 %v816, 16
        %v1033 = vrot.slane %v1031, 7
        %v1034 = vshll.u32 %v816, 16
        %v1036 = vor.u32 %v1033, %v1034
        %v1037 = vrot.slane %v1033, 4
        %v1039 = vshrl.u32 %v817, 16
        %v1041 = vrot.slane %v1039, 7
        %v1042 = vshll.u32 %v817, 16
        %v1044 = vor.u32 %v1041, %v1042
        %v1045 = vsel %vm825, %v1037, %v1044
        %v1046 = vrot.slane %v1041, 4
        %v1048 = vshrl.u32 %v818, 16
        %v1050 = vrot.slane %v1048, 7
        %v1051 = vshll.u32 %v818, 16
        %v1053 = vor.u32 %v1050, %v1051
        %v1054 = vrot.slane %v1050, 4
        %v1056 = vshrl.u32 %v819, 16
        %v1058 = vrot.slane %v1056, 7
        %v1059 = vshll.u32 %v819, 16
        %v1061 = vor.u32 %v1058, %v1059
        %v1062 = vsel %vm825, %v1054, %v1061
        %v1063 = vrot.slane %v1058, 4
        %v1065 = vshrl.u32 %v820, 16
        %v1067 = vrot.slane %v1065, 7
        %v1068 = vshll.u32 %v820, 16
        %v1070 = vor.u32 %v1067, %v1068
        %v1071 = vrot.slane %v1067, 4
        %v1073 = vshrl.u32 %v821, 16
        %v1075 = vrot.slane %v1073, 7
        %v1076 = vshll.u32 %v821, 16
        %v1078 = vor.u32 %v1075, %v1076
        %v1079 = vsel %vm825, %v1071, %v1078
        %v1080 = vrot.slane %v1075, 4
        %v1082 = vshrl.u32 %v822, 16
        %v1084 = vrot.slane %v1082, 7
        %v1085 = vshll.u32 %v822, 16
        %v1087 = vor.u32 %v1084, %v1085
        %v1088 = vrot.slane %v1084, 4
        %v1090 = vshrl.u32 %v823, 16
        %v1092 = vrot.slane %v1090, 7
        %v1093 = vshll.u32 %v823, 16
        %v1095 = vor.u32 %v1092, %v1093
        %v1096 = vsel %vm825, %v1088, %v1095
        %v1097 = vrot.slane %v1092, 4
        %s1146 = scalar_lea.vmem [#allocation2], 12
        %vm1147 = vcmask 257024
        %vm1148 = vmand %vm1147, %vm383
        %v1149 = vld [vmem:[%s1146] sm:$0xf]
        %v1150 = vsel %vm1148, %v832, %v1149
        %1151 = vst [vmem:[%s1146] sm:$0xf] %v1150
        %1152 = vst.msk [vmem:[%s1146 + $0x4] sm:$0xf] %vm317, %v841
        %v1153 = vld [vmem:[%s1146 + $0x8] sm:$0x1]
        %v1154 = vsel %vm328, %v842, %v1153
        %1155 = vst [vmem:[%s1146 + $0x8] sm:$0x1] %v1154
        %v1156 = vld [vmem:[%s1146 + $0xc] sm:$0xf]
        %v1157 = vsel %vm1148, %v849, %v1156
        %1158 = vst [vmem:[%s1146 + $0xc] sm:$0xf] %v1157
        %1159 = vst.msk [vmem:[%s1146 + $0x10] sm:$0xf] %vm317, %v858
        %v1160 = vld [vmem:[%s1146 + $0x14] sm:$0x1]
        %v1161 = vsel %vm328, %v859, %v1160
        %1162 = vst [vmem:[%s1146 + $0x14] sm:$0x1] %v1161
        %v1163 = vld [vmem:[%s1146 + $0x18] sm:$0xf]
        %v1164 = vsel %vm1148, %v866, %v1163
        %1165 = vst [vmem:[%s1146 + $0x18] sm:$0xf] %v1164
        %1166 = vst.msk [vmem:[%s1146 + $0x1c] sm:$0xf] %vm317, %v875
        %v1167 = vld [vmem:[%s1146 + $0x20] sm:$0x1]
        %v1168 = vsel %vm328, %v876, %v1167
        %1169 = vst [vmem:[%s1146 + $0x20] sm:$0x1] %v1168
        %v1170 = vld [vmem:[%s1146 + $0x24] sm:$0xf]
        %v1171 = vsel %vm1148, %v883, %v1170
        %1172 = vst [vmem:[%s1146 + $0x24] sm:$0xf] %v1171
        %1173 = vst.msk [vmem:[%s1146 + $0x28] sm:$0xf] %vm317, %v892
        %v1174 = vld [vmem:[%s1146 + $0x2c] sm:$0x1]
        %v1175 = vsel %vm328, %v893, %v1174
        %1176 = vst [vmem:[%s1146 + $0x2c] sm:$0x1] %v1175
        %v1177 = vld [vmem:[%s1146 + $0x30] sm:$0xf]
        %v1178 = vsel %vm1148, %v900, %v1177
        %1179 = vst [vmem:[%s1146 + $0x30] sm:$0xf] %v1178
        %1180 = vst.msk [vmem:[%s1146 + $0x34] sm:$0xf] %vm317, %v909
        %v1181 = vld [vmem:[%s1146 + $0x38] sm:$0x1]
        %v1182 = vsel %vm328, %v910, %v1181
        %1183 = vst [vmem:[%s1146 + $0x38] sm:$0x1] %v1182
        %v1184 = vld [vmem:[%s1146 + $0x3c] sm:$0xf]
        %v1185 = vsel %vm1148, %v917, %v1184
        %1186 = vst [vmem:[%s1146 + $0x3c] sm:$0xf] %v1185
        %1187 = vst.msk [vmem:[%s1146 + $0x40] sm:$0xf] %vm317, %v926
        %v1188 = vld [vmem:[%s1146 + $0x44] sm:$0x1]
        %v1189 = vsel %vm328, %v927, %v1188
        %1190 = vst [vmem:[%s1146 + $0x44] sm:$0x1] %v1189
        %v1191 = vld [vmem:[%s1146 + $0x48] sm:$0xf]
        %v1192 = vsel %vm1148, %v934, %v1191
        %1193 = vst [vmem:[%s1146 + $0x48] sm:$0xf] %v1192
        %1194 = vst.msk [vmem:[%s1146 + $0x4c] sm:$0xf] %vm317, %v943
        %v1195 = vld [vmem:[%s1146 + $0x50] sm:$0x1]
        %v1196 = vsel %vm328, %v944, %v1195
        %1197 = vst [vmem:[%s1146 + $0x50] sm:$0x1] %v1196
        %v1198 = vld [vmem:[%s1146 + $0x54] sm:$0xf]
        %v1199 = vsel %vm1148, %v951, %v1198
        %1200 = vst [vmem:[%s1146 + $0x54] sm:$0xf] %v1199
        %1201 = vst.msk [vmem:[%s1146 + $0x58] sm:$0xf] %vm317, %v960
        %v1202 = vld [vmem:[%s1146 + $0x5c] sm:$0x1]
        %v1203 = vsel %vm328, %v961, %v1202
        %1204 = vst [vmem:[%s1146 + $0x5c] sm:$0x1] %v1203
        %v1205 = vld [vmem:[%s1146 + $0x60] sm:$0xf]
        %v1206 = vsel %vm1148, %v968, %v1205
        %1207 = vst [vmem:[%s1146 + $0x60] sm:$0xf] %v1206
        %1208 = vst.msk [vmem:[%s1146 + $0x64] sm:$0xf] %vm317, %v977
        %v1209 = vld [vmem:[%s1146 + $0x68] sm:$0x1]
        %v1210 = vsel %vm328, %v978, %v1209
        %1211 = vst [vmem:[%s1146 + $0x68] sm:$0x1] %v1210
        %v1212 = vld [vmem:[%s1146 + $0x6c] sm:$0xf]
        %v1213 = vsel %vm1148, %v985, %v1212
        %1214 = vst [vmem:[%s1146 + $0x6c] sm:$0xf] %v1213
        %1215 = vst.msk [vmem:[%s1146 + $0x70] sm:$0xf] %vm317, %v994
        %v1216 = vld [vmem:[%s1146 + $0x74] sm:$0x1]
        %v1217 = vsel %vm328, %v995, %v1216
        %1218 = vst [vmem:[%s1146 + $0x74] sm:$0x1] %v1217
        %v1219 = vld [vmem:[%s1146 + $0x78] sm:$0xf]
        %v1220 = vsel %vm1148, %v1002, %v1219
        %1221 = vst [vmem:[%s1146 + $0x78] sm:$0xf] %v1220
        %1222 = vst.msk [vmem:[%s1146 + $0x7c] sm:$0xf] %vm317, %v1011
        %v1223 = vld [vmem:[%s1146 + $0x80] sm:$0x1]
        %v1224 = vsel %vm328, %v1012, %v1223
        %1225 = vst [vmem:[%s1146 + $0x80] sm:$0x1] %v1224
        %v1226 = vld [vmem:[%s1146 + $0x84] sm:$0xf]
        %v1227 = vsel %vm1148, %v1019, %v1226
        %1228 = vst [vmem:[%s1146 + $0x84] sm:$0xf] %v1227
        %1229 = vst.msk [vmem:[%s1146 + $0x88] sm:$0xf] %vm317, %v1028
        %v1230 = vld [vmem:[%s1146 + $0x8c] sm:$0x1]
        %v1231 = vsel %vm328, %v1029, %v1230
        %1232 = vst [vmem:[%s1146 + $0x8c] sm:$0x1] %v1231
        %v1233 = vld [vmem:[%s1146 + $0x90] sm:$0xf]
        %v1234 = vsel %vm1148, %v1036, %v1233
        %1235 = vst [vmem:[%s1146 + $0x90] sm:$0xf] %v1234
        %1236 = vst.msk [vmem:[%s1146 + $0x94] sm:$0xf] %vm317, %v1045
        %v1237 = vld [vmem:[%s1146 + $0x98] sm:$0x1]
        %v1238 = vsel %vm328, %v1046, %v1237
        %1239 = vst [vmem:[%s1146 + $0x98] sm:$0x1] %v1238
        %v1240 = vld [vmem:[%s1146 + $0x9c] sm:$0xf]
        %v1241 = vsel %vm1148, %v1053, %v1240
        %1242 = vst [vmem:[%s1146 + $0x9c] sm:$0xf] %v1241
        %1243 = vst.msk [vmem:[%s1146 + $0xa0] sm:$0xf] %vm317, %v1062
        %v1244 = vld [vmem:[%s1146 + $0xa4] sm:$0x1]
        %v1245 = vsel %vm328, %v1063, %v1244
        %1246 = vst [vmem:[%s1146 + $0xa4] sm:$0x1] %v1245
        %v1247 = vld [vmem:[%s1146 + $0xa8] sm:$0xf]
        %v1248 = vsel %vm1148, %v1070, %v1247
        %1249 = vst [vmem:[%s1146 + $0xa8] sm:$0xf] %v1248
        %1250 = vst.msk [vmem:[%s1146 + $0xac] sm:$0xf] %vm317, %v1079
        %v1251 = vld [vmem:[%s1146 + $0xb0] sm:$0x1]
        %v1252 = vsel %vm328, %v1080, %v1251
        %1253 = vst [vmem:[%s1146 + $0xb0] sm:$0x1] %v1252
        %v1254 = vld [vmem:[%s1146 + $0xb4] sm:$0xf]
        %v1255 = vsel %vm1148, %v1087, %v1254
        %1256 = vst [vmem:[%s1146 + $0xb4] sm:$0xf] %v1255
        %1257 = vst.msk [vmem:[%s1146 + $0xb8] sm:$0xf] %vm317, %v1096
        %v1258 = vld [vmem:[%s1146 + $0xbc] sm:$0x1]
        %v1259 = vsel %vm328, %v1097, %v1258
        %1260 = vst [vmem:[%s1146 + $0xbc] sm:$0x1] %v1259
      $region40: #{decoder_block_forward.5} parent=35 // pred_fallthru
        _
      %s1261 = smul.u32 %s312, 3
      %s1262 = smul.addr %s1261, 4
      %s1263 = scalar_lea.vmem [#allocation2], %s1262
      %v1264 = vld [vmem:[%s1263] sm:$0xf]
      %v1265 = vld [vmem:[%s1263 + $0x4] sm:$0xf]
      %v1266 = vld [vmem:[%s1263 + $0xc] sm:$0xf]
      %v1267 = vld [vmem:[%s1263 + $0x10] sm:$0xf]
      %v1268 = vld [vmem:[%s1263 + $0x18] sm:$0xf]
      %v1269 = vld [vmem:[%s1263 + $0x1c] sm:$0xf]
      %v1270 = vld [vmem:[%s1263 + $0x24] sm:$0xf]
      %v1271 = vld [vmem:[%s1263 + $0x28] sm:$0xf]
      %v1272 = vld [vmem:[%s1263 + $0x30] sm:$0xf]
      %v1273 = vld [vmem:[%s1263 + $0x34] sm:$0xf]
      %v1274 = vld [vmem:[%s1263 + $0x3c] sm:$0xf]
      %v1275 = vld [vmem:[%s1263 + $0x40] sm:$0xf]
      %v1276 = vld [vmem:[%s1263 + $0x48] sm:$0xf]
      %v1277 = vld [vmem:[%s1263 + $0x4c] sm:$0xf]
      %v1278 = vld [vmem:[%s1263 + $0x54] sm:$0xf]
      %v1279 = vld [vmem:[%s1263 + $0x58] sm:$0xf]
      %v1280 = vld [vmem:[%s1263 + $0x60] sm:$0xf]
      %v1281 = vld [vmem:[%s1263 + $0x64] sm:$0xf]
      %v1282 = vld [vmem:[%s1263 + $0x6c] sm:$0xf]
      %v1283 = vld [vmem:[%s1263 + $0x70] sm:$0xf]
      %v1284 = vld [vmem:[%s1263 + $0x78] sm:$0xf]
      %v1285 = vld [vmem:[%s1263 + $0x7c] sm:$0xf]
      %v1286 = vld [vmem:[%s1263 + $0x84] sm:$0xf]
      %v1287 = vld [vmem:[%s1263 + $0x88] sm:$0xf]
      %v1288 = vld [vmem:[%s1263 + $0x90] sm:$0xf]
      %v1289 = vld [vmem:[%s1263 + $0x94] sm:$0xf]
      %v1290 = vld [vmem:[%s1263 + $0x9c] sm:$0xf]
      %v1291 = vld [vmem:[%s1263 + $0xa0] sm:$0xf]
      %v1292 = vld [vmem:[%s1263 + $0xa8] sm:$0xf]
      %v1293 = vld [vmem:[%s1263 + $0xac] sm:$0xf]
      %v1294 = vld [vmem:[%s1263 + $0xb4] sm:$0xf]
      %v1295 = vld [vmem:[%s1263 + $0xb8] sm:$0xf]
      %v1296 = vld [vmem:[%s2] sm:$0xf]
      %v1297 = vld [vmem:[%s2 + $0x4] sm:$0xf]
      %v1298 = vld [vmem:[%s2 + $0x8] sm:$0xf]
      %v1299 = vld [vmem:[%s2 + $0xc] sm:$0xf]
      %v1300 = vld [vmem:[%s1263 + $0x8] sm:$0x1]
      %v1301 = vld [vmem:[%s1263 + $0x14] sm:$0x1]
      %v1302 = vld [vmem:[%s1263 + $0x20] sm:$0x1]
      %v1303 = vld [vmem:[%s1263 + $0x2c] sm:$0x1]
      %v1304 = vld [vmem:[%s1263 + $0x38] sm:$0x1]
      %v1305 = vld [vmem:[%s1263 + $0x44] sm:$0x1]
      %v1306 = vld [vmem:[%s1263 + $0x50] sm:$0x1]
      %v1307 = vld [vmem:[%s1263 + $0x5c] sm:$0x1]
      %v1308 = vld [vmem:[%s1263 + $0x68] sm:$0x1]
      %v1309 = vld [vmem:[%s1263 + $0x74] sm:$0x1]
      %v1310 = vld [vmem:[%s1263 + $0x80] sm:$0x1]
      %v1311 = vld [vmem:[%s1263 + $0x8c] sm:$0x1]
      %v1312 = vld [vmem:[%s1263 + $0x98] sm:$0x1]
      %v1313 = vld [vmem:[%s1263 + $0xa4] sm:$0x1]
      %v1314 = vld [vmem:[%s1263 + $0xb0] sm:$0x1]
      %v1315 = vld [vmem:[%s1263 + $0xbc] sm:$0x1]
      %vm1316 = vsmask.f32 3328
      %vm1317 = vsmask.f32 7440
      %vm1318 = vmor %vm1316, %vm1317
      %v1320 = vshrl.u32 %v1264, 16
      %v1322 = vrot.slane %v1320, 4
      %v1323 = vshll.u32 %v1264, 16
      %v1325 = vrot.slane %v1323, 5
      %v1326 = vor.u32 %v1322, %v1325
      %v1327 = vrot.slane %v1326, 4
      %v1329 = vshll.u32 %v1265, 16
      %v1331 = vrot.slane %v1329, 5
      %v1332 = vsel %vm1318, %v1327, %v1331
      %v1333 = vshrl.u32 %v1265, 16
      %v1335 = vrot.slane %v1333, 4
      %v1336 = vor.u32 %v1335, %v1331
      %v1337 = vrot.slane %v1336, 4
      %v1339 = vshll.u32 %v1300, 16
      %v1341 = vrot.slane %v1339, 5
      %v1342 = vsel %vm1318, %v1337, %v1341
      %v1344 = vshrl.u32 %v1266, 16
      %v1346 = vrot.slane %v1344, 4
      %v1347 = vshll.u32 %v1266, 16
      %v1349 = vrot.slane %v1347, 5
      %v1350 = vor.u32 %v1346, %v1349
      %v1351 = vrot.slane %v1350, 4
      %v1353 = vshll.u32 %v1267, 16
      %v1355 = vrot.slane %v1353, 5
      %v1356 = vsel %vm1318, %v1351, %v1355
      %v1357 = vshrl.u32 %v1267, 16
      %v1359 = vrot.slane %v1357, 4
      %v1360 = vor.u32 %v1359, %v1355
      %v1361 = vrot.slane %v1360, 4
      %v1363 = vshll.u32 %v1301, 16
      %v1365 = vrot.slane %v1363, 5
      %v1366 = vsel %vm1318, %v1361, %v1365
      %v1368 = vshrl.u32 %v1268, 16
      %v1370 = vrot.slane %v1368, 4
      %v1371 = vshll.u32 %v1268, 16
      %v1373 = vrot.slane %v1371, 5
      %v1374 = vor.u32 %v1370, %v1373
      %v1375 = vrot.slane %v1374, 4
      %v1377 = vshll.u32 %v1269, 16
      %v1379 = vrot.slane %v1377, 5
      %v1380 = vsel %vm1318, %v1375, %v1379
      %v1381 = vshrl.u32 %v1269, 16
      %v1383 = vrot.slane %v1381, 4
      %v1384 = vor.u32 %v1383, %v1379
      %v1385 = vrot.slane %v1384, 4
      %v1387 = vshll.u32 %v1302, 16
      %v1389 = vrot.slane %v1387, 5
      %v1390 = vsel %vm1318, %v1385, %v1389
      %v1392 = vshrl.u32 %v1270, 16
      %v1394 = vrot.slane %v1392, 4
      %v1395 = vshll.u32 %v1270, 16
      %v1397 = vrot.slane %v1395, 5
      %v1398 = vor.u32 %v1394, %v1397
      %v1399 = vrot.slane %v1398, 4
      %v1401 = vshll.u32 %v1271, 16
      %v1403 = vrot.slane %v1401, 5
      %v1404 = vsel %vm1318, %v1399, %v1403
      %v1405 = vshrl.u32 %v1271, 16
      %v1407 = vrot.slane %v1405, 4
      %v1408 = vor.u32 %v1407, %v1403
      %v1409 = vrot.slane %v1408, 4
      %v1411 = vshll.u32 %v1303, 16
      %v1413 = vrot.slane %v1411, 5
      %v1414 = vsel %vm1318, %v1409, %v1413
      %v1416 = vshrl.u32 %v1272, 16
      %v1418 = vrot.slane %v1416, 4
      %v1419 = vshll.u32 %v1272, 16
      %v1421 = vrot.slane %v1419, 5
      %v1422 = vor.u32 %v1418, %v1421
      %v1423 = vrot.slane %v1422, 4
      %v1425 = vshll.u32 %v1273, 16
      %v1427 = vrot.slane %v1425, 5
      %v1428 = vsel %vm1318, %v1423, %v1427
      %v1429 = vshrl.u32 %v1273, 16
      %v1431 = vrot.slane %v1429, 4
      %v1432 = vor.u32 %v1431, %v1427
      %v1433 = vrot.slane %v1432, 4
      %v1435 = vshll.u32 %v1304, 16
      %v1437 = vrot.slane %v1435, 5
      %v1438 = vsel %vm1318, %v1433, %v1437
      %v1440 = vshrl.u32 %v1274, 16
      %v1442 = vrot.slane %v1440, 4
      %v1443 = vshll.u32 %v1274, 16
      %v1445 = vrot.slane %v1443, 5
      %v1446 = vor.u32 %v1442, %v1445
      %v1447 = vrot.slane %v1446, 4
      %v1449 = vshll.u32 %v1275, 16
      %v1451 = vrot.slane %v1449, 5
      %v1452 = vsel %vm1318, %v1447, %v1451
      %v1453 = vshrl.u32 %v1275, 16
      %v1455 = vrot.slane %v1453, 4
      %v1456 = vor.u32 %v1455, %v1451
      %v1457 = vrot.slane %v1456, 4
      %v1459 = vshll.u32 %v1305, 16
      %v1461 = vrot.slane %v1459, 5
      %v1462 = vsel %vm1318, %v1457, %v1461
      %v1464 = vshrl.u32 %v1276, 16
      %v1466 = vrot.slane %v1464, 4
      %v1467 = vshll.u32 %v1276, 16
      %v1469 = vrot.slane %v1467, 5
      %v1470 = vor.u32 %v1466, %v1469
      %v1471 = vrot.slane %v1470, 4
      %v1473 = vshll.u32 %v1277, 16
      %v1475 = vrot.slane %v1473, 5
      %v1476 = vsel %vm1318, %v1471, %v1475
      %v1477 = vshrl.u32 %v1277, 16
      %v1479 = vrot.slane %v1477, 4
      %v1480 = vor.u32 %v1479, %v1475
      %v1481 = vrot.slane %v1480, 4
      %v1483 = vshll.u32 %v1306, 16
      %v1485 = vrot.slane %v1483, 5
      %v1486 = vsel %vm1318, %v1481, %v1485
      %v1488 = vshrl.u32 %v1278, 16
      %v1490 = vrot.slane %v1488, 4
      %v1491 = vshll.u32 %v1278, 16
      %v1493 = vrot.slane %v1491, 5
      %v1494 = vor.u32 %v1490, %v1493
      %v1495 = vrot.slane %v1494, 4
      %v1497 = vshll.u32 %v1279, 16
      %v1499 = vrot.slane %v1497, 5
      %v1500 = vsel %vm1318, %v1495, %v1499
      %v1501 = vshrl.u32 %v1279, 16
      %v1503 = vrot.slane %v1501, 4
      %v1504 = vor.u32 %v1503, %v1499
      %v1505 = vrot.slane %v1504, 4
      %v1507 = vshll.u32 %v1307, 16
      %v1509 = vrot.slane %v1507, 5
      %v1510 = vsel %vm1318, %v1505, %v1509
      %v1512 = vshrl.u32 %v1280, 16
      %v1514 = vrot.slane %v1512, 4
      %v1515 = vshll.u32 %v1280, 16
      %v1517 = vrot.slane %v1515, 5
      %v1518 = vor.u32 %v1514, %v1517
      %v1519 = vrot.slane %v1518, 4
      %v1521 = vshll.u32 %v1281, 16
      %v1523 = vrot.slane %v1521, 5
      %v1524 = vsel %vm1318, %v1519, %v1523
      %v1525 = vshrl.u32 %v1281, 16
      %v1527 = vrot.slane %v1525, 4
      %v1528 = vor.u32 %v1527, %v1523
      %v1529 = vrot.slane %v1528, 4
      %v1531 = vshll.u32 %v1308, 16
      %v1533 = vrot.slane %v1531, 5
      %v1534 = vsel %vm1318, %v1529, %v1533
      %v1536 = vshrl.u32 %v1282, 16
      %v1538 = vrot.slane %v1536, 4
      %v1539 = vshll.u32 %v1282, 16
      %v1541 = vrot.slane %v1539, 5
      %v1542 = vor.u32 %v1538, %v1541
      %v1543 = vrot.slane %v1542, 4
      %v1545 = vshll.u32 %v1283, 16
      %v1547 = vrot.slane %v1545, 5
      %v1548 = vsel %vm1318, %v1543, %v1547
      %v1549 = vshrl.u32 %v1283, 16
      %v1551 = vrot.slane %v1549, 4
      %v1552 = vor.u32 %v1551, %v1547
      %v1553 = vrot.slane %v1552, 4
      %v1555 = vshll.u32 %v1309, 16
      %v1557 = vrot.slane %v1555, 5
      %v1558 = vsel %vm1318, %v1553, %v1557
      %v1560 = vshrl.u32 %v1284, 16
      %v1562 = vrot.slane %v1560, 4
      %v1563 = vshll.u32 %v1284, 16
      %v1565 = vrot.slane %v1563, 5
      %v1566 = vor.u32 %v1562, %v1565
      %v1567 = vrot.slane %v1566, 4
      %v1569 = vshll.u32 %v1285, 16
      %v1571 = vrot.slane %v1569, 5
      %v1572 = vsel %vm1318, %v1567, %v1571
      %v1573 = vshrl.u32 %v1285, 16
      %v1575 = vrot.slane %v1573, 4
      %v1576 = vor.u32 %v1575, %v1571
      %v1577 = vrot.slane %v1576, 4
      %v1579 = vshll.u32 %v1310, 16
      %v1581 = vrot.slane %v1579, 5
      %v1582 = vsel %vm1318, %v1577, %v1581
      %v1584 = vshrl.u32 %v1286, 16
      %v1586 = vrot.slane %v1584, 4
      %v1587 = vshll.u32 %v1286, 16
      %v1589 = vrot.slane %v1587, 5
      %v1590 = vor.u32 %v1586, %v1589
      %v1591 = vrot.slane %v1590, 4
      %v1593 = vshll.u32 %v1287, 16
      %v1595 = vrot.slane %v1593, 5
      %v1596 = vsel %vm1318, %v1591, %v1595
      %v1597 = vshrl.u32 %v1287, 16
      %v1599 = vrot.slane %v1597, 4
      %v1600 = vor.u32 %v1599, %v1595
      %v1601 = vrot.slane %v1600, 4
      %v1603 = vshll.u32 %v1311, 16
      %v1605 = vrot.slane %v1603, 5
      %v1606 = vsel %vm1318, %v1601, %v1605
      %v1608 = vshrl.u32 %v1288, 16
      %v1610 = vrot.slane %v1608, 4
      %v1611 = vshll.u32 %v1288, 16
      %v1613 = vrot.slane %v1611, 5
      %v1614 = vor.u32 %v1610, %v1613
      %v1615 = vrot.slane %v1614, 4
      %v1617 = vshll.u32 %v1289, 16
      %v1619 = vrot.slane %v1617, 5
      %v1620 = vsel %vm1318, %v1615, %v1619
      %v1621 = vshrl.u32 %v1289, 16
      %v1623 = vrot.slane %v1621, 4
      %v1624 = vor.u32 %v1623, %v1619
      %v1625 = vrot.slane %v1624, 4
      %v1627 = vshll.u32 %v1312, 16
      %v1629 = vrot.slane %v1627, 5
      %v1630 = vsel %vm1318, %v1625, %v1629
      %v1632 = vshrl.u32 %v1290, 16
      %v1634 = vrot.slane %v1632, 4
      %v1635 = vshll.u32 %v1290, 16
      %v1637 = vrot.slane %v1635, 5
      %v1638 = vor.u32 %v1634, %v1637
      %v1639 = vrot.slane %v1638, 4
      %v1641 = vshll.u32 %v1291, 16
      %v1643 = vrot.slane %v1641, 5
      %v1644 = vsel %vm1318, %v1639, %v1643
      %v1645 = vshrl.u32 %v1291, 16
      %v1647 = vrot.slane %v1645, 4
      %v1648 = vor.u32 %v1647, %v1643
      %v1649 = vrot.slane %v1648, 4
      %v1651 = vshll.u32 %v1313, 16
      %v1653 = vrot.slane %v1651, 5
      %v1654 = vsel %vm1318, %v1649, %v1653
      %v1656 = vshrl.u32 %v1292, 16
      %v1658 = vrot.slane %v1656, 4
      %v1659 = vshll.u32 %v1292, 16
      %v1661 = vrot.slane %v1659, 5
      %v1662 = vor.u32 %v1658, %v1661
      %v1663 = vrot.slane %v1662, 4
      %v1665 = vshll.u32 %v1293, 16
      %v1667 = vrot.slane %v1665, 5
      %v1668 = vsel %vm1318, %v1663, %v1667
      %v1669 = vshrl.u32 %v1293, 16
      %v1671 = vrot.slane %v1669, 4
      %v1672 = vor.u32 %v1671, %v1667
      %v1673 = vrot.slane %v1672, 4
      %v1675 = vshll.u32 %v1314, 16
      %v1677 = vrot.slane %v1675, 5
      %v1678 = vsel %vm1318, %v1673, %v1677
      %v1680 = vshrl.u32 %v1294, 16
      %v1682 = vrot.slane %v1680, 4
      %v1683 = vshll.u32 %v1294, 16
      %v1685 = vrot.slane %v1683, 5
      %v1686 = vor.u32 %v1682, %v1685
      %v1687 = vrot.slane %v1686, 4
      %v1689 = vshll.u32 %v1295, 16
      %v1691 = vrot.slane %v1689, 5
      %v1692 = vsel %vm1318, %v1687, %v1691
      %v1693 = vshrl.u32 %v1295, 16
      %v1695 = vrot.slane %v1693, 4
      %v1696 = vor.u32 %v1695, %v1691
      %v1697 = vrot.slane %v1696, 4
      %v1699 = vshll.u32 %v1315, 16
      %v1701 = vrot.slane %v1699, 5
      %v1702 = vsel %vm1318, %v1697, %v1701
      %s1703 = scalar_lea.vmem %s2, 16
      %v1704 = vld [vmem:[%s1703] sm:$0xf]
      %v1705 = vld [vmem:[%s1703 + $0x4] sm:$0xf]
      %v1706 = vld [vmem:[%s1703 + $0x8] sm:$0xf]
      %v1707 = vld [vmem:[%s1703 + $0xc] sm:$0xf]
      %v1708 = vunpack.c.l.b16 %v1332
      %v1709 = vunpack.c.l.b16 %v1342
      %v1710 = vunpack.c.l.b16 %v1356
      %v1711 = vunpack.c.l.b16 %v1366
      %v1712 = vunpack.c.l.b16 %v1380
      %v1713 = vunpack.c.l.b16 %v1390
      %v1714 = vunpack.c.l.b16 %v1404
      %v1715 = vunpack.c.l.b16 %v1414
      %v1716 = vunpack.c.l.b16 %v1428
      %v1717 = vunpack.c.l.b16 %v1438
      %v1718 = vunpack.c.l.b16 %v1452
      %v1719 = vunpack.c.l.b16 %v1462
      %v1720 = vunpack.c.l.b16 %v1476
      %v1721 = vunpack.c.l.b16 %v1486
      %v1722 = vunpack.c.l.b16 %v1500
      %v1723 = vunpack.c.l.b16 %v1510
      %v1724 = vunpack.c.l.b16 %v1524
      %v1725 = vunpack.c.l.b16 %v1534
      %v1726 = vunpack.c.l.b16 %v1548
      %v1727 = vunpack.c.l.b16 %v1558
      %v1728 = vunpack.c.l.b16 %v1572
      %v1729 = vunpack.c.l.b16 %v1582
      %v1730 = vunpack.c.l.b16 %v1596
      %v1731 = vunpack.c.l.b16 %v1606
      %v1732 = vunpack.c.l.b16 %v1620
      %v1733 = vunpack.c.l.b16 %v1630
      %v1734 = vunpack.c.l.b16 %v1644
      %v1735 = vunpack.c.l.b16 %v1654
      %v1736 = vunpack.c.l.b16 %v1668
      %v1737 = vunpack.c.l.b16 %v1678
      %v1738 = vunpack.c.l.b16 %v1692
      %v1739 = vunpack.c.l.b16 %v1702
      %v1740 = vpack.c.b16 %v1709, %v1708
      %v1741 = vpack.c.b16 %v1711, %v1710
      %v1742 = vpack.c.b16 %v1713, %v1712
      %v1743 = vpack.c.b16 %v1715, %v1714
      %v1744 = vpack.c.b16 %v1717, %v1716
      %v1745 = vpack.c.b16 %v1719, %v1718
      %v1746 = vpack.c.b16 %v1721, %v1720
      %v1747 = vpack.c.b16 %v1723, %v1722
      %v1748 = vpack.c.b16 %v1725, %v1724
      %v1749 = vpack.c.b16 %v1727, %v1726
      %v1750 = vpack.c.b16 %v1729, %v1728
      %v1751 = vpack.c.b16 %v1731, %v1730
      %v1752 = vpack.c.b16 %v1733, %v1732
      %v1753 = vpack.c.b16 %v1735, %v1734
      %v1754 = vpack.c.b16 %v1737, %v1736
      %v1755 = vpack.c.b16 %v1739, %v1738
      %v1760 = vunpack.c.l.b16 %v1704
      %v1761 = vunpack.c.l.b16 %v1705
      %v1762 = vunpack.c.l.b16 %v1706
      %v1763 = vunpack.c.l.b16 %v1707
      %v1764 = vpack.c.b16 %v1761, %v1760
      %v1765 = vpack.c.b16 %v1763, %v1762
      %vm1768 = vcmask 261120
      %v1770 = vsel %vm1768, %v1740, 0
      %v1773 = vsel %vm1768, %v1741, 0
      %v1776 = vsel %vm1768, %v1742, 0
      %v1779 = vsel %vm1768, %v1743, 0
      %v1782 = vsel %vm1768, %v1744, 0
      %v1785 = vsel %vm1768, %v1745, 0
      %v1788 = vsel %vm1768, %v1746, 0
      %v1791 = vsel %vm1768, %v1747, 0
      %v1794 = vsel %vm1768, %v1748, 0
      %v1797 = vsel %vm1768, %v1749, 0
      %v1800 = vsel %vm1768, %v1750, 0
      %v1803 = vsel %vm1768, %v1751, 0
      %v1806 = vsel %vm1768, %v1752, 0
      %v1809 = vsel %vm1768, %v1753, 0
      %v1812 = vsel %vm1768, %v1754, 0
      %v1815 = vsel %vm1768, %v1755, 0
      %1817 = vmatpush.bf16.msra.mxu0 0
      %1818 = vmatpush.bf16.msra.mxu0 0
      %1819 = vmatpush.bf16.msra.mxu0 0
      %1820 = vmatpush.bf16.msra.mxu0 0
      %1821 = vmatpush.bf16.msra.mxu0 0
      %1822 = vmatpush.bf16.msra.mxu0 0
      %1823 = vmatpush.bf16.msra.mxu0 %v1765
      %1824 = vmatpush.bf16.msra.mxu0 %v1764
      %1825 = vmatmul.bf16.gmra.mxu0 %v1770
      %v1826 = vpop.f32.mrf.mxu0
      %v1827 = vadd.f32 0.0, %v1826
      %v1828 = vpop.f32.mrf.mxu0
      %v1829 = vadd.f32 0.0, %v1828
      %1830 = vmatmul.bf16.gmra.mxu0 %v1773
      %v1831 = vpop.f32.mrf.mxu0
      %v1832 = vadd.f32 0.0, %v1831
      %v1833 = vpop.f32.mrf.mxu0
      %v1834 = vadd.f32 0.0, %v1833
      %1835 = vmatmul.bf16.gmra.mxu0 %v1776
      %v1836 = vpop.f32.mrf.mxu0
      %v1837 = vadd.f32 0.0, %v1836
      %v1838 = vpop.f32.mrf.mxu0
      %v1839 = vadd.f32 0.0, %v1838
      %1840 = vmatmul.bf16.gmra.mxu0 %v1779
      %v1841 = vpop.f32.mrf.mxu0
      %v1842 = vadd.f32 0.0, %v1841
      %v1843 = vpop.f32.mrf.mxu0
      %v1844 = vadd.f32 0.0, %v1843
      %1845 = vmatmul.bf16.gmra.mxu0 %v1782
      %v1846 = vpop.f32.mrf.mxu0
      %v1847 = vadd.f32 0.0, %v1846
      %v1848 = vpop.f32.mrf.mxu0
      %v1849 = vadd.f32 0.0, %v1848
      %1850 = vmatmul.bf16.gmra.mxu0 %v1785
      %v1851 = vpop.f32.mrf.mxu0
      %v1852 = vadd.f32 0.0, %v1851
      %v1853 = vpop.f32.mrf.mxu0
      %v1854 = vadd.f32 0.0, %v1853
      %1855 = vmatmul.bf16.gmra.mxu0 %v1788
      %v1856 = vpop.f32.mrf.mxu0
      %v1857 = vadd.f32 0.0, %v1856
      %v1858 = vpop.f32.mrf.mxu0
      %v1859 = vadd.f32 0.0, %v1858
      %1860 = vmatmul.bf16.gmra.mxu0 %v1791
      %v1861 = vpop.f32.mrf.mxu0
      %v1862 = vadd.f32 0.0, %v1861
      %v1863 = vpop.f32.mrf.mxu0
      %v1864 = vadd.f32 0.0, %v1863
      %1865 = vmatmul.bf16.gmra.mxu0 %v1794
      %v1866 = vpop.f32.mrf.mxu0
      %v1867 = vadd.f32 0.0, %v1866
      %v1868 = vpop.f32.mrf.mxu0
      %v1869 = vadd.f32 0.0, %v1868
      %1870 = vmatmul.bf16.gmra.mxu0 %v1797
      %v1871 = vpop.f32.mrf.mxu0
      %v1872 = vadd.f32 0.0, %v1871
      %v1873 = vpop.f32.mrf.mxu0
      %v1874 = vadd.f32 0.0, %v1873
      %1875 = vmatmul.bf16.gmra.mxu0 %v1800
      %v1876 = vpop.f32.mrf.mxu0
      %v1877 = vadd.f32 0.0, %v1876
      %v1878 = vpop.f32.mrf.mxu0
      %v1879 = vadd.f32 0.0, %v1878
      %1880 = vmatmul.bf16.gmra.mxu0 %v1803
      %v1881 = vpop.f32.mrf.mxu0
      %v1882 = vadd.f32 0.0, %v1881
      %v1883 = vpop.f32.mrf.mxu0
      %v1884 = vadd.f32 0.0, %v1883
      %1885 = vmatmul.bf16.gmra.mxu0 %v1806
      %v1886 = vpop.f32.mrf.mxu0
      %v1887 = vadd.f32 0.0, %v1886
      %v1888 = vpop.f32.mrf.mxu0
      %v1889 = vadd.f32 0.0, %v1888
      %1890 = vmatmul.bf16.gmra.mxu0 %v1809
      %v1891 = vpop.f32.mrf.mxu0
      %v1892 = vadd.f32 0.0, %v1891
      %v1893 = vpop.f32.mrf.mxu0
      %v1894 = vadd.f32 0.0, %v1893
      %1895 = vmatmul.bf16.gmra.mxu0 %v1812
      %v1896 = vpop.f32.mrf.mxu0
      %v1897 = vadd.f32 0.0, %v1896
      %v1898 = vpop.f32.mrf.mxu0
      %v1899 = vadd.f32 0.0, %v1898
      %1900 = vmatmul.bf16.gmra.mxu0 %v1815
      %v1901 = vpop.f32.mrf.mxu0
      %v1902 = vadd.f32 0.0, %v1901
      %v1903 = vpop.f32.mrf.mxu0
      %v1904 = vadd.f32 0.0, %v1903
      %1905 = vdwg.mxu0
      %v1938 = vunpack.c.l.b16 %v1264
      %v1939 = vunpack.c.l.b16 %v1265
      %v1940 = vunpack.c.l.b16 %v1266
      %v1941 = vunpack.c.l.b16 %v1267
      %v1942 = vunpack.c.l.b16 %v1268
      %v1943 = vunpack.c.l.b16 %v1269
      %v1944 = vunpack.c.l.b16 %v1270
      %v1945 = vunpack.c.l.b16 %v1271
      %v1946 = vunpack.c.l.b16 %v1272
      %v1947 = vunpack.c.l.b16 %v1273
      %v1948 = vunpack.c.l.b16 %v1274
      %v1949 = vunpack.c.l.b16 %v1275
      %v1950 = vunpack.c.l.b16 %v1276
      %v1951 = vunpack.c.l.b16 %v1277
      %v1952 = vunpack.c.l.b16 %v1278
      %v1953 = vunpack.c.l.b16 %v1279
      %v1954 = vunpack.c.l.b16 %v1280
      %v1955 = vunpack.c.l.b16 %v1281
      %v1956 = vunpack.c.l.b16 %v1282
      %v1957 = vunpack.c.l.b16 %v1283
      %v1958 = vunpack.c.l.b16 %v1284
      %v1959 = vunpack.c.l.b16 %v1285
      %v1960 = vunpack.c.l.b16 %v1286
      %v1961 = vunpack.c.l.b16 %v1287
      %v1962 = vunpack.c.l.b16 %v1288
      %v1963 = vunpack.c.l.b16 %v1289
      %v1964 = vunpack.c.l.b16 %v1290
      %v1965 = vunpack.c.l.b16 %v1291
      %v1966 = vunpack.c.l.b16 %v1292
      %v1967 = vunpack.c.l.b16 %v1293
      %v1968 = vunpack.c.l.b16 %v1294
      %v1969 = vunpack.c.l.b16 %v1295
      %v1970 = vpack.c.b16 %v1939, %v1938
      %v1971 = vpack.c.b16 %v1941, %v1940
      %v1972 = vpack.c.b16 %v1943, %v1942
      %v1973 = vpack.c.b16 %v1945, %v1944
      %v1974 = vpack.c.b16 %v1947, %v1946
      %v1975 = vpack.c.b16 %v1949, %v1948
      %v1976 = vpack.c.b16 %v1951, %v1950
      %v1977 = vpack.c.b16 %v1953, %v1952
      %v1978 = vpack.c.b16 %v1955, %v1954
      %v1979 = vpack.c.b16 %v1957, %v1956
      %v1980 = vpack.c.b16 %v1959, %v1958
      %v1981 = vpack.c.b16 %v1961, %v1960
      %v1982 = vpack.c.b16 %v1963, %v1962
      %v1983 = vpack.c.b16 %v1965, %v1964
      %v1984 = vpack.c.b16 %v1967, %v1966
      %v1985 = vpack.c.b16 %v1969, %v1968
      %v1990 = vunpack.c.l.b16 %v1296
      %v1991 = vunpack.c.l.b16 %v1297
      %v1992 = vunpack.c.l.b16 %v1298
      %v1993 = vunpack.c.l.b16 %v1299
      %v1994 = vpack.c.b16 %v1991, %v1990
      %v1995 = vpack.c.b16 %v1993, %v1992
      %v1999 = vsel %vm1768, %v1970, 0
      %v2002 = vsel %vm1768, %v1971, 0
      %v2005 = vsel %vm1768, %v1972, 0
      %v2008 = vsel %vm1768, %v1973, 0
      %v2011 = vsel %vm1768, %v1974, 0
      %v2014 = vsel %vm1768, %v1975, 0
      %v2017 = vsel %vm1768, %v1976, 0
      %v2020 = vsel %vm1768, %v1977, 0
      %v2023 = vsel %vm1768, %v1978, 0
      %v2026 = vsel %vm1768, %v1979, 0
      %v2029 = vsel %vm1768, %v1980, 0
      %v2032 = vsel %vm1768, %v1981, 0
      %v2035 = vsel %vm1768, %v1982, 0
      %v2038 = vsel %vm1768, %v1983, 0
      %v2041 = vsel %vm1768, %v1984, 0
      %v2044 = vsel %vm1768, %v1985, 0
      %2046 = vmatpush.bf16.msra.mxu0 0
      %2047 = vmatpush.bf16.msra.mxu0 0
      %2048 = vmatpush.bf16.msra.mxu0 0
      %2049 = vmatpush.bf16.msra.mxu0 0
      %2050 = vmatpush.bf16.msra.mxu0 0
      %2051 = vmatpush.bf16.msra.mxu0 0
      %2052 = vmatpush.bf16.msra.mxu0 %v1995
      %2053 = vmatpush.bf16.msra.mxu0 %v1994
      %2054 = vmatmul.bf16.gmra.mxu0 %v1999
      %v2055 = vpop.f32.mrf.mxu0
      %v2056 = vadd.f32 %v1827, %v2055
      %v2057 = vpop.f32.mrf.mxu0
      %v2058 = vadd.f32 %v1829, %v2057
      %2059 = vmatmul.bf16.gmra.mxu0 %v2002
      %v2060 = vpop.f32.mrf.mxu0
      %v2061 = vadd.f32 %v1832, %v2060
      %v2062 = vpop.f32.mrf.mxu0
      %v2063 = vadd.f32 %v1834, %v2062
      %2064 = vmatmul.bf16.gmra.mxu0 %v2005
      %v2065 = vpop.f32.mrf.mxu0
      %v2066 = vadd.f32 %v1837, %v2065
      %v2067 = vpop.f32.mrf.mxu0
      %v2068 = vadd.f32 %v1839, %v2067
      %2069 = vmatmul.bf16.gmra.mxu0 %v2008
      %v2070 = vpop.f32.mrf.mxu0
      %v2071 = vadd.f32 %v1842, %v2070
      %v2072 = vpop.f32.mrf.mxu0
      %v2073 = vadd.f32 %v1844, %v2072
      %2074 = vmatmul.bf16.gmra.mxu0 %v2011
      %v2075 = vpop.f32.mrf.mxu0
      %v2076 = vadd.f32 %v1847, %v2075
      %v2077 = vpop.f32.mrf.mxu0
      %v2078 = vadd.f32 %v1849, %v2077
      %2079 = vmatmul.bf16.gmra.mxu0 %v2014
      %v2080 = vpop.f32.mrf.mxu0
      %v2081 = vadd.f32 %v1852, %v2080
      %v2082 = vpop.f32.mrf.mxu0
      %v2083 = vadd.f32 %v1854, %v2082
      %2084 = vmatmul.bf16.gmra.mxu0 %v2017
      %v2085 = vpop.f32.mrf.mxu0
      %v2086 = vadd.f32 %v1857, %v2085
      %v2087 = vpop.f32.mrf.mxu0
      %v2088 = vadd.f32 %v1859, %v2087
      %2089 = vmatmul.bf16.gmra.mxu0 %v2020
      %v2090 = vpop.f32.mrf.mxu0
      %v2091 = vadd.f32 %v1862, %v2090
      %v2092 = vpop.f32.mrf.mxu0
      %v2093 = vadd.f32 %v1864, %v2092
      %2094 = vmatmul.bf16.gmra.mxu0 %v2023
      %v2095 = vpop.f32.mrf.mxu0
      %v2096 = vadd.f32 %v1867, %v2095
      %v2097 = vpop.f32.mrf.mxu0
      %v2098 = vadd.f32 %v1869, %v2097
      %2099 = vmatmul.bf16.gmra.mxu0 %v2026
      %v2100 = vpop.f32.mrf.mxu0
      %v2101 = vadd.f32 %v1872, %v2100
      %v2102 = vpop.f32.mrf.mxu0
      %v2103 = vadd.f32 %v1874, %v2102
      %2104 = vmatmul.bf16.gmra.mxu0 %v2029
      %v2105 = vpop.f32.mrf.mxu0
      %v2106 = vadd.f32 %v1877, %v2105
      %v2107 = vpop.f32.mrf.mxu0
      %v2108 = vadd.f32 %v1879, %v2107
      %2109 = vmatmul.bf16.gmra.mxu0 %v2032
      %v2110 = vpop.f32.mrf.mxu0
      %v2111 = vadd.f32 %v1882, %v2110
      %v2112 = vpop.f32.mrf.mxu0
      %v2113 = vadd.f32 %v1884, %v2112
      %2114 = vmatmul.bf16.gmra.mxu0 %v2035
      %v2115 = vpop.f32.mrf.mxu0
      %v2116 = vadd.f32 %v1887, %v2115
      %v2117 = vpop.f32.mrf.mxu0
      %v2118 = vadd.f32 %v1889, %v2117
      %2119 = vmatmul.bf16.gmra.mxu0 %v2038
      %v2120 = vpop.f32.mrf.mxu0
      %v2121 = vadd.f32 %v1892, %v2120
      %v2122 = vpop.f32.mrf.mxu0
      %v2123 = vadd.f32 %v1894, %v2122
      %2124 = vmatmul.bf16.gmra.mxu0 %v2041
      %v2125 = vpop.f32.mrf.mxu0
      %v2126 = vadd.f32 %v1897, %v2125
      %v2127 = vpop.f32.mrf.mxu0
      %v2128 = vadd.f32 %v1899, %v2127
      %2129 = vmatmul.bf16.gmra.mxu0 %v2044
      %v2130 = vpop.f32.mrf.mxu0
      %v2131 = vadd.f32 %v1902, %v2130
      %v2132 = vpop.f32.mrf.mxu0
      %v2133 = vadd.f32 %v1904, %v2132
      %2134 = vdwg.mxu0
      %v2135 = vld [vmem:[%s1263] sm:$0xe]
      %v2136 = vld [vmem:[%s1263 + $0xc] sm:$0xe]
      %v2137 = vld [vmem:[%s1263 + $0x18] sm:$0xe]
      %v2138 = vld [vmem:[%s1263 + $0x24] sm:$0xe]
      %v2139 = vld [vmem:[%s1263 + $0x30] sm:$0xe]
      %v2140 = vld [vmem:[%s1263 + $0x3c] sm:$0xe]
      %v2141 = vld [vmem:[%s1263 + $0x48] sm:$0xe]
      %v2142 = vld [vmem:[%s1263 + $0x54] sm:$0xe]
      %v2143 = vld [vmem:[%s1263 + $0x60] sm:$0xe]
      %v2144 = vld [vmem:[%s1263 + $0x6c] sm:$0xe]
      %v2145 = vld [vmem:[%s1263 + $0x78] sm:$0xe]
      %v2146 = vld [vmem:[%s1263 + $0x84] sm:$0xe]
      %v2147 = vld [vmem:[%s1263 + $0x90] sm:$0xe]
      %v2148 = vld [vmem:[%s1263 + $0x9c] sm:$0xe]
      %v2149 = vld [vmem:[%s1263 + $0xa8] sm:$0xe]
      %v2150 = vld [vmem:[%s1263 + $0xb4] sm:$0xe]
      %vm2183 = vcmask 1042432
      %vm2184 = vcmask 1046532
      %vm2185 = vmor %vm2183, %vm2184
      %v2186 = vrot.slane %v2135, 5
      %v2187 = vrot.slane %v2186, 4
      %v2188 = vrot.slane %v1265, 5
      %v2189 = vsel %vm2185, %v2187, %v2188
      %v2190 = vrot.slane %v2188, 4
      %v2191 = vrot.slane %v1300, 5
      %v2192 = vsel %vm2185, %v2190, %v2191
      %v2193 = vrot.slane %v2136, 5
      %v2194 = vrot.slane %v2193, 4
      %v2195 = vrot.slane %v1267, 5
      %v2196 = vsel %vm2185, %v2194, %v2195
      %v2197 = vrot.slane %v2195, 4
      %v2198 = vrot.slane %v1301, 5
      %v2199 = vsel %vm2185, %v2197, %v2198
      %v2200 = vrot.slane %v2137, 5
      %v2201 = vrot.slane %v2200, 4
      %v2202 = vrot.slane %v1269, 5
      %v2203 = vsel %vm2185, %v2201, %v2202
      %v2204 = vrot.slane %v2202, 4
      %v2205 = vrot.slane %v1302, 5
      %v2206 = vsel %vm2185, %v2204, %v2205
      %v2207 = vrot.slane %v2138, 5
      %v2208 = vrot.slane %v2207, 4
      %v2209 = vrot.slane %v1271, 5
      %v2210 = vsel %vm2185, %v2208, %v2209
      %v2211 = vrot.slane %v2209, 4
      %v2212 = vrot.slane %v1303, 5
      %v2213 = vsel %vm2185, %v2211, %v2212
      %v2214 = vrot.slane %v2139, 5
      %v2215 = vrot.slane %v2214, 4
      %v2216 = vrot.slane %v1273, 5
      %v2217 = vsel %vm2185, %v2215, %v2216
      %v2218 = vrot.slane %v2216, 4
      %v2219 = vrot.slane %v1304, 5
      %v2220 = vsel %vm2185, %v2218, %v2219
      %v2221 = vrot.slane %v2140, 5
      %v2222 = vrot.slane %v2221, 4
      %v2223 = vrot.slane %v1275, 5
      %v2224 = vsel %vm2185, %v2222, %v2223
      %v2225 = vrot.slane %v2223, 4
      %v2226 = vrot.slane %v1305, 5
      %v2227 = vsel %vm2185, %v2225, %v2226
      %v2228 = vrot.slane %v2141, 5
      %v2229 = vrot.slane %v2228, 4
      %v2230 = vrot.slane %v1277, 5
      %v2231 = vsel %vm2185, %v2229, %v2230
      %v2232 = vrot.slane %v2230, 4
      %v2233 = vrot.slane %v1306, 5
      %v2234 = vsel %vm2185, %v2232, %v2233
      %v2235 = vrot.slane %v2142, 5
      %v2236 = vrot.slane %v2235, 4
      %v2237 = vrot.slane %v1279, 5
      %v2238 = vsel %vm2185, %v2236, %v2237
      %v2239 = vrot.slane %v2237, 4
      %v2240 = vrot.slane %v1307, 5
      %v2241 = vsel %vm2185, %v2239, %v2240
      %v2242 = vrot.slane %v2143, 5
      %v2243 = vrot.slane %v2242, 4
      %v2244 = vrot.slane %v1281, 5
      %v2245 = vsel %vm2185, %v2243, %v2244
      %v2246 = vrot.slane %v2244, 4
      %v2247 = vrot.slane %v1308, 5
      %v2248 = vsel %vm2185, %v2246, %v2247
      %v2249 = vrot.slane %v2144, 5
      %v2250 = vrot.slane %v2249, 4
      %v2251 = vrot.slane %v1283, 5
      %v2252 = vsel %vm2185, %v2250, %v2251
      %v2253 = vrot.slane %v2251, 4
      %v2254 = vrot.slane %v1309, 5
      %v2255 = vsel %vm2185, %v2253, %v2254
      %v2256 = vrot.slane %v2145, 5
      %v2257 = vrot.slane %v2256, 4
      %v2258 = vrot.slane %v1285, 5
      %v2259 = vsel %vm2185, %v2257, %v2258
      %v2260 = vrot.slane %v2258, 4
      %v2261 = vrot.slane %v1310, 5
      %v2262 = vsel %vm2185, %v2260, %v2261
      %v2263 = vrot.slane %v2146, 5
      %v2264 = vrot.slane %v2263, 4
      %v2265 = vrot.slane %v1287, 5
      %v2266 = vsel %vm2185, %v2264, %v2265
      %v2267 = vrot.slane %v2265, 4
      %v2268 = vrot.slane %v1311, 5
      %v2269 = vsel %vm2185, %v2267, %v2268
      %v2270 = vrot.slane %v2147, 5
      %v2271 = vrot.slane %v2270, 4
      %v2272 = vrot.slane %v1289, 5
      %v2273 = vsel %vm2185, %v2271, %v2272
      %v2274 = vrot.slane %v2272, 4
      %v2275 = vrot.slane %v1312, 5
      %v2276 = vsel %vm2185, %v2274, %v2275
      %v2277 = vrot.slane %v2148, 5
      %v2278 = vrot.slane %v2277, 4
      %v2279 = vrot.slane %v1291, 5
      %v2280 = vsel %vm2185, %v2278, %v2279
      %v2281 = vrot.slane %v2279, 4
      %v2282 = vrot.slane %v1313, 5
      %v2283 = vsel %vm2185, %v2281, %v2282
      %v2284 = vrot.slane %v2149, 5
      %v2285 = vrot.slane %v2284, 4
      %v2286 = vrot.slane %v1293, 5
      %v2287 = vsel %vm2185, %v2285, %v2286
      %v2288 = vrot.slane %v2286, 4
      %v2289 = vrot.slane %v1314, 5
      %v2290 = vsel %vm2185, %v2288, %v2289
      %v2291 = vrot.slane %v2150, 5
      %v2292 = vrot.slane %v2291, 4
      %v2293 = vrot.slane %v1295, 5
      %v2294 = vsel %vm2185, %v2292, %v2293
      %v2295 = vrot.slane %v2293, 4
      %v2296 = vrot.slane %v1315, 5
      %v2297 = vsel %vm2185, %v2295, %v2296
      %s2298 = scalar_lea.vmem %s2, 32
      %v2299 = vld [vmem:[%s2298] sm:$0xf]
      %v2300 = vld [vmem:[%s2298 + $0x4] sm:$0xf]
      %v2301 = vld [vmem:[%s2298 + $0x8] sm:$0xf]
      %v2302 = vld [vmem:[%s2298 + $0xc] sm:$0xf]
      %v2303 = vunpack.c.l.b16 %v2189
      %v2304 = vunpack.c.l.b16 %v2192
      %v2305 = vunpack.c.l.b16 %v2196
      %v2306 = vunpack.c.l.b16 %v2199
      %v2307 = vunpack.c.l.b16 %v2203
      %v2308 = vunpack.c.l.b16 %v2206
      %v2309 = vunpack.c.l.b16 %v2210
      %v2310 = vunpack.c.l.b16 %v2213
      %v2311 = vunpack.c.l.b16 %v2217
      %v2312 = vunpack.c.l.b16 %v2220
      %v2313 = vunpack.c.l.b16 %v2224
      %v2314 = vunpack.c.l.b16 %v2227
      %v2315 = vunpack.c.l.b16 %v2231
      %v2316 = vunpack.c.l.b16 %v2234
      %v2317 = vunpack.c.l.b16 %v2238
      %v2318 = vunpack.c.l.b16 %v2241
      %v2319 = vunpack.c.l.b16 %v2245
      %v2320 = vunpack.c.l.b16 %v2248
      %v2321 = vunpack.c.l.b16 %v2252
      %v2322 = vunpack.c.l.b16 %v2255
      %v2323 = vunpack.c.l.b16 %v2259
      %v2324 = vunpack.c.l.b16 %v2262
      %v2325 = vunpack.c.l.b16 %v2266
      %v2326 = vunpack.c.l.b16 %v2269
      %v2327 = vunpack.c.l.b16 %v2273
      %v2328 = vunpack.c.l.b16 %v2276
      %v2329 = vunpack.c.l.b16 %v2280
      %v2330 = vunpack.c.l.b16 %v2283
      %v2331 = vunpack.c.l.b16 %v2287
      %v2332 = vunpack.c.l.b16 %v2290
      %v2333 = vunpack.c.l.b16 %v2294
      %v2334 = vunpack.c.l.b16 %v2297
      %v2335 = vpack.c.b16 %v2304, %v2303
      %v2336 = vpack.c.b16 %v2306, %v2305
      %v2337 = vpack.c.b16 %v2308, %v2307
      %v2338 = vpack.c.b16 %v2310, %v2309
      %v2339 = vpack.c.b16 %v2312, %v2311
      %v2340 = vpack.c.b16 %v2314, %v2313
      %v2341 = vpack.c.b16 %v2316, %v2315
      %v2342 = vpack.c.b16 %v2318, %v2317
      %v2343 = vpack.c.b16 %v2320, %v2319
      %v2344 = vpack.c.b16 %v2322, %v2321
      %v2345 = vpack.c.b16 %v2324, %v2323
      %v2346 = vpack.c.b16 %v2326, %v2325
      %v2347 = vpack.c.b16 %v2328, %v2327
      %v2348 = vpack.c.b16 %v2330, %v2329
      %v2349 = vpack.c.b16 %v2332, %v2331
      %v2350 = vpack.c.b16 %v2334, %v2333
      %v2355 = vunpack.c.l.b16 %v2299
      %v2356 = vunpack.c.l.b16 %v2300
      %v2357 = vunpack.c.l.b16 %v2301
      %v2358 = vunpack.c.l.b16 %v2302
      %v2359 = vpack.c.b16 %v2356, %v2355
      %v2360 = vpack.c.b16 %v2358, %v2357
      %v2364 = vsel %vm1768, %v2335, 0
      %v2367 = vsel %vm1768, %v2336, 0
      %v2370 = vsel %vm1768, %v2337, 0
      %v2373 = vsel %vm1768, %v2338, 0
      %v2376 = vsel %vm1768, %v2339, 0
      %v2379 = vsel %vm1768, %v2340, 0
      %v2382 = vsel %vm1768, %v2341, 0
      %v2385 = vsel %vm1768, %v2342, 0
      %v2388 = vsel %vm1768, %v2343, 0
      %v2391 = vsel %vm1768, %v2344, 0
      %v2394 = vsel %vm1768, %v2345, 0
      %v2397 = vsel %vm1768, %v2346, 0
      %v2400 = vsel %vm1768, %v2347, 0
      %v2403 = vsel %vm1768, %v2348, 0
      %v2406 = vsel %vm1768, %v2349, 0
      %v2409 = vsel %vm1768, %v2350, 0
      %2411 = vmatpush.bf16.msra.mxu0 0
      %2412 = vmatpush.bf16.msra.mxu0 0
      %2413 = vmatpush.bf16.msra.mxu0 0
      %2414 = vmatpush.bf16.msra.mxu0 0
      %2415 = vmatpush.bf16.msra.mxu0 0
      %2416 = vmatpush.bf16.msra.mxu0 0
      %2417 = vmatpush.bf16.msra.mxu0 %v2360
      %2418 = vmatpush.bf16.msra.mxu0 %v2359
      %2419 = vmatmul.bf16.gmra.mxu0 %v2364
      %v2420 = vpop.f32.mrf.mxu0
      %v2421 = vadd.f32 0.0, %v2420
      %v2422 = vpop.f32.mrf.mxu0
      %v2423 = vadd.f32 0.0, %v2422
      %2424 = vmatmul.bf16.gmra.mxu0 %v2367
      %v2425 = vpop.f32.mrf.mxu0
      %v2426 = vadd.f32 0.0, %v2425
      %v2427 = vpop.f32.mrf.mxu0
      %v2428 = vadd.f32 0.0, %v2427
      %2429 = vmatmul.bf16.gmra.mxu0 %v2370
      %v2430 = vpop.f32.mrf.mxu0
      %v2431 = vadd.f32 0.0, %v2430
      %v2432 = vpop.f32.mrf.mxu0
      %v2433 = vadd.f32 0.0, %v2432
      %2434 = vmatmul.bf16.gmra.mxu0 %v2373
      %v2435 = vpop.f32.mrf.mxu0
      %v2436 = vadd.f32 0.0, %v2435
      %v2437 = vpop.f32.mrf.mxu0
      %v2438 = vadd.f32 0.0, %v2437
      %2439 = vmatmul.bf16.gmra.mxu0 %v2376
      %v2440 = vpop.f32.mrf.mxu0
      %v2441 = vadd.f32 0.0, %v2440
      %v2442 = vpop.f32.mrf.mxu0
      %v2443 = vadd.f32 0.0, %v2442
      %2444 = vmatmul.bf16.gmra.mxu0 %v2379
      %v2445 = vpop.f32.mrf.mxu0
      %v2446 = vadd.f32 0.0, %v2445
      %v2447 = vpop.f32.mrf.mxu0
      %v2448 = vadd.f32 0.0, %v2447
      %2449 = vmatmul.bf16.gmra.mxu0 %v2382
      %v2450 = vpop.f32.mrf.mxu0
      %v2451 = vadd.f32 0.0, %v2450
      %v2452 = vpop.f32.mrf.mxu0
      %v2453 = vadd.f32 0.0, %v2452
      %2454 = vmatmul.bf16.gmra.mxu0 %v2385
      %v2455 = vpop.f32.mrf.mxu0
      %v2456 = vadd.f32 0.0, %v2455
      %v2457 = vpop.f32.mrf.mxu0
      %v2458 = vadd.f32 0.0, %v2457
      %2459 = vmatmul.bf16.gmra.mxu0 %v2388
      %v2460 = vpop.f32.mrf.mxu0
      %v2461 = vadd.f32 0.0, %v2460
      %v2462 = vpop.f32.mrf.mxu0
      %v2463 = vadd.f32 0.0, %v2462
      %2464 = vmatmul.bf16.gmra.mxu0 %v2391
      %v2465 = vpop.f32.mrf.mxu0
      %v2466 = vadd.f32 0.0, %v2465
      %v2467 = vpop.f32.mrf.mxu0
      %v2468 = vadd.f32 0.0, %v2467
      %2469 = vmatmul.bf16.gmra.mxu0 %v2394
      %v2470 = vpop.f32.mrf.mxu0
      %v2471 = vadd.f32 0.0, %v2470
      %v2472 = vpop.f32.mrf.mxu0
      %v2473 = vadd.f32 0.0, %v2472
      %2474 = vmatmul.bf16.gmra.mxu0 %v2397
      %v2475 = vpop.f32.mrf.mxu0
      %v2476 = vadd.f32 0.0, %v2475
      %v2477 = vpop.f32.mrf.mxu0
      %v2478 = vadd.f32 0.0, %v2477
      %2479 = vmatmul.bf16.gmra.mxu0 %v2400
      %v2480 = vpop.f32.mrf.mxu0
      %v2481 = vadd.f32 0.0, %v2480
      %v2482 = vpop.f32.mrf.mxu0
      %v2483 = vadd.f32 0.0, %v2482
      %2484 = vmatmul.bf16.gmra.mxu0 %v2403
      %v2485 = vpop.f32.mrf.mxu0
      %v2486 = vadd.f32 0.0, %v2485
      %v2487 = vpop.f32.mrf.mxu0
      %v2488 = vadd.f32 0.0, %v2487
      %2489 = vmatmul.bf16.gmra.mxu0 %v2406
      %v2490 = vpop.f32.mrf.mxu0
      %v2491 = vadd.f32 0.0, %v2490
      %v2492 = vpop.f32.mrf.mxu0
      %v2493 = vadd.f32 0.0, %v2492
      %2494 = vmatmul.bf16.gmra.mxu0 %v2409
      %v2495 = vpop.f32.mrf.mxu0
      %v2496 = vadd.f32 0.0, %v2495
      %v2497 = vpop.f32.mrf.mxu0
      %v2498 = vadd.f32 0.0, %v2497
      %2499 = vdwg.mxu0
      %v2500 = vadd.f32 %v2056, %v2421
      %v2501 = vadd.f32 %v2058, %v2423
      %v2502 = vadd.f32 %v2061, %v2426
      %v2503 = vadd.f32 %v2063, %v2428
      %v2504 = vadd.f32 %v2066, %v2431
      %v2505 = vadd.f32 %v2068, %v2433
      %v2506 = vadd.f32 %v2071, %v2436
      %v2507 = vadd.f32 %v2073, %v2438
      %v2508 = vadd.f32 %v2076, %v2441
      %v2509 = vadd.f32 %v2078, %v2443
      %v2510 = vadd.f32 %v2081, %v2446
      %v2511 = vadd.f32 %v2083, %v2448
      %v2512 = vadd.f32 %v2086, %v2451
      %v2513 = vadd.f32 %v2088, %v2453
      %v2514 = vadd.f32 %v2091, %v2456
      %v2515 = vadd.f32 %v2093, %v2458
      %v2516 = vadd.f32 %v2096, %v2461
      %v2517 = vadd.f32 %v2098, %v2463
      %v2518 = vadd.f32 %v2101, %v2466
      %v2519 = vadd.f32 %v2103, %v2468
      %v2520 = vadd.f32 %v2106, %v2471
      %v2521 = vadd.f32 %v2108, %v2473
      %v2522 = vadd.f32 %v2111, %v2476
      %v2523 = vadd.f32 %v2113, %v2478
      %v2524 = vadd.f32 %v2116, %v2481
      %v2525 = vadd.f32 %v2118, %v2483
      %v2526 = vadd.f32 %v2121, %v2486
      %v2527 = vadd.f32 %v2123, %v2488
      %v2528 = vadd.f32 %v2126, %v2491
      %v2529 = vadd.f32 %v2128, %v2493
      %v2530 = vadd.f32 %v2131, %v2496
      %v2531 = vadd.f32 %v2133, %v2498
      %s2532 = sadd.s32 %s312, 1
      %s2533 = smul.u32 %s2532, 3
      %s2534 = smul.addr %s2533, 4
      %s2535 = scalar_lea.vmem [#allocation2], %s2534
      %v2536 = vld [vmem:[%s2535] sm:$0xf]
      %v2537 = vld [vmem:[%s2535 + $0x4] sm:$0xf]
      %v2538 = vld [vmem:[%s2535 + $0xc] sm:$0xf]
      %v2539 = vld [vmem:[%s2535 + $0x10] sm:$0xf]
      %v2540 = vld [vmem:[%s2535 + $0x18] sm:$0xf]
      %v2541 = vld [vmem:[%s2535 + $0x1c] sm:$0xf]
      %v2542 = vld [vmem:[%s2535 + $0x24] sm:$0xf]
      %v2543 = vld [vmem:[%s2535 + $0x28] sm:$0xf]
      %v2544 = vld [vmem:[%s2535 + $0x30] sm:$0xf]
      %v2545 = vld [vmem:[%s2535 + $0x34] sm:$0xf]
      %v2546 = vld [vmem:[%s2535 + $0x3c] sm:$0xf]
      %v2547 = vld [vmem:[%s2535 + $0x40] sm:$0xf]
      %v2548 = vld [vmem:[%s2535 + $0x48] sm:$0xf]
      %v2549 = vld [vmem:[%s2535 + $0x4c] sm:$0xf]
      %v2550 = vld [vmem:[%s2535 + $0x54] sm:$0xf]
      %v2551 = vld [vmem:[%s2535 + $0x58] sm:$0xf]
      %v2552 = vld [vmem:[%s2535 + $0x60] sm:$0xf]
      %v2553 = vld [vmem:[%s2535 + $0x64] sm:$0xf]
      %v2554 = vld [vmem:[%s2535 + $0x6c] sm:$0xf]
      %v2555 = vld [vmem:[%s2535 + $0x70] sm:$0xf]
      %v2556 = vld [vmem:[%s2535 + $0x78] sm:$0xf]
      %v2557 = vld [vmem:[%s2535 + $0x7c] sm:$0xf]
      %v2558 = vld [vmem:[%s2535 + $0x84] sm:$0xf]
      %v2559 = vld [vmem:[%s2535 + $0x88] sm:$0xf]
      %v2560 = vld [vmem:[%s2535 + $0x90] sm:$0xf]
      %v2561 = vld [vmem:[%s2535 + $0x94] sm:$0xf]
      %v2562 = vld [vmem:[%s2535 + $0x9c] sm:$0xf]
      %v2563 = vld [vmem:[%s2535 + $0xa0] sm:$0xf]
      %v2564 = vld [vmem:[%s2535 + $0xa8] sm:$0xf]
      %v2565 = vld [vmem:[%s2535 + $0xac] sm:$0xf]
      %v2566 = vld [vmem:[%s2535 + $0xb4] sm:$0xf]
      %v2567 = vld [vmem:[%s2535 + $0xb8] sm:$0xf]
      %s2568 = scalar_lea.vmem %s2, 48
      %v2569 = vld [vmem:[%s2568] sm:$0xf]
      %v2570 = vld [vmem:[%s2568 + $0x4] sm:$0xf]
      %v2571 = vld [vmem:[%s2568 + $0x8] sm:$0xf]
      %v2572 = vld [vmem:[%s2568 + $0xc] sm:$0xf]
      %v2605 = vunpack.c.l.b16 %v2536
      %v2606 = vunpack.c.l.b16 %v2537
      %v2607 = vunpack.c.l.b16 %v2538
      %v2608 = vunpack.c.l.b16 %v2539
      %v2609 = vunpack.c.l.b16 %v2540
      %v2610 = vunpack.c.l.b16 %v2541
      %v2611 = vunpack.c.l.b16 %v2542
      %v2612 = vunpack.c.l.b16 %v2543
      %v2613 = vunpack.c.l.b16 %v2544
      %v2614 = vunpack.c.l.b16 %v2545
      %v2615 = vunpack.c.l.b16 %v2546
      %v2616 = vunpack.c.l.b16 %v2547
      %v2617 = vunpack.c.l.b16 %v2548
      %v2618 = vunpack.c.l.b16 %v2549
      %v2619 = vunpack.c.l.b16 %v2550
      %v2620 = vunpack.c.l.b16 %v2551
      %v2621 = vunpack.c.l.b16 %v2552
      %v2622 = vunpack.c.l.b16 %v2553
      %v2623 = vunpack.c.l.b16 %v2554
      %v2624 = vunpack.c.l.b16 %v2555
      %v2625 = vunpack.c.l.b16 %v2556
      %v2626 = vunpack.c.l.b16 %v2557
      %v2627 = vunpack.c.l.b16 %v2558
      %v2628 = vunpack.c.l.b16 %v2559
      %v2629 = vunpack.c.l.b16 %v2560
      %v2630 = vunpack.c.l.b16 %v2561
      %v2631 = vunpack.c.l.b16 %v2562
      %v2632 = vunpack.c.l.b16 %v2563
      %v2633 = vunpack.c.l.b16 %v2564
      %v2634 = vunpack.c.l.b16 %v2565
      %v2635 = vunpack.c.l.b16 %v2566
      %v2636 = vunpack.c.l.b16 %v2567
      %v2637 = vpack.c.b16 %v2606, %v2605
      %v2638 = vpack.c.b16 %v2608, %v2607
      %v2639 = vpack.c.b16 %v2610, %v2609
      %v2640 = vpack.c.b16 %v2612, %v2611
      %v2641 = vpack.c.b16 %v2614, %v2613
      %v2642 = vpack.c.b16 %v2616, %v2615
      %v2643 = vpack.c.b16 %v2618, %v2617
      %v2644 = vpack.c.b16 %v2620, %v2619
      %v2645 = vpack.c.b16 %v2622, %v2621
      %v2646 = vpack.c.b16 %v2624, %v2623
      %v2647 = vpack.c.b16 %v2626, %v2625
      %v2648 = vpack.c.b16 %v2628, %v2627
      %v2649 = vpack.c.b16 %v2630, %v2629
      %v2650 = vpack.c.b16 %v2632, %v2631
      %v2651 = vpack.c.b16 %v2634, %v2633
      %v2652 = vpack.c.b16 %v2636, %v2635
      %v2657 = vunpack.c.l.b16 %v2569
      %v2658 = vunpack.c.l.b16 %v2570
      %v2659 = vunpack.c.l.b16 %v2571
      %v2660 = vunpack.c.l.b16 %v2572
      %v2661 = vpack.c.b16 %v2658, %v2657
      %v2662 = vpack.c.b16 %v2660, %v2659
      %v2666 = vsel %vm1768, %v2637, 0
      %v2669 = vsel %vm1768, %v2638, 0
      %v2672 = vsel %vm1768, %v2639, 0
      %v2675 = vsel %vm1768, %v2640, 0
      %v2678 = vsel %vm1768, %v2641, 0
      %v2681 = vsel %vm1768, %v2642, 0
      %v2684 = vsel %vm1768, %v2643, 0
      %v2687 = vsel %vm1768, %v2644, 0
      %v2690 = vsel %vm1768, %v2645, 0
      %v2693 = vsel %vm1768, %v2646, 0
      %v2696 = vsel %vm1768, %v2647, 0
      %v2699 = vsel %vm1768, %v2648, 0
      %v2702 = vsel %vm1768, %v2649, 0
      %v2705 = vsel %vm1768, %v2650, 0
      %v2708 = vsel %vm1768, %v2651, 0
      %v2711 = vsel %vm1768, %v2652, 0
      %2713 = vmatpush.bf16.msra.mxu0 0
      %2714 = vmatpush.bf16.msra.mxu0 0
      %2715 = vmatpush.bf16.msra.mxu0 0
      %2716 = vmatpush.bf16.msra.mxu0 0
      %2717 = vmatpush.bf16.msra.mxu0 0
      %2718 = vmatpush.bf16.msra.mxu0 0
      %2719 = vmatpush.bf16.msra.mxu0 %v2662
      %2720 = vmatpush.bf16.msra.mxu0 %v2661
      %2721 = vmatmul.bf16.gmra.mxu0 %v2666
      %v2722 = vpop.f32.mrf.mxu0
      %v2723 = vadd.f32 0.0, %v2722
      %v2724 = vpop.f32.mrf.mxu0
      %v2725 = vadd.f32 0.0, %v2724
      %2726 = vmatmul.bf16.gmra.mxu0 %v2669
      %v2727 = vpop.f32.mrf.mxu0
      %v2728 = vadd.f32 0.0, %v2727
      %v2729 = vpop.f32.mrf.mxu0
      %v2730 = vadd.f32 0.0, %v2729
      %2731 = vmatmul.bf16.gmra.mxu0 %v2672
      %v2732 = vpop.f32.mrf.mxu0
      %v2733 = vadd.f32 0.0, %v2732
      %v2734 = vpop.f32.mrf.mxu0
      %v2735 = vadd.f32 0.0, %v2734
      %2736 = vmatmul.bf16.gmra.mxu0 %v2675
      %v2737 = vpop.f32.mrf.mxu0
      %v2738 = vadd.f32 0.0, %v2737
      %v2739 = vpop.f32.mrf.mxu0
      %v2740 = vadd.f32 0.0, %v2739
      %2741 = vmatmul.bf16.gmra.mxu0 %v2678
      %v2742 = vpop.f32.mrf.mxu0
      %v2743 = vadd.f32 0.0, %v2742
      %v2744 = vpop.f32.mrf.mxu0
      %v2745 = vadd.f32 0.0, %v2744
      %2746 = vmatmul.bf16.gmra.mxu0 %v2681
      %v2747 = vpop.f32.mrf.mxu0
      %v2748 = vadd.f32 0.0, %v2747
      %v2749 = vpop.f32.mrf.mxu0
      %v2750 = vadd.f32 0.0, %v2749
      %2751 = vmatmul.bf16.gmra.mxu0 %v2684
      %v2752 = vpop.f32.mrf.mxu0
      %v2753 = vadd.f32 0.0, %v2752
      %v2754 = vpop.f32.mrf.mxu0
      %v2755 = vadd.f32 0.0, %v2754
      %2756 = vmatmul.bf16.gmra.mxu0 %v2687
      %v2757 = vpop.f32.mrf.mxu0
      %v2758 = vadd.f32 0.0, %v2757
      %v2759 = vpop.f32.mrf.mxu0
      %v2760 = vadd.f32 0.0, %v2759
      %2761 = vmatmul.bf16.gmra.mxu0 %v2690
      %v2762 = vpop.f32.mrf.mxu0
      %v2763 = vadd.f32 0.0, %v2762
      %v2764 = vpop.f32.mrf.mxu0
      %v2765 = vadd.f32 0.0, %v2764
      %2766 = vmatmul.bf16.gmra.mxu0 %v2693
      %v2767 = vpop.f32.mrf.mxu0
      %v2768 = vadd.f32 0.0, %v2767
      %v2769 = vpop.f32.mrf.mxu0
      %v2770 = vadd.f32 0.0, %v2769
      %2771 = vmatmul.bf16.gmra.mxu0 %v2696
      %v2772 = vpop.f32.mrf.mxu0
      %v2773 = vadd.f32 0.0, %v2772
      %v2774 = vpop.f32.mrf.mxu0
      %v2775 = vadd.f32 0.0, %v2774
      %2776 = vmatmul.bf16.gmra.mxu0 %v2699
      %v2777 = vpop.f32.mrf.mxu0
      %v2778 = vadd.f32 0.0, %v2777
      %v2779 = vpop.f32.mrf.mxu0
      %v2780 = vadd.f32 0.0, %v2779
      %2781 = vmatmul.bf16.gmra.mxu0 %v2702
      %v2782 = vpop.f32.mrf.mxu0
      %v2783 = vadd.f32 0.0, %v2782
      %v2784 = vpop.f32.mrf.mxu0
      %v2785 = vadd.f32 0.0, %v2784
      %2786 = vmatmul.bf16.gmra.mxu0 %v2705
      %v2787 = vpop.f32.mrf.mxu0
      %v2788 = vadd.f32 0.0, %v2787
      %v2789 = vpop.f32.mrf.mxu0
      %v2790 = vadd.f32 0.0, %v2789
      %2791 = vmatmul.bf16.gmra.mxu0 %v2708
      %v2792 = vpop.f32.mrf.mxu0
      %v2793 = vadd.f32 0.0, %v2792
      %v2794 = vpop.f32.mrf.mxu0
      %v2795 = vadd.f32 0.0, %v2794
      %2796 = vmatmul.bf16.gmra.mxu0 %v2711
      %v2797 = vpop.f32.mrf.mxu0
      %v2798 = vadd.f32 0.0, %v2797
      %v2799 = vpop.f32.mrf.mxu0
      %v2800 = vadd.f32 0.0, %v2799
      %2801 = vdwg.mxu0
      %v2802 = vadd.f32 %v2500, %v2723
      %v2803 = vadd.f32 %v2501, %v2725
      %v2804 = vadd.f32 %v2502, %v2728
      %v2805 = vadd.f32 %v2503, %v2730
      %v2806 = vadd.f32 %v2504, %v2733
      %v2807 = vadd.f32 %v2505, %v2735
      %v2808 = vadd.f32 %v2506, %v2738
      %v2809 = vadd.f32 %v2507, %v2740
      %v2810 = vadd.f32 %v2508, %v2743
      %v2811 = vadd.f32 %v2509, %v2745
      %v2812 = vadd.f32 %v2510, %v2748
      %v2813 = vadd.f32 %v2511, %v2750
      %v2814 = vadd.f32 %v2512, %v2753
      %v2815 = vadd.f32 %v2513, %v2755
      %v2816 = vadd.f32 %v2514, %v2758
      %v2817 = vadd.f32 %v2515, %v2760
      %v2818 = vadd.f32 %v2516, %v2763
      %v2819 = vadd.f32 %v2517, %v2765
      %v2820 = vadd.f32 %v2518, %v2768
      %v2821 = vadd.f32 %v2519, %v2770
      %v2822 = vadd.f32 %v2520, %v2773
      %v2823 = vadd.f32 %v2521, %v2775
      %v2824 = vadd.f32 %v2522, %v2778
      %v2825 = vadd.f32 %v2523, %v2780
      %v2826 = vadd.f32 %v2524, %v2783
      %v2827 = vadd.f32 %v2525, %v2785
      %v2828 = vadd.f32 %v2526, %v2788
      %v2829 = vadd.f32 %v2527, %v2790
      %v2830 = vadd.f32 %v2528, %v2793
      %v2831 = vadd.f32 %v2529, %v2795
      %v2832 = vadd.f32 %v2530, %v2798
      %v2833 = vadd.f32 %v2531, %v2800
      %v2834 = vld [vmem:[%s2535] sm:$0xf]
      %v2835 = vld [vmem:[%s2535 + $0x4] sm:$0xf]
      %v2836 = vld [vmem:[%s2535 + $0x8] sm:$0x1]
      %v2837 = vld [vmem:[%s2535 + $0xc] sm:$0xf]
      %v2838 = vld [vmem:[%s2535 + $0x10] sm:$0xf]
      %v2839 = vld [vmem:[%s2535 + $0x14] sm:$0x1]
      %v2840 = vld [vmem:[%s2535 + $0x18] sm:$0xf]
      %v2841 = vld [vmem:[%s2535 + $0x1c] sm:$0xf]
      %v2842 = vld [vmem:[%s2535 + $0x20] sm:$0x1]
      %v2843 = vld [vmem:[%s2535 + $0x24] sm:$0xf]
      %v2844 = vld [vmem:[%s2535 + $0x28] sm:$0xf]
      %v2845 = vld [vmem:[%s2535 + $0x2c] sm:$0x1]
      %v2846 = vld [vmem:[%s2535 + $0x30] sm:$0xf]
      %v2847 = vld [vmem:[%s2535 + $0x34] sm:$0xf]
      %v2848 = vld [vmem:[%s2535 + $0x38] sm:$0x1]
      %v2849 = vld [vmem:[%s2535 + $0x3c] sm:$0xf]
      %v2850 = vld [vmem:[%s2535 + $0x40] sm:$0xf]
      %v2851 = vld [vmem:[%s2535 + $0x44] sm:$0x1]
      %v2852 = vld [vmem:[%s2535 + $0x48] sm:$0xf]
      %v2853 = vld [vmem:[%s2535 + $0x4c] sm:$0xf]
      %v2854 = vld [vmem:[%s2535 + $0x50] sm:$0x1]
      %v2855 = vld [vmem:[%s2535 + $0x54] sm:$0xf]
      %v2856 = vld [vmem:[%s2535 + $0x58] sm:$0xf]
      %v2857 = vld [vmem:[%s2535 + $0x5c] sm:$0x1]
      %v2858 = vld [vmem:[%s2535 + $0x60] sm:$0xf]
      %v2859 = vld [vmem:[%s2535 + $0x64] sm:$0xf]
      %v2860 = vld [vmem:[%s2535 + $0x68] sm:$0x1]
      %v2861 = vld [vmem:[%s2535 + $0x6c] sm:$0xf]
      %v2862 = vld [vmem:[%s2535 + $0x70] sm:$0xf]
      %v2863 = vld [vmem:[%s2535 + $0x74] sm:$0x1]
      %v2864 = vld [vmem:[%s2535 + $0x78] sm:$0xf]
      %v2865 = vld [vmem:[%s2535 + $0x7c] sm:$0xf]
      %v2866 = vld [vmem:[%s2535 + $0x80] sm:$0x1]
      %v2867 = vld [vmem:[%s2535 + $0x84] sm:$0xf]
      %v2868 = vld [vmem:[%s2535 + $0x88] sm:$0xf]
      %v2869 = vld [vmem:[%s2535 + $0x8c] sm:$0x1]
      %v2870 = vld [vmem:[%s2535 + $0x90] sm:$0xf]
      %v2871 = vld [vmem:[%s2535 + $0x94] sm:$0xf]
      %v2872 = vld [vmem:[%s2535 + $0x98] sm:$0x1]
      %v2873 = vld [vmem:[%s2535 + $0x9c] sm:$0xf]
      %v2874 = vld [vmem:[%s2535 + $0xa0] sm:$0xf]
      %v2875 = vld [vmem:[%s2535 + $0xa4] sm:$0x1]
      %v2876 = vld [vmem:[%s2535 + $0xa8] sm:$0xf]
      %v2877 = vld [vmem:[%s2535 + $0xac] sm:$0xf]
      %v2878 = vld [vmem:[%s2535 + $0xb0] sm:$0x1]
      %v2879 = vld [vmem:[%s2535 + $0xb4] sm:$0xf]
      %v2880 = vld [vmem:[%s2535 + $0xb8] sm:$0xf]
      %v2881 = vld [vmem:[%s2535 + $0xbc] sm:$0x1]
      %v2883 = vshrl.u32 %v2834, 16
      %v2885 = vrot.slane %v2883, 4
      %v2886 = vshll.u32 %v2834, 16
      %v2888 = vrot.slane %v2886, 5
      %v2889 = vor.u32 %v2885, %v2888
      %v2890 = vrot.slane %v2889, 4
      %v2892 = vshll.u32 %v2835, 16
      %v2894 = vrot.slane %v2892, 5
      %v2895 = vsel %vm1318, %v2890, %v2894
      %v2896 = vshrl.u32 %v2835, 16
      %v2898 = vrot.slane %v2896, 4
      %v2899 = vor.u32 %v2898, %v2894
      %v2900 = vrot.slane %v2899, 4
      %v2902 = vshll.u32 %v2836, 16
      %v2904 = vrot.slane %v2902, 5
      %v2905 = vsel %vm1318, %v2900, %v2904
      %v2907 = vshrl.u32 %v2837, 16
      %v2909 = vrot.slane %v2907, 4
      %v2910 = vshll.u32 %v2837, 16
      %v2912 = vrot.slane %v2910, 5
      %v2913 = vor.u32 %v2909, %v2912
      %v2914 = vrot.slane %v2913, 4
      %v2916 = vshll.u32 %v2838, 16
      %v2918 = vrot.slane %v2916, 5
      %v2919 = vsel %vm1318, %v2914, %v2918
      %v2920 = vshrl.u32 %v2838, 16
      %v2922 = vrot.slane %v2920, 4
      %v2923 = vor.u32 %v2922, %v2918
      %v2924 = vrot.slane %v2923, 4
      %v2926 = vshll.u32 %v2839, 16
      %v2928 = vrot.slane %v2926, 5
      %v2929 = vsel %vm1318, %v2924, %v2928
      %v2931 = vshrl.u32 %v2840, 16
      %v2933 = vrot.slane %v2931, 4
      %v2934 = vshll.u32 %v2840, 16
      %v2936 = vrot.slane %v2934, 5
      %v2937 = vor.u32 %v2933, %v2936
      %v2938 = vrot.slane %v2937, 4
      %v2940 = vshll.u32 %v2841, 16
      %v2942 = vrot.slane %v2940, 5
      %v2943 = vsel %vm1318, %v2938, %v2942
      %v2944 = vshrl.u32 %v2841, 16
      %v2946 = vrot.slane %v2944, 4
      %v2947 = vor.u32 %v2946, %v2942
      %v2948 = vrot.slane %v2947, 4
      %v2950 = vshll.u32 %v2842, 16
      %v2952 = vrot.slane %v2950, 5
      %v2953 = vsel %vm1318, %v2948, %v2952
      %v2955 = vshrl.u32 %v2843, 16
      %v2957 = vrot.slane %v2955, 4
      %v2958 = vshll.u32 %v2843, 16
      %v2960 = vrot.slane %v2958, 5
      %v2961 = vor.u32 %v2957, %v2960
      %v2962 = vrot.slane %v2961, 4
      %v2964 = vshll.u32 %v2844, 16
      %v2966 = vrot.slane %v2964, 5
      %v2967 = vsel %vm1318, %v2962, %v2966
      %v2968 = vshrl.u32 %v2844, 16
      %v2970 = vrot.slane %v2968, 4
      %v2971 = vor.u32 %v2970, %v2966
      %v2972 = vrot.slane %v2971, 4
      %v2974 = vshll.u32 %v2845, 16
      %v2976 = vrot.slane %v2974, 5
      %v2977 = vsel %vm1318, %v2972, %v2976
      %v2979 = vshrl.u32 %v2846, 16
      %v2981 = vrot.slane %v2979, 4
      %v2982 = vshll.u32 %v2846, 16
      %v2984 = vrot.slane %v2982, 5
      %v2985 = vor.u32 %v2981, %v2984
      %v2986 = vrot.slane %v2985, 4
      %v2988 = vshll.u32 %v2847, 16
      %v2990 = vrot.slane %v2988, 5
      %v2991 = vsel %vm1318, %v2986, %v2990
      %v2992 = vshrl.u32 %v2847, 16
      %v2994 = vrot.slane %v2992, 4
      %v2995 = vor.u32 %v2994, %v2990
      %v2996 = vrot.slane %v2995, 4
      %v2998 = vshll.u32 %v2848, 16
      %v3000 = vrot.slane %v2998, 5
      %v3001 = vsel %vm1318, %v2996, %v3000
      %v3003 = vshrl.u32 %v2849, 16
      %v3005 = vrot.slane %v3003, 4
      %v3006 = vshll.u32 %v2849, 16
      %v3008 = vrot.slane %v3006, 5
      %v3009 = vor.u32 %v3005, %v3008
      %v3010 = vrot.slane %v3009, 4
      %v3012 = vshll.u32 %v2850, 16
      %v3014 = vrot.slane %v3012, 5
      %v3015 = vsel %vm1318, %v3010, %v3014
      %v3016 = vshrl.u32 %v2850, 16
      %v3018 = vrot.slane %v3016, 4
      %v3019 = vor.u32 %v3018, %v3014
      %v3020 = vrot.slane %v3019, 4
      %v3022 = vshll.u32 %v2851, 16
      %v3024 = vrot.slane %v3022, 5
      %v3025 = vsel %vm1318, %v3020, %v3024
      %v3027 = vshrl.u32 %v2852, 16
      %v3029 = vrot.slane %v3027, 4
      %v3030 = vshll.u32 %v2852, 16
      %v3032 = vrot.slane %v3030, 5
      %v3033 = vor.u32 %v3029, %v3032
      %v3034 = vrot.slane %v3033, 4
      %v3036 = vshll.u32 %v2853, 16
      %v3038 = vrot.slane %v3036, 5
      %v3039 = vsel %vm1318, %v3034, %v3038
      %v3040 = vshrl.u32 %v2853, 16
      %v3042 = vrot.slane %v3040, 4
      %v3043 = vor.u32 %v3042, %v3038
      %v3044 = vrot.slane %v3043, 4
      %v3046 = vshll.u32 %v2854, 16
      %v3048 = vrot.slane %v3046, 5
      %v3049 = vsel %vm1318, %v3044, %v3048
      %v3051 = vshrl.u32 %v2855, 16
      %v3053 = vrot.slane %v3051, 4
      %v3054 = vshll.u32 %v2855, 16
      %v3056 = vrot.slane %v3054, 5
      %v3057 = vor.u32 %v3053, %v3056
      %v3058 = vrot.slane %v3057, 4
      %v3060 = vshll.u32 %v2856, 16
      %v3062 = vrot.slane %v3060, 5
      %v3063 = vsel %vm1318, %v3058, %v3062
      %v3064 = vshrl.u32 %v2856, 16
      %v3066 = vrot.slane %v3064, 4
      %v3067 = vor.u32 %v3066, %v3062
      %v3068 = vrot.slane %v3067, 4
      %v3070 = vshll.u32 %v2857, 16
      %v3072 = vrot.slane %v3070, 5
      %v3073 = vsel %vm1318, %v3068, %v3072
      %v3075 = vshrl.u32 %v2858, 16
      %v3077 = vrot.slane %v3075, 4
      %v3078 = vshll.u32 %v2858, 16
      %v3080 = vrot.slane %v3078, 5
      %v3081 = vor.u32 %v3077, %v3080
      %v3082 = vrot.slane %v3081, 4
      %v3084 = vshll.u32 %v2859, 16
      %v3086 = vrot.slane %v3084, 5
      %v3087 = vsel %vm1318, %v3082, %v3086
      %v3088 = vshrl.u32 %v2859, 16
      %v3090 = vrot.slane %v3088, 4
      %v3091 = vor.u32 %v3090, %v3086
      %v3092 = vrot.slane %v3091, 4
      %v3094 = vshll.u32 %v2860, 16
      %v3096 = vrot.slane %v3094, 5
      %v3097 = vsel %vm1318, %v3092, %v3096
      %v3099 = vshrl.u32 %v2861, 16
      %v3101 = vrot.slane %v3099, 4
      %v3102 = vshll.u32 %v2861, 16
      %v3104 = vrot.slane %v3102, 5
      %v3105 = vor.u32 %v3101, %v3104
      %v3106 = vrot.slane %v3105, 4
      %v3108 = vshll.u32 %v2862, 16
      %v3110 = vrot.slane %v3108, 5
      %v3111 = vsel %vm1318, %v3106, %v3110
      %v3112 = vshrl.u32 %v2862, 16
      %v3114 = vrot.slane %v3112, 4
      %v3115 = vor.u32 %v3114, %v3110
      %v3116 = vrot.slane %v3115, 4
      %v3118 = vshll.u32 %v2863, 16
      %v3120 = vrot.slane %v3118, 5
      %v3121 = vsel %vm1318, %v3116, %v3120
      %v3123 = vshrl.u32 %v2864, 16
      %v3125 = vrot.slane %v3123, 4
      %v3126 = vshll.u32 %v2864, 16
      %v3128 = vrot.slane %v3126, 5
      %v3129 = vor.u32 %v3125, %v3128
      %v3130 = vrot.slane %v3129, 4
      %v3132 = vshll.u32 %v2865, 16
      %v3134 = vrot.slane %v3132, 5
      %v3135 = vsel %vm1318, %v3130, %v3134
      %v3136 = vshrl.u32 %v2865, 16
      %v3138 = vrot.slane %v3136, 4
      %v3139 = vor.u32 %v3138, %v3134
      %v3140 = vrot.slane %v3139, 4
      %v3142 = vshll.u32 %v2866, 16
      %v3144 = vrot.slane %v3142, 5
      %v3145 = vsel %vm1318, %v3140, %v3144
      %v3147 = vshrl.u32 %v2867, 16
      %v3149 = vrot.slane %v3147, 4
      %v3150 = vshll.u32 %v2867, 16
      %v3152 = vrot.slane %v3150, 5
      %v3153 = vor.u32 %v3149, %v3152
      %v3154 = vrot.slane %v3153, 4
      %v3156 = vshll.u32 %v2868, 16
      %v3158 = vrot.slane %v3156, 5
      %v3159 = vsel %vm1318, %v3154, %v3158
      %v3160 = vshrl.u32 %v2868, 16
      %v3162 = vrot.slane %v3160, 4
      %v3163 = vor.u32 %v3162, %v3158
      %v3164 = vrot.slane %v3163, 4
      %v3166 = vshll.u32 %v2869, 16
      %v3168 = vrot.slane %v3166, 5
      %v3169 = vsel %vm1318, %v3164, %v3168
      %v3171 = vshrl.u32 %v2870, 16
      %v3173 = vrot.slane %v3171, 4
      %v3174 = vshll.u32 %v2870, 16
      %v3176 = vrot.slane %v3174, 5
      %v3177 = vor.u32 %v3173, %v3176
      %v3178 = vrot.slane %v3177, 4
      %v3180 = vshll.u32 %v2871, 16
      %v3182 = vrot.slane %v3180, 5
      %v3183 = vsel %vm1318, %v3178, %v3182
      %v3184 = vshrl.u32 %v2871, 16
      %v3186 = vrot.slane %v3184, 4
      %v3187 = vor.u32 %v3186, %v3182
      %v3188 = vrot.slane %v3187, 4
      %v3190 = vshll.u32 %v2872, 16
      %v3192 = vrot.slane %v3190, 5
      %v3193 = vsel %vm1318, %v3188, %v3192
      %v3195 = vshrl.u32 %v2873, 16
      %v3197 = vrot.slane %v3195, 4
      %v3198 = vshll.u32 %v2873, 16
      %v3200 = vrot.slane %v3198, 5
      %v3201 = vor.u32 %v3197, %v3200
      %v3202 = vrot.slane %v3201, 4
      %v3204 = vshll.u32 %v2874, 16
      %v3206 = vrot.slane %v3204, 5
      %v3207 = vsel %vm1318, %v3202, %v3206
      %v3208 = vshrl.u32 %v2874, 16
      %v3210 = vrot.slane %v3208, 4
      %v3211 = vor.u32 %v3210, %v3206
      %v3212 = vrot.slane %v3211, 4
      %v3214 = vshll.u32 %v2875, 16
      %v3216 = vrot.slane %v3214, 5
      %v3217 = vsel %vm1318, %v3212, %v3216
      %v3219 = vshrl.u32 %v2876, 16
      %v3221 = vrot.slane %v3219, 4
      %v3222 = vshll.u32 %v2876, 16
      %v3224 = vrot.slane %v3222, 5
      %v3225 = vor.u32 %v3221, %v3224
      %v3226 = vrot.slane %v3225, 4
      %v3228 = vshll.u32 %v2877, 16
      %v3230 = vrot.slane %v3228, 5
      %v3231 = vsel %vm1318, %v3226, %v3230
      %v3232 = vshrl.u32 %v2877, 16
      %v3234 = vrot.slane %v3232, 4
      %v3235 = vor.u32 %v3234, %v3230
      %v3236 = vrot.slane %v3235, 4
      %v3238 = vshll.u32 %v2878, 16
      %v3240 = vrot.slane %v3238, 5
      %v3241 = vsel %vm1318, %v3236, %v3240
      %v3243 = vshrl.u32 %v2879, 16
      %v3245 = vrot.slane %v3243, 4
      %v3246 = vshll.u32 %v2879, 16
      %v3248 = vrot.slane %v3246, 5
      %v3249 = vor.u32 %v3245, %v3248
      %v3250 = vrot.slane %v3249, 4
      %v3252 = vshll.u32 %v2880, 16
      %v3254 = vrot.slane %v3252, 5
      %v3255 = vsel %vm1318, %v3250, %v3254
      %v3256 = vshrl.u32 %v2880, 16
      %v3258 = vrot.slane %v3256, 4
      %v3259 = vor.u32 %v3258, %v3254
      %v3260 = vrot.slane %v3259, 4
      %v3262 = vshll.u32 %v2881, 16
      %v3264 = vrot.slane %v3262, 5
      %v3265 = vsel %vm1318, %v3260, %v3264
      %s3266 = scalar_lea.vmem %s2, 64
      %v3267 = vld [vmem:[%s3266] sm:$0xf]
      %v3268 = vld [vmem:[%s3266 + $0x4] sm:$0xf]
      %v3269 = vld [vmem:[%s3266 + $0x8] sm:$0xf]
      %v3270 = vld [vmem:[%s3266 + $0xc] sm:$0xf]
      %v3271 = vunpack.c.l.b16 %v2895
      %v3272 = vunpack.c.l.b16 %v2905
      %v3273 = vunpack.c.l.b16 %v2919
      %v3274 = vunpack.c.l.b16 %v2929
      %v3275 = vunpack.c.l.b16 %v2943
      %v3276 = vunpack.c.l.b16 %v2953
      %v3277 = vunpack.c.l.b16 %v2967
      %v3278 = vunpack.c.l.b16 %v2977
      %v3279 = vunpack.c.l.b16 %v2991
      %v3280 = vunpack.c.l.b16 %v3001
      %v3281 = vunpack.c.l.b16 %v3015
      %v3282 = vunpack.c.l.b16 %v3025
      %v3283 = vunpack.c.l.b16 %v3039
      %v3284 = vunpack.c.l.b16 %v3049
      %v3285 = vunpack.c.l.b16 %v3063
      %v3286 = vunpack.c.l.b16 %v3073
      %v3287 = vunpack.c.l.b16 %v3087
      %v3288 = vunpack.c.l.b16 %v3097
      %v3289 = vunpack.c.l.b16 %v3111
      %v3290 = vunpack.c.l.b16 %v3121
      %v3291 = vunpack.c.l.b16 %v3135
      %v3292 = vunpack.c.l.b16 %v3145
      %v3293 = vunpack.c.l.b16 %v3159
      %v3294 = vunpack.c.l.b16 %v3169
      %v3295 = vunpack.c.l.b16 %v3183
      %v3296 = vunpack.c.l.b16 %v3193
      %v3297 = vunpack.c.l.b16 %v3207
      %v3298 = vunpack.c.l.b16 %v3217
      %v3299 = vunpack.c.l.b16 %v3231
      %v3300 = vunpack.c.l.b16 %v3241
      %v3301 = vunpack.c.l.b16 %v3255
      %v3302 = vunpack.c.l.b16 %v3265
      %v3303 = vpack.c.b16 %v3272, %v3271
      %v3304 = vpack.c.b16 %v3274, %v3273
      %v3305 = vpack.c.b16 %v3276, %v3275
      %v3306 = vpack.c.b16 %v3278, %v3277
      %v3307 = vpack.c.b16 %v3280, %v3279
      %v3308 = vpack.c.b16 %v3282, %v3281
      %v3309 = vpack.c.b16 %v3284, %v3283
      %v3310 = vpack.c.b16 %v3286, %v3285
      %v3311 = vpack.c.b16 %v3288, %v3287
      %v3312 = vpack.c.b16 %v3290, %v3289
      %v3313 = vpack.c.b16 %v3292, %v3291
      %v3314 = vpack.c.b16 %v3294, %v3293
      %v3315 = vpack.c.b16 %v3296, %v3295
      %v3316 = vpack.c.b16 %v3298, %v3297
      %v3317 = vpack.c.b16 %v3300, %v3299
      %v3318 = vpack.c.b16 %v3302, %v3301
      %v3323 = vunpack.c.l.b16 %v3267
      %v3324 = vunpack.c.l.b16 %v3268
      %v3325 = vunpack.c.l.b16 %v3269
      %v3326 = vunpack.c.l.b16 %v3270
      %v3327 = vpack.c.b16 %v3324, %v3323
      %v3328 = vpack.c.b16 %v3326, %v3325
      %v3332 = vsel %vm1768, %v3303, 0
      %v3335 = vsel %vm1768, %v3304, 0
      %v3338 = vsel %vm1768, %v3305, 0
      %v3341 = vsel %vm1768, %v3306, 0
      %v3344 = vsel %vm1768, %v3307, 0
      %v3347 = vsel %vm1768, %v3308, 0
      %v3350 = vsel %vm1768, %v3309, 0
      %v3353 = vsel %vm1768, %v3310, 0
      %v3356 = vsel %vm1768, %v3311, 0
      %v3359 = vsel %vm1768, %v3312, 0
      %v3362 = vsel %vm1768, %v3313, 0
      %v3365 = vsel %vm1768, %v3314, 0
      %v3368 = vsel %vm1768, %v3315, 0
      %v3371 = vsel %vm1768, %v3316, 0
      %v3374 = vsel %vm1768, %v3317, 0
      %v3377 = vsel %vm1768, %v3318, 0
      %3379 = vmatpush.bf16.msra.mxu0 0
      %3380 = vmatpush.bf16.msra.mxu0 0
      %3381 = vmatpush.bf16.msra.mxu0 0
      %3382 = vmatpush.bf16.msra.mxu0 0
      %3383 = vmatpush.bf16.msra.mxu0 0
      %3384 = vmatpush.bf16.msra.mxu0 0
      %3385 = vmatpush.bf16.msra.mxu0 %v3328
      %3386 = vmatpush.bf16.msra.mxu0 %v3327
      %3387 = vmatmul.bf16.gmra.mxu0 %v3332
      %v3388 = vpop.f32.mrf.mxu0
      %v3389 = vadd.f32 0.0, %v3388
      %v3390 = vpop.f32.mrf.mxu0
      %v3391 = vadd.f32 0.0, %v3390
      %3392 = vmatmul.bf16.gmra.mxu0 %v3335
      %v3393 = vpop.f32.mrf.mxu0
      %v3394 = vadd.f32 0.0, %v3393
      %v3395 = vpop.f32.mrf.mxu0
      %v3396 = vadd.f32 0.0, %v3395
      %3397 = vmatmul.bf16.gmra.mxu0 %v3338
      %v3398 = vpop.f32.mrf.mxu0
      %v3399 = vadd.f32 0.0, %v3398
      %v3400 = vpop.f32.mrf.mxu0
      %v3401 = vadd.f32 0.0, %v3400
      %3402 = vmatmul.bf16.gmra.mxu0 %v3341
      %v3403 = vpop.f32.mrf.mxu0
      %v3404 = vadd.f32 0.0, %v3403
      %v3405 = vpop.f32.mrf.mxu0
      %v3406 = vadd.f32 0.0, %v3405
      %3407 = vmatmul.bf16.gmra.mxu0 %v3344
      %v3408 = vpop.f32.mrf.mxu0
      %v3409 = vadd.f32 0.0, %v3408
      %v3410 = vpop.f32.mrf.mxu0
      %v3411 = vadd.f32 0.0, %v3410
      %3412 = vmatmul.bf16.gmra.mxu0 %v3347
      %v3413 = vpop.f32.mrf.mxu0
      %v3414 = vadd.f32 0.0, %v3413
      %v3415 = vpop.f32.mrf.mxu0
      %v3416 = vadd.f32 0.0, %v3415
      %3417 = vmatmul.bf16.gmra.mxu0 %v3350
      %v3418 = vpop.f32.mrf.mxu0
      %v3419 = vadd.f32 0.0, %v3418
      %v3420 = vpop.f32.mrf.mxu0
      %v3421 = vadd.f32 0.0, %v3420
      %3422 = vmatmul.bf16.gmra.mxu0 %v3353
      %v3423 = vpop.f32.mrf.mxu0
      %v3424 = vadd.f32 0.0, %v3423
      %v3425 = vpop.f32.mrf.mxu0
      %v3426 = vadd.f32 0.0, %v3425
      %3427 = vmatmul.bf16.gmra.mxu0 %v3356
      %v3428 = vpop.f32.mrf.mxu0
      %v3429 = vadd.f32 0.0, %v3428
      %v3430 = vpop.f32.mrf.mxu0
      %v3431 = vadd.f32 0.0, %v3430
      %3432 = vmatmul.bf16.gmra.mxu0 %v3359
      %v3433 = vpop.f32.mrf.mxu0
      %v3434 = vadd.f32 0.0, %v3433
      %v3435 = vpop.f32.mrf.mxu0
      %v3436 = vadd.f32 0.0, %v3435
      %3437 = vmatmul.bf16.gmra.mxu0 %v3362
      %v3438 = vpop.f32.mrf.mxu0
      %v3439 = vadd.f32 0.0, %v3438
      %v3440 = vpop.f32.mrf.mxu0
      %v3441 = vadd.f32 0.0, %v3440
      %3442 = vmatmul.bf16.gmra.mxu0 %v3365
      %v3443 = vpop.f32.mrf.mxu0
      %v3444 = vadd.f32 0.0, %v3443
      %v3445 = vpop.f32.mrf.mxu0
      %v3446 = vadd.f32 0.0, %v3445
      %3447 = vmatmul.bf16.gmra.mxu0 %v3368
      %v3448 = vpop.f32.mrf.mxu0
      %v3449 = vadd.f32 0.0, %v3448
      %v3450 = vpop.f32.mrf.mxu0
      %v3451 = vadd.f32 0.0, %v3450
      %3452 = vmatmul.bf16.gmra.mxu0 %v3371
      %v3453 = vpop.f32.mrf.mxu0
      %v3454 = vadd.f32 0.0, %v3453
      %v3455 = vpop.f32.mrf.mxu0
      %v3456 = vadd.f32 0.0, %v3455
      %3457 = vmatmul.bf16.gmra.mxu0 %v3374
      %v3458 = vpop.f32.mrf.mxu0
      %v3459 = vadd.f32 0.0, %v3458
      %v3460 = vpop.f32.mrf.mxu0
      %v3461 = vadd.f32 0.0, %v3460
      %3462 = vmatmul.bf16.gmra.mxu0 %v3377
      %v3463 = vpop.f32.mrf.mxu0
      %v3464 = vadd.f32 0.0, %v3463
      %v3465 = vpop.f32.mrf.mxu0
      %v3466 = vadd.f32 0.0, %v3465
      %3467 = vdwg.mxu0
      %v3468 = vadd.f32 %v2802, %v3389
      %v3469 = vadd.f32 %v2803, %v3391
      %v3470 = vadd.f32 %v2804, %v3394
      %v3471 = vadd.f32 %v2805, %v3396
      %v3472 = vadd.f32 %v2806, %v3399
      %v3473 = vadd.f32 %v2807, %v3401
      %v3474 = vadd.f32 %v2808, %v3404
      %v3475 = vadd.f32 %v2809, %v3406
      %v3476 = vadd.f32 %v2810, %v3409
      %v3477 = vadd.f32 %v2811, %v3411
      %v3478 = vadd.f32 %v2812, %v3414
      %v3479 = vadd.f32 %v2813, %v3416
      %v3480 = vadd.f32 %v2814, %v3419
      %v3481 = vadd.f32 %v2815, %v3421
      %v3482 = vadd.f32 %v2816, %v3424
      %v3483 = vadd.f32 %v2817, %v3426
      %v3484 = vadd.f32 %v2818, %v3429
      %v3485 = vadd.f32 %v2819, %v3431
      %v3486 = vadd.f32 %v2820, %v3434
      %v3487 = vadd.f32 %v2821, %v3436
      %v3488 = vadd.f32 %v2822, %v3439
      %v3489 = vadd.f32 %v2823, %v3441
      %v3490 = vadd.f32 %v2824, %v3444
      %v3491 = vadd.f32 %v2825, %v3446
      %v3492 = vadd.f32 %v2826, %v3449
      %v3493 = vadd.f32 %v2827, %v3451
      %v3494 = vadd.f32 %v2828, %v3454
      %v3495 = vadd.f32 %v2829, %v3456
      %v3496 = vadd.f32 %v2830, %v3459
      %v3497 = vadd.f32 %v2831, %v3461
      %v3498 = vadd.f32 %v2832, %v3464
      %v3499 = vadd.f32 %v2833, %v3466
      %v3500 = vld [vmem:[%s2535] sm:$0xe]
      %v3501 = vld [vmem:[%s2535 + $0xc] sm:$0xe]
      %v3502 = vld [vmem:[%s2535 + $0x18] sm:$0xe]
      %v3503 = vld [vmem:[%s2535 + $0x24] sm:$0xe]
      %v3504 = vld [vmem:[%s2535 + $0x30] sm:$0xe]
      %v3505 = vld [vmem:[%s2535 + $0x3c] sm:$0xe]
      %v3506 = vld [vmem:[%s2535 + $0x48] sm:$0xe]
      %v3507 = vld [vmem:[%s2535 + $0x54] sm:$0xe]
      %v3508 = vld [vmem:[%s2535 + $0x60] sm:$0xe]
      %v3509 = vld [vmem:[%s2535 + $0x6c] sm:$0xe]
      %v3510 = vld [vmem:[%s2535 + $0x78] sm:$0xe]
      %v3511 = vld [vmem:[%s2535 + $0x84] sm:$0xe]
      %v3512 = vld [vmem:[%s2535 + $0x90] sm:$0xe]
      %v3513 = vld [vmem:[%s2535 + $0x9c] sm:$0xe]
      %v3514 = vld [vmem:[%s2535 + $0xa8] sm:$0xe]
      %v3515 = vld [vmem:[%s2535 + $0xb4] sm:$0xe]
      %v3564 = vrot.slane %v3500, 5
      %v3565 = vrot.slane %v3564, 4
      %v3566 = vrot.slane %v2835, 5
      %v3567 = vsel %vm2185, %v3565, %v3566
      %v3568 = vrot.slane %v3566, 4
      %v3569 = vrot.slane %v2836, 5
      %v3570 = vsel %vm2185, %v3568, %v3569
      %v3571 = vrot.slane %v3501, 5
      %v3572 = vrot.slane %v3571, 4
      %v3573 = vrot.slane %v2838, 5
      %v3574 = vsel %vm2185, %v3572, %v3573
      %v3575 = vrot.slane %v3573, 4
      %v3576 = vrot.slane %v2839, 5
      %v3577 = vsel %vm2185, %v3575, %v3576
      %v3578 = vrot.slane %v3502, 5
      %v3579 = vrot.slane %v3578, 4
      %v3580 = vrot.slane %v2841, 5
      %v3581 = vsel %vm2185, %v3579, %v3580
      %v3582 = vrot.slane %v3580, 4
      %v3583 = vrot.slane %v2842, 5
      %v3584 = vsel %vm2185, %v3582, %v3583
      %v3585 = vrot.slane %v3503, 5
      %v3586 = vrot.slane %v3585, 4
      %v3587 = vrot.slane %v2844, 5
      %v3588 = vsel %vm2185, %v3586, %v3587
      %v3589 = vrot.slane %v3587, 4
      %v3590 = vrot.slane %v2845, 5
      %v3591 = vsel %vm2185, %v3589, %v3590
      %v3592 = vrot.slane %v3504, 5
      %v3593 = vrot.slane %v3592, 4
      %v3594 = vrot.slane %v2847, 5
      %v3595 = vsel %vm2185, %v3593, %v3594
      %v3596 = vrot.slane %v3594, 4
      %v3597 = vrot.slane %v2848, 5
      %v3598 = vsel %vm2185, %v3596, %v3597
      %v3599 = vrot.slane %v3505, 5
      %v3600 = vrot.slane %v3599, 4
      %v3601 = vrot.slane %v2850, 5
      %v3602 = vsel %vm2185, %v3600, %v3601
      %v3603 = vrot.slane %v3601, 4
      %v3604 = vrot.slane %v2851, 5
      %v3605 = vsel %vm2185, %v3603, %v3604
      %v3606 = vrot.slane %v3506, 5
      %v3607 = vrot.slane %v3606, 4
      %v3608 = vrot.slane %v2853, 5
      %v3609 = vsel %vm2185, %v3607, %v3608
      %v3610 = vrot.slane %v3608, 4
      %v3611 = vrot.slane %v2854, 5
      %v3612 = vsel %vm2185, %v3610, %v3611
      %v3613 = vrot.slane %v3507, 5
      %v3614 = vrot.slane %v3613, 4
      %v3615 = vrot.slane %v2856, 5
      %v3616 = vsel %vm2185, %v3614, %v3615
      %v3617 = vrot.slane %v3615, 4
      %v3618 = vrot.slane %v2857, 5
      %v3619 = vsel %vm2185, %v3617, %v3618
      %v3620 = vrot.slane %v3508, 5
      %v3621 = vrot.slane %v3620, 4
      %v3622 = vrot.slane %v2859, 5
      %v3623 = vsel %vm2185, %v3621, %v3622
      %v3624 = vrot.slane %v3622, 4
      %v3625 = vrot.slane %v2860, 5
      %v3626 = vsel %vm2185, %v3624, %v3625
      %v3627 = vrot.slane %v3509, 5
      %v3628 = vrot.slane %v3627, 4
      %v3629 = vrot.slane %v2862, 5
      %v3630 = vsel %vm2185, %v3628, %v3629
      %v3631 = vrot.slane %v3629, 4
      %v3632 = vrot.slane %v2863, 5
      %v3633 = vsel %vm2185, %v3631, %v3632
      %v3634 = vrot.slane %v3510, 5
      %v3635 = vrot.slane %v3634, 4
      %v3636 = vrot.slane %v2865, 5
      %v3637 = vsel %vm2185, %v3635, %v3636
      %v3638 = vrot.slane %v3636, 4
      %v3639 = vrot.slane %v2866, 5
      %v3640 = vsel %vm2185, %v3638, %v3639
      %v3641 = vrot.slane %v3511, 5
      %v3642 = vrot.slane %v3641, 4
      %v3643 = vrot.slane %v2868, 5
      %v3644 = vsel %vm2185, %v3642, %v3643
      %v3645 = vrot.slane %v3643, 4
      %v3646 = vrot.slane %v2869, 5
      %v3647 = vsel %vm2185, %v3645, %v3646
      %v3648 = vrot.slane %v3512, 5
      %v3649 = vrot.slane %v3648, 4
      %v3650 = vrot.slane %v2871, 5
      %v3651 = vsel %vm2185, %v3649, %v3650
      %v3652 = vrot.slane %v3650, 4
      %v3653 = vrot.slane %v2872, 5
      %v3654 = vsel %vm2185, %v3652, %v3653
      %v3655 = vrot.slane %v3513, 5
      %v3656 = vrot.slane %v3655, 4
      %v3657 = vrot.slane %v2874, 5
      %v3658 = vsel %vm2185, %v3656, %v3657
      %v3659 = vrot.slane %v3657, 4
      %v3660 = vrot.slane %v2875, 5
      %v3661 = vsel %vm2185, %v3659, %v3660
      %v3662 = vrot.slane %v3514, 5
      %v3663 = vrot.slane %v3662, 4
      %v3664 = vrot.slane %v2877, 5
      %v3665 = vsel %vm2185, %v3663, %v3664
      %v3666 = vrot.slane %v3664, 4
      %v3667 = vrot.slane %v2878, 5
      %v3668 = vsel %vm2185, %v3666, %v3667
      %v3669 = vrot.slane %v3515, 5
      %v3670 = vrot.slane %v3669, 4
      %v3671 = vrot.slane %v2880, 5
      %v3672 = vsel %vm2185, %v3670, %v3671
      %v3673 = vrot.slane %v3671, 4
      %v3674 = vrot.slane %v2881, 5
      %v3675 = vsel %vm2185, %v3673, %v3674
      %s3676 = scalar_lea.vmem %s2, 80
      %v3677 = vld [vmem:[%s3676] sm:$0xf]
      %v3678 = vld [vmem:[%s3676 + $0x4] sm:$0xf]
      %v3679 = vld [vmem:[%s3676 + $0x8] sm:$0xf]
      %v3680 = vld [vmem:[%s3676 + $0xc] sm:$0xf]
      %v3681 = vunpack.c.l.b16 %v3567
      %v3682 = vunpack.c.l.b16 %v3570
      %v3683 = vunpack.c.l.b16 %v3574
      %v3684 = vunpack.c.l.b16 %v3577
      %v3685 = vunpack.c.l.b16 %v3581
      %v3686 = vunpack.c.l.b16 %v3584
      %v3687 = vunpack.c.l.b16 %v3588
      %v3688 = vunpack.c.l.b16 %v3591
      %v3689 = vunpack.c.l.b16 %v3595
      %v3690 = vunpack.c.l.b16 %v3598
      %v3691 = vunpack.c.l.b16 %v3602
      %v3692 = vunpack.c.l.b16 %v3605
      %v3693 = vunpack.c.l.b16 %v3609
      %v3694 = vunpack.c.l.b16 %v3612
      %v3695 = vunpack.c.l.b16 %v3616
      %v3696 = vunpack.c.l.b16 %v3619
      %v3697 = vunpack.c.l.b16 %v3623
      %v3698 = vunpack.c.l.b16 %v3626
      %v3699 = vunpack.c.l.b16 %v3630
      %v3700 = vunpack.c.l.b16 %v3633
      %v3701 = vunpack.c.l.b16 %v3637
      %v3702 = vunpack.c.l.b16 %v3640
      %v3703 = vunpack.c.l.b16 %v3644
      %v3704 = vunpack.c.l.b16 %v3647
      %v3705 = vunpack.c.l.b16 %v3651
      %v3706 = vunpack.c.l.b16 %v3654
      %v3707 = vunpack.c.l.b16 %v3658
      %v3708 = vunpack.c.l.b16 %v3661
      %v3709 = vunpack.c.l.b16 %v3665
      %v3710 = vunpack.c.l.b16 %v3668
      %v3711 = vunpack.c.l.b16 %v3672
      %v3712 = vunpack.c.l.b16 %v3675
      %v3713 = vpack.c.b16 %v3682, %v3681
      %v3714 = vpack.c.b16 %v3684, %v3683
      %v3715 = vpack.c.b16 %v3686, %v3685
      %v3716 = vpack.c.b16 %v3688, %v3687
      %v3717 = vpack.c.b16 %v3690, %v3689
      %v3718 = vpack.c.b16 %v3692, %v3691
      %v3719 = vpack.c.b16 %v3694, %v3693
      %v3720 = vpack.c.b16 %v3696, %v3695
      %v3721 = vpack.c.b16 %v3698, %v3697
      %v3722 = vpack.c.b16 %v3700, %v3699
      %v3723 = vpack.c.b16 %v3702, %v3701
      %v3724 = vpack.c.b16 %v3704, %v3703
      %v3725 = vpack.c.b16 %v3706, %v3705
      %v3726 = vpack.c.b16 %v3708, %v3707
      %v3727 = vpack.c.b16 %v3710, %v3709
      %v3728 = vpack.c.b16 %v3712, %v3711
      %v3733 = vunpack.c.l.b16 %v3677
      %v3734 = vunpack.c.l.b16 %v3678
      %v3735 = vunpack.c.l.b16 %v3679
      %v3736 = vunpack.c.l.b16 %v3680
      %v3737 = vpack.c.b16 %v3734, %v3733
      %v3738 = vpack.c.b16 %v3736, %v3735
      %v3742 = vsel %vm1768, %v3713, 0
      %v3745 = vsel %vm1768, %v3714, 0
      %v3748 = vsel %vm1768, %v3715, 0
      %v3751 = vsel %vm1768, %v3716, 0
      %v3754 = vsel %vm1768, %v3717, 0
      %v3757 = vsel %vm1768, %v3718, 0
      %v3760 = vsel %vm1768, %v3719, 0
      %v3763 = vsel %vm1768, %v3720, 0
      %v3766 = vsel %vm1768, %v3721, 0
      %v3769 = vsel %vm1768, %v3722, 0
      %v3772 = vsel %vm1768, %v3723, 0
      %v3775 = vsel %vm1768, %v3724, 0
      %v3778 = vsel %vm1768, %v3725, 0
      %v3781 = vsel %vm1768, %v3726, 0
      %v3784 = vsel %vm1768, %v3727, 0
      %v3787 = vsel %vm1768, %v3728, 0
      %3789 = vmatpush.bf16.msra.mxu0 0
      %3790 = vmatpush.bf16.msra.mxu0 0
      %3791 = vmatpush.bf16.msra.mxu0 0
      %3792 = vmatpush.bf16.msra.mxu0 0
      %3793 = vmatpush.bf16.msra.mxu0 0
      %3794 = vmatpush.bf16.msra.mxu0 0
      %3795 = vmatpush.bf16.msra.mxu0 %v3738
      %3796 = vmatpush.bf16.msra.mxu0 %v3737
      %3797 = vmatmul.bf16.gmra.mxu0 %v3742
      %v3798 = vpop.f32.mrf.mxu0
      %v3799 = vadd.f32 0.0, %v3798
      %v3800 = vpop.f32.mrf.mxu0
      %v3801 = vadd.f32 0.0, %v3800
      %3802 = vmatmul.bf16.gmra.mxu0 %v3745
      %v3803 = vpop.f32.mrf.mxu0
      %v3804 = vadd.f32 0.0, %v3803
      %v3805 = vpop.f32.mrf.mxu0
      %v3806 = vadd.f32 0.0, %v3805
      %3807 = vmatmul.bf16.gmra.mxu0 %v3748
      %v3808 = vpop.f32.mrf.mxu0
      %v3809 = vadd.f32 0.0, %v3808
      %v3810 = vpop.f32.mrf.mxu0
      %v3811 = vadd.f32 0.0, %v3810
      %3812 = vmatmul.bf16.gmra.mxu0 %v3751
      %v3813 = vpop.f32.mrf.mxu0
      %v3814 = vadd.f32 0.0, %v3813
      %v3815 = vpop.f32.mrf.mxu0
      %v3816 = vadd.f32 0.0, %v3815
      %3817 = vmatmul.bf16.gmra.mxu0 %v3754
      %v3818 = vpop.f32.mrf.mxu0
      %v3819 = vadd.f32 0.0, %v3818
      %v3820 = vpop.f32.mrf.mxu0
      %v3821 = vadd.f32 0.0, %v3820
      %3822 = vmatmul.bf16.gmra.mxu0 %v3757
      %v3823 = vpop.f32.mrf.mxu0
      %v3824 = vadd.f32 0.0, %v3823
      %v3825 = vpop.f32.mrf.mxu0
      %v3826 = vadd.f32 0.0, %v3825
      %3827 = vmatmul.bf16.gmra.mxu0 %v3760
      %v3828 = vpop.f32.mrf.mxu0
      %v3829 = vadd.f32 0.0, %v3828
      %v3830 = vpop.f32.mrf.mxu0
      %v3831 = vadd.f32 0.0, %v3830
      %3832 = vmatmul.bf16.gmra.mxu0 %v3763
      %v3833 = vpop.f32.mrf.mxu0
      %v3834 = vadd.f32 0.0, %v3833
      %v3835 = vpop.f32.mrf.mxu0
      %v3836 = vadd.f32 0.0, %v3835
      %3837 = vmatmul.bf16.gmra.mxu0 %v3766
      %v3838 = vpop.f32.mrf.mxu0
      %v3839 = vadd.f32 0.0, %v3838
      %v3840 = vpop.f32.mrf.mxu0
      %v3841 = vadd.f32 0.0, %v3840
      %3842 = vmatmul.bf16.gmra.mxu0 %v3769
      %v3843 = vpop.f32.mrf.mxu0
      %v3844 = vadd.f32 0.0, %v3843
      %v3845 = vpop.f32.mrf.mxu0
      %v3846 = vadd.f32 0.0, %v3845
      %3847 = vmatmul.bf16.gmra.mxu0 %v3772
      %v3848 = vpop.f32.mrf.mxu0
      %v3849 = vadd.f32 0.0, %v3848
      %v3850 = vpop.f32.mrf.mxu0
      %v3851 = vadd.f32 0.0, %v3850
      %3852 = vmatmul.bf16.gmra.mxu0 %v3775
      %v3853 = vpop.f32.mrf.mxu0
      %v3854 = vadd.f32 0.0, %v3853
      %v3855 = vpop.f32.mrf.mxu0
      %v3856 = vadd.f32 0.0, %v3855
      %3857 = vmatmul.bf16.gmra.mxu0 %v3778
      %v3858 = vpop.f32.mrf.mxu0
      %v3859 = vadd.f32 0.0, %v3858
      %v3860 = vpop.f32.mrf.mxu0
      %v3861 = vadd.f32 0.0, %v3860
      %3862 = vmatmul.bf16.gmra.mxu0 %v3781
      %v3863 = vpop.f32.mrf.mxu0
      %v3864 = vadd.f32 0.0, %v3863
      %v3865 = vpop.f32.mrf.mxu0
      %v3866 = vadd.f32 0.0, %v3865
      %3867 = vmatmul.bf16.gmra.mxu0 %v3784
      %v3868 = vpop.f32.mrf.mxu0
      %v3869 = vadd.f32 0.0, %v3868
      %v3870 = vpop.f32.mrf.mxu0
      %v3871 = vadd.f32 0.0, %v3870
      %3872 = vmatmul.bf16.gmra.mxu0 %v3787
      %v3873 = vpop.f32.mrf.mxu0
      %v3874 = vadd.f32 0.0, %v3873
      %v3875 = vpop.f32.mrf.mxu0
      %v3876 = vadd.f32 0.0, %v3875
      %3877 = vdwg.mxu0
      %v3878 = vadd.f32 %v3468, %v3799
      %v3879 = vadd.f32 %v3469, %v3801
      %v3880 = vadd.f32 %v3470, %v3804
      %v3881 = vadd.f32 %v3471, %v3806
      %v3882 = vadd.f32 %v3472, %v3809
      %v3883 = vadd.f32 %v3473, %v3811
      %v3884 = vadd.f32 %v3474, %v3814
      %v3885 = vadd.f32 %v3475, %v3816
      %v3886 = vadd.f32 %v3476, %v3819
      %v3887 = vadd.f32 %v3477, %v3821
      %v3888 = vadd.f32 %v3478, %v3824
      %v3889 = vadd.f32 %v3479, %v3826
      %v3890 = vadd.f32 %v3480, %v3829
      %v3891 = vadd.f32 %v3481, %v3831
      %v3892 = vadd.f32 %v3482, %v3834
      %v3893 = vadd.f32 %v3483, %v3836
      %v3894 = vadd.f32 %v3484, %v3839
      %v3895 = vadd.f32 %v3485, %v3841
      %v3896 = vadd.f32 %v3486, %v3844
      %v3897 = vadd.f32 %v3487, %v3846
      %v3898 = vadd.f32 %v3488, %v3849
      %v3899 = vadd.f32 %v3489, %v3851
      %v3900 = vadd.f32 %v3490, %v3854
      %v3901 = vadd.f32 %v3491, %v3856
      %v3902 = vadd.f32 %v3492, %v3859
      %v3903 = vadd.f32 %v3493, %v3861
      %v3904 = vadd.f32 %v3494, %v3864
      %v3905 = vadd.f32 %v3495, %v3866
      %v3906 = vadd.f32 %v3496, %v3869
      %v3907 = vadd.f32 %v3497, %v3871
      %v3908 = vadd.f32 %v3498, %v3874
      %v3909 = vadd.f32 %v3499, %v3876
      %s3910 = sadd.s32 %s312, 2
      %s3911 = smul.u32 %s3910, 3
      %s3912 = smul.addr %s3911, 4
      %s3913 = scalar_lea.vmem [#allocation2], %s3912
      %v3914 = vld [vmem:[%s3913] sm:$0xf]
      %v3915 = vld [vmem:[%s3913 + $0x4] sm:$0xf]
      %v3916 = vld [vmem:[%s3913 + $0xc] sm:$0xf]
      %v3917 = vld [vmem:[%s3913 + $0x10] sm:$0xf]
      %v3918 = vld [vmem:[%s3913 + $0x18] sm:$0xf]
      %v3919 = vld [vmem:[%s3913 + $0x1c] sm:$0xf]
      %v3920 = vld [vmem:[%s3913 + $0x24] sm:$0xf]
      %v3921 = vld [vmem:[%s3913 + $0x28] sm:$0xf]
      %v3922 = vld [vmem:[%s3913 + $0x30] sm:$0xf]
      %v3923 = vld [vmem:[%s3913 + $0x34] sm:$0xf]
      %v3924 = vld [vmem:[%s3913 + $0x3c] sm:$0xf]
      %v3925 = vld [vmem:[%s3913 + $0x40] sm:$0xf]
      %v3926 = vld [vmem:[%s3913 + $0x48] sm:$0xf]
      %v3927 = vld [vmem:[%s3913 + $0x4c] sm:$0xf]
      %v3928 = vld [vmem:[%s3913 + $0x54] sm:$0xf]
      %v3929 = vld [vmem:[%s3913 + $0x58] sm:$0xf]
      %v3930 = vld [vmem:[%s3913 + $0x60] sm:$0xf]
      %v3931 = vld [vmem:[%s3913 + $0x64] sm:$0xf]
      %v3932 = vld [vmem:[%s3913 + $0x6c] sm:$0xf]
      %v3933 = vld [vmem:[%s3913 + $0x70] sm:$0xf]
      %v3934 = vld [vmem:[%s3913 + $0x78] sm:$0xf]
      %v3935 = vld [vmem:[%s3913 + $0x7c] sm:$0xf]
      %v3936 = vld [vmem:[%s3913 + $0x84] sm:$0xf]
      %v3937 = vld [vmem:[%s3913 + $0x88] sm:$0xf]
      %v3938 = vld [vmem:[%s3913 + $0x90] sm:$0xf]
      %v3939 = vld [vmem:[%s3913 + $0x94] sm:$0xf]
      %v3940 = vld [vmem:[%s3913 + $0x9c] sm:$0xf]
      %v3941 = vld [vmem:[%s3913 + $0xa0] sm:$0xf]
      %v3942 = vld [vmem:[%s3913 + $0xa8] sm:$0xf]
      %v3943 = vld [vmem:[%s3913 + $0xac] sm:$0xf]
      %v3944 = vld [vmem:[%s3913 + $0xb4] sm:$0xf]
      %v3945 = vld [vmem:[%s3913 + $0xb8] sm:$0xf]
      %s3946 = scalar_lea.vmem %s2, 96
      %v3947 = vld [vmem:[%s3946] sm:$0xf]
      %v3948 = vld [vmem:[%s3946 + $0x4] sm:$0xf]
      %v3949 = vld [vmem:[%s3946 + $0x8] sm:$0xf]
      %v3950 = vld [vmem:[%s3946 + $0xc] sm:$0xf]
      %v3983 = vunpack.c.l.b16 %v3914
      %v3984 = vunpack.c.l.b16 %v3915
      %v3985 = vunpack.c.l.b16 %v3916
      %v3986 = vunpack.c.l.b16 %v3917
      %v3987 = vunpack.c.l.b16 %v3918
      %v3988 = vunpack.c.l.b16 %v3919
      %v3989 = vunpack.c.l.b16 %v3920
      %v3990 = vunpack.c.l.b16 %v3921
      %v3991 = vunpack.c.l.b16 %v3922
      %v3992 = vunpack.c.l.b16 %v3923
      %v3993 = vunpack.c.l.b16 %v3924
      %v3994 = vunpack.c.l.b16 %v3925
      %v3995 = vunpack.c.l.b16 %v3926
      %v3996 = vunpack.c.l.b16 %v3927
      %v3997 = vunpack.c.l.b16 %v3928
      %v3998 = vunpack.c.l.b16 %v3929
      %v3999 = vunpack.c.l.b16 %v3930
      %v4000 = vunpack.c.l.b16 %v3931
      %v4001 = vunpack.c.l.b16 %v3932
      %v4002 = vunpack.c.l.b16 %v3933
      %v4003 = vunpack.c.l.b16 %v3934
      %v4004 = vunpack.c.l.b16 %v3935
      %v4005 = vunpack.c.l.b16 %v3936
      %v4006 = vunpack.c.l.b16 %v3937
      %v4007 = vunpack.c.l.b16 %v3938
      %v4008 = vunpack.c.l.b16 %v3939
      %v4009 = vunpack.c.l.b16 %v3940
      %v4010 = vunpack.c.l.b16 %v3941
      %v4011 = vunpack.c.l.b16 %v3942
      %v4012 = vunpack.c.l.b16 %v3943
      %v4013 = vunpack.c.l.b16 %v3944
      %v4014 = vunpack.c.l.b16 %v3945
      %v4015 = vpack.c.b16 %v3984, %v3983
      %v4016 = vpack.c.b16 %v3986, %v3985
      %v4017 = vpack.c.b16 %v3988, %v3987
      %v4018 = vpack.c.b16 %v3990, %v3989
      %v4019 = vpack.c.b16 %v3992, %v3991
      %v4020 = vpack.c.b16 %v3994, %v3993
      %v4021 = vpack.c.b16 %v3996, %v3995
      %v4022 = vpack.c.b16 %v3998, %v3997
      %v4023 = vpack.c.b16 %v4000, %v3999
      %v4024 = vpack.c.b16 %v4002, %v4001
      %v4025 = vpack.c.b16 %v4004, %v4003
      %v4026 = vpack.c.b16 %v4006, %v4005
      %v4027 = vpack.c.b16 %v4008, %v4007
      %v4028 = vpack.c.b16 %v4010, %v4009
      %v4029 = vpack.c.b16 %v4012, %v4011
      %v4030 = vpack.c.b16 %v4014, %v4013
      %v4035 = vunpack.c.l.b16 %v3947
      %v4036 = vunpack.c.l.b16 %v3948
      %v4037 = vunpack.c.l.b16 %v3949
      %v4038 = vunpack.c.l.b16 %v3950
      %v4039 = vpack.c.b16 %v4036, %v4035
      %v4040 = vpack.c.b16 %v4038, %v4037
      %v4044 = vsel %vm1768, %v4015, 0
      %v4047 = vsel %vm1768, %v4016, 0
      %v4050 = vsel %vm1768, %v4017, 0
      %v4053 = vsel %vm1768, %v4018, 0
      %v4056 = vsel %vm1768, %v4019, 0
      %v4059 = vsel %vm1768, %v4020, 0
      %v4062 = vsel %vm1768, %v4021, 0
      %v4065 = vsel %vm1768, %v4022, 0
      %v4068 = vsel %vm1768, %v4023, 0
      %v4071 = vsel %vm1768, %v4024, 0
      %v4074 = vsel %vm1768, %v4025, 0
      %v4077 = vsel %vm1768, %v4026, 0
      %v4080 = vsel %vm1768, %v4027, 0
      %v4083 = vsel %vm1768, %v4028, 0
      %v4086 = vsel %vm1768, %v4029, 0
      %v4089 = vsel %vm1768, %v4030, 0
      %4091 = vmatpush.bf16.msra.mxu0 0
      %4092 = vmatpush.bf16.msra.mxu0 0
      %4093 = vmatpush.bf16.msra.mxu0 0
      %4094 = vmatpush.bf16.msra.mxu0 0
      %4095 = vmatpush.bf16.msra.mxu0 0
      %4096 = vmatpush.bf16.msra.mxu0 0
      %4097 = vmatpush.bf16.msra.mxu0 %v4040
      %4098 = vmatpush.bf16.msra.mxu0 %v4039
      %4099 = vmatmul.bf16.gmra.mxu0 %v4044
      %v4100 = vpop.f32.mrf.mxu0
      %v4101 = vadd.f32 0.0, %v4100
      %v4102 = vpop.f32.mrf.mxu0
      %v4103 = vadd.f32 0.0, %v4102
      %4104 = vmatmul.bf16.gmra.mxu0 %v4047
      %v4105 = vpop.f32.mrf.mxu0
      %v4106 = vadd.f32 0.0, %v4105
      %v4107 = vpop.f32.mrf.mxu0
      %v4108 = vadd.f32 0.0, %v4107
      %4109 = vmatmul.bf16.gmra.mxu0 %v4050
      %v4110 = vpop.f32.mrf.mxu0
      %v4111 = vadd.f32 0.0, %v4110
      %v4112 = vpop.f32.mrf.mxu0
      %v4113 = vadd.f32 0.0, %v4112
      %4114 = vmatmul.bf16.gmra.mxu0 %v4053
      %v4115 = vpop.f32.mrf.mxu0
      %v4116 = vadd.f32 0.0, %v4115
      %v4117 = vpop.f32.mrf.mxu0
      %v4118 = vadd.f32 0.0, %v4117
      %4119 = vmatmul.bf16.gmra.mxu0 %v4056
      %v4120 = vpop.f32.mrf.mxu0
      %v4121 = vadd.f32 0.0, %v4120
      %v4122 = vpop.f32.mrf.mxu0
      %v4123 = vadd.f32 0.0, %v4122
      %4124 = vmatmul.bf16.gmra.mxu0 %v4059
      %v4125 = vpop.f32.mrf.mxu0
      %v4126 = vadd.f32 0.0, %v4125
      %v4127 = vpop.f32.mrf.mxu0
      %v4128 = vadd.f32 0.0, %v4127
      %4129 = vmatmul.bf16.gmra.mxu0 %v4062
      %v4130 = vpop.f32.mrf.mxu0
      %v4131 = vadd.f32 0.0, %v4130
      %v4132 = vpop.f32.mrf.mxu0
      %v4133 = vadd.f32 0.0, %v4132
      %4134 = vmatmul.bf16.gmra.mxu0 %v4065
      %v4135 = vpop.f32.mrf.mxu0
      %v4136 = vadd.f32 0.0, %v4135
      %v4137 = vpop.f32.mrf.mxu0
      %v4138 = vadd.f32 0.0, %v4137
      %4139 = vmatmul.bf16.gmra.mxu0 %v4068
      %v4140 = vpop.f32.mrf.mxu0
      %v4141 = vadd.f32 0.0, %v4140
      %v4142 = vpop.f32.mrf.mxu0
      %v4143 = vadd.f32 0.0, %v4142
      %4144 = vmatmul.bf16.gmra.mxu0 %v4071
      %v4145 = vpop.f32.mrf.mxu0
      %v4146 = vadd.f32 0.0, %v4145
      %v4147 = vpop.f32.mrf.mxu0
      %v4148 = vadd.f32 0.0, %v4147
      %4149 = vmatmul.bf16.gmra.mxu0 %v4074
      %v4150 = vpop.f32.mrf.mxu0
      %v4151 = vadd.f32 0.0, %v4150
      %v4152 = vpop.f32.mrf.mxu0
      %v4153 = vadd.f32 0.0, %v4152
      %4154 = vmatmul.bf16.gmra.mxu0 %v4077
      %v4155 = vpop.f32.mrf.mxu0
      %v4156 = vadd.f32 0.0, %v4155
      %v4157 = vpop.f32.mrf.mxu0
      %v4158 = vadd.f32 0.0, %v4157
      %4159 = vmatmul.bf16.gmra.mxu0 %v4080
      %v4160 = vpop.f32.mrf.mxu0
      %v4161 = vadd.f32 0.0, %v4160
      %v4162 = vpop.f32.mrf.mxu0
      %v4163 = vadd.f32 0.0, %v4162
      %4164 = vmatmul.bf16.gmra.mxu0 %v4083
      %v4165 = vpop.f32.mrf.mxu0
      %v4166 = vadd.f32 0.0, %v4165
      %v4167 = vpop.f32.mrf.mxu0
      %v4168 = vadd.f32 0.0, %v4167
      %4169 = vmatmul.bf16.gmra.mxu0 %v4086
      %v4170 = vpop.f32.mrf.mxu0
      %v4171 = vadd.f32 0.0, %v4170
      %v4172 = vpop.f32.mrf.mxu0
      %v4173 = vadd.f32 0.0, %v4172
      %4174 = vmatmul.bf16.gmra.mxu0 %v4089
      %v4175 = vpop.f32.mrf.mxu0
      %v4176 = vadd.f32 0.0, %v4175
      %v4177 = vpop.f32.mrf.mxu0
      %v4178 = vadd.f32 0.0, %v4177
      %4179 = vdwg.mxu0
      %v4180 = vadd.f32 %v3878, %v4101
      %v4181 = vadd.f32 %v3879, %v4103
      %v4182 = vadd.f32 %v3880, %v4106
      %v4183 = vadd.f32 %v3881, %v4108
      %v4184 = vadd.f32 %v3882, %v4111
      %v4185 = vadd.f32 %v3883, %v4113
      %v4186 = vadd.f32 %v3884, %v4116
      %v4187 = vadd.f32 %v3885, %v4118
      %v4188 = vadd.f32 %v3886, %v4121
      %v4189 = vadd.f32 %v3887, %v4123
      %v4190 = vadd.f32 %v3888, %v4126
      %v4191 = vadd.f32 %v3889, %v4128
      %v4192 = vadd.f32 %v3890, %v4131
      %v4193 = vadd.f32 %v3891, %v4133
      %v4194 = vadd.f32 %v3892, %v4136
      %v4195 = vadd.f32 %v3893, %v4138
      %v4196 = vadd.f32 %v3894, %v4141
      %v4197 = vadd.f32 %v3895, %v4143
      %v4198 = vadd.f32 %v3896, %v4146
      %v4199 = vadd.f32 %v3897, %v4148
      %v4200 = vadd.f32 %v3898, %v4151
      %v4201 = vadd.f32 %v3899, %v4153
      %v4202 = vadd.f32 %v3900, %v4156
      %v4203 = vadd.f32 %v3901, %v4158
      %v4204 = vadd.f32 %v3902, %v4161
      %v4205 = vadd.f32 %v3903, %v4163
      %v4206 = vadd.f32 %v3904, %v4166
      %v4207 = vadd.f32 %v3905, %v4168
      %v4208 = vadd.f32 %v3906, %v4171
      %v4209 = vadd.f32 %v3907, %v4173
      %v4210 = vadd.f32 %v3908, %v4176
      %v4211 = vadd.f32 %v3909, %v4178
      %v4212 = vld [vmem:[%s3913] sm:$0xf]
      %v4213 = vld [vmem:[%s3913 + $0x4] sm:$0xf]
      %v4214 = vld [vmem:[%s3913 + $0x8] sm:$0x1]
      %v4215 = vld [vmem:[%s3913 + $0xc] sm:$0xf]
      %v4216 = vld [vmem:[%s3913 + $0x10] sm:$0xf]
      %v4217 = vld [vmem:[%s3913 + $0x14] sm:$0x1]
      %v4218 = vld [vmem:[%s3913 + $0x18] sm:$0xf]
      %v4219 = vld [vmem:[%s3913 + $0x1c] sm:$0xf]
      %v4220 = vld [vmem:[%s3913 + $0x20] sm:$0x1]
      %v4221 = vld [vmem:[%s3913 + $0x24] sm:$0xf]
      %v4222 = vld [vmem:[%s3913 + $0x28] sm:$0xf]
      %v4223 = vld [vmem:[%s3913 + $0x2c] sm:$0x1]
      %v4224 = vld [vmem:[%s3913 + $0x30] sm:$0xf]
      %v4225 = vld [vmem:[%s3913 + $0x34] sm:$0xf]
      %v4226 = vld [vmem:[%s3913 + $0x38] sm:$0x1]
      %v4227 = vld [vmem:[%s3913 + $0x3c] sm:$0xf]
      %v4228 = vld [vmem:[%s3913 + $0x40] sm:$0xf]
      %v4229 = vld [vmem:[%s3913 + $0x44] sm:$0x1]
      %v4230 = vld [vmem:[%s3913 + $0x48] sm:$0xf]
      %v4231 = vld [vmem:[%s3913 + $0x4c] sm:$0xf]
      %v4232 = vld [vmem:[%s3913 + $0x50] sm:$0x1]
      %v4233 = vld [vmem:[%s3913 + $0x54] sm:$0xf]
      %v4234 = vld [vmem:[%s3913 + $0x58] sm:$0xf]
      %v4235 = vld [vmem:[%s3913 + $0x5c] sm:$0x1]
      %v4236 = vld [vmem:[%s3913 + $0x60] sm:$0xf]
      %v4237 = vld [vmem:[%s3913 + $0x64] sm:$0xf]
      %v4238 = vld [vmem:[%s3913 + $0x68] sm:$0x1]
      %v4239 = vld [vmem:[%s3913 + $0x6c] sm:$0xf]
      %v4240 = vld [vmem:[%s3913 + $0x70] sm:$0xf]
      %v4241 = vld [vmem:[%s3913 + $0x74] sm:$0x1]
      %v4242 = vld [vmem:[%s3913 + $0x78] sm:$0xf]
      %v4243 = vld [vmem:[%s3913 + $0x7c] sm:$0xf]
      %v4244 = vld [vmem:[%s3913 + $0x80] sm:$0x1]
      %v4245 = vld [vmem:[%s3913 + $0x84] sm:$0xf]
      %v4246 = vld [vmem:[%s3913 + $0x88] sm:$0xf]
      %v4247 = vld [vmem:[%s3913 + $0x8c] sm:$0x1]
      %v4248 = vld [vmem:[%s3913 + $0x90] sm:$0xf]
      %v4249 = vld [vmem:[%s3913 + $0x94] sm:$0xf]
      %v4250 = vld [vmem:[%s3913 + $0x98] sm:$0x1]
      %v4251 = vld [vmem:[%s3913 + $0x9c] sm:$0xf]
      %v4252 = vld [vmem:[%s3913 + $0xa0] sm:$0xf]
      %v4253 = vld [vmem:[%s3913 + $0xa4] sm:$0x1]
      %v4254 = vld [vmem:[%s3913 + $0xa8] sm:$0xf]
      %v4255 = vld [vmem:[%s3913 + $0xac] sm:$0xf]
      %v4256 = vld [vmem:[%s3913 + $0xb0] sm:$0x1]
      %v4257 = vld [vmem:[%s3913 + $0xb4] sm:$0xf]
      %v4258 = vld [vmem:[%s3913 + $0xb8] sm:$0xf]
      %v4259 = vld [vmem:[%s3913 + $0xbc] sm:$0x1]
      %v4261 = vshrl.u32 %v4212, 16
      %v4263 = vrot.slane %v4261, 4
      %v4264 = vshll.u32 %v4212, 16
      %v4266 = vrot.slane %v4264, 5
      %v4267 = vor.u32 %v4263, %v4266
      %v4268 = vrot.slane %v4267, 4
      %v4270 = vshll.u32 %v4213, 16
      %v4272 = vrot.slane %v4270, 5
      %v4273 = vsel %vm1318, %v4268, %v4272
      %v4274 = vshrl.u32 %v4213, 16
      %v4276 = vrot.slane %v4274, 4
      %v4277 = vor.u32 %v4276, %v4272
      %v4278 = vrot.slane %v4277, 4
      %v4280 = vshll.u32 %v4214, 16
      %v4282 = vrot.slane %v4280, 5
      %v4283 = vsel %vm1318, %v4278, %v4282
      %v4285 = vshrl.u32 %v4215, 16
      %v4287 = vrot.slane %v4285, 4
      %v4288 = vshll.u32 %v4215, 16
      %v4290 = vrot.slane %v4288, 5
      %v4291 = vor.u32 %v4287, %v4290
      %v4292 = vrot.slane %v4291, 4
      %v4294 = vshll.u32 %v4216, 16
      %v4296 = vrot.slane %v4294, 5
      %v4297 = vsel %vm1318, %v4292, %v4296
      %v4298 = vshrl.u32 %v4216, 16
      %v4300 = vrot.slane %v4298, 4
      %v4301 = vor.u32 %v4300, %v4296
      %v4302 = vrot.slane %v4301, 4
      %v4304 = vshll.u32 %v4217, 16
      %v4306 = vrot.slane %v4304, 5
      %v4307 = vsel %vm1318, %v4302, %v4306
      %v4309 = vshrl.u32 %v4218, 16
      %v4311 = vrot.slane %v4309, 4
      %v4312 = vshll.u32 %v4218, 16
      %v4314 = vrot.slane %v4312, 5
      %v4315 = vor.u32 %v4311, %v4314
      %v4316 = vrot.slane %v4315, 4
      %v4318 = vshll.u32 %v4219, 16
      %v4320 = vrot.slane %v4318, 5
      %v4321 = vsel %vm1318, %v4316, %v4320
      %v4322 = vshrl.u32 %v4219, 16
      %v4324 = vrot.slane %v4322, 4
      %v4325 = vor.u32 %v4324, %v4320
      %v4326 = vrot.slane %v4325, 4
      %v4328 = vshll.u32 %v4220, 16
      %v4330 = vrot.slane %v4328, 5
      %v4331 = vsel %vm1318, %v4326, %v4330
      %v4333 = vshrl.u32 %v4221, 16
      %v4335 = vrot.slane %v4333, 4
      %v4336 = vshll.u32 %v4221, 16
      %v4338 = vrot.slane %v4336, 5
      %v4339 = vor.u32 %v4335, %v4338
      %v4340 = vrot.slane %v4339, 4
      %v4342 = vshll.u32 %v4222, 16
      %v4344 = vrot.slane %v4342, 5
      %v4345 = vsel %vm1318, %v4340, %v4344
      %v4346 = vshrl.u32 %v4222, 16
      %v4348 = vrot.slane %v4346, 4
      %v4349 = vor.u32 %v4348, %v4344
      %v4350 = vrot.slane %v4349, 4
      %v4352 = vshll.u32 %v4223, 16
      %v4354 = vrot.slane %v4352, 5
      %v4355 = vsel %vm1318, %v4350, %v4354
      %v4357 = vshrl.u32 %v4224, 16
      %v4359 = vrot.slane %v4357, 4
      %v4360 = vshll.u32 %v4224, 16
      %v4362 = vrot.slane %v4360, 5
      %v4363 = vor.u32 %v4359, %v4362
      %v4364 = vrot.slane %v4363, 4
      %v4366 = vshll.u32 %v4225, 16
      %v4368 = vrot.slane %v4366, 5
      %v4369 = vsel %vm1318, %v4364, %v4368
      %v4370 = vshrl.u32 %v4225, 16
      %v4372 = vrot.slane %v4370, 4
      %v4373 = vor.u32 %v4372, %v4368
      %v4374 = vrot.slane %v4373, 4
      %v4376 = vshll.u32 %v4226, 16
      %v4378 = vrot.slane %v4376, 5
      %v4379 = vsel %vm1318, %v4374, %v4378
      %v4381 = vshrl.u32 %v4227, 16
      %v4383 = vrot.slane %v4381, 4
      %v4384 = vshll.u32 %v4227, 16
      %v4386 = vrot.slane %v4384, 5
      %v4387 = vor.u32 %v4383, %v4386
      %v4388 = vrot.slane %v4387, 4
      %v4390 = vshll.u32 %v4228, 16
      %v4392 = vrot.slane %v4390, 5
      %v4393 = vsel %vm1318, %v4388, %v4392
      %v4394 = vshrl.u32 %v4228, 16
      %v4396 = vrot.slane %v4394, 4
      %v4397 = vor.u32 %v4396, %v4392
      %v4398 = vrot.slane %v4397, 4
      %v4400 = vshll.u32 %v4229, 16
      %v4402 = vrot.slane %v4400, 5
      %v4403 = vsel %vm1318, %v4398, %v4402
      %v4405 = vshrl.u32 %v4230, 16
      %v4407 = vrot.slane %v4405, 4
      %v4408 = vshll.u32 %v4230, 16
      %v4410 = vrot.slane %v4408, 5
      %v4411 = vor.u32 %v4407, %v4410
      %v4412 = vrot.slane %v4411, 4
      %v4414 = vshll.u32 %v4231, 16
      %v4416 = vrot.slane %v4414, 5
      %v4417 = vsel %vm1318, %v4412, %v4416
      %v4418 = vshrl.u32 %v4231, 16
      %v4420 = vrot.slane %v4418, 4
      %v4421 = vor.u32 %v4420, %v4416
      %v4422 = vrot.slane %v4421, 4
      %v4424 = vshll.u32 %v4232, 16
      %v4426 = vrot.slane %v4424, 5
      %v4427 = vsel %vm1318, %v4422, %v4426
      %v4429 = vshrl.u32 %v4233, 16
      %v4431 = vrot.slane %v4429, 4
      %v4432 = vshll.u32 %v4233, 16
      %v4434 = vrot.slane %v4432, 5
      %v4435 = vor.u32 %v4431, %v4434
      %v4436 = vrot.slane %v4435, 4
      %v4438 = vshll.u32 %v4234, 16
      %v4440 = vrot.slane %v4438, 5
      %v4441 = vsel %vm1318, %v4436, %v4440
      %v4442 = vshrl.u32 %v4234, 16
      %v4444 = vrot.slane %v4442, 4
      %v4445 = vor.u32 %v4444, %v4440
      %v4446 = vrot.slane %v4445, 4
      %v4448 = vshll.u32 %v4235, 16
      %v4450 = vrot.slane %v4448, 5
      %v4451 = vsel %vm1318, %v4446, %v4450
      %v4453 = vshrl.u32 %v4236, 16
      %v4455 = vrot.slane %v4453, 4
      %v4456 = vshll.u32 %v4236, 16
      %v4458 = vrot.slane %v4456, 5
      %v4459 = vor.u32 %v4455, %v4458
      %v4460 = vrot.slane %v4459, 4
      %v4462 = vshll.u32 %v4237, 16
      %v4464 = vrot.slane %v4462, 5
      %v4465 = vsel %vm1318, %v4460, %v4464
      %v4466 = vshrl.u32 %v4237, 16
      %v4468 = vrot.slane %v4466, 4
      %v4469 = vor.u32 %v4468, %v4464
      %v4470 = vrot.slane %v4469, 4
      %v4472 = vshll.u32 %v4238, 16
      %v4474 = vrot.slane %v4472, 5
      %v4475 = vsel %vm1318, %v4470, %v4474
      %v4477 = vshrl.u32 %v4239, 16
      %v4479 = vrot.slane %v4477, 4
      %v4480 = vshll.u32 %v4239, 16
      %v4482 = vrot.slane %v4480, 5
      %v4483 = vor.u32 %v4479, %v4482
      %v4484 = vrot.slane %v4483, 4
      %v4486 = vshll.u32 %v4240, 16
      %v4488 = vrot.slane %v4486, 5
      %v4489 = vsel %vm1318, %v4484, %v4488
      %v4490 = vshrl.u32 %v4240, 16
      %v4492 = vrot.slane %v4490, 4
      %v4493 = vor.u32 %v4492, %v4488
      %v4494 = vrot.slane %v4493, 4
      %v4496 = vshll.u32 %v4241, 16
      %v4498 = vrot.slane %v4496, 5
      %v4499 = vsel %vm1318, %v4494, %v4498
      %v4501 = vshrl.u32 %v4242, 16
      %v4503 = vrot.slane %v4501, 4
      %v4504 = vshll.u32 %v4242, 16
      %v4506 = vrot.slane %v4504, 5
      %v4507 = vor.u32 %v4503, %v4506
      %v4508 = vrot.slane %v4507, 4
      %v4510 = vshll.u32 %v4243, 16
      %v4512 = vrot.slane %v4510, 5
      %v4513 = vsel %vm1318, %v4508, %v4512
      %v4514 = vshrl.u32 %v4243, 16
      %v4516 = vrot.slane %v4514, 4
      %v4517 = vor.u32 %v4516, %v4512
      %v4518 = vrot.slane %v4517, 4
      %v4520 = vshll.u32 %v4244, 16
      %v4522 = vrot.slane %v4520, 5
      %v4523 = vsel %vm1318, %v4518, %v4522
      %v4525 = vshrl.u32 %v4245, 16
      %v4527 = vrot.slane %v4525, 4
      %v4528 = vshll.u32 %v4245, 16
      %v4530 = vrot.slane %v4528, 5
      %v4531 = vor.u32 %v4527, %v4530
      %v4532 = vrot.slane %v4531, 4
      %v4534 = vshll.u32 %v4246, 16
      %v4536 = vrot.slane %v4534, 5
      %v4537 = vsel %vm1318, %v4532, %v4536
      %v4538 = vshrl.u32 %v4246, 16
      %v4540 = vrot.slane %v4538, 4
      %v4541 = vor.u32 %v4540, %v4536
      %v4542 = vrot.slane %v4541, 4
      %v4544 = vshll.u32 %v4247, 16
      %v4546 = vrot.slane %v4544, 5
      %v4547 = vsel %vm1318, %v4542, %v4546
      %v4549 = vshrl.u32 %v4248, 16
      %v4551 = vrot.slane %v4549, 4
      %v4552 = vshll.u32 %v4248, 16
      %v4554 = vrot.slane %v4552, 5
      %v4555 = vor.u32 %v4551, %v4554
      %v4556 = vrot.slane %v4555, 4
      %v4558 = vshll.u32 %v4249, 16
      %v4560 = vrot.slane %v4558, 5
      %v4561 = vsel %vm1318, %v4556, %v4560
      %v4562 = vshrl.u32 %v4249, 16
      %v4564 = vrot.slane %v4562, 4
      %v4565 = vor.u32 %v4564, %v4560
      %v4566 = vrot.slane %v4565, 4
      %v4568 = vshll.u32 %v4250, 16
      %v4570 = vrot.slane %v4568, 5
      %v4571 = vsel %vm1318, %v4566, %v4570
      %v4573 = vshrl.u32 %v4251, 16
      %v4575 = vrot.slane %v4573, 4
      %v4576 = vshll.u32 %v4251, 16
      %v4578 = vrot.slane %v4576, 5
      %v4579 = vor.u32 %v4575, %v4578
      %v4580 = vrot.slane %v4579, 4
      %v4582 = vshll.u32 %v4252, 16
      %v4584 = vrot.slane %v4582, 5
      %v4585 = vsel %vm1318, %v4580, %v4584
      %v4586 = vshrl.u32 %v4252, 16
      %v4588 = vrot.slane %v4586, 4
      %v4589 = vor.u32 %v4588, %v4584
      %v4590 = vrot.slane %v4589, 4
      %v4592 = vshll.u32 %v4253, 16
      %v4594 = vrot.slane %v4592, 5
      %v4595 = vsel %vm1318, %v4590, %v4594
      %v4597 = vshrl.u32 %v4254, 16
      %v4599 = vrot.slane %v4597, 4
      %v4600 = vshll.u32 %v4254, 16
      %v4602 = vrot.slane %v4600, 5
      %v4603 = vor.u32 %v4599, %v4602
      %v4604 = vrot.slane %v4603, 4
      %v4606 = vshll.u32 %v4255, 16
      %v4608 = vrot.slane %v4606, 5
      %v4609 = vsel %vm1318, %v4604, %v4608
      %v4610 = vshrl.u32 %v4255, 16
      %v4612 = vrot.slane %v4610, 4
      %v4613 = vor.u32 %v4612, %v4608
      %v4614 = vrot.slane %v4613, 4
      %v4616 = vshll.u32 %v4256, 16
      %v4618 = vrot.slane %v4616, 5
      %v4619 = vsel %vm1318, %v4614, %v4618
      %v4621 = vshrl.u32 %v4257, 16
      %v4623 = vrot.slane %v4621, 4
      %v4624 = vshll.u32 %v4257, 16
      %v4626 = vrot.slane %v4624, 5
      %v4627 = vor.u32 %v4623, %v4626
      %v4628 = vrot.slane %v4627, 4
      %v4630 = vshll.u32 %v4258, 16
      %v4632 = vrot.slane %v4630, 5
      %v4633 = vsel %vm1318, %v4628, %v4632
      %v4634 = vshrl.u32 %v4258, 16
      %v4636 = vrot.slane %v4634, 4
      %v4637 = vor.u32 %v4636, %v4632
      %v4638 = vrot.slane %v4637, 4
      %v4640 = vshll.u32 %v4259, 16
      %v4642 = vrot.slane %v4640, 5
      %v4643 = vsel %vm1318, %v4638, %v4642
      %s4644 = scalar_lea.vmem %s2, 112
      %v4645 = vld [vmem:[%s4644] sm:$0xf]
      %v4646 = vld [vmem:[%s4644 + $0x4] sm:$0xf]
      %v4647 = vld [vmem:[%s4644 + $0x8] sm:$0xf]
      %v4648 = vld [vmem:[%s4644 + $0xc] sm:$0xf]
      %v4649 = vunpack.c.l.b16 %v4273
      %v4650 = vunpack.c.l.b16 %v4283
      %v4651 = vunpack.c.l.b16 %v4297
      %v4652 = vunpack.c.l.b16 %v4307
      %v4653 = vunpack.c.l.b16 %v4321
      %v4654 = vunpack.c.l.b16 %v4331
      %v4655 = vunpack.c.l.b16 %v4345
      %v4656 = vunpack.c.l.b16 %v4355
      %v4657 = vunpack.c.l.b16 %v4369
      %v4658 = vunpack.c.l.b16 %v4379
      %v4659 = vunpack.c.l.b16 %v4393
      %v4660 = vunpack.c.l.b16 %v4403
      %v4661 = vunpack.c.l.b16 %v4417
      %v4662 = vunpack.c.l.b16 %v4427
      %v4663 = vunpack.c.l.b16 %v4441
      %v4664 = vunpack.c.l.b16 %v4451
      %v4665 = vunpack.c.l.b16 %v4465
      %v4666 = vunpack.c.l.b16 %v4475
      %v4667 = vunpack.c.l.b16 %v4489
      %v4668 = vunpack.c.l.b16 %v4499
      %v4669 = vunpack.c.l.b16 %v4513
      %v4670 = vunpack.c.l.b16 %v4523
      %v4671 = vunpack.c.l.b16 %v4537
      %v4672 = vunpack.c.l.b16 %v4547
      %v4673 = vunpack.c.l.b16 %v4561
      %v4674 = vunpack.c.l.b16 %v4571
      %v4675 = vunpack.c.l.b16 %v4585
      %v4676 = vunpack.c.l.b16 %v4595
      %v4677 = vunpack.c.l.b16 %v4609
      %v4678 = vunpack.c.l.b16 %v4619
      %v4679 = vunpack.c.l.b16 %v4633
      %v4680 = vunpack.c.l.b16 %v4643
      %v4681 = vpack.c.b16 %v4650, %v4649
      %v4682 = vpack.c.b16 %v4652, %v4651
      %v4683 = vpack.c.b16 %v4654, %v4653
      %v4684 = vpack.c.b16 %v4656, %v4655
      %v4685 = vpack.c.b16 %v4658, %v4657
      %v4686 = vpack.c.b16 %v4660, %v4659
      %v4687 = vpack.c.b16 %v4662, %v4661
      %v4688 = vpack.c.b16 %v4664, %v4663
      %v4689 = vpack.c.b16 %v4666, %v4665
      %v4690 = vpack.c.b16 %v4668, %v4667
      %v4691 = vpack.c.b16 %v4670, %v4669
      %v4692 = vpack.c.b16 %v4672, %v4671
      %v4693 = vpack.c.b16 %v4674, %v4673
      %v4694 = vpack.c.b16 %v4676, %v4675
      %v4695 = vpack.c.b16 %v4678, %v4677
      %v4696 = vpack.c.b16 %v4680, %v4679
      %v4701 = vunpack.c.l.b16 %v4645
      %v4702 = vunpack.c.l.b16 %v4646
      %v4703 = vunpack.c.l.b16 %v4647
      %v4704 = vunpack.c.l.b16 %v4648
      %v4705 = vpack.c.b16 %v4702, %v4701
      %v4706 = vpack.c.b16 %v4704, %v4703
      %v4710 = vsel %vm1768, %v4681, 0
      %v4713 = vsel %vm1768, %v4682, 0
      %v4716 = vsel %vm1768, %v4683, 0
      %v4719 = vsel %vm1768, %v4684, 0
      %v4722 = vsel %vm1768, %v4685, 0
      %v4725 = vsel %vm1768, %v4686, 0
      %v4728 = vsel %vm1768, %v4687, 0
      %v4731 = vsel %vm1768, %v4688, 0
      %v4734 = vsel %vm1768, %v4689, 0
      %v4737 = vsel %vm1768, %v4690, 0
      %v4740 = vsel %vm1768, %v4691, 0
      %v4743 = vsel %vm1768, %v4692, 0
      %v4746 = vsel %vm1768, %v4693, 0
      %v4749 = vsel %vm1768, %v4694, 0
      %v4752 = vsel %vm1768, %v4695, 0
      %v4755 = vsel %vm1768, %v4696, 0
      %4757 = vmatpush.bf16.msra.mxu0 0
      %4758 = vmatpush.bf16.msra.mxu0 0
      %4759 = vmatpush.bf16.msra.mxu0 0
      %4760 = vmatpush.bf16.msra.mxu0 0
      %4761 = vmatpush.bf16.msra.mxu0 0
      %4762 = vmatpush.bf16.msra.mxu0 0
      %4763 = vmatpush.bf16.msra.mxu0 %v4706
      %4764 = vmatpush.bf16.msra.mxu0 %v4705
      %4765 = vmatmul.bf16.gmra.mxu0 %v4710
      %v4766 = vpop.f32.mrf.mxu0
      %v4767 = vadd.f32 0.0, %v4766
      %v4768 = vpop.f32.mrf.mxu0
      %v4769 = vadd.f32 0.0, %v4768
      %4770 = vmatmul.bf16.gmra.mxu0 %v4713
      %v4771 = vpop.f32.mrf.mxu0
      %v4772 = vadd.f32 0.0, %v4771
      %v4773 = vpop.f32.mrf.mxu0
      %v4774 = vadd.f32 0.0, %v4773
      %4775 = vmatmul.bf16.gmra.mxu0 %v4716
      %v4776 = vpop.f32.mrf.mxu0
      %v4777 = vadd.f32 0.0, %v4776
      %v4778 = vpop.f32.mrf.mxu0
      %v4779 = vadd.f32 0.0, %v4778
      %4780 = vmatmul.bf16.gmra.mxu0 %v4719
      %v4781 = vpop.f32.mrf.mxu0
      %v4782 = vadd.f32 0.0, %v4781
      %v4783 = vpop.f32.mrf.mxu0
      %v4784 = vadd.f32 0.0, %v4783
      %4785 = vmatmul.bf16.gmra.mxu0 %v4722
      %v4786 = vpop.f32.mrf.mxu0
      %v4787 = vadd.f32 0.0, %v4786
      %v4788 = vpop.f32.mrf.mxu0
      %v4789 = vadd.f32 0.0, %v4788
      %4790 = vmatmul.bf16.gmra.mxu0 %v4725
      %v4791 = vpop.f32.mrf.mxu0
      %v4792 = vadd.f32 0.0, %v4791
      %v4793 = vpop.f32.mrf.mxu0
      %v4794 = vadd.f32 0.0, %v4793
      %4795 = vmatmul.bf16.gmra.mxu0 %v4728
      %v4796 = vpop.f32.mrf.mxu0
      %v4797 = vadd.f32 0.0, %v4796
      %v4798 = vpop.f32.mrf.mxu0
      %v4799 = vadd.f32 0.0, %v4798
      %4800 = vmatmul.bf16.gmra.mxu0 %v4731
      %v4801 = vpop.f32.mrf.mxu0
      %v4802 = vadd.f32 0.0, %v4801
      %v4803 = vpop.f32.mrf.mxu0
      %v4804 = vadd.f32 0.0, %v4803
      %4805 = vmatmul.bf16.gmra.mxu0 %v4734
      %v4806 = vpop.f32.mrf.mxu0
      %v4807 = vadd.f32 0.0, %v4806
      %v4808 = vpop.f32.mrf.mxu0
      %v4809 = vadd.f32 0.0, %v4808
      %4810 = vmatmul.bf16.gmra.mxu0 %v4737
      %v4811 = vpop.f32.mrf.mxu0
      %v4812 = vadd.f32 0.0, %v4811
      %v4813 = vpop.f32.mrf.mxu0
      %v4814 = vadd.f32 0.0, %v4813
      %4815 = vmatmul.bf16.gmra.mxu0 %v4740
      %v4816 = vpop.f32.mrf.mxu0
      %v4817 = vadd.f32 0.0, %v4816
      %v4818 = vpop.f32.mrf.mxu0
      %v4819 = vadd.f32 0.0, %v4818
      %4820 = vmatmul.bf16.gmra.mxu0 %v4743
      %v4821 = vpop.f32.mrf.mxu0
      %v4822 = vadd.f32 0.0, %v4821
      %v4823 = vpop.f32.mrf.mxu0
      %v4824 = vadd.f32 0.0, %v4823
      %4825 = vmatmul.bf16.gmra.mxu0 %v4746
      %v4826 = vpop.f32.mrf.mxu0
      %v4827 = vadd.f32 0.0, %v4826
      %v4828 = vpop.f32.mrf.mxu0
      %v4829 = vadd.f32 0.0, %v4828
      %4830 = vmatmul.bf16.gmra.mxu0 %v4749
      %v4831 = vpop.f32.mrf.mxu0
      %v4832 = vadd.f32 0.0, %v4831
      %v4833 = vpop.f32.mrf.mxu0
      %v4834 = vadd.f32 0.0, %v4833
      %4835 = vmatmul.bf16.gmra.mxu0 %v4752
      %v4836 = vpop.f32.mrf.mxu0
      %v4837 = vadd.f32 0.0, %v4836
      %v4838 = vpop.f32.mrf.mxu0
      %v4839 = vadd.f32 0.0, %v4838
      %4840 = vmatmul.bf16.gmra.mxu0 %v4755
      %v4841 = vpop.f32.mrf.mxu0
      %v4842 = vadd.f32 0.0, %v4841
      %v4843 = vpop.f32.mrf.mxu0
      %v4844 = vadd.f32 0.0, %v4843
      %4845 = vdwg.mxu0
      %v4846 = vadd.f32 %v4180, %v4767
      %v4847 = vadd.f32 %v4181, %v4769
      %v4848 = vadd.f32 %v4182, %v4772
      %v4849 = vadd.f32 %v4183, %v4774
      %v4850 = vadd.f32 %v4184, %v4777
      %v4851 = vadd.f32 %v4185, %v4779
      %v4852 = vadd.f32 %v4186, %v4782
      %v4853 = vadd.f32 %v4187, %v4784
      %v4854 = vadd.f32 %v4188, %v4787
      %v4855 = vadd.f32 %v4189, %v4789
      %v4856 = vadd.f32 %v4190, %v4792
      %v4857 = vadd.f32 %v4191, %v4794
      %v4858 = vadd.f32 %v4192, %v4797
      %v4859 = vadd.f32 %v4193, %v4799
      %v4860 = vadd.f32 %v4194, %v4802
      %v4861 = vadd.f32 %v4195, %v4804
      %v4862 = vadd.f32 %v4196, %v4807
      %v4863 = vadd.f32 %v4197, %v4809
      %v4864 = vadd.f32 %v4198, %v4812
      %v4865 = vadd.f32 %v4199, %v4814
      %v4866 = vadd.f32 %v4200, %v4817
      %v4867 = vadd.f32 %v4201, %v4819
      %v4868 = vadd.f32 %v4202, %v4822
      %v4869 = vadd.f32 %v4203, %v4824
      %v4870 = vadd.f32 %v4204, %v4827
      %v4871 = vadd.f32 %v4205, %v4829
      %v4872 = vadd.f32 %v4206, %v4832
      %v4873 = vadd.f32 %v4207, %v4834
      %v4874 = vadd.f32 %v4208, %v4837
      %v4875 = vadd.f32 %v4209, %v4839
      %v4876 = vadd.f32 %v4210, %v4842
      %v4877 = vadd.f32 %v4211, %v4844
      %v4878 = vld [vmem:[%s3913] sm:$0xe]
      %v4879 = vld [vmem:[%s3913 + $0xc] sm:$0xe]
      %v4880 = vld [vmem:[%s3913 + $0x18] sm:$0xe]
      %v4881 = vld [vmem:[%s3913 + $0x24] sm:$0xe]
      %v4882 = vld [vmem:[%s3913 + $0x30] sm:$0xe]
      %v4883 = vld [vmem:[%s3913 + $0x3c] sm:$0xe]
      %v4884 = vld [vmem:[%s3913 + $0x48] sm:$0xe]
      %v4885 = vld [vmem:[%s3913 + $0x54] sm:$0xe]
      %v4886 = vld [vmem:[%s3913 + $0x60] sm:$0xe]
      %v4887 = vld [vmem:[%s3913 + $0x6c] sm:$0xe]
      %v4888 = vld [vmem:[%s3913 + $0x78] sm:$0xe]
      %v4889 = vld [vmem:[%s3913 + $0x84] sm:$0xe]
      %v4890 = vld [vmem:[%s3913 + $0x90] sm:$0xe]
      %v4891 = vld [vmem:[%s3913 + $0x9c] sm:$0xe]
      %v4892 = vld [vmem:[%s3913 + $0xa8] sm:$0xe]
      %v4893 = vld [vmem:[%s3913 + $0xb4] sm:$0xe]
      %v4942 = vrot.slane %v4878, 5
      %v4943 = vrot.slane %v4942, 4
      %v4944 = vrot.slane %v4213, 5
      %v4945 = vsel %vm2185, %v4943, %v4944
      %v4946 = vrot.slane %v4944, 4
      %v4947 = vrot.slane %v4214, 5
      %v4948 = vsel %vm2185, %v4946, %v4947
      %v4949 = vrot.slane %v4879, 5
      %v4950 = vrot.slane %v4949, 4
      %v4951 = vrot.slane %v4216, 5
      %v4952 = vsel %vm2185, %v4950, %v4951
      %v4953 = vrot.slane %v4951, 4
      %v4954 = vrot.slane %v4217, 5
      %v4955 = vsel %vm2185, %v4953, %v4954
      %v4956 = vrot.slane %v4880, 5
      %v4957 = vrot.slane %v4956, 4
      %v4958 = vrot.slane %v4219, 5
      %v4959 = vsel %vm2185, %v4957, %v4958
      %v4960 = vrot.slane %v4958, 4
      %v4961 = vrot.slane %v4220, 5
      %v4962 = vsel %vm2185, %v4960, %v4961
      %v4963 = vrot.slane %v4881, 5
      %v4964 = vrot.slane %v4963, 4
      %v4965 = vrot.slane %v4222, 5
      %v4966 = vsel %vm2185, %v4964, %v4965
      %v4967 = vrot.slane %v4965, 4
      %v4968 = vrot.slane %v4223, 5
      %v4969 = vsel %vm2185, %v4967, %v4968
      %v4970 = vrot.slane %v4882, 5
      %v4971 = vrot.slane %v4970, 4
      %v4972 = vrot.slane %v4225, 5
      %v4973 = vsel %vm2185, %v4971, %v4972
      %v4974 = vrot.slane %v4972, 4
      %v4975 = vrot.slane %v4226, 5
      %v4976 = vsel %vm2185, %v4974, %v4975
      %v4977 = vrot.slane %v4883, 5
      %v4978 = vrot.slane %v4977, 4
      %v4979 = vrot.slane %v4228, 5
      %v4980 = vsel %vm2185, %v4978, %v4979
      %v4981 = vrot.slane %v4979, 4
      %v4982 = vrot.slane %v4229, 5
      %v4983 = vsel %vm2185, %v4981, %v4982
      %v4984 = vrot.slane %v4884, 5
      %v4985 = vrot.slane %v4984, 4
      %v4986 = vrot.slane %v4231, 5
      %v4987 = vsel %vm2185, %v4985, %v4986
      %v4988 = vrot.slane %v4986, 4
      %v4989 = vrot.slane %v4232, 5
      %v4990 = vsel %vm2185, %v4988, %v4989
      %v4991 = vrot.slane %v4885, 5
      %v4992 = vrot.slane %v4991, 4
      %v4993 = vrot.slane %v4234, 5
      %v4994 = vsel %vm2185, %v4992, %v4993
      %v4995 = vrot.slane %v4993, 4
      %v4996 = vrot.slane %v4235, 5
      %v4997 = vsel %vm2185, %v4995, %v4996
      %v4998 = vrot.slane %v4886, 5
      %v4999 = vrot.slane %v4998, 4
      %v5000 = vrot.slane %v4237, 5
      %v5001 = vsel %vm2185, %v4999, %v5000
      %v5002 = vrot.slane %v5000, 4
      %v5003 = vrot.slane %v4238, 5
      %v5004 = vsel %vm2185, %v5002, %v5003
      %v5005 = vrot.slane %v4887, 5
      %v5006 = vrot.slane %v5005, 4
      %v5007 = vrot.slane %v4240, 5
      %v5008 = vsel %vm2185, %v5006, %v5007
      %v5009 = vrot.slane %v5007, 4
      %v5010 = vrot.slane %v4241, 5
      %v5011 = vsel %vm2185, %v5009, %v5010
      %v5012 = vrot.slane %v4888, 5
      %v5013 = vrot.slane %v5012, 4
      %v5014 = vrot.slane %v4243, 5
      %v5015 = vsel %vm2185, %v5013, %v5014
      %v5016 = vrot.slane %v5014, 4
      %v5017 = vrot.slane %v4244, 5
      %v5018 = vsel %vm2185, %v5016, %v5017
      %v5019 = vrot.slane %v4889, 5
      %v5020 = vrot.slane %v5019, 4
      %v5021 = vrot.slane %v4246, 5
      %v5022 = vsel %vm2185, %v5020, %v5021
      %v5023 = vrot.slane %v5021, 4
      %v5024 = vrot.slane %v4247, 5
      %v5025 = vsel %vm2185, %v5023, %v5024
      %v5026 = vrot.slane %v4890, 5
      %v5027 = vrot.slane %v5026, 4
      %v5028 = vrot.slane %v4249, 5
      %v5029 = vsel %vm2185, %v5027, %v5028
      %v5030 = vrot.slane %v5028, 4
      %v5031 = vrot.slane %v4250, 5
      %v5032 = vsel %vm2185, %v5030, %v5031
      %v5033 = vrot.slane %v4891, 5
      %v5034 = vrot.slane %v5033, 4
      %v5035 = vrot.slane %v4252, 5
      %v5036 = vsel %vm2185, %v5034, %v5035
      %v5037 = vrot.slane %v5035, 4
      %v5038 = vrot.slane %v4253, 5
      %v5039 = vsel %vm2185, %v5037, %v5038
      %v5040 = vrot.slane %v4892, 5
      %v5041 = vrot.slane %v5040, 4
      %v5042 = vrot.slane %v4255, 5
      %v5043 = vsel %vm2185, %v5041, %v5042
      %v5044 = vrot.slane %v5042, 4
      %v5045 = vrot.slane %v4256, 5
      %v5046 = vsel %vm2185, %v5044, %v5045
      %v5047 = vrot.slane %v4893, 5
      %v5048 = vrot.slane %v5047, 4
      %v5049 = vrot.slane %v4258, 5
      %v5050 = vsel %vm2185, %v5048, %v5049
      %v5051 = vrot.slane %v5049, 4
      %v5052 = vrot.slane %v4259, 5
      %v5053 = vsel %vm2185, %v5051, %v5052
      %s5054 = scalar_lea.vmem %s2, 128
      %v5055 = vld [vmem:[%s5054] sm:$0xf]
      %v5056 = vld [vmem:[%s5054 + $0x4] sm:$0xf]
      %v5057 = vld [vmem:[%s5054 + $0x8] sm:$0xf]
      %v5058 = vld [vmem:[%s5054 + $0xc] sm:$0xf]
      %v5059 = vunpack.c.l.b16 %v4945
      %v5060 = vunpack.c.l.b16 %v4948
      %v5061 = vunpack.c.l.b16 %v4952
      %v5062 = vunpack.c.l.b16 %v4955
      %v5063 = vunpack.c.l.b16 %v4959
      %v5064 = vunpack.c.l.b16 %v4962
      %v5065 = vunpack.c.l.b16 %v4966
      %v5066 = vunpack.c.l.b16 %v4969
      %v5067 = vunpack.c.l.b16 %v4973
      %v5068 = vunpack.c.l.b16 %v4976
      %v5069 = vunpack.c.l.b16 %v4980
      %v5070 = vunpack.c.l.b16 %v4983
      %v5071 = vunpack.c.l.b16 %v4987
      %v5072 = vunpack.c.l.b16 %v4990
      %v5073 = vunpack.c.l.b16 %v4994
      %v5074 = vunpack.c.l.b16 %v4997
      %v5075 = vunpack.c.l.b16 %v5001
      %v5076 = vunpack.c.l.b16 %v5004
      %v5077 = vunpack.c.l.b16 %v5008
      %v5078 = vunpack.c.l.b16 %v5011
      %v5079 = vunpack.c.l.b16 %v5015
      %v5080 = vunpack.c.l.b16 %v5018
      %v5081 = vunpack.c.l.b16 %v5022
      %v5082 = vunpack.c.l.b16 %v5025
      %v5083 = vunpack.c.l.b16 %v5029
      %v5084 = vunpack.c.l.b16 %v5032
      %v5085 = vunpack.c.l.b16 %v5036
      %v5086 = vunpack.c.l.b16 %v5039
      %v5087 = vunpack.c.l.b16 %v5043
      %v5088 = vunpack.c.l.b16 %v5046
      %v5089 = vunpack.c.l.b16 %v5050
      %v5090 = vunpack.c.l.b16 %v5053
      %v5091 = vpack.c.b16 %v5060, %v5059
      %v5092 = vpack.c.b16 %v5062, %v5061
      %v5093 = vpack.c.b16 %v5064, %v5063
      %v5094 = vpack.c.b16 %v5066, %v5065
      %v5095 = vpack.c.b16 %v5068, %v5067
      %v5096 = vpack.c.b16 %v5070, %v5069
      %v5097 = vpack.c.b16 %v5072, %v5071
      %v5098 = vpack.c.b16 %v5074, %v5073
      %v5099 = vpack.c.b16 %v5076, %v5075
      %v5100 = vpack.c.b16 %v5078, %v5077
      %v5101 = vpack.c.b16 %v5080, %v5079
      %v5102 = vpack.c.b16 %v5082, %v5081
      %v5103 = vpack.c.b16 %v5084, %v5083
      %v5104 = vpack.c.b16 %v5086, %v5085
      %v5105 = vpack.c.b16 %v5088, %v5087
      %v5106 = vpack.c.b16 %v5090, %v5089
      %v5111 = vunpack.c.l.b16 %v5055
      %v5112 = vunpack.c.l.b16 %v5056
      %v5113 = vunpack.c.l.b16 %v5057
      %v5114 = vunpack.c.l.b16 %v5058
      %v5115 = vpack.c.b16 %v5112, %v5111
      %v5116 = vpack.c.b16 %v5114, %v5113
      %v5120 = vsel %vm1768, %v5091, 0
      %v5123 = vsel %vm1768, %v5092, 0
      %v5126 = vsel %vm1768, %v5093, 0
      %v5129 = vsel %vm1768, %v5094, 0
      %v5132 = vsel %vm1768, %v5095, 0
      %v5135 = vsel %vm1768, %v5096, 0
      %v5138 = vsel %vm1768, %v5097, 0
      %v5141 = vsel %vm1768, %v5098, 0
      %v5144 = vsel %vm1768, %v5099, 0
      %v5147 = vsel %vm1768, %v5100, 0
      %v5150 = vsel %vm1768, %v5101, 0
      %v5153 = vsel %vm1768, %v5102, 0
      %v5156 = vsel %vm1768, %v5103, 0
      %v5159 = vsel %vm1768, %v5104, 0
      %v5162 = vsel %vm1768, %v5105, 0
      %v5165 = vsel %vm1768, %v5106, 0
      %5167 = vmatpush.bf16.msra.mxu0 0
      %5168 = vmatpush.bf16.msra.mxu0 0
      %5169 = vmatpush.bf16.msra.mxu0 0
      %5170 = vmatpush.bf16.msra.mxu0 0
      %5171 = vmatpush.bf16.msra.mxu0 0
      %5172 = vmatpush.bf16.msra.mxu0 0
      %5173 = vmatpush.bf16.msra.mxu0 %v5116
      %5174 = vmatpush.bf16.msra.mxu0 %v5115
      %5175 = vmatmul.bf16.gmra.mxu0 %v5120
      %v5176 = vpop.f32.mrf.mxu0
      %v5177 = vadd.f32 0.0, %v5176
      %v5178 = vpop.f32.mrf.mxu0
      %v5179 = vadd.f32 0.0, %v5178
      %5180 = vmatmul.bf16.gmra.mxu0 %v5123
      %v5181 = vpop.f32.mrf.mxu0
      %v5182 = vadd.f32 0.0, %v5181
      %v5183 = vpop.f32.mrf.mxu0
      %v5184 = vadd.f32 0.0, %v5183
      %5185 = vmatmul.bf16.gmra.mxu0 %v5126
      %v5186 = vpop.f32.mrf.mxu0
      %v5187 = vadd.f32 0.0, %v5186
      %v5188 = vpop.f32.mrf.mxu0
      %v5189 = vadd.f32 0.0, %v5188
      %5190 = vmatmul.bf16.gmra.mxu0 %v5129
      %v5191 = vpop.f32.mrf.mxu0
      %v5192 = vadd.f32 0.0, %v5191
      %v5193 = vpop.f32.mrf.mxu0
      %v5194 = vadd.f32 0.0, %v5193
      %5195 = vmatmul.bf16.gmra.mxu0 %v5132
      %v5196 = vpop.f32.mrf.mxu0
      %v5197 = vadd.f32 0.0, %v5196
      %v5198 = vpop.f32.mrf.mxu0
      %v5199 = vadd.f32 0.0, %v5198
      %5200 = vmatmul.bf16.gmra.mxu0 %v5135
      %v5201 = vpop.f32.mrf.mxu0
      %v5202 = vadd.f32 0.0, %v5201
      %v5203 = vpop.f32.mrf.mxu0
      %v5204 = vadd.f32 0.0, %v5203
      %5205 = vmatmul.bf16.gmra.mxu0 %v5138
      %v5206 = vpop.f32.mrf.mxu0
      %v5207 = vadd.f32 0.0, %v5206
      %v5208 = vpop.f32.mrf.mxu0
      %v5209 = vadd.f32 0.0, %v5208
      %5210 = vmatmul.bf16.gmra.mxu0 %v5141
      %v5211 = vpop.f32.mrf.mxu0
      %v5212 = vadd.f32 0.0, %v5211
      %v5213 = vpop.f32.mrf.mxu0
      %v5214 = vadd.f32 0.0, %v5213
      %5215 = vmatmul.bf16.gmra.mxu0 %v5144
      %v5216 = vpop.f32.mrf.mxu0
      %v5217 = vadd.f32 0.0, %v5216
      %v5218 = vpop.f32.mrf.mxu0
      %v5219 = vadd.f32 0.0, %v5218
      %5220 = vmatmul.bf16.gmra.mxu0 %v5147
      %v5221 = vpop.f32.mrf.mxu0
      %v5222 = vadd.f32 0.0, %v5221
      %v5223 = vpop.f32.mrf.mxu0
      %v5224 = vadd.f32 0.0, %v5223
      %5225 = vmatmul.bf16.gmra.mxu0 %v5150
      %v5226 = vpop.f32.mrf.mxu0
      %v5227 = vadd.f32 0.0, %v5226
      %v5228 = vpop.f32.mrf.mxu0
      %v5229 = vadd.f32 0.0, %v5228
      %5230 = vmatmul.bf16.gmra.mxu0 %v5153
      %v5231 = vpop.f32.mrf.mxu0
      %v5232 = vadd.f32 0.0, %v5231
      %v5233 = vpop.f32.mrf.mxu0
      %v5234 = vadd.f32 0.0, %v5233
      %5235 = vmatmul.bf16.gmra.mxu0 %v5156
      %v5236 = vpop.f32.mrf.mxu0
      %v5237 = vadd.f32 0.0, %v5236
      %v5238 = vpop.f32.mrf.mxu0
      %v5239 = vadd.f32 0.0, %v5238
      %5240 = vmatmul.bf16.gmra.mxu0 %v5159
      %v5241 = vpop.f32.mrf.mxu0
      %v5242 = vadd.f32 0.0, %v5241
      %v5243 = vpop.f32.mrf.mxu0
      %v5244 = vadd.f32 0.0, %v5243
      %5245 = vmatmul.bf16.gmra.mxu0 %v5162
      %v5246 = vpop.f32.mrf.mxu0
      %v5247 = vadd.f32 0.0, %v5246
      %v5248 = vpop.f32.mrf.mxu0
      %v5249 = vadd.f32 0.0, %v5248
      %5250 = vmatmul.bf16.gmra.mxu0 %v5165
      %v5251 = vpop.f32.mrf.mxu0
      %v5252 = vadd.f32 0.0, %v5251
      %v5253 = vpop.f32.mrf.mxu0
      %v5254 = vadd.f32 0.0, %v5253
      %5255 = vdwg.mxu0
      %v5256 = vadd.f32 %v4846, %v5177
      %v5257 = vadd.f32 %v4847, %v5179
      %v5258 = vadd.f32 %v4848, %v5182
      %v5259 = vadd.f32 %v4849, %v5184
      %v5260 = vadd.f32 %v4850, %v5187
      %v5261 = vadd.f32 %v4851, %v5189
      %v5262 = vadd.f32 %v4852, %v5192
      %v5263 = vadd.f32 %v4853, %v5194
      %v5264 = vadd.f32 %v4854, %v5197
      %v5265 = vadd.f32 %v4855, %v5199
      %v5266 = vadd.f32 %v4856, %v5202
      %v5267 = vadd.f32 %v4857, %v5204
      %v5268 = vadd.f32 %v4858, %v5207
      %v5269 = vadd.f32 %v4859, %v5209
      %v5270 = vadd.f32 %v4860, %v5212
      %v5271 = vadd.f32 %v4861, %v5214
      %v5272 = vadd.f32 %v4862, %v5217
      %v5273 = vadd.f32 %v4863, %v5219
      %v5274 = vadd.f32 %v4864, %v5222
      %v5275 = vadd.f32 %v4865, %v5224
      %v5276 = vadd.f32 %v4866, %v5227
      %v5277 = vadd.f32 %v4867, %v5229
      %v5278 = vadd.f32 %v4868, %v5232
      %v5279 = vadd.f32 %v4869, %v5234
      %v5280 = vadd.f32 %v4870, %v5237
      %v5281 = vadd.f32 %v4871, %v5239
      %v5282 = vadd.f32 %v4872, %v5242
      %v5283 = vadd.f32 %v4873, %v5244
      %v5284 = vadd.f32 %v4874, %v5247
      %v5285 = vadd.f32 %v4875, %v5249
      %v5286 = vadd.f32 %v4876, %v5252
      %v5287 = vadd.f32 %v4877, %v5254
      %v5288 = vld [vmem:[%s3] sm:$0x1]
      %v5290 = vperm.slane %v5288, 0
      %v5292 = vadd.f32 %v5256, %v5290
      %v5293 = vadd.f32 %v5257, %v5290
      %v5294 = vadd.f32 %v5258, %v5290
      %v5295 = vadd.f32 %v5259, %v5290
      %v5296 = vadd.f32 %v5260, %v5290
      %v5297 = vadd.f32 %v5261, %v5290
      %v5298 = vadd.f32 %v5262, %v5290
      %v5299 = vadd.f32 %v5263, %v5290
      %v5300 = vadd.f32 %v5264, %v5290
      %v5301 = vadd.f32 %v5265, %v5290
      %v5302 = vadd.f32 %v5266, %v5290
      %v5303 = vadd.f32 %v5267, %v5290
      %v5304 = vadd.f32 %v5268, %v5290
      %v5305 = vadd.f32 %v5269, %v5290
      %v5306 = vadd.f32 %v5270, %v5290
      %v5307 = vadd.f32 %v5271, %v5290
      %v5308 = vadd.f32 %v5272, %v5290
      %v5309 = vadd.f32 %v5273, %v5290
      %v5310 = vadd.f32 %v5274, %v5290
      %v5311 = vadd.f32 %v5275, %v5290
      %v5312 = vadd.f32 %v5276, %v5290
      %v5313 = vadd.f32 %v5277, %v5290
      %v5314 = vadd.f32 %v5278, %v5290
      %v5315 = vadd.f32 %v5279, %v5290
      %v5316 = vadd.f32 %v5280, %v5290
      %v5317 = vadd.f32 %v5281, %v5290
      %v5318 = vadd.f32 %v5282, %v5290
      %v5319 = vadd.f32 %v5283, %v5290
      %v5320 = vadd.f32 %v5284, %v5290
      %v5321 = vadd.f32 %v5285, %v5290
      %v5322 = vadd.f32 %v5286, %v5290
      %v5323 = vadd.f32 %v5287, %v5290
      %v5324 = vpack.c.bf16 %v5292, %v5292
      %v5325 = vpack.c.bf16 %v5293, %v5293
      %v5326 = vpack.c.bf16 %v5294, %v5294
      %v5327 = vpack.c.bf16 %v5295, %v5295
      %v5328 = vpack.c.bf16 %v5296, %v5296
      %v5329 = vpack.c.bf16 %v5297, %v5297
      %v5330 = vpack.c.bf16 %v5298, %v5298
      %v5331 = vpack.c.bf16 %v5299, %v5299
      %v5332 = vpack.c.bf16 %v5300, %v5300
      %v5333 = vpack.c.bf16 %v5301, %v5301
      %v5334 = vpack.c.bf16 %v5302, %v5302
      %v5335 = vpack.c.bf16 %v5303, %v5303
      %v5336 = vpack.c.bf16 %v5304, %v5304
      %v5337 = vpack.c.bf16 %v5305, %v5305
      %v5338 = vpack.c.bf16 %v5306, %v5306
      %v5339 = vpack.c.bf16 %v5307, %v5307
      %v5340 = vpack.c.bf16 %v5308, %v5308
      %v5341 = vpack.c.bf16 %v5309, %v5309
      %v5342 = vpack.c.bf16 %v5310, %v5310
      %v5343 = vpack.c.bf16 %v5311, %v5311
      %v5344 = vpack.c.bf16 %v5312, %v5312
      %v5345 = vpack.c.bf16 %v5313, %v5313
      %v5346 = vpack.c.bf16 %v5314, %v5314
      %v5347 = vpack.c.bf16 %v5315, %v5315
      %v5348 = vpack.c.bf16 %v5316, %v5316
      %v5349 = vpack.c.bf16 %v5317, %v5317
      %v5350 = vpack.c.bf16 %v5318, %v5318
      %v5351 = vpack.c.bf16 %v5319, %v5319
      %v5352 = vpack.c.bf16 %v5320, %v5320
      %v5353 = vpack.c.bf16 %v5321, %v5321
      %v5354 = vpack.c.bf16 %v5322, %v5322
      %v5355 = vpack.c.bf16 %v5323, %v5323
      %vm5356 = vcmask 125952
      %5357 = vst.msk [vmem:[%s304] sm:$0xf] %vm5356, %v5324
      %5358 = vst.msk [vmem:[%s304 + $0x4] sm:$0xf] %vm5356, %v5325
      %5359 = vst.msk [vmem:[%s304 + $0x8] sm:$0xf] %vm5356, %v5326
      %5360 = vst.msk [vmem:[%s304 + $0xc] sm:$0xf] %vm5356, %v5327
      %5361 = vst.msk [vmem:[%s304 + $0x10] sm:$0xf] %vm5356, %v5328
      %5362 = vst.msk [vmem:[%s304 + $0x14] sm:$0xf] %vm5356, %v5329
      %5363 = vst.msk [vmem:[%s304 + $0x18] sm:$0xf] %vm5356, %v5330
      %5364 = vst.msk [vmem:[%s304 + $0x1c] sm:$0xf] %vm5356, %v5331
      %5365 = vst.msk [vmem:[%s304 + $0x20] sm:$0xf] %vm5356, %v5332
      %5366 = vst.msk [vmem:[%s304 + $0x24] sm:$0xf] %vm5356, %v5333
      %5367 = vst.msk [vmem:[%s304 + $0x28] sm:$0xf] %vm5356, %v5334
      %5368 = vst.msk [vmem:[%s304 + $0x2c] sm:$0xf] %vm5356, %v5335
      %5369 = vst.msk [vmem:[%s304 + $0x30] sm:$0xf] %vm5356, %v5336
      %5370 = vst.msk [vmem:[%s304 + $0x34] sm:$0xf] %vm5356, %v5337
      %5371 = vst.msk [vmem:[%s304 + $0x38] sm:$0xf] %vm5356, %v5338
      %5372 = vst.msk [vmem:[%s304 + $0x3c] sm:$0xf] %vm5356, %v5339
      %5373 = vst.msk [vmem:[%s304 + $0x40] sm:$0xf] %vm5356, %v5340
      %5374 = vst.msk [vmem:[%s304 + $0x44] sm:$0xf] %vm5356, %v5341
      %5375 = vst.msk [vmem:[%s304 + $0x48] sm:$0xf] %vm5356, %v5342
      %5376 = vst.msk [vmem:[%s304 + $0x4c] sm:$0xf] %vm5356, %v5343
      %5377 = vst.msk [vmem:[%s304 + $0x50] sm:$0xf] %vm5356, %v5344
      %5378 = vst.msk [vmem:[%s304 + $0x54] sm:$0xf] %vm5356, %v5345
      %5379 = vst.msk [vmem:[%s304 + $0x58] sm:$0xf] %vm5356, %v5346
      %5380 = vst.msk [vmem:[%s304 + $0x5c] sm:$0xf] %vm5356, %v5347
      %5381 = vst.msk [vmem:[%s304 + $0x60] sm:$0xf] %vm5356, %v5348
      %5382 = vst.msk [vmem:[%s304 + $0x64] sm:$0xf] %vm5356, %v5349
      %5383 = vst.msk [vmem:[%s304 + $0x68] sm:$0xf] %vm5356, %v5350
      %5384 = vst.msk [vmem:[%s304 + $0x6c] sm:$0xf] %vm5356, %v5351
      %5385 = vst.msk [vmem:[%s304 + $0x70] sm:$0xf] %vm5356, %v5352
      %5386 = vst.msk [vmem:[%s304 + $0x74] sm:$0xf] %vm5356, %v5353
      %5387 = vst.msk [vmem:[%s304 + $0x78] sm:$0xf] %vm5356, %v5354
      %5388 = vst.msk [vmem:[%s304 + $0x7c] sm:$0xf] %vm5356, %v5355
      %vm5389 = vcmask 130048
      %v5390 = vsel %vm5389, %v5292, 0.0
      %v5391 = vsel %vm5389, %v5293, 0.0
      %v5392 = vadd.f32 %v5390, %v5391
      %v5393 = vsel %vm5389, %v5294, 0.0
      %v5394 = vadd.f32 %v5392, %v5393
      %v5395 = vsel %vm5389, %v5295, 0.0
      %v5396 = vadd.f32 %v5394, %v5395
      %v5397 = vsel %vm5389, %v5296, 0.0
      %v5398 = vadd.f32 %v5396, %v5397
      %v5399 = vsel %vm5389, %v5297, 0.0
      %v5400 = vadd.f32 %v5398, %v5399
      %v5401 = vsel %vm5389, %v5298, 0.0
      %v5402 = vadd.f32 %v5400, %v5401
      %v5403 = vsel %vm5389, %v5299, 0.0
      %v5404 = vadd.f32 %v5402, %v5403
      %v5405 = vsel %vm5389, %v5300, 0.0
      %v5406 = vadd.f32 %v5404, %v5405
      %v5407 = vsel %vm5389, %v5301, 0.0
      %v5408 = vadd.f32 %v5406, %v5407
      %v5409 = vsel %vm5389, %v5302, 0.0
      %v5410 = vadd.f32 %v5408, %v5409
      %v5411 = vsel %vm5389, %v5303, 0.0
      %v5412 = vadd.f32 %v5410, %v5411
      %v5413 = vsel %vm5389, %v5304, 0.0
      %v5414 = vadd.f32 %v5412, %v5413
      %v5415 = vsel %vm5389, %v5305, 0.0
      %v5416 = vadd.f32 %v5414, %v5415
      %v5417 = vsel %vm5389, %v5306, 0.0
      %v5418 = vadd.f32 %v5416, %v5417
      %v5419 = vsel %vm5389, %v5307, 0.0
      %v5420 = vadd.f32 %v5418, %v5419
      %v5421 = vsel %vm5389, %v5308, 0.0
      %v5422 = vadd.f32 %v5420, %v5421
      %v5423 = vsel %vm5389, %v5309, 0.0
      %v5424 = vadd.f32 %v5422, %v5423
      %v5425 = vsel %vm5389, %v5310, 0.0
      %v5426 = vadd.f32 %v5424, %v5425
      %v5427 = vsel %vm5389, %v5311, 0.0
      %v5428 = vadd.f32 %v5426, %v5427
      %v5429 = vsel %vm5389, %v5312, 0.0
      %v5430 = vadd.f32 %v5428, %v5429
      %v5431 = vsel %vm5389, %v5313, 0.0
      %v5432 = vadd.f32 %v5430, %v5431
      %v5433 = vsel %vm5389, %v5314, 0.0
      %v5434 = vadd.f32 %v5432, %v5433
      %v5435 = vsel %vm5389, %v5315, 0.0
      %v5436 = vadd.f32 %v5434, %v5435
      %v5437 = vsel %vm5389, %v5316, 0.0
      %v5438 = vadd.f32 %v5436, %v5437
      %v5439 = vsel %vm5389, %v5317, 0.0
      %v5440 = vadd.f32 %v5438, %v5439
      %v5441 = vsel %vm5389, %v5318, 0.0
      %v5442 = vadd.f32 %v5440, %v5441
      %v5443 = vsel %vm5389, %v5319, 0.0
      %v5444 = vadd.f32 %v5442, %v5443
      %v5445 = vsel %vm5389, %v5320, 0.0
      %v5446 = vadd.f32 %v5444, %v5445
      %v5447 = vsel %vm5389, %v5321, 0.0
      %v5448 = vadd.f32 %v5446, %v5447
      %v5449 = vsel %vm5389, %v5322, 0.0
      %v5450 = vadd.f32 %v5448, %v5449
      %v5451 = vsel %vm5389, %v5323, 0.0
      %v5452 = vadd.f32 %v5450, %v5451
      %v5453 = vrot.slane %v5452, 4
      %v5454 = vadd.f32 %v5452, %v5453
      %v5455 = vrot.slane %v5454, 2
      %v5456 = vadd.f32 %v5454, %v5455
      %v5457 = vrot.slane %v5456, 1
      %v5458 = vadd.f32 %v5456, %v5457
      %v5459 = vmul.f32 %v5292, %v5292
      %v5460 = vmul.f32 %v5293, %v5293
      %v5461 = vmul.f32 %v5294, %v5294
      %v5462 = vmul.f32 %v5295, %v5295
      %v5463 = vmul.f32 %v5296, %v5296
      %v5464 = vmul.f32 %v5297, %v5297
      %v5465 = vmul.f32 %v5298, %v5298
      %v5466 = vmul.f32 %v5299, %v5299
      %v5467 = vmul.f32 %v5300, %v5300
      %v5468 = vmul.f32 %v5301, %v5301
      %v5469 = vmul.f32 %v5302, %v5302
      %v5470 = vmul.f32 %v5303, %v5303
      %v5471 = vmul.f32 %v5304, %v5304
      %v5472 = vmul.f32 %v5305, %v5305
      %v5473 = vmul.f32 %v5306, %v5306
      %v5474 = vmul.f32 %v5307, %v5307
      %v5475 = vmul.f32 %v5308, %v5308
      %v5476 = vmul.f32 %v5309, %v5309
      %v5477 = vmul.f32 %v5310, %v5310
      %v5478 = vmul.f32 %v5311, %v5311
      %v5479 = vmul.f32 %v5312, %v5312
      %v5480 = vmul.f32 %v5313, %v5313
      %v5481 = vmul.f32 %v5314, %v5314
      %v5482 = vmul.f32 %v5315, %v5315
      %v5483 = vmul.f32 %v5316, %v5316
      %v5484 = vmul.f32 %v5317, %v5317
      %v5485 = vmul.f32 %v5318, %v5318
      %v5486 = vmul.f32 %v5319, %v5319
      %v5487 = vmul.f32 %v5320, %v5320
      %v5488 = vmul.f32 %v5321, %v5321
      %v5489 = vmul.f32 %v5322, %v5322
      %v5490 = vmul.f32 %v5323, %v5323
      %v5491 = vsel %vm5389, %v5459, 0.0
      %v5492 = vsel %vm5389, %v5460, 0.0
      %v5493 = vadd.f32 %v5491, %v5492
      %v5494 = vsel %vm5389, %v5461, 0.0
      %v5495 = vadd.f32 %v5493, %v5494
      %v5496 = vsel %vm5389, %v5462, 0.0
      %v5497 = vadd.f32 %v5495, %v5496
      %v5498 = vsel %vm5389, %v5463, 0.0
      %v5499 = vadd.f32 %v5497, %v5498
      %v5500 = vsel %vm5389, %v5464, 0.0
      %v5501 = vadd.f32 %v5499, %v5500
      %v5502 = vsel %vm5389, %v5465, 0.0
      %v5503 = vadd.f32 %v5501, %v5502
      %v5504 = vsel %vm5389, %v5466, 0.0
      %v5505 = vadd.f32 %v5503, %v5504
      %v5506 = vsel %vm5389, %v5467, 0.0
      %v5507 = vadd.f32 %v5505, %v5506
      %v5508 = vsel %vm5389, %v5468, 0.0
      %v5509 = vadd.f32 %v5507, %v5508
      %v5510 = vsel %vm5389, %v5469, 0.0
      %v5511 = vadd.f32 %v5509, %v5510
      %v5512 = vsel %vm5389, %v5470, 0.0
      %v5513 = vadd.f32 %v5511, %v5512
      %v5514 = vsel %vm5389, %v5471, 0.0
      %v5515 = vadd.f32 %v5513, %v5514
      %v5516 = vsel %vm5389, %v5472, 0.0
      %v5517 = vadd.f32 %v5515, %v5516
      %v5518 = vsel %vm5389, %v5473, 0.0
      %v5519 = vadd.f32 %v5517, %v5518
      %v5520 = vsel %vm5389, %v5474, 0.0
      %v5521 = vadd.f32 %v5519, %v5520
      %v5522 = vsel %vm5389, %v5475, 0.0
      %v5523 = vadd.f32 %v5521, %v5522
      %v5524 = vsel %vm5389, %v5476, 0.0
      %v5525 = vadd.f32 %v5523, %v5524
      %v5526 = vsel %vm5389, %v5477, 0.0
      %v5527 = vadd.f32 %v5525, %v5526
      %v5528 = vsel %vm5389, %v5478, 0.0
      %v5529 = vadd.f32 %v5527, %v5528
      %v5530 = vsel %vm5389, %v5479, 0.0
      %v5531 = vadd.f32 %v5529, %v5530
      %v5532 = vsel %vm5389, %v5480, 0.0
      %v5533 = vadd.f32 %v5531, %v5532
      %v5534 = vsel %vm5389, %v5481, 0.0
      %v5535 = vadd.f32 %v5533, %v5534
      %v5536 = vsel %vm5389, %v5482, 0.0
      %v5537 = vadd.f32 %v5535, %v5536
      %v5538 = vsel %vm5389, %v5483, 0.0
      %v5539 = vadd.f32 %v5537, %v5538
      %v5540 = vsel %vm5389, %v5484, 0.0
      %v5541 = vadd.f32 %v5539, %v5540
      %v5542 = vsel %vm5389, %v5485, 0.0
      %v5543 = vadd.f32 %v5541, %v5542
      %v5544 = vsel %vm5389, %v5486, 0.0
      %v5545 = vadd.f32 %v5543, %v5544
      %v5546 = vsel %vm5389, %v5487, 0.0
      %v5547 = vadd.f32 %v5545, %v5546
      %v5548 = vsel %vm5389, %v5488, 0.0
      %v5549 = vadd.f32 %v5547, %v5548
      %v5550 = vsel %vm5389, %v5489, 0.0
      %v5551 = vadd.f32 %v5549, %v5550
      %v5552 = vsel %vm5389, %v5490, 0.0
      %v5553 = vadd.f32 %v5551, %v5552
      %v5554 = vrot.slane %v5553, 4
      %v5555 = vadd.f32 %v5553, %v5554
      %v5556 = vrot.slane %v5555, 2
      %v5557 = vadd.f32 %v5555, %v5556
      %v5558 = vrot.slane %v5557, 1
      %v5559 = vadd.f32 %v5557, %v5558
      // Predicated region
      $region41: #{decoder_block_forward.5} parent=35 // pred_check
        %p5560 = pneg %p313
      $region42: #{decoder_block_forward.5} parent=35 // pred_check_branch
        %5562 = sbr.rel (%p5560) target = $region44
      $region43: #{decoder_block_forward.5} parent=35 // pred_region
        %vm5563 = vcmask 122880
        %5564 = vst.msk [vmem:[%s307] sm:$0x1] %vm5563, %v5458
        %5565 = vst.msk [vmem:[%s310] sm:$0x1] %vm5563, %v5559
      $region44: #{decoder_block_forward.5} parent=35 // pred_fallthru
        _
      %p5566 = scmp.gt.s32.totalorder %s23, 0
      // Predicated region
      $region45: #{decoder_block_forward.5} parent=35 // pred_check
        %p5567 = pneg %p5566
      $region46: #{decoder_block_forward.5} parent=35 // pred_check_branch
        %5569 = sbr.rel (%p5567) target = $region48
      $region47: #{decoder_block_forward.5} parent=35 // pred_region
        %v5570 = vld [vmem:[%s307] sm:$0x1]
        %v5571 = vadd.f32 %v5570, %v5458
        %vm5572 = vcmask 122880
        %5573 = vst.msk [vmem:[%s307] sm:$0x1] %vm5572, %v5571
        %v5574 = vld [vmem:[%s310] sm:$0x1]
        %v5575 = vadd.f32 %v5574, %v5559
        %5576 = vst.msk [vmem:[%s310] sm:$0x1] %vm5572, %v5575
      $region48: #{decoder_block_forward.5} parent=35 // pred_fallthru
        _
      %p5577 = scmp.lt.s32.totalorder %s22, 1
      %s5578 = scalar_select %p5577, %s22, 1
      %p5579 = scmp.lt.s32.totalorder %s23, 0
      %s5580 = scalar_select %p5579, %s23, 0
      %s5581 = smul.addr %s5580, 32
      %s5582 = smul.addr %s5578, 32
      %s5583 = sadd.s32 %s5581, %s5582
      %s5584 = smul.addr %s5583, 4
      %s5585 = scalar_lea.vmem %s4, %s5584
      %p5586 = scmp.lt.s32.totalorder %s22, 1
      %s5587 = scalar_select %p5586, %s22, 1
      %s5588 = scalar_lea.vmem %s5, %s5587
      %p5589 = scmp.lt.s32.totalorder %s22, 1
      %s5590 = scalar_select %p5589, %s22, 1
      %s5591 = scalar_lea.vmem %s6, %s5590
      // Predicated region
      $region49: #{decoder_block_forward.5} parent=35 // pred_check
        %p5592 = pneg %p144
      $region50: #{decoder_block_forward.5} parent=35 // pred_check_branch
        %5594 = sbr.rel (%p5592) target = $region52
      $region51: #{decoder_block_forward.5} parent=35 // pred_region
        _
      $region52: #{decoder_block_forward.5} parent=35 // pred_fallthru
        _
      // Predicated region
      $region53: #{decoder_block_forward.5} parent=35 // pred_check
        %p5595 = pneg %p170
      $region54: #{decoder_block_forward.5} parent=35 // pred_check_branch
        %5597 = sbr.rel (%p5595) target = $region56
      $region55: #{decoder_block_forward.5} parent=35 // pred_region
        _
      $region56: #{decoder_block_forward.5} parent=35 // pred_fallthru
        _
      // Predicated region
      $region57: #{decoder_block_forward.5} parent=35 // pred_check
        %p5598 = pneg %p196
      $region58: #{decoder_block_forward.5} parent=35 // pred_check_branch
        %5600 = sbr.rel (%p5598) target = $region60
      $region59: #{decoder_block_forward.5} parent=35 // pred_region
        _
      $region60: #{decoder_block_forward.5} parent=35 // pred_fallthru
        _
    $region36: #{decoder_block_forward.5} parent=5 // pred_fallthru
      _
    %p5601 = scmp.le.s32.totalorder 2, %s13
    // Predicated region
    $region61: #{decoder_block_forward.5} parent=5 // pred_check
      %p5602 = pneg %p5601
    $region62: #{decoder_block_forward.5} parent=5 // pred_check_branch
      %5604 = sbr.rel (%p5602) target = $region64
    $region63: #{decoder_block_forward.5} parent=5 // pred_region
      %s5605 = ssub.s32 %s13, 2
      // Predicated region
      $region65: #{decoder_block_forward.5} parent=63 // pred_check
        %p5606 = pneg %p150
      $region66: #{decoder_block_forward.5} parent=63 // pred_check_branch
        %5608 = sbr.rel (%p5606) target = $region68
      $region67: #{decoder_block_forward.5} parent=63 // pred_region
        %p5609 = scmp.lt.s32.totalorder %s24, 1
        %s5610 = scalar_select %p5609, %s24, 1
        %p5611 = scmp.lt.s32.totalorder %s25, 0
        %s5612 = scalar_select %p5611, %s25, 0
        %s5613 = smul.addr %s5612, 32
        %s5614 = smul.addr %s5610, 32
        %s5615 = sadd.s32 %s5613, %s5614
        %s5616 = smul.addr %s5615, 4
        %s5617 = scalar_lea.vmem %s4, %s5616
      $region68: #{decoder_block_forward.5} parent=63 // pred_fallthru
        _
      // Predicated region
      $region69: #{decoder_block_forward.5} parent=63 // pred_check
        %p5618 = pneg %p176
      $region70: #{decoder_block_forward.5} parent=63 // pred_check_branch
        %5620 = sbr.rel (%p5618) target = $region72
      $region71: #{decoder_block_forward.5} parent=63 // pred_region
        %p5621 = scmp.lt.s32.totalorder %s24, 1
        %s5622 = scalar_select %p5621, %s24, 1
        %s5623 = scalar_lea.vmem %s5, %s5622
      $region72: #{decoder_block_forward.5} parent=63 // pred_fallthru
        _
      // Predicated region
      $region73: #{decoder_block_forward.5} parent=63 // pred_check
        %p5624 = pneg %p202
      $region74: #{decoder_block_forward.5} parent=63 // pred_check_branch
        %5626 = sbr.rel (%p5624) target = $region76
      $region75: #{decoder_block_forward.5} parent=63 // pred_region
        %p5627 = scmp.lt.s32.totalorder %s24, 1
        %s5628 = scalar_select %p5627, %s24, 1
        %s5629 = scalar_lea.vmem %s6, %s5628
      $region76: #{decoder_block_forward.5} parent=63 // pred_fallthru
        _
    $region64: #{decoder_block_forward.5} parent=5 // pred_fallthru
      _
  $region6: #{decoder_block_forward.5} parent=0 // loop_footer
    %s17 = sadd.s32 1, %s13
  $region7: #{decoder_block_forward.5} parent=0 // loop_footer_branch
    %12 = sbr.rel target = $region3
  $region8: #{decoder_block_forward.5} parent=0 // loop_exit
    _

</llo_original>
